<compile_context>
chip_gen: v7x
topology: tpu7x:2x2x1
jax: 0.10.0
libtpu: 0.0.40
codegen_flags: <defaults>
</compile_context>

<pallas_src>
import functools
import math

import jax
import jax.numpy as jnp
from jax.experimental import pallas as pl
from jax.experimental.pallas import tpu as pltpu


# ----------------------------------------------------------------------------
# Small helpers
# ----------------------------------------------------------------------------
def _row_tile(n_rows: int, row_bytes: int, target_bytes: int = 1 << 20) -> int:
    """Row-tile: multiple of 8, ~target_bytes per tile, capped at n_rows."""
    ts = max(1, target_bytes // max(1, row_bytes))
    ts = max(8, (ts // 8) * 8)
    return min(n_rows, ts)


def _head_block(bh: int, sq: int, sk: int, dh: int,
                target_bytes: int = 1 << 20) -> int:
    """Largest divisor of bh whose per-tile footprint stays small."""
    per_head = 4 * (2 * sq * dh + 2 * sk * dh + 2 * sq * sk)
    hb = max(1, min(bh, target_bytes // max(per_head, 1)))
    while bh % hb:
        hb -= 1
    return hb


def _tpu_params(dimension_semantics):
    if jax.default_backend() != "tpu":
        return None
    return pltpu.CompilerParams(dimension_semantics=dimension_semantics)


def make_positional_encoding(max_len: int, hidden_dim: int) -> jnp.ndarray:
    """Equivalent of the registered `pe` buffer, shape (max_len, hidden_dim)."""
    position = jnp.arange(max_len, dtype=jnp.float32)[:, None]
    div_term = jnp.exp(
        jnp.arange(0, hidden_dim, 2, dtype=jnp.float32)
        * (-math.log(10000.0) / hidden_dim)
    )
    pe = jnp.zeros((max_len, hidden_dim), dtype=jnp.float32)
    pe = pe.at[:, 0::2].set(jnp.sin(position * div_term))
    pe = pe.at[:, 1::2].set(jnp.cos(position * div_term))
    return pe


def causal_mask(seq_len: int) -> jnp.ndarray:
    """_generate_square_subsequent_mask: 0 on/below diag, -inf above."""
    i = jnp.arange(seq_len)
    return jnp.where(i[None, :] > i[:, None], -jnp.inf, 0.0).astype(jnp.float32)


# ----------------------------------------------------------------------------
# Kernel 1: positional encoding add (+ optional dropout), lane-dense 2-D
# ----------------------------------------------------------------------------
def pe_add_kernel(x_ref, pe_ref, o_ref):
    o_ref[...] = x_ref[...] + pe_ref[...]


def pe_add_dropout_kernel(x_ref, pe_ref, bits_ref, o_ref, *, threshold, scale):
    y = x_ref[...] + pe_ref[...]
    keep = bits_ref[...] >= jnp.uint32(threshold)          # P(keep) = 1 - p
    o_ref[...] = (y * jnp.where(keep, jnp.float32(scale), jnp.float32(0.0))
                  ).astype(o_ref.dtype)


def positional_encoding_forward(x, pe, *, dropout_p=0.1, training=False,
                                rng_key=None):
    """x: (S, B, H) float32; pe: (max_len, H). Returns (S, B, H)."""
    S, B, H = x.shape
    W = B * H
    x2 = x.reshape(S, W)                       # (S, B*H), b outer / h inner
    pe2 = jnp.tile(pe[:S], (1, B))             # matching (S, B*H) layout
    ts = _row_tile(S, W * 4)
    grid = (pl.cdiv(S, ts),)
    tile_spec = pl.BlockSpec((ts, W), lambda i: (i, 0))
    cparams = _tpu_params(("parallel",))

    if (not training) or dropout_p == 0.0:
        y2 = pl.pallas_call(
            pe_add_kernel,
            out_shape=jax.ShapeDtypeStruct((S, W), x.dtype),
            grid=grid,
            in_specs=[tile_spec, tile_spec],
            out_specs=tile_spec,
            compiler_params=cparams,
        )(x2, pe2)
        return y2.reshape(S, B, H)

    assert rng_key is not None
    bits = jax.random.bits(rng_key, (S, W), dtype=jnp.uint32)
    threshold = min(int(round(dropout_p * float(1 << 32))), (1 << 32) - 1)
    scale = 1.0 / (1.0 - dropout_p)
    y2 = pl.pallas_call(
        functools.partial(pe_add_dropout_kernel, threshold=threshold, scale=scale),
        out_shape=jax.ShapeDtypeStruct((S, W), x.dtype),
        grid=grid,
        in_specs=[tile_spec, tile_spec, tile_spec],
        out_specs=tile_spec,
        compiler_params=cparams,
    )(x2, pe2, bits)
    return y2.reshape(S, B, H)


# ----------------------------------------------------------------------------
# Kernel 2: linear (x @ W^T + b), optional fused ReLU, (M, N)-tiled, full K
# ----------------------------------------------------------------------------
def linear_kernel(x_ref, wt_ref, b_ref, o_ref, *, apply_relu):
    y = jnp.dot(x_ref[...], wt_ref[...], preferred_element_type=jnp.float32)
    y = y + b_ref[...]
    if apply_relu:
        y = jnp.maximum(y, 0.0)
    o_ref[...] = y.astype(o_ref.dtype)


def linear_pallas(x, w, b, *, apply_relu=False):
    """x: (M, K); w: (N, K) (PyTorch layout); b: (N,). Returns (M, N)."""
    M, K = x.shape
    N = w.shape[0]
    wt = w.T                                    # (K, N): lane-dense for MXU
    b2 = b.reshape(1, N)
    tm = M if M <= 256 else 256
    tn = N if N <= 256 else 256
    grid = (pl.cdiv(M, tm), pl.cdiv(N, tn))
    return pl.pallas_call(
        functools.partial(linear_kernel, apply_relu=apply_relu),
        out_shape=jax.ShapeDtypeStruct((M, N), x.dtype),
        grid=grid,
        in_specs=[
            pl.BlockSpec((tm, K), lambda i, j: (i, 0)),
            pl.BlockSpec((K, tn), lambda i, j: (0, j)),
            pl.BlockSpec((1, tn), lambda i, j: (0, j)),
        ],
        out_specs=pl.BlockSpec((tm, tn), lambda i, j: (i, j)),
        compiler_params=_tpu_params(("parallel", "parallel")),
    )(x, wt, b2)


# ----------------------------------------------------------------------------
# Kernel 3: fused (a @ Wo^T + bo) + residual + LayerNorm   (attention out-proj)
# ----------------------------------------------------------------------------
def proj_residual_ln_kernel(a_ref, wt_ref, b_ref, res_ref, g_ref, beta_ref,
                            o_ref, *, eps):
    y = jnp.dot(a_ref[...], wt_ref[...], preferred_element_type=jnp.float32)
    z = res_ref[...] + y + b_ref[...]
    mu = jnp.mean(z, axis=-1, keepdims=True)
    c = z - mu
    var = jnp.mean(c * c, axis=-1, keepdims=True)
    inv = jax.lax.rsqrt(var + eps)
    o_ref[...] = (c * inv * g_ref[...] + beta_ref[...]).astype(o_ref.dtype)


def proj_residual_ln(a, w, b, res, gamma, beta, *, eps=1e-5):
    """LayerNorm(res + a @ w.T + b). a: (M, K); w: (N, K); res: (M, N)."""
    M, K = a.shape
    N = w.shape[0]
    wt = w.T
    tm = _row_tile(M, (K + 3 * N) * 4)
    grid = (pl.cdiv(M, tm),)
    vec = pl.BlockSpec((1, N), lambda i: (0, 0))
    return pl.pallas_call(
        functools.partial(proj_residual_ln_kernel, eps=eps),
        out_shape=jax.ShapeDtypeStruct((M, N), a.dtype),
        grid=grid,
        in_specs=[
            pl.BlockSpec((tm, K), lambda i: (i, 0)),
            pl.BlockSpec((K, N), lambda i: (0, 0)),
            vec,
            pl.BlockSpec((tm, N), lambda i: (i, 0)),
            vec,
            vec,
        ],
        out_specs=pl.BlockSpec((tm, N), lambda i: (i, 0)),
        compiler_params=_tpu_params(("parallel",)),
    )(a, wt, b.reshape(1, N), res, gamma.reshape(1, N), beta.reshape(1, N))


# ----------------------------------------------------------------------------
# Kernel 4: fused FFN (linear -> relu -> linear) + residual + LayerNorm
# ----------------------------------------------------------------------------
def ffn_residual_ln_kernel(x_ref, w1t_ref, b1_ref, w2t_ref, b2_ref,
                           g_ref, beta_ref, o_ref, *, eps):
    x = x_ref[...]
    h = jnp.dot(x, w1t_ref[...], preferred_element_type=jnp.float32) + b1_ref[...]
    h = jnp.maximum(h, 0.0)
    f = jnp.dot(h, w2t_ref[...], preferred_element_type=jnp.float32) + b2_ref[...]
    z = x + f
    mu = jnp.mean(z, axis=-1, keepdims=True)
    c = z - mu
    var = jnp.mean(c * c, axis=-1, keepdims=True)
    inv = jax.lax.rsqrt(var + eps)
    o_ref[...] = (c * inv * g_ref[...] + beta_ref[...]).astype(o_ref.dtype)


def ffn_residual_ln(x, w1, b1, w2, b2, gamma, beta, *, eps=1e-5):
    """LayerNorm(x + W2 relu(W1 x + b1) + b2). x: (M, D); w1: (F, D); w2: (D, F)."""
    M, D = x.shape
    F = w1.shape[0]
    tm = _row_tile(M, (3 * D + 2 * F) * 4)
    grid = (pl.cdiv(M, tm),)
    return pl.pallas_call(
        functools.partial(ffn_residual_ln_kernel, eps=eps),
        out_shape=jax.ShapeDtypeStruct((M, D), x.dtype),
        grid=grid,
        in_specs=[
            pl.BlockSpec((tm, D), lambda i: (i, 0)),
            pl.BlockSpec((D, F), lambda i: (0, 0)),
            pl.BlockSpec((1, F), lambda i: (0, 0)),
            pl.BlockSpec((F, D), lambda i: (0, 0)),
            pl.BlockSpec((1, D), lambda i: (0, 0)),
            pl.BlockSpec((1, D), lambda i: (0, 0)),
            pl.BlockSpec((1, D), lambda i: (0, 0)),
        ],
        out_specs=pl.BlockSpec((tm, D), lambda i: (i, 0)),
        compiler_params=_tpu_params(("parallel",)),
    )(x, w1.T, b1.reshape(1, F), w2.T, b2.reshape(1, D),
      gamma.reshape(1, D), beta.reshape(1, D))


# ----------------------------------------------------------------------------
# Kernel 5: masked-softmax attention, batched over a block of heads
# ----------------------------------------------------------------------------
def attention_kernel(q_ref, k_ref, v_ref, m_ref, o_ref, *, scale):
    q = q_ref[...]                               # (hb, Sq, Dh)
    k = k_ref[...]                               # (hb, Sk, Dh)
    v = v_ref[...]                               # (hb, Sk, Dh)
    s = jnp.einsum("hqd,hkd->hqk", q, k,
                   preferred_element_type=jnp.float32) * scale
    s = s + m_ref[...][None, :, :]
    s = s - jnp.max(s, axis=-1, keepdims=True)
    p = jnp.exp(s)
    p = p / jnp.sum(p, axis=-1, keepdims=True)
    o_ref[...] = jnp.einsum("hqk,hkd->hqd", p, v,
                            preferred_element_type=jnp.float32).astype(o_ref.dtype)


def attention_pallas(q, k, v, mask, *, scale):
    """q: (BH, Sq, Dh); k, v: (BH, Sk, Dh); mask: (Sq, Sk) additive float."""
    BH, Sq, Dh = q.shape
    Sk = k.shape[1]
    hb = _head_block(BH, Sq, Sk, Dh)
    grid = (BH // hb,)
    q_spec = pl.BlockSpec((hb, Sq, Dh), lambda i: (i, 0, 0))
    kv_spec = pl.BlockSpec((hb, Sk, Dh), lambda i: (i, 0, 0))
    m_spec = pl.BlockSpec((Sq, Sk), lambda i: (0, 0))
    return pl.pallas_call(
        functools.partial(attention_kernel, scale=scale),
        out_shape=jax.ShapeDtypeStruct((BH, Sq, Dh), q.dtype),
        grid=grid,
        in_specs=[q_spec, kv_spec, kv_spec, m_spec],
        out_specs=q_spec,
        compiler_params=_tpu_params(("parallel",)),
    )(q, k, v, mask)


# ----------------------------------------------------------------------------
# Module composition (glue around the Pallas kernels)
# ----------------------------------------------------------------------------
def mha_heads_out(query, key, value, mask, p, *, num_heads, is_self):
    """Returns concatenated per-head attention output, shape (Sq*B, D).

    Self-attention fuses the q/k/v projections into one matmul; cross-attention
    fuses k/v. Output projection + residual + LayerNorm is fused downstream.
    """
    Sq, B, D = query.shape
    Sk = key.shape[0]
    Dh = D // num_heads

    if is_self:
        w_qkv = jnp.concatenate([p["wq"], p["wk"], p["wv"]], axis=0)    # (3D, D)
        b_qkv = jnp.concatenate([p["bq"], p["bk"], p["bv"]], axis=0)
        qkv = linear_pallas(query.reshape(Sq * B, D), w_qkv, b_qkv)
        q, k, v = qkv[:, :D], qkv[:, D:2 * D], qkv[:, 2 * D:]
    else:
        q = linear_pallas(query.reshape(Sq * B, D), p["wq"], p["bq"])
        w_kv = jnp.concatenate([p["wk"], p["wv"]], axis=0)              # (2D, D)
        b_kv = jnp.concatenate([p["bk"], p["bv"]], axis=0)
        kv = linear_pallas(key.reshape(Sk * B, D), w_kv, b_kv)
        k, v = kv[:, :D], kv[:, D:]

    def to_heads(t, S):
        return (t.reshape(S, B, num_heads, Dh)
                 .transpose(1, 2, 0, 3)
                 .reshape(B * num_heads, S, Dh))

    oh = attention_pallas(to_heads(q, Sq), to_heads(k, Sk), to_heads(v, Sk),
                          mask, scale=1.0 / math.sqrt(Dh))
    return (oh.reshape(B, num_heads, Sq, Dh)
              .transpose(2, 0, 1, 3)
              .reshape(Sq * B, D))


def decoder_layer_forward(x, memory, mask, p, *, num_heads):
    """PyTorch TransformerDecoderLayer (post-norm, relu, eval mode)."""
    S, B, D = x.shape
    xf = x.reshape(S * B, D)

    sa = mha_heads_out(x, x, x, mask, p["self_attn"],
                       num_heads=num_heads, is_self=True)
    xf = proj_residual_ln(sa, p["self_attn"]["wo"], p["self_attn"]["bo"], xf,
                          p["ln1_g"], p["ln1_b"])
    x = xf.reshape(S, B, D)

    ca = mha_heads_out(x, memory, memory, mask, p["cross_attn"],
                       num_heads=num_heads, is_self=False)
    xf = proj_residual_ln(ca, p["cross_attn"]["wo"], p["cross_attn"]["bo"], xf,
                          p["ln2_g"], p["ln2_b"])

    xf = ffn_residual_ln(xf, p["w1"], p["b1"], p["w2"], p["b2"],
                         p["ln3_g"], p["ln3_b"])
    return xf.reshape(S, B, D)


def time_series_transformer_forward(x, params):
    """x: (B, S, D). Returns ((B, S, output_dim), None) — eval-mode forward."""
    B, S, D = x.shape
    xs = jnp.transpose(x, (1, 0, 2))                       # (S, B, D)
    xs = positional_encoding_forward(xs, params["pe"],
                                     dropout_p=params["dropout_p"],
                                     training=False)
    mask = causal_mask(S)
    mem = xs
    for layer_p in params["layers"]:
        xs = decoder_layer_forward(xs, mem, mask, layer_p,
                                   num_heads=params["num_heads"])
    out = jnp.transpose(xs, (1, 0, 2)).reshape(B * S, D)   # (B, S, D) flat
    out = linear_pallas(out, params["fc_w"], params["fc_b"])
    return out.reshape(B, S, -1), None


# ----------------------------------------------------------------------------
# Deterministic parameter init (mirrors the torch module's structure)
# ----------------------------------------------------------------------------
def init_params(key, *, d_model, num_heads, dim_ff, num_layers, output_dim,
                max_len=5000, dropout_p=0.1):
    def dense(k, out_d, in_d):
        w = jax.random.normal(k, (out_d, in_d), jnp.float32) / math.sqrt(in_d)
        return w, jnp.zeros((out_d,), jnp.float32)

    def attn_params(ks):
        wq, bq = dense(ks[0], d_model, d_model)
        wk, bk = dense(ks[1], d_model, d_model)
        wv, bv = dense(ks[2], d_model, d_model)
        wo, bo = dense(ks[3], d_model, d_model)
        return dict(wq=wq, bq=bq, wk=wk, bk=bk, wv=wv, bv=bv, wo=wo, bo=bo)

    ones = jnp.ones((d_model,), jnp.float32)
    zeros = jnp.zeros((d_model,), jnp.float32)
    layers = []
    for _ in range(num_layers):
        key, *ks = jax.random.split(key, 11)
        w1, b1 = dense(ks[8], dim_ff, d_model)
        w2, b2 = dense(ks[9], d_model, dim_ff)
        layers.append(dict(
            self_attn=attn_params(ks[0:4]),
            cross_attn=attn_params(ks[4:8]),
            w1=w1, b1=b1, w2=w2, b2=b2,
            ln1_g=ones, ln1_b=zeros,
            ln2_g=ones, ln2_b=zeros,
            ln3_g=ones, ln3_b=zeros,
        ))
    key, kf = jax.random.split(key)
    fc_w, fc_b = dense(kf, output_dim, d_model)
    return dict(pe=make_positional_encoding(max_len, d_model),
                layers=layers, fc_w=fc_w, fc_b=fc_b,
                num_heads=num_heads, dropout_p=dropout_p)


# ----------------------------------------------------------------------------
# Pure-JAX reference (for correctness checking only)
# ----------------------------------------------------------------------------
def _ref_linear(x, w, b):
    return x @ w.T + b


def _ref_layer_norm(z, g, b, eps=1e-5):
    mu = jnp.mean(z, axis=-1, keepdims=True)
    var = jnp.mean((z - mu) ** 2, axis=-1, keepdims=True)
    return (z - mu) / jnp.sqrt(var + eps) * g + b


def _ref_mha(q_in, kv_in, mask, p, num_heads):
    Sq, B, D = q_in.shape
    Sk = kv_in.shape[0]
    Dh = D // num_heads
    q = _ref_linear(q_in, p["wq"], p["bq"])
    k = _ref_linear(kv_in, p["wk"], p["bk"])
    v = _ref_linear(kv_in, p["wv"], p["bv"])
    q = q.reshape(Sq, B, num_heads, Dh).transpose(1, 2, 0, 3)
    k = k.reshape(Sk, B, num_heads, Dh).transpose(1, 2, 0, 3)
    v = v.reshape(Sk, B, num_heads, Dh).transpose(1, 2, 0, 3)
    s = jnp.einsum("bhqd,bhkd->bhqk", q, k) / math.sqrt(Dh) + mask
    a = jax.nn.softmax(s, axis=-1)
    o = jnp.einsum("bhqk,bhkd->bhqd", a, v)
    o = o.transpose(2, 0, 1, 3).reshape(Sq, B, D)
    return _ref_linear(o, p["wo"], p["bo"])


def ref_forward(x, params):
    B, S, D = x.shape
    xs = jnp.transpose(x, (1, 0, 2))
    xs = xs + params["pe"][:S][:, None, :]
    mask = causal_mask(S)
    mem = xs
    nh = params["num_heads"]
    for p in params["layers"]:
        sa = _ref_mha(xs, xs, mask, p["self_attn"], nh)
        xs = _ref_layer_norm(xs + sa, p["ln1_g"], p["ln1_b"])
        ca = _ref_mha(xs, mem, mask, p["cross_attn"], nh)
        xs = _ref_layer_norm(xs + ca, p["ln2_g"], p["ln2_b"])
        h = jax.nn.relu(_ref_linear(xs, p["w1"], p["b1"]))
        f = _ref_linear(h, p["w2"], p["b2"])
        xs = _ref_layer_norm(xs + f, p["ln3_g"], p["ln3_b"])
    out = jnp.transpose(xs, (1, 0, 2))
    return _ref_linear(out, params["fc_w"], params["fc_b"])


# ----------------------------------------------------------------------------
# Test
# ----------------------------------------------------------------------------
if __name__ == "__main__":
    input_dim = 32          # d_model; nhead = input_dim per the module spec
    output_dim = 8
    num_layers = 2
    dim_ff = 128            # small-shape choice (nn.TransformerDecoderLayer default is 2048)
    batch = 2
    seq_len = 8
    dropout_p = 0.1

    root = jax.random.PRNGKey(0)
    k_param, k_x, k_drop = jax.random.split(root, 3)
    params = init_params(k_param, d_model=input_dim, num_heads=input_dim,
                         dim_ff=dim_ff, num_layers=num_layers,
                         output_dim=output_dim, dropout_p=dropout_p)
    x = jax.random.normal(k_x, (batch, seq_len, input_dim), dtype=jnp.float32)

    # Full model forward (eval mode, jitted) vs. pure-JAX reference.
    fwd = jax.jit(lambda inp: time_series_transformer_forward(inp, params))
    out, aux = fwd(x)
    out = jax.block_until_ready(out)
    assert aux is None
    assert out.shape == (batch, seq_len, output_dim)
    ref = ref_forward(x, params)
    assert jnp.allclose(out, ref, atol=1e-2, rtol=1e-2), \
        float(jnp.max(jnp.abs(out - ref)))

    # Positional-encoding kernel, eval path: exact broadcast add.
    xs = jnp.transpose(x, (1, 0, 2))                        # (S, B, D)
    pe_eval = positional_encoding_forward(xs, params["pe"], dropout_p=dropout_p,
                                          training=False)
    pe_eval = jax.block_until_ready(pe_eval)
    base = xs + params["pe"][:seq_len][:, None, :]
    assert jnp.allclose(pe_eval, base, atol=1e-6, rtol=1e-6)

    # Positional-encoding kernel, training path: inverted dropout.
    pe_train = positional_encoding_forward(xs, params["pe"], dropout_p=dropout_p,
                                           training=True, rng_key=k_drop)
    pe_train = jax.block_until_ready(pe_train)
    scaled = base / (1.0 - dropout_p)
    ok = jnp.logical_or(jnp.isclose(pe_train, 0.0, atol=1e-6),
                        jnp.isclose(pe_train, scaled, atol=1e-5, rtol=1e-5))
    assert bool(jnp.all(ok))
    keep_frac = float(jnp.mean((pe_train != 0.0).astype(jnp.float32)))
    assert 0.5 < keep_frac <= 1.0

    print("KERNEL_OK")
</pallas_src>

<mosaic_0001>
module attributes {stable_mosaic.version = 11 : i64} {
  func.func @pe_add_kernel(%arg0: i32, %arg1: memref<8x64xf32, #tpu.memory_space<vmem>>, %arg2: memref<8x64xf32, #tpu.memory_space<vmem>>, %arg3: memref<8x64xf32, #tpu.memory_space<vmem>>) attributes {dimension_semantics = [#tpu.dimension_semantics<arbitrary>], iteration_bounds = array<i64: 1>, scalar_prefetch = 0 : i64, scratch_operands = 0 : i64, tpu.core_type = #tpu.core_type<tc>, window_params = [{transform_indices = @transform_0, window_bounds = array<i64: 8, 64>}, {transform_indices = @transform_1, window_bounds = array<i64: 8, 64>}, {transform_indices = @transform_2, window_bounds = array<i64: 8, 64>}]} {
    %c0 = arith.constant 0 : index
    %c0_0 = arith.constant 0 : index
    %0 = vector.load %arg1[%c0, %c0_0] : memref<8x64xf32, #tpu.memory_space<vmem>>, vector<8x64xf32>
    %c0_1 = arith.constant 0 : index
    %c0_2 = arith.constant 0 : index
    %1 = vector.load %arg2[%c0_1, %c0_2] : memref<8x64xf32, #tpu.memory_space<vmem>>, vector<8x64xf32>
    %2 = arith.addf %0, %1 : vector<8x64xf32>
    %c0_3 = arith.constant 0 : index
    %c0_4 = arith.constant 0 : index
    %3 = vector.load %arg3[%c0_3, %c0_4] : memref<8x64xf32, #tpu.memory_space<vmem>>, vector<8x64xf32>
    tpu.vector_store %arg3[%c0_3, %c0_4], %2 {strides = array<i32>} : memref<8x64xf32, #tpu.memory_space<vmem>>, vector<8x64xf32>,
    return
  }
  func.func @transform_0(%arg0: i32) -> (i32, i32) {
    %c0_i32 = arith.constant 0 : i32
    %c0_i32_0 = arith.constant 0 : i32
    return %arg0, %c0_i32 : i32, i32
  }
  func.func @transform_1(%arg0: i32) -> (i32, i32) {
    %c0_i32 = arith.constant 0 : i32
    %c0_i32_0 = arith.constant 0 : i32
    return %arg0, %c0_i32 : i32, i32
  }
  func.func @transform_2(%arg0: i32) -> (i32, i32) {
    %c0_i32 = arith.constant 0 : i32
    %c0_i32_0 = arith.constant 0 : i32
    return %arg0, %c0_i32 : i32, i32
  }
}

module attributes {stable_mosaic.version = 11 : i64} {
  func.func @linear_kernel(%arg0: i32, %arg1: i32, %arg2: memref<16x32xf32, #tpu.memory_space<vmem>>, %arg3: memref<32x96xf32, #tpu.memory_space<vmem>>, %arg4: memref<1x96xf32, #tpu.memory_space<vmem>>, %arg5: memref<16x96xf32, #tpu.memory_space<vmem>>) attributes {dimension_semantics = [#tpu.dimension_semantics<arbitrary>, #tpu.dimension_semantics<arbitrary>], iteration_bounds = array<i64: 1, 1>, scalar_prefetch = 0 : i64, scratch_operands = 0 : i64, tpu.core_type = #tpu.core_type<tc>, window_params = [{transform_indices = @transform_0, window_bounds = array<i64: 16, 32>}, {transform_indices = @transform_1, window_bounds = array<i64: 32, 96>}, {transform_indices = @transform_2, window_bounds = array<i64: 1, 96>}, {transform_indices = @transform_3, window_bounds = array<i64: 16, 96>}]} {
    %c0 = arith.constant 0 : index
    %c0_0 = arith.constant 0 : index
    %0 = vector.load %arg2[%c0, %c0_0] : memref<16x32xf32, #tpu.memory_space<vmem>>, vector<16x32xf32>
    %c0_1 = arith.constant 0 : index
    %c0_2 = arith.constant 0 : index
    %1 = vector.load %arg3[%c0_1, %c0_2] : memref<32x96xf32, #tpu.memory_space<vmem>>, vector<32x96xf32>
    %cst = arith.constant dense<0.000000e+00> : vector<16x96xf32>
    %2 = tpu.matmul %0, %1, %cst {dimension_numbers = #tpu.dot_dimension_numbers<[1], [0], [0], [1], [0, 0, 1, 1], [], []>} : vector<16x32xf32>, vector<32x96xf32>, vector<16x96xf32> -> vector<16x96xf32>
    %c0_3 = arith.constant 0 : index
    %c0_4 = arith.constant 0 : index
    %3 = vector.load %arg4[%c0_3, %c0_4] : memref<1x96xf32, #tpu.memory_space<vmem>>, vector<1x96xf32>
    %4 = vector.broadcast %3 : vector<1x96xf32> to vector<16x96xf32>
    %5 = arith.addf %2, %4 : vector<16x96xf32>
    %c0_5 = arith.constant 0 : index
    %c0_6 = arith.constant 0 : index
    %6 = vector.load %arg5[%c0_5, %c0_6] : memref<16x96xf32, #tpu.memory_space<vmem>>, vector<16x96xf32>
    tpu.vector_store %arg5[%c0_5, %c0_6], %5 {strides = array<i32>} : memref<16x96xf32, #tpu.memory_space<vmem>>, vector<16x96xf32>,
    return
  }
  func.func @transform_0(%arg0: i32, %arg1: i32) -> (i32, i32) {
    %c0_i32 = arith.constant 0 : i32
    %c0_i32_0 = arith.constant 0 : i32
    return %arg0, %c0_i32 : i32, i32
  }
  func.func @transform_1(%arg0: i32, %arg1: i32) -> (i32, i32) {
    %c0_i32 = arith.constant 0 : i32
    %c0_i32_0 = arith.constant 0 : i32
    return %c0_i32, %arg1 : i32, i32
  }
  func.func @transform_2(%arg0: i32, %arg1: i32) -> (i32, i32) {
    %c0_i32 = arith.constant 0 : i32
    %c0_i32_0 = arith.constant 0 : i32
    return %c0_i32, %arg1 : i32, i32
  }
  func.func @transform_3(%arg0: i32, %arg1: i32) -> (i32, i32) {
    %c0_i32 = arith.constant 0 : i32
    return %arg0, %arg1 : i32, i32
  }
}

module attributes {stable_mosaic.version = 11 : i64} {
  func.func @attention_kernel(%arg0: i32, %arg1: memref<64x8x1xf32, #tpu.memory_space<vmem>>, %arg2: memref<64x8x1xf32, #tpu.memory_space<vmem>>, %arg3: memref<64x8x1xf32, #tpu.memory_space<vmem>>, %arg4: memref<8x8xf32, #tpu.memory_space<vmem>>, %arg5: memref<64x8x1xf32, #tpu.memory_space<vmem>>) attributes {dimension_semantics = [#tpu.dimension_semantics<arbitrary>], iteration_bounds = array<i64: 1>, scalar_prefetch = 0 : i64, scratch_operands = 0 : i64, tpu.core_type = #tpu.core_type<tc>, window_params = [{transform_indices = @transform_0, window_bounds = array<i64: 64, 8, 1>}, {transform_indices = @transform_1, window_bounds = array<i64: 64, 8, 1>}, {transform_indices = @transform_2, window_bounds = array<i64: 64, 8, 1>}, {pipeline_mode = #tpu.pipeline_mode<synchronous>, transform_indices = @transform_3, window_bounds = array<i64: 8, 8>}, {transform_indices = @transform_4, window_bounds = array<i64: 64, 8, 1>}]} {
    %c0 = arith.constant 0 : index
    %c0_0 = arith.constant 0 : index
    %c0_1 = arith.constant 0 : index
    %0 = vector.load %arg1[%c0, %c0_0, %c0_1] : memref<64x8x1xf32, #tpu.memory_space<vmem>>, vector<64x8x1xf32>
    %c0_2 = arith.constant 0 : index
    %c0_3 = arith.constant 0 : index
    %c0_4 = arith.constant 0 : index
    %1 = vector.load %arg2[%c0_2, %c0_3, %c0_4] : memref<64x8x1xf32, #tpu.memory_space<vmem>>, vector<64x8x1xf32>
    %c0_5 = arith.constant 0 : index
    %c0_6 = arith.constant 0 : index
    %c0_7 = arith.constant 0 : index
    %2 = vector.load %arg3[%c0_5, %c0_6, %c0_7] : memref<64x8x1xf32, #tpu.memory_space<vmem>>, vector<64x8x1xf32>
    "tpu.trace_start"() <{level = 10 : i32, message = "hqd,hkd->hqk"}> : () -> ()
    %cst = arith.constant dense<0.000000e+00> : vector<64x8x8xf32>
    %3 = tpu.matmul %0, %1, %cst {dimension_numbers = #tpu.dot_dimension_numbers<[2], [2], [1], [1], [0, 0, 0, 1, 1, 1], [0], [0]>} : vector<64x8x1xf32>, vector<64x8x1xf32>, vector<64x8x8xf32> -> vector<64x8x8xf32>
    "tpu.trace_stop"() : () -> ()
    %cst_8 = arith.constant 1.000000e+00 : f32
    %4 = vector.broadcast %cst_8 : f32 to vector<64x8x8xf32>
    %5 = arith.mulf %3, %4 : vector<64x8x8xf32>
    %c0_9 = arith.constant 0 : index
    %c0_10 = arith.constant 0 : index
    %6 = vector.load %arg4[%c0_9, %c0_10] : memref<8x8xf32, #tpu.memory_space<vmem>>, vector<8x8xf32>
    %7 = vector.shape_cast %6 : vector<8x8xf32> to vector<1x8x8xf32>
    %8 = vector.broadcast %7 : vector<1x8x8xf32> to vector<64x8x8xf32>
    %9 = arith.addf %5, %8 : vector<64x8x8xf32>
    %cst_11 = arith.constant dense<0xFF800000> : vector<64x8xf32>
    %10 = vector.multi_reduction <maximumf>, %9, %cst_11 [2] : vector<64x8x8xf32> to vector<64x8xf32>
    %11 = vector.shape_cast %10 : vector<64x8xf32> to vector<64x8x1xf32>
    %12 = vector.broadcast %11 : vector<64x8x1xf32> to vector<64x8x8xf32>
    %13 = arith.subf %9, %12 : vector<64x8x8xf32>
    %14 = math.exp %13 : vector<64x8x8xf32>
    %cst_12 = arith.constant dense<0.000000e+00> : vector<64x8xf32>
    %15 = vector.multi_reduction <add>, %14, %cst_12 [2] : vector<64x8x8xf32> to vector<64x8xf32>
    %16 = vector.shape_cast %15 : vector<64x8xf32> to vector<64x8x1xf32>
    %17 = vector.broadcast %16 : vector<64x8x1xf32> to vector<64x8x8xf32>
    %18 = arith.divf %14, %17 : vector<64x8x8xf32>
    "tpu.trace_start"() <{level = 10 : i32, message = "hqk,hkd->hqd"}> : () -> ()
    %cst_13 = arith.constant dense<0.000000e+00> : vector<64x8x1xf32>
    %19 = tpu.matmul %18, %2, %cst_13 {dimension_numbers = #tpu.dot_dimension_numbers<[2], [1], [1], [2], [0, 0, 0, 1, 1, 2], [0], [0]>} : vector<64x8x8xf32>, vector<64x8x1xf32>, vector<64x8x1xf32> -> vector<64x8x1xf32>
    "tpu.trace_stop"() : () -> ()
    %c0_14 = arith.constant 0 : index
    %c0_15 = arith.constant 0 : index
    %c0_16 = arith.constant 0 : index
    %20 = vector.load %arg5[%c0_14, %c0_15, %c0_16] : memref<64x8x1xf32, #tpu.memory_space<vmem>>, vector<64x8x1xf32>
    tpu.vector_store %arg5[%c0_14, %c0_15, %c0_16], %19 {strides = array<i32>} : memref<64x8x1xf32, #tpu.memory_space<vmem>>, vector<64x8x1xf32>,
    return
  }
  func.func @transform_0(%arg0: i32) -> (i32, i32, i32) {
    %c0_i32 = arith.constant 0 : i32
    %c0_i32_0 = arith.constant 0 : i32
    %c0_i32_1 = arith.constant 0 : i32
    return %arg0, %c0_i32, %c0_i32_0 : i32, i32, i32
  }
  func.func @transform_1(%arg0: i32) -> (i32, i32, i32) {
    %c0_i32 = arith.constant 0 : i32
    %c0_i32_0 = arith.constant 0 : i32
    %c0_i32_1 = arith.constant 0 : i32
    return %arg0, %c0_i32, %c0_i32_0 : i32, i32, i32
  }
  func.func @transform_2(%arg0: i32) -> (i32, i32, i32) {
    %c0_i32 = arith.constant 0 : i32
    %c0_i32_0 = arith.constant 0 : i32
    %c0_i32_1 = arith.constant 0 : i32
    return %arg0, %c0_i32, %c0_i32_0 : i32, i32, i32
  }
  func.func @transform_3(%arg0: i32) -> (i32, i32) {
    %c0_i32 = arith.constant 0 : i32
    %c0_i32_0 = arith.constant 0 : i32
    %c0_i32_1 = arith.constant 0 : i32
    return %c0_i32, %c0_i32_0 : i32, i32
  }
  func.func @transform_4(%arg0: i32) -> (i32, i32, i32) {
    %c0_i32 = arith.constant 0 : i32
    %c0_i32_0 = arith.constant 0 : i32
    %c0_i32_1 = arith.constant 0 : i32
    return %arg0, %c0_i32, %c0_i32_0 : i32, i32, i32
  }
}

module attributes {stable_mosaic.version = 11 : i64} {
  func.func @proj_residual_ln_kernel(%arg0: i32, %arg1: memref<16x32xf32, #tpu.memory_space<vmem>>, %arg2: memref<32x32xf32, #tpu.memory_space<vmem>>, %arg3: memref<1x32xf32, #tpu.memory_space<vmem>>, %arg4: memref<16x32xf32, #tpu.memory_space<vmem>>, %arg5: memref<1x32xf32, #tpu.memory_space<vmem>>, %arg6: memref<1x32xf32, #tpu.memory_space<vmem>>, %arg7: memref<16x32xf32, #tpu.memory_space<vmem>>) attributes {dimension_semantics = [#tpu.dimension_semantics<arbitrary>], iteration_bounds = array<i64: 1>, scalar_prefetch = 0 : i64, scratch_operands = 0 : i64, tpu.core_type = #tpu.core_type<tc>, window_params = [{transform_indices = @transform_0, window_bounds = array<i64: 16, 32>}, {pipeline_mode = #tpu.pipeline_mode<synchronous>, transform_indices = @transform_1, window_bounds = array<i64: 32, 32>}, {pipeline_mode = #tpu.pipeline_mode<synchronous>, transform_indices = @transform_2, window_bounds = array<i64: 1, 32>}, {transform_indices = @transform_3, window_bounds = array<i64: 16, 32>}, {pipeline_mode = #tpu.pipeline_mode<synchronous>, transform_indices = @transform_4, window_bounds = array<i64: 1, 32>}, {pipeline_mode = #tpu.pipeline_mode<synchronous>, transform_indices = @transform_5, window_bounds = array<i64: 1, 32>}, {transform_indices = @transform_6, window_bounds = array<i64: 16, 32>}]} {
    %c0 = arith.constant 0 : index
    %c0_0 = arith.constant 0 : index
    %0 = vector.load %arg1[%c0, %c0_0] : memref<16x32xf32, #tpu.memory_space<vmem>>, vector<16x32xf32>
    %c0_1 = arith.constant 0 : index
    %c0_2 = arith.constant 0 : index
    %1 = vector.load %arg2[%c0_1, %c0_2] : memref<32x32xf32, #tpu.memory_space<vmem>>, vector<32x32xf32>
    %cst = arith.constant dense<0.000000e+00> : vector<16x32xf32>
    %2 = tpu.matmul %0, %1, %cst {dimension_numbers = #tpu.dot_dimension_numbers<[1], [0], [0], [1], [0, 0, 1, 1], [], []>} : vector<16x32xf32>, vector<32x32xf32>, vector<16x32xf32> -> vector<16x32xf32>
    %c0_3 = arith.constant 0 : index
    %c0_4 = arith.constant 0 : index
    %3 = vector.load %arg4[%c0_3, %c0_4] : memref<16x32xf32, #tpu.memory_space<vmem>>, vector<16x32xf32>
    %4 = arith.addf %3, %2 : vector<16x32xf32>
    %c0_5 = arith.constant 0 : index
    %c0_6 = arith.constant 0 : index
    %5 = vector.load %arg3[%c0_5, %c0_6] : memref<1x32xf32, #tpu.memory_space<vmem>>, vector<1x32xf32>
    %6 = vector.broadcast %5 : vector<1x32xf32> to vector<16x32xf32>
    %7 = arith.addf %4, %6 : vector<16x32xf32>
    %cst_7 = arith.constant dense<0.000000e+00> : vector<16xf32>
    %8 = vector.multi_reduction <add>, %7, %cst_7 [1] : vector<16x32xf32> to vector<16xf32>
    %9 = vector.shape_cast %8 : vector<16xf32> to vector<16x1xf32>
    %cst_8 = arith.constant 3.200000e+01 : f32
    %10 = vector.broadcast %cst_8 : f32 to vector<16x1xf32>
    %11 = arith.divf %9, %10 : vector<16x1xf32>
    %12 = vector.broadcast %11 : vector<16x1xf32> to vector<16x32xf32>
    %13 = arith.subf %7, %12 : vector<16x32xf32>
    %14 = arith.mulf %13, %13 : vector<16x32xf32>
    %cst_9 = arith.constant dense<0.000000e+00> : vector<16xf32>
    %15 = vector.multi_reduction <add>, %14, %cst_9 [1] : vector<16x32xf32> to vector<16xf32>
    %16 = vector.shape_cast %15 : vector<16xf32> to vector<16x1xf32>
    %cst_10 = arith.constant 3.200000e+01 : f32
    %17 = vector.broadcast %cst_10 : f32 to vector<16x1xf32>
    %18 = arith.divf %16, %17 : vector<16x1xf32>
    %cst_11 = arith.constant 9.99999974E-6 : f32
    %19 = vector.broadcast %cst_11 : f32 to vector<16x1xf32>
    %20 = arith.addf %18, %19 : vector<16x1xf32>
    %21 = math.rsqrt %20 : vector<16x1xf32>
    %22 = vector.broadcast %21 : vector<16x1xf32> to vector<16x32xf32>
    %23 = arith.mulf %13, %22 : vector<16x32xf32>
    %c0_12 = arith.constant 0 : index
    %c0_13 = arith.constant 0 : index
    %24 = vector.load %arg5[%c0_12, %c0_13] : memref<1x32xf32, #tpu.memory_space<vmem>>, vector<1x32xf32>
    %25 = vector.broadcast %24 : vector<1x32xf32> to vector<16x32xf32>
    %26 = arith.mulf %23, %25 : vector<16x32xf32>
    %c0_14 = arith.constant 0 : index
    %c0_15 = arith.constant 0 : index
    %27 = vector.load %arg6[%c0_14, %c0_15] : memref<1x32xf32, #tpu.memory_space<vmem>>, vector<1x32xf32>
    %28 = vector.broadcast %27 : vector<1x32xf32> to vector<16x32xf32>
    %29 = arith.addf %26, %28 : vector<16x32xf32>
    %c0_16 = arith.constant 0 : index
    %c0_17 = arith.constant 0 : index
    %30 = vector.load %arg7[%c0_16, %c0_17] : memref<16x32xf32, #tpu.memory_space<vmem>>, vector<16x32xf32>
    tpu.vector_store %arg7[%c0_16, %c0_17], %29 {strides = array<i32>} : memref<16x32xf32, #tpu.memory_space<vmem>>, vector<16x32xf32>,
    return
  }
  func.func @transform_0(%arg0: i32) -> (i32, i32) {
    %c0_i32 = arith.constant 0 : i32
    %c0_i32_0 = arith.constant 0 : i32
    return %arg0, %c0_i32 : i32, i32
  }
  func.func @transform_1(%arg0: i32) -> (i32, i32) {
    %c0_i32 = arith.constant 0 : i32
    %c0_i32_0 = arith.constant 0 : i32
    %c0_i32_1 = arith.constant 0 : i32
    return %c0_i32, %c0_i32_0 : i32, i32
  }
  func.func @transform_2(%arg0: i32) -> (i32, i32) {
    %c0_i32 = arith.constant 0 : i32
    %c0_i32_0 = arith.constant 0 : i32
    %c0_i32_1 = arith.constant 0 : i32
    return %c0_i32, %c0_i32_0 : i32, i32
  }
  func.func @transform_3(%arg0: i32) -> (i32, i32) {
    %c0_i32 = arith.constant 0 : i32
    %c0_i32_0 = arith.constant 0 : i32
    return %arg0, %c0_i32 : i32, i32
  }
  func.func @transform_4(%arg0: i32) -> (i32, i32) {
    %c0_i32 = arith.constant 0 : i32
    %c0_i32_0 = arith.constant 0 : i32
    %c0_i32_1 = arith.constant 0 : i32
    return %c0_i32, %c0_i32_0 : i32, i32
  }
  func.func @transform_5(%arg0: i32) -> (i32, i32) {
    %c0_i32 = arith.constant 0 : i32
    %c0_i32_0 = arith.constant 0 : i32
    %c0_i32_1 = arith.constant 0 : i32
    return %c0_i32, %c0_i32_0 : i32, i32
  }
  func.func @transform_6(%arg0: i32) -> (i32, i32) {
    %c0_i32 = arith.constant 0 : i32
    %c0_i32_0 = arith.constant 0 : i32
    return %arg0, %c0_i32 : i32, i32
  }
}

module attributes {stable_mosaic.version = 11 : i64} {
  func.func @linear_kernel(%arg0: i32, %arg1: i32, %arg2: memref<16x32xf32, #tpu.memory_space<vmem>>, %arg3: memref<32x64xf32, #tpu.memory_space<vmem>>, %arg4: memref<1x64xf32, #tpu.memory_space<vmem>>, %arg5: memref<16x64xf32, #tpu.memory_space<vmem>>) attributes {dimension_semantics = [#tpu.dimension_semantics<arbitrary>, #tpu.dimension_semantics<arbitrary>], iteration_bounds = array<i64: 1, 1>, scalar_prefetch = 0 : i64, scratch_operands = 0 : i64, tpu.core_type = #tpu.core_type<tc>, window_params = [{transform_indices = @transform_0, window_bounds = array<i64: 16, 32>}, {transform_indices = @transform_1, window_bounds = array<i64: 32, 64>}, {transform_indices = @transform_2, window_bounds = array<i64: 1, 64>}, {transform_indices = @transform_3, window_bounds = array<i64: 16, 64>}]} {
    %c0 = arith.constant 0 : index
    %c0_0 = arith.constant 0 : index
    %0 = vector.load %arg2[%c0, %c0_0] : memref<16x32xf32, #tpu.memory_space<vmem>>, vector<16x32xf32>
    %c0_1 = arith.constant 0 : index
    %c0_2 = arith.constant 0 : index
    %1 = vector.load %arg3[%c0_1, %c0_2] : memref<32x64xf32, #tpu.memory_space<vmem>>, vector<32x64xf32>
    %cst = arith.constant dense<0.000000e+00> : vector<16x64xf32>
    %2 = tpu.matmul %0, %1, %cst {dimension_numbers = #tpu.dot_dimension_numbers<[1], [0], [0], [1], [0, 0, 1, 1], [], []>} : vector<16x32xf32>, vector<32x64xf32>, vector<16x64xf32> -> vector<16x64xf32>
    %c0_3 = arith.constant 0 : index
    %c0_4 = arith.constant 0 : index
    %3 = vector.load %arg4[%c0_3, %c0_4] : memref<1x64xf32, #tpu.memory_space<vmem>>, vector<1x64xf32>
    %4 = vector.broadcast %3 : vector<1x64xf32> to vector<16x64xf32>
    %5 = arith.addf %2, %4 : vector<16x64xf32>
    %c0_5 = arith.constant 0 : index
    %c0_6 = arith.constant 0 : index
    %6 = vector.load %arg5[%c0_5, %c0_6] : memref<16x64xf32, #tpu.memory_space<vmem>>, vector<16x64xf32>
    tpu.vector_store %arg5[%c0_5, %c0_6], %5 {strides = array<i32>} : memref<16x64xf32, #tpu.memory_space<vmem>>, vector<16x64xf32>,
    return
  }
  func.func @transform_0(%arg0: i32, %arg1: i32) -> (i32, i32) {
    %c0_i32 = arith.constant 0 : i32
    %c0_i32_0 = arith.constant 0 : i32
    return %arg0, %c0_i32 : i32, i32
  }
  func.func @transform_1(%arg0: i32, %arg1: i32) -> (i32, i32) {
    %c0_i32 = arith.constant 0 : i32
    %c0_i32_0 = arith.constant 0 : i32
    return %c0_i32, %arg1 : i32, i32
  }
  func.func @transform_2(%arg0: i32, %arg1: i32) -> (i32, i32) {
    %c0_i32 = arith.constant 0 : i32
    %c0_i32_0 = arith.constant 0 : i32
    return %c0_i32, %arg1 : i32, i32
  }
  func.func @transform_3(%arg0: i32, %arg1: i32) -> (i32, i32) {
    %c0_i32 = arith.constant 0 : i32
    return %arg0, %arg1 : i32, i32
  }
}

module attributes {stable_mosaic.version = 11 : i64} {
  func.func @linear_kernel(%arg0: i32, %arg1: i32, %arg2: memref<16x32xf32, #tpu.memory_space<vmem>>, %arg3: memref<32x32xf32, #tpu.memory_space<vmem>>, %arg4: memref<1x32xf32, #tpu.memory_space<vmem>>, %arg5: memref<16x32xf32, #tpu.memory_space<vmem>>) attributes {dimension_semantics = [#tpu.dimension_semantics<arbitrary>, #tpu.dimension_semantics<arbitrary>], iteration_bounds = array<i64: 1, 1>, scalar_prefetch = 0 : i64, scratch_operands = 0 : i64, tpu.core_type = #tpu.core_type<tc>, window_params = [{transform_indices = @transform_0, window_bounds = array<i64: 16, 32>}, {transform_indices = @transform_1, window_bounds = array<i64: 32, 32>}, {transform_indices = @transform_2, window_bounds = array<i64: 1, 32>}, {transform_indices = @transform_3, window_bounds = array<i64: 16, 32>}]} {
    %c0 = arith.constant 0 : index
    %c0_0 = arith.constant 0 : index
    %0 = vector.load %arg2[%c0, %c0_0] : memref<16x32xf32, #tpu.memory_space<vmem>>, vector<16x32xf32>
    %c0_1 = arith.constant 0 : index
    %c0_2 = arith.constant 0 : index
    %1 = vector.load %arg3[%c0_1, %c0_2] : memref<32x32xf32, #tpu.memory_space<vmem>>, vector<32x32xf32>
    %cst = arith.constant dense<0.000000e+00> : vector<16x32xf32>
    %2 = tpu.matmul %0, %1, %cst {dimension_numbers = #tpu.dot_dimension_numbers<[1], [0], [0], [1], [0, 0, 1, 1], [], []>} : vector<16x32xf32>, vector<32x32xf32>, vector<16x32xf32> -> vector<16x32xf32>
    %c0_3 = arith.constant 0 : index
    %c0_4 = arith.constant 0 : index
    %3 = vector.load %arg4[%c0_3, %c0_4] : memref<1x32xf32, #tpu.memory_space<vmem>>, vector<1x32xf32>
    %4 = vector.broadcast %3 : vector<1x32xf32> to vector<16x32xf32>
    %5 = arith.addf %2, %4 : vector<16x32xf32>
    %c0_5 = arith.constant 0 : index
    %c0_6 = arith.constant 0 : index
    %6 = vector.load %arg5[%c0_5, %c0_6] : memref<16x32xf32, #tpu.memory_space<vmem>>, vector<16x32xf32>
    tpu.vector_store %arg5[%c0_5, %c0_6], %5 {strides = array<i32>} : memref<16x32xf32, #tpu.memory_space<vmem>>, vector<16x32xf32>,
    return
  }
  func.func @transform_0(%arg0: i32, %arg1: i32) -> (i32, i32) {
    %c0_i32 = arith.constant 0 : i32
    %c0_i32_0 = arith.constant 0 : i32
    return %arg0, %c0_i32 : i32, i32
  }
  func.func @transform_1(%arg0: i32, %arg1: i32) -> (i32, i32) {
    %c0_i32 = arith.constant 0 : i32
    %c0_i32_0 = arith.constant 0 : i32
    return %c0_i32, %arg1 : i32, i32
  }
  func.func @transform_2(%arg0: i32, %arg1: i32) -> (i32, i32) {
    %c0_i32 = arith.constant 0 : i32
    %c0_i32_0 = arith.constant 0 : i32
    return %c0_i32, %arg1 : i32, i32
  }
  func.func @transform_3(%arg0: i32, %arg1: i32) -> (i32, i32) {
    %c0_i32 = arith.constant 0 : i32
    return %arg0, %arg1 : i32, i32
  }
}

module attributes {stable_mosaic.version = 11 : i64} {
  func.func @ffn_residual_ln_kernel(%arg0: i32, %arg1: memref<16x32xf32, #tpu.memory_space<vmem>>, %arg2: memref<32x128xf32, #tpu.memory_space<vmem>>, %arg3: memref<1x128xf32, #tpu.memory_space<vmem>>, %arg4: memref<128x32xf32, #tpu.memory_space<vmem>>, %arg5: memref<1x32xf32, #tpu.memory_space<vmem>>, %arg6: memref<1x32xf32, #tpu.memory_space<vmem>>, %arg7: memref<1x32xf32, #tpu.memory_space<vmem>>, %arg8: memref<16x32xf32, #tpu.memory_space<vmem>>) attributes {dimension_semantics = [#tpu.dimension_semantics<arbitrary>], iteration_bounds = array<i64: 1>, scalar_prefetch = 0 : i64, scratch_operands = 0 : i64, tpu.core_type = #tpu.core_type<tc>, window_params = [{transform_indices = @transform_0, window_bounds = array<i64: 16, 32>}, {pipeline_mode = #tpu.pipeline_mode<synchronous>, transform_indices = @transform_1, window_bounds = array<i64: 32, 128>}, {pipeline_mode = #tpu.pipeline_mode<synchronous>, transform_indices = @transform_2, window_bounds = array<i64: 1, 128>}, {pipeline_mode = #tpu.pipeline_mode<synchronous>, transform_indices = @transform_3, window_bounds = array<i64: 128, 32>}, {pipeline_mode = #tpu.pipeline_mode<synchronous>, transform_indices = @transform_4, window_bounds = array<i64: 1, 32>}, {pipeline_mode = #tpu.pipeline_mode<synchronous>, transform_indices = @transform_5, window_bounds = array<i64: 1, 32>}, {pipeline_mode = #tpu.pipeline_mode<synchronous>, transform_indices = @transform_6, window_bounds = array<i64: 1, 32>}, {transform_indices = @transform_7, window_bounds = array<i64: 16, 32>}]} {
    %c0 = arith.constant 0 : index
    %c0_0 = arith.constant 0 : index
    %0 = vector.load %arg1[%c0, %c0_0] : memref<16x32xf32, #tpu.memory_space<vmem>>, vector<16x32xf32>
    %c0_1 = arith.constant 0 : index
    %c0_2 = arith.constant 0 : index
    %1 = vector.load %arg2[%c0_1, %c0_2] : memref<32x128xf32, #tpu.memory_space<vmem>>, vector<32x128xf32>
    %cst = arith.constant dense<0.000000e+00> : vector<16x128xf32>
    %2 = tpu.matmul %0, %1, %cst {dimension_numbers = #tpu.dot_dimension_numbers<[1], [0], [0], [1], [0, 0, 1, 1], [], []>} : vector<16x32xf32>, vector<32x128xf32>, vector<16x128xf32> -> vector<16x128xf32>
    %c0_3 = arith.constant 0 : index
    %c0_4 = arith.constant 0 : index
    %3 = vector.load %arg3[%c0_3, %c0_4] : memref<1x128xf32, #tpu.memory_space<vmem>>, vector<1x128xf32>
    %4 = vector.broadcast %3 : vector<1x128xf32> to vector<16x128xf32>
    %5 = arith.addf %2, %4 : vector<16x128xf32>
    %cst_5 = arith.constant 0.000000e+00 : f32
    %6 = vector.broadcast %cst_5 : f32 to vector<16x128xf32>
    %7 = arith.maximumf %5, %6 : vector<16x128xf32>
    %c0_6 = arith.constant 0 : index
    %c0_7 = arith.constant 0 : index
    %8 = vector.load %arg4[%c0_6, %c0_7] : memref<128x32xf32, #tpu.memory_space<vmem>>, vector<128x32xf32>
    %cst_8 = arith.constant dense<0.000000e+00> : vector<16x32xf32>
    %9 = tpu.matmul %7, %8, %cst_8 {dimension_numbers = #tpu.dot_dimension_numbers<[1], [0], [0], [1], [0, 0, 1, 1], [], []>} : vector<16x128xf32>, vector<128x32xf32>, vector<16x32xf32> -> vector<16x32xf32>
    %c0_9 = arith.constant 0 : index
    %c0_10 = arith.constant 0 : index
    %10 = vector.load %arg5[%c0_9, %c0_10] : memref<1x32xf32, #tpu.memory_space<vmem>>, vector<1x32xf32>
    %11 = vector.broadcast %10 : vector<1x32xf32> to vector<16x32xf32>
    %12 = arith.addf %9, %11 : vector<16x32xf32>
    %13 = arith.addf %0, %12 : vector<16x32xf32>
    %cst_11 = arith.constant dense<0.000000e+00> : vector<16xf32>
    %14 = vector.multi_reduction <add>, %13, %cst_11 [1] : vector<16x32xf32> to vector<16xf32>
    %15 = vector.shape_cast %14 : vector<16xf32> to vector<16x1xf32>
    %cst_12 = arith.constant 3.200000e+01 : f32
    %16 = vector.broadcast %cst_12 : f32 to vector<16x1xf32>
    %17 = arith.divf %15, %16 : vector<16x1xf32>
    %18 = vector.broadcast %17 : vector<16x1xf32> to vector<16x32xf32>
    %19 = arith.subf %13, %18 : vector<16x32xf32>
    %20 = arith.mulf %19, %19 : vector<16x32xf32>
    %cst_13 = arith.constant dense<0.000000e+00> : vector<16xf32>
    %21 = vector.multi_reduction <add>, %20, %cst_13 [1] : vector<16x32xf32> to vector<16xf32>
    %22 = vector.shape_cast %21 : vector<16xf32> to vector<16x1xf32>
    %cst_14 = arith.constant 3.200000e+01 : f32
    %23 = vector.broadcast %cst_14 : f32 to vector<16x1xf32>
    %24 = arith.divf %22, %23 : vector<16x1xf32>
    %cst_15 = arith.constant 9.99999974E-6 : f32
    %25 = vector.broadcast %cst_15 : f32 to vector<16x1xf32>
    %26 = arith.addf %24, %25 : vector<16x1xf32>
    %27 = math.rsqrt %26 : vector<16x1xf32>
    %28 = vector.broadcast %27 : vector<16x1xf32> to vector<16x32xf32>
    %29 = arith.mulf %19, %28 : vector<16x32xf32>
    %c0_16 = arith.constant 0 : index
    %c0_17 = arith.constant 0 : index
    %30 = vector.load %arg6[%c0_16, %c0_17] : memref<1x32xf32, #tpu.memory_space<vmem>>, vector<1x32xf32>
    %31 = vector.broadcast %30 : vector<1x32xf32> to vector<16x32xf32>
    %32 = arith.mulf %29, %31 : vector<16x32xf32>
    %c0_18 = arith.constant 0 : index
    %c0_19 = arith.constant 0 : index
    %33 = vector.load %arg7[%c0_18, %c0_19] : memref<1x32xf32, #tpu.memory_space<vmem>>, vector<1x32xf32>
    %34 = vector.broadcast %33 : vector<1x32xf32> to vector<16x32xf32>
    %35 = arith.addf %32, %34 : vector<16x32xf32>
    %c0_20 = arith.constant 0 : index
    %c0_21 = arith.constant 0 : index
    %36 = vector.load %arg8[%c0_20, %c0_21] : memref<16x32xf32, #tpu.memory_space<vmem>>, vector<16x32xf32>
    tpu.vector_store %arg8[%c0_20, %c0_21], %35 {strides = array<i32>} : memref<16x32xf32, #tpu.memory_space<vmem>>, vector<16x32xf32>,
    return
  }
  func.func @transform_0(%arg0: i32) -> (i32, i32) {
    %c0_i32 = arith.constant 0 : i32
    %c0_i32_0 = arith.constant 0 : i32
    return %arg0, %c0_i32 : i32, i32
  }
  func.func @transform_1(%arg0: i32) -> (i32, i32) {
    %c0_i32 = arith.constant 0 : i32
    %c0_i32_0 = arith.constant 0 : i32
    %c0_i32_1 = arith.constant 0 : i32
    return %c0_i32, %c0_i32_0 : i32, i32
  }
  func.func @transform_2(%arg0: i32) -> (i32, i32) {
    %c0_i32 = arith.constant 0 : i32
    %c0_i32_0 = arith.constant 0 : i32
    %c0_i32_1 = arith.constant 0 : i32
    return %c0_i32, %c0_i32_0 : i32, i32
  }
  func.func @transform_3(%arg0: i32) -> (i32, i32) {
    %c0_i32 = arith.constant 0 : i32
    %c0_i32_0 = arith.constant 0 : i32
    %c0_i32_1 = arith.constant 0 : i32
    return %c0_i32, %c0_i32_0 : i32, i32
  }
  func.func @transform_4(%arg0: i32) -> (i32, i32) {
    %c0_i32 = arith.constant 0 : i32
    %c0_i32_0 = arith.constant 0 : i32
    %c0_i32_1 = arith.constant 0 : i32
    return %c0_i32, %c0_i32_0 : i32, i32
  }
  func.func @transform_5(%arg0: i32) -> (i32, i32) {
    %c0_i32 = arith.constant 0 : i32
    %c0_i32_0 = arith.constant 0 : i32
    %c0_i32_1 = arith.constant 0 : i32
    return %c0_i32, %c0_i32_0 : i32, i32
  }
  func.func @transform_6(%arg0: i32) -> (i32, i32) {
    %c0_i32 = arith.constant 0 : i32
    %c0_i32_0 = arith.constant 0 : i32
    %c0_i32_1 = arith.constant 0 : i32
    return %c0_i32, %c0_i32_0 : i32, i32
  }
  func.func @transform_7(%arg0: i32) -> (i32, i32) {
    %c0_i32 = arith.constant 0 : i32
    %c0_i32_0 = arith.constant 0 : i32
    return %arg0, %c0_i32 : i32, i32
  }
}

module attributes {stable_mosaic.version = 11 : i64} {
  func.func @linear_kernel(%arg0: i32, %arg1: i32, %arg2: memref<16x32xf32, #tpu.memory_space<vmem>>, %arg3: memref<32x8xf32, #tpu.memory_space<vmem>>, %arg4: memref<1x8xf32, #tpu.memory_space<vmem>>, %arg5: memref<16x8xf32, #tpu.memory_space<vmem>>) attributes {dimension_semantics = [#tpu.dimension_semantics<arbitrary>, #tpu.dimension_semantics<arbitrary>], iteration_bounds = array<i64: 1, 1>, scalar_prefetch = 0 : i64, scratch_operands = 0 : i64, tpu.core_type = #tpu.core_type<tc>, window_params = [{transform_indices = @transform_0, window_bounds = array<i64: 16, 32>}, {transform_indices = @transform_1, window_bounds = array<i64: 32, 8>}, {transform_indices = @transform_2, window_bounds = array<i64: 1, 8>}, {transform_indices = @transform_3, window_bounds = array<i64: 16, 8>}]} {
    %c0 = arith.constant 0 : index
    %c0_0 = arith.constant 0 : index
    %0 = vector.load %arg2[%c0, %c0_0] : memref<16x32xf32, #tpu.memory_space<vmem>>, vector<16x32xf32>
    %c0_1 = arith.constant 0 : index
    %c0_2 = arith.constant 0 : index
    %1 = vector.load %arg3[%c0_1, %c0_2] : memref<32x8xf32, #tpu.memory_space<vmem>>, vector<32x8xf32>
    %cst = arith.constant dense<0.000000e+00> : vector<16x8xf32>
    %2 = tpu.matmul %0, %1, %cst {dimension_numbers = #tpu.dot_dimension_numbers<[1], [0], [0], [1], [0, 0, 1, 1], [], []>} : vector<16x32xf32>, vector<32x8xf32>, vector<16x8xf32> -> vector<16x8xf32>
    %c0_3 = arith.constant 0 : index
    %c0_4 = arith.constant 0 : index
    %3 = vector.load %arg4[%c0_3, %c0_4] : memref<1x8xf32, #tpu.memory_space<vmem>>, vector<1x8xf32>
    %4 = vector.broadcast %3 : vector<1x8xf32> to vector<16x8xf32>
    %5 = arith.addf %2, %4 : vector<16x8xf32>
    %c0_5 = arith.constant 0 : index
    %c0_6 = arith.constant 0 : index
    %6 = vector.load %arg5[%c0_5, %c0_6] : memref<16x8xf32, #tpu.memory_space<vmem>>, vector<16x8xf32>
    tpu.vector_store %arg5[%c0_5, %c0_6], %5 {strides = array<i32>} : memref<16x8xf32, #tpu.memory_space<vmem>>, vector<16x8xf32>,
    return
  }
  func.func @transform_0(%arg0: i32, %arg1: i32) -> (i32, i32) {
    %c0_i32 = arith.constant 0 : i32
    %c0_i32_0 = arith.constant 0 : i32
    return %arg0, %c0_i32 : i32, i32
  }
  func.func @transform_1(%arg0: i32, %arg1: i32) -> (i32, i32) {
    %c0_i32 = arith.constant 0 : i32
    %c0_i32_0 = arith.constant 0 : i32
    return %c0_i32, %arg1 : i32, i32
  }
  func.func @transform_2(%arg0: i32, %arg1: i32) -> (i32, i32) {
    %c0_i32 = arith.constant 0 : i32
    %c0_i32_0 = arith.constant 0 : i32
    return %c0_i32, %arg1 : i32, i32
  }
  func.func @transform_3(%arg0: i32, %arg1: i32) -> (i32, i32) {
    %c0_i32 = arith.constant 0 : i32
    return %arg0, %arg1 : i32, i32
  }
}

</mosaic_0001>

<llo_original>
// kernel: _lambda_.18
$region0: #{_lambda_.18}
  #allocation0 [shape = 'u32[]', space=smem, size = 0x4, offset = 0x4, fixed_abs, tag = 'smem constant byte address 0x4 - core index']
  #allocation1 [shape = 'u32[144,128]{1,0:T(1,128)}', space=vmem, size = 0x12000, scoped, tag = 'internal scratch']
  %s0 = inlined_call_operand.vmem [shape: f32[8,64], index: 0, kind: input, shape index: {}]
  %s1 = inlined_call_operand.vmem [shape: f32[8,64], index: 1, kind: input, shape index: {}]
  %s2 = inlined_call_operand.vmem [shape: f32[8,64], index: 2, kind: output, shape index: {}]
  %s3 = sld [smem:[#allocation0]]
  $region18: #{_lambda_.18} parent=0
    _
  %s5 = ssub.s32 1, %s3
  %s6 = scalar_select 0, %s5, %s3
  // Predicated region
  $region2: #{_lambda_.18} parent=0 // pred_check
    _
  $region3: #{_lambda_.18} parent=0 // pred_check_branch
    %8 = sbr.rel (0) target = $region5
  $region4: #{_lambda_.18} parent=0 // pred_region
    _
  $region5: #{_lambda_.18} parent=0 // pred_fallthru
    _
  // Predicated region
  $region6: #{_lambda_.18} parent=0 // pred_check
    _
  $region7: #{_lambda_.18} parent=0 // pred_check_branch
    %10 = sbr.rel (0) target = $region9
  $region8: #{_lambda_.18} parent=0 // pred_region
    _
  $region9: #{_lambda_.18} parent=0 // pred_fallthru
    _
  %v11 = vld [vmem:[%s0] sm:$0xff]
  %v12 = vld [vmem:[%s1] sm:$0xff]
  %v13 = vadd.f32 %v11, %v12
  %vm14 = vcmask 523264
  %15 = vst.msk [vmem:[%s2] sm:$0xff] %vm14, %v13
  // Predicated region
  $region10: #{_lambda_.18} parent=0 // pred_check
    _
  $region11: #{_lambda_.18} parent=0 // pred_check_branch
    %17 = sbr.rel (0) target = $region13
  $region12: #{_lambda_.18} parent=0 // pred_region
    _
  $region13: #{_lambda_.18} parent=0 // pred_fallthru
    _
  // Predicated region
  $region14: #{_lambda_.18} parent=0 // pred_check
    _
  $region15: #{_lambda_.18} parent=0 // pred_check_branch
    %19 = sbr.rel (0) target = $region17
  $region16: #{_lambda_.18} parent=0 // pred_region
    _
  $region17: #{_lambda_.18} parent=0 // pred_fallthru
    _

// kernel: _lambda_.19
$region0: #{_lambda_.19}
  #allocation0 [shape = 'u32[]', space=smem, size = 0x4, offset = 0x4, fixed_abs, tag = 'smem constant byte address 0x4 - core index']
  #allocation1 [shape = 'u32[144,128]{1,0:T(1,128)}', space=vmem, size = 0x12000, scoped, tag = 'internal scratch']
  %s0 = inlined_call_operand.vmem [shape: f32[16,32], index: 0, kind: input, shape index: {}]
  %s1 = inlined_call_operand.vmem [shape: f32[32,96], index: 1, kind: input, shape index: {}]
  %s2 = inlined_call_operand.vmem [shape: f32[1,96], index: 2, kind: input, shape index: {}]
  %s3 = inlined_call_operand.vmem [shape: f32[16,96], index: 3, kind: output, shape index: {}]
  %s4 = sld [smem:[#allocation0]]
  $region22: #{_lambda_.19} parent=0
    _
  %s6 = ssub.s32 1, %s4
  %s7 = scalar_select 0, %s6, %s4
  // Predicated region
  $region2: #{_lambda_.19} parent=0 // pred_check
    _
  $region3: #{_lambda_.19} parent=0 // pred_check_branch
    %9 = sbr.rel (0) target = $region5
  $region4: #{_lambda_.19} parent=0 // pred_region
    _
  $region5: #{_lambda_.19} parent=0 // pred_fallthru
    _
  // Predicated region
  $region6: #{_lambda_.19} parent=0 // pred_check
    _
  $region7: #{_lambda_.19} parent=0 // pred_check_branch
    %11 = sbr.rel (0) target = $region9
  $region8: #{_lambda_.19} parent=0 // pred_region
    _
  $region9: #{_lambda_.19} parent=0 // pred_fallthru
    _
  // Predicated region
  $region10: #{_lambda_.19} parent=0 // pred_check
    _
  $region11: #{_lambda_.19} parent=0 // pred_check_branch
    %13 = sbr.rel (0) target = $region13
  $region12: #{_lambda_.19} parent=0 // pred_region
    _
  $region13: #{_lambda_.19} parent=0 // pred_fallthru
    _
  %v14 = vld [vmem:[%s0] sm:$0xff]
  %v15 = vld [vmem:[%s0 + $0x8] sm:$0xff]
  %v16 = vld [vmem:[%s1] sm:$0xff]
  %v17 = vld [vmem:[%s1 + $0x8] sm:$0xff]
  %v18 = vld [vmem:[%s1 + $0x10] sm:$0xff]
  %v19 = vld [vmem:[%s1 + $0x18] sm:$0xff]
  %v20 = vld [vmem:[%s2] sm:$0x1]
  %v22 = vlaneseq
  %v23 = vshrl.u32 %v22, 7
  %v24 = vsub.s32 0, %v23
  %v25 = vrot.slane %v20, %v24
  %vm27 = vcmask 261120
  %v29 = vsel %vm27, %v14, 0
  %v32 = vsel %vm27, %v15, 0
  %34 = vmatprep.subr.mxu0 0.0
  %35 = vmatpush1.msra.mxu0 %v16
  %36 = vmatprep.subr.mxu0 0.0
  %37 = vmatpush1.msra.mxu0 %v17
  %38 = vmatprep.subr.mxu0 0.0
  %39 = vmatpush1.msra.mxu0 %v18
  %40 = vmatprep.subr.mxu0 0.0
  %41 = vmatpush1.msra.mxu0 %v19
  %42 = vmatprep.subr.mxu0 0.0
  %43 = vmatpush1.msra.mxu0 0.0
  %44 = vmatprep.subr.mxu0 0.0
  %45 = vmatpush1.msra.mxu0 0.0
  %46 = vmatprep.subr.mxu0 0.0
  %47 = vmatpush1.msra.mxu0 0.0
  %48 = vmatprep.subr.mxu0 0.0
  %49 = vmatpush1.msra.mxu0 0.0
  %50 = vmatprep.subr.mxu0 0.0
  %51 = vmatpush1.msra.mxu0 0.0
  %52 = vmatprep.subr.mxu0 0.0
  %53 = vmatpush1.msra.mxu0 0.0
  %54 = vmatprep.subr.mxu0 0.0
  %55 = vmatpush1.msra.mxu0 0.0
  %56 = vmatprep.subr.mxu0 0.0
  %57 = vmatpush1.msra.mxu0 0.0
  %58 = vmatprep.subr.mxu0 0.0
  %59 = vmatpush1.msra.mxu0 0.0
  %60 = vmatprep.subr.mxu0 0.0
  %61 = vmatpush1.msra.mxu0 0.0
  %62 = vmatprep.subr.mxu0 0.0
  %63 = vmatpush1.msra.mxu0 0.0
  %64 = vmatprep.subr.mxu0 0.0
  %65 = vmatpush1.msra.mxu0 0.0
  %66 = vmatprep.subr.mxu0 0.0
  %67 = vmatpush1.msra.mxu0 0.0
  %68 = vmatprep.subr.mxu0 0.0
  %69 = vmatpush1.msra.mxu0 0.0
  %70 = vmatprep.subr.mxu0 0.0
  %71 = vmatpush1.msra.mxu0 0.0
  %72 = vmatprep.subr.mxu0 0.0
  %73 = vmatpush1.msra.mxu0 0.0
  %74 = vmatprep.subr.mxu0 0.0
  %75 = vmatpush1.msra.mxu0 0.0
  %76 = vmatprep.subr.mxu0 0.0
  %77 = vmatpush1.msra.mxu0 0.0
  %78 = vmatprep.subr.mxu0 0.0
  %79 = vmatpush1.msra.mxu0 0.0
  %80 = vmatprep.subr.mxu0 0.0
  %81 = vmatpush1.msra.mxu0 0.0
  %82 = vmatprep.subr.mxu0 0.0
  %83 = vmatpush1.msra.mxu0 0.0
  %84 = vmatprep.subr.mxu0 0.0
  %85 = vmatpush1.msra.mxu0 0.0
  %86 = vmatprep.subr.mxu0 0.0
  %87 = vmatpush1.msra.mxu0 0.0
  %88 = vmatprep.subr.mxu0 0.0
  %89 = vmatpush1.msra.mxu0 0.0
  %90 = vmatprep.subr.mxu0 0.0
  %91 = vmatpush1.msra.mxu0 0.0
  %92 = vmatprep.subr.mxu0 0.0
  %93 = vmatpush1.msra.mxu0 0.0
  %94 = vmatprep.subr.mxu0 0.0
  %95 = vmatpush1.msra.mxu0 0.0
  %96 = vmatprep.subr.mxu0 0.0
  %97 = vmatpush1.msra.mxu0 0.0
  %98 = vmatprep.mubr.f32.mxu0 0.0
  %99 = vmatmul.mubr.f32.gmra.mrb[0].mxu0 %v29
  %v100 = vpop.f32.mrb[0].mxu0
  %v101 = vadd.f32 %v25, %v100
  %v102 = vpop.f32.mrb[0].mxu0
  %103 = vmatprep.mubr.f32.mxu0 0.0
  %104 = vmatmul.mubr.f32.gmra.mrb[0].mxu0 %v32
  %v105 = vpop.f32.mrb[0].mxu0
  %v106 = vadd.f32 %v25, %v105
  %v107 = vpop.f32.mrb[0].mxu0
  %108 = vdwg.mxu0
  %vm109 = vcmask 785408
  %110 = vst.msk [vmem:[%s3] sm:$0xff] %vm109, %v101
  %111 = vst.msk [vmem:[%s3 + $0x8] sm:$0xff] %vm109, %v106
  // Predicated region
  $region14: #{_lambda_.19} parent=0 // pred_check
    _
  $region15: #{_lambda_.19} parent=0 // pred_check_branch
    %113 = sbr.rel (0) target = $region17
  $region16: #{_lambda_.19} parent=0 // pred_region
    _
  $region17: #{_lambda_.19} parent=0 // pred_fallthru
    _
  // Predicated region
  $region18: #{_lambda_.19} parent=0 // pred_check
    _
  $region19: #{_lambda_.19} parent=0 // pred_check_branch
    %115 = sbr.rel (0) target = $region21
  $region20: #{_lambda_.19} parent=0 // pred_region
    _
  $region21: #{_lambda_.19} parent=0 // pred_fallthru
    _

// kernel: _lambda_.21
$region0: #{_lambda_.21}
  #allocation0 [shape = 'u32[]', space=smem, size = 0x4, offset = 0x4, fixed_abs, tag = 'smem constant byte address 0x4 - core index']
  #allocation1 [shape = 'u32[144,128]{1,0:T(1,128)}', space=vmem, size = 0x12000, scoped, tag = 'internal scratch']
  %s0 = inlined_call_operand.vmem [shape: f32[16,32], index: 0, kind: input, shape index: {}]
  %s1 = inlined_call_operand.vmem [shape: f32[32,32], index: 1, kind: input, shape index: {}]
  %s2 = inlined_call_operand.vmem [shape: f32[1,32], index: 2, kind: input, shape index: {}, may-alias: {2,5}]
  %s3 = inlined_call_operand.vmem [shape: f32[16,32], index: 3, kind: input, shape index: {}]
  %s4 = inlined_call_operand.vmem [shape: f32[1,32], index: 4, kind: input, shape index: {}]
  %s5 = inlined_call_operand.vmem [shape: f32[1,32], index: 5, kind: input, shape index: {}, may-alias: {2,5}]
  %s6 = inlined_call_operand.vmem [shape: f32[16,32], index: 6, kind: output, shape index: {}]
  %s7 = sld [smem:[#allocation0]]
  $region34: #{_lambda_.21} parent=0
    _
  %s9 = ssub.s32 1, %s7
  %s10 = scalar_select 0, %s9, %s7
  // Predicated region
  $region2: #{_lambda_.21} parent=0 // pred_check
    _
  $region3: #{_lambda_.21} parent=0 // pred_check_branch
    %12 = sbr.rel (0) target = $region5
  $region4: #{_lambda_.21} parent=0 // pred_region
    _
  $region5: #{_lambda_.21} parent=0 // pred_fallthru
    _
  // Predicated region
  $region6: #{_lambda_.21} parent=0 // pred_check
    _
  $region7: #{_lambda_.21} parent=0 // pred_check_branch
    %14 = sbr.rel (0) target = $region9
  $region8: #{_lambda_.21} parent=0 // pred_region
    _
  $region9: #{_lambda_.21} parent=0 // pred_fallthru
    _
  // Predicated region
  $region10: #{_lambda_.21} parent=0 // pred_check
    _
  $region11: #{_lambda_.21} parent=0 // pred_check_branch
    %16 = sbr.rel (0) target = $region13
  $region12: #{_lambda_.21} parent=0 // pred_region
    _
  $region13: #{_lambda_.21} parent=0 // pred_fallthru
    _
  // Predicated region
  $region14: #{_lambda_.21} parent=0 // pred_check
    _
  $region15: #{_lambda_.21} parent=0 // pred_check_branch
    %18 = sbr.rel (0) target = $region17
  $region16: #{_lambda_.21} parent=0 // pred_region
    _
  $region17: #{_lambda_.21} parent=0 // pred_fallthru
    _
  // Predicated region
  $region18: #{_lambda_.21} parent=0 // pred_check
    _
  $region19: #{_lambda_.21} parent=0 // pred_check_branch
    %20 = sbr.rel (0) target = $region21
  $region20: #{_lambda_.21} parent=0 // pred_region
    _
  $region21: #{_lambda_.21} parent=0 // pred_fallthru
    _
  // Predicated region
  $region22: #{_lambda_.21} parent=0 // pred_check
    _
  $region23: #{_lambda_.21} parent=0 // pred_check_branch
    %22 = sbr.rel (0) target = $region25
  $region24: #{_lambda_.21} parent=0 // pred_region
    _
  $region25: #{_lambda_.21} parent=0 // pred_fallthru
    _
  %v23 = vld [vmem:[%s0] sm:$0xff]
  %v24 = vld [vmem:[%s0 + $0x8] sm:$0xff]
  %v25 = vld [vmem:[%s1] sm:$0xff]
  %v26 = vld [vmem:[%s1 + $0x8] sm:$0xff]
  %v27 = vld [vmem:[%s1 + $0x10] sm:$0xff]
  %v28 = vld [vmem:[%s1 + $0x18] sm:$0xff]
  %vm29 = vcmask 261120
  %v31 = vsel %vm29, %v23, 0
  %v34 = vsel %vm29, %v24, 0
  %36 = vmatprep.subr.mxu0 0.0
  %37 = vmatpush1.msra.mxu0 %v25
  %38 = vmatprep.subr.mxu0 0.0
  %39 = vmatpush1.msra.mxu0 %v26
  %40 = vmatprep.subr.mxu0 0.0
  %41 = vmatpush1.msra.mxu0 %v27
  %42 = vmatprep.subr.mxu0 0.0
  %43 = vmatpush1.msra.mxu0 %v28
  %44 = vmatprep.subr.mxu0 0.0
  %45 = vmatpush1.msra.mxu0 0.0
  %46 = vmatprep.subr.mxu0 0.0
  %47 = vmatpush1.msra.mxu0 0.0
  %48 = vmatprep.subr.mxu0 0.0
  %49 = vmatpush1.msra.mxu0 0.0
  %50 = vmatprep.subr.mxu0 0.0
  %51 = vmatpush1.msra.mxu0 0.0
  %52 = vmatprep.subr.mxu0 0.0
  %53 = vmatpush1.msra.mxu0 0.0
  %54 = vmatprep.subr.mxu0 0.0
  %55 = vmatpush1.msra.mxu0 0.0
  %56 = vmatprep.subr.mxu0 0.0
  %57 = vmatpush1.msra.mxu0 0.0
  %58 = vmatprep.subr.mxu0 0.0
  %59 = vmatpush1.msra.mxu0 0.0
  %60 = vmatprep.subr.mxu0 0.0
  %61 = vmatpush1.msra.mxu0 0.0
  %62 = vmatprep.subr.mxu0 0.0
  %63 = vmatpush1.msra.mxu0 0.0
  %64 = vmatprep.subr.mxu0 0.0
  %65 = vmatpush1.msra.mxu0 0.0
  %66 = vmatprep.subr.mxu0 0.0
  %67 = vmatpush1.msra.mxu0 0.0
  %68 = vmatprep.subr.mxu0 0.0
  %69 = vmatpush1.msra.mxu0 0.0
  %70 = vmatprep.subr.mxu0 0.0
  %71 = vmatpush1.msra.mxu0 0.0
  %72 = vmatprep.subr.mxu0 0.0
  %73 = vmatpush1.msra.mxu0 0.0
  %74 = vmatprep.subr.mxu0 0.0
  %75 = vmatpush1.msra.mxu0 0.0
  %76 = vmatprep.subr.mxu0 0.0
  %77 = vmatpush1.msra.mxu0 0.0
  %78 = vmatprep.subr.mxu0 0.0
  %79 = vmatpush1.msra.mxu0 0.0
  %80 = vmatprep.subr.mxu0 0.0
  %81 = vmatpush1.msra.mxu0 0.0
  %82 = vmatprep.subr.mxu0 0.0
  %83 = vmatpush1.msra.mxu0 0.0
  %84 = vmatprep.subr.mxu0 0.0
  %85 = vmatpush1.msra.mxu0 0.0
  %86 = vmatprep.subr.mxu0 0.0
  %87 = vmatpush1.msra.mxu0 0.0
  %88 = vmatprep.subr.mxu0 0.0
  %89 = vmatpush1.msra.mxu0 0.0
  %90 = vmatprep.subr.mxu0 0.0
  %91 = vmatpush1.msra.mxu0 0.0
  %92 = vmatprep.subr.mxu0 0.0
  %93 = vmatpush1.msra.mxu0 0.0
  %94 = vmatprep.subr.mxu0 0.0
  %95 = vmatpush1.msra.mxu0 0.0
  %96 = vmatprep.subr.mxu0 0.0
  %97 = vmatpush1.msra.mxu0 0.0
  %98 = vmatprep.subr.mxu0 0.0
  %99 = vmatpush1.msra.mxu0 0.0
  %100 = vmatprep.mubr.f32.mxu0 0.0
  %101 = vmatmul.mubr.f32.gmra.mrb[0].mxu0 %v31
  %v102 = vpop.f32.mrb[0].mxu0
  %v103 = vadd.f32 0.0, %v102
  %v104 = vpop.f32.mrb[0].mxu0
  %105 = vmatprep.mubr.f32.mxu0 0.0
  %106 = vmatmul.mubr.f32.gmra.mrb[0].mxu0 %v34
  %v107 = vpop.f32.mrb[0].mxu0
  %v108 = vadd.f32 0.0, %v107
  %v109 = vpop.f32.mrb[0].mxu0
  %110 = vdwg.mxu0
  %v111 = vld [vmem:[%s3] sm:$0xff]
  %v112 = vld [vmem:[%s3 + $0x8] sm:$0xff]
  %v113 = vadd.f32 %v111, %v103
  %v114 = vadd.f32 %v112, %v108
  %v115 = vld [vmem:[%s2] sm:$0x1]
  %v117 = vlaneseq
  %v118 = vshrl.u32 %v117, 7
  %v119 = vsub.s32 0, %v118
  %v120 = vrot.slane %v115, %v119
  %v122 = vadd.f32 %v113, %v120
  %v123 = vadd.f32 %v114, %v120
  %v124 = vsel %vm29, %v122, 0.0
  %125 = vadd.xlane.f32.xlu0 %v124
  %v126 = vpop.xlane.xlu0 %125
  %v127 = vsel %vm29, %v123, 0.0
  %128 = vadd.xlane.f32.xlu0 %v127
  %v129 = vpop.xlane.xlu0 %128
  %v130 = vrcp.pop 32.0
  %v131 = vmul.f32 %v126, %v130
  %v132 = vmul.f32 %v129, %v130
  %v133 = vsub.f32 %v122, %v131
  %v134 = vsub.f32 %v123, %v132
  %v135 = vmul.f32 %v133, %v133
  %v136 = vmul.f32 %v134, %v134
  %v137 = vsel %vm29, %v135, 0.0
  %138 = vadd.xlane.f32.xlu0 %v137
  %v139 = vpop.xlane.xlu0 %138
  %v140 = vsel %vm29, %v136, 0.0
  %141 = vadd.xlane.f32.xlu0 %v140
  %v142 = vpop.xlane.xlu0 %141
  %v143 = vmul.f32 %v139, %v130
  %v144 = vmul.f32 %v142, %v130
  %v145 = vadd.f32 %v143, 1e-05
  %v146 = vadd.f32 %v144, 1e-05
  %v147 = vrsqrt.pop %v145
  %v148 = vrsqrt.pop %v146
  %v149 = vmul.f32 %v133, %v147
  %v150 = vmul.f32 %v134, %v148
  %v151 = vld [vmem:[%s4] sm:$0x1]
  %v153 = vlaneseq
  %v154 = vshrl.u32 %v153, 7
  %v155 = vsub.s32 0, %v154
  %v156 = vrot.slane %v151, %v155
  %v158 = vmul.f32 %v149, %v156
  %v159 = vmul.f32 %v150, %v156
  %v160 = vld [vmem:[%s5] sm:$0x1]
  %v162 = vlaneseq
  %v163 = vshrl.u32 %v162, 7
  %v164 = vsub.s32 0, %v163
  %v165 = vrot.slane %v160, %v164
  %v167 = vadd.f32 %v158, %v165
  %v168 = vadd.f32 %v159, %v165
  %169 = vst.msk [vmem:[%s6] sm:$0xff] %vm29, %v167
  %170 = vst.msk [vmem:[%s6 + $0x8] sm:$0xff] %vm29, %v168
  // Predicated region
  $region26: #{_lambda_.21} parent=0 // pred_check
    _
  $region27: #{_lambda_.21} parent=0 // pred_check_branch
    %172 = sbr.rel (0) target = $region29
  $region28: #{_lambda_.21} parent=0 // pred_region
    _
  $region29: #{_lambda_.21} parent=0 // pred_fallthru
    _
  // Predicated region
  $region30: #{_lambda_.21} parent=0 // pred_check
    _
  $region31: #{_lambda_.21} parent=0 // pred_check_branch
    %174 = sbr.rel (0) target = $region33
  $region32: #{_lambda_.21} parent=0 // pred_region
    _
  $region33: #{_lambda_.21} parent=0 // pred_fallthru
    _

// kernel: _lambda_.23
$region0: #{_lambda_.23}
  #allocation0 [shape = 'u32[]', space=smem, size = 0x4, offset = 0x4, fixed_abs, tag = 'smem constant byte address 0x4 - core index']
  #allocation1 [shape = 'u32[144,128]{1,0:T(1,128)}', space=vmem, size = 0x12000, scoped, tag = 'internal scratch']
  %s0 = inlined_call_operand.vmem [shape: f32[16,32], index: 0, kind: input, shape index: {}]
  %s1 = inlined_call_operand.vmem [shape: f32[32,64], index: 1, kind: input, shape index: {}]
  %s2 = inlined_call_operand.vmem [shape: f32[1,64], index: 2, kind: input, shape index: {}]
  %s3 = inlined_call_operand.vmem [shape: f32[16,64], index: 3, kind: output, shape index: {}]
  %s4 = sld [smem:[#allocation0]]
  $region22: #{_lambda_.23} parent=0
    _
  %s6 = ssub.s32 1, %s4
  %s7 = scalar_select 0, %s6, %s4
  // Predicated region
  $region2: #{_lambda_.23} parent=0 // pred_check
    _
  $region3: #{_lambda_.23} parent=0 // pred_check_branch
    %9 = sbr.rel (0) target = $region5
  $region4: #{_lambda_.23} parent=0 // pred_region
    _
  $region5: #{_lambda_.23} parent=0 // pred_fallthru
    _
  // Predicated region
  $region6: #{_lambda_.23} parent=0 // pred_check
    _
  $region7: #{_lambda_.23} parent=0 // pred_check_branch
    %11 = sbr.rel (0) target = $region9
  $region8: #{_lambda_.23} parent=0 // pred_region
    _
  $region9: #{_lambda_.23} parent=0 // pred_fallthru
    _
  // Predicated region
  $region10: #{_lambda_.23} parent=0 // pred_check
    _
  $region11: #{_lambda_.23} parent=0 // pred_check_branch
    %13 = sbr.rel (0) target = $region13
  $region12: #{_lambda_.23} parent=0 // pred_region
    _
  $region13: #{_lambda_.23} parent=0 // pred_fallthru
    _
  %v14 = vld [vmem:[%s0] sm:$0xff]
  %v15 = vld [vmem:[%s0 + $0x8] sm:$0xff]
  %v16 = vld [vmem:[%s1] sm:$0xff]
  %v17 = vld [vmem:[%s1 + $0x8] sm:$0xff]
  %v18 = vld [vmem:[%s1 + $0x10] sm:$0xff]
  %v19 = vld [vmem:[%s1 + $0x18] sm:$0xff]
  %v20 = vld [vmem:[%s2] sm:$0x1]
  %v22 = vlaneseq
  %v23 = vshrl.u32 %v22, 7
  %v24 = vsub.s32 0, %v23
  %v25 = vrot.slane %v20, %v24
  %vm27 = vcmask 261120
  %v29 = vsel %vm27, %v14, 0
  %v32 = vsel %vm27, %v15, 0
  %34 = vmatprep.subr.mxu0 0.0
  %35 = vmatpush1.msra.mxu0 %v16
  %36 = vmatprep.subr.mxu0 0.0
  %37 = vmatpush1.msra.mxu0 %v17
  %38 = vmatprep.subr.mxu0 0.0
  %39 = vmatpush1.msra.mxu0 %v18
  %40 = vmatprep.subr.mxu0 0.0
  %41 = vmatpush1.msra.mxu0 %v19
  %42 = vmatprep.subr.mxu0 0.0
  %43 = vmatpush1.msra.mxu0 0.0
  %44 = vmatprep.subr.mxu0 0.0
  %45 = vmatpush1.msra.mxu0 0.0
  %46 = vmatprep.subr.mxu0 0.0
  %47 = vmatpush1.msra.mxu0 0.0
  %48 = vmatprep.subr.mxu0 0.0
  %49 = vmatpush1.msra.mxu0 0.0
  %50 = vmatprep.subr.mxu0 0.0
  %51 = vmatpush1.msra.mxu0 0.0
  %52 = vmatprep.subr.mxu0 0.0
  %53 = vmatpush1.msra.mxu0 0.0
  %54 = vmatprep.subr.mxu0 0.0
  %55 = vmatpush1.msra.mxu0 0.0
  %56 = vmatprep.subr.mxu0 0.0
  %57 = vmatpush1.msra.mxu0 0.0
  %58 = vmatprep.subr.mxu0 0.0
  %59 = vmatpush1.msra.mxu0 0.0
  %60 = vmatprep.subr.mxu0 0.0
  %61 = vmatpush1.msra.mxu0 0.0
  %62 = vmatprep.subr.mxu0 0.0
  %63 = vmatpush1.msra.mxu0 0.0
  %64 = vmatprep.subr.mxu0 0.0
  %65 = vmatpush1.msra.mxu0 0.0
  %66 = vmatprep.subr.mxu0 0.0
  %67 = vmatpush1.msra.mxu0 0.0
  %68 = vmatprep.subr.mxu0 0.0
  %69 = vmatpush1.msra.mxu0 0.0
  %70 = vmatprep.subr.mxu0 0.0
  %71 = vmatpush1.msra.mxu0 0.0
  %72 = vmatprep.subr.mxu0 0.0
  %73 = vmatpush1.msra.mxu0 0.0
  %74 = vmatprep.subr.mxu0 0.0
  %75 = vmatpush1.msra.mxu0 0.0
  %76 = vmatprep.subr.mxu0 0.0
  %77 = vmatpush1.msra.mxu0 0.0
  %78 = vmatprep.subr.mxu0 0.0
  %79 = vmatpush1.msra.mxu0 0.0
  %80 = vmatprep.subr.mxu0 0.0
  %81 = vmatpush1.msra.mxu0 0.0
  %82 = vmatprep.subr.mxu0 0.0
  %83 = vmatpush1.msra.mxu0 0.0
  %84 = vmatprep.subr.mxu0 0.0
  %85 = vmatpush1.msra.mxu0 0.0
  %86 = vmatprep.subr.mxu0 0.0
  %87 = vmatpush1.msra.mxu0 0.0
  %88 = vmatprep.subr.mxu0 0.0
  %89 = vmatpush1.msra.mxu0 0.0
  %90 = vmatprep.subr.mxu0 0.0
  %91 = vmatpush1.msra.mxu0 0.0
  %92 = vmatprep.subr.mxu0 0.0
  %93 = vmatpush1.msra.mxu0 0.0
  %94 = vmatprep.subr.mxu0 0.0
  %95 = vmatpush1.msra.mxu0 0.0
  %96 = vmatprep.subr.mxu0 0.0
  %97 = vmatpush1.msra.mxu0 0.0
  %98 = vmatprep.mubr.f32.mxu0 0.0
  %99 = vmatmul.mubr.f32.gmra.mrb[0].mxu0 %v29
  %v100 = vpop.f32.mrb[0].mxu0
  %v101 = vadd.f32 %v25, %v100
  %v102 = vpop.f32.mrb[0].mxu0
  %103 = vmatprep.mubr.f32.mxu0 0.0
  %104 = vmatmul.mubr.f32.gmra.mrb[0].mxu0 %v32
  %v105 = vpop.f32.mrb[0].mxu0
  %v106 = vadd.f32 %v25, %v105
  %v107 = vpop.f32.mrb[0].mxu0
  %108 = vdwg.mxu0
  %vm109 = vcmask 523264
  %110 = vst.msk [vmem:[%s3] sm:$0xff] %vm109, %v101
  %111 = vst.msk [vmem:[%s3 + $0x8] sm:$0xff] %vm109, %v106
  // Predicated region
  $region14: #{_lambda_.23} parent=0 // pred_check
    _
  $region15: #{_lambda_.23} parent=0 // pred_check_branch
    %113 = sbr.rel (0) target = $region17
  $region16: #{_lambda_.23} parent=0 // pred_region
    _
  $region17: #{_lambda_.23} parent=0 // pred_fallthru
    _
  // Predicated region
  $region18: #{_lambda_.23} parent=0 // pred_check
    _
  $region19: #{_lambda_.23} parent=0 // pred_check_branch
    %115 = sbr.rel (0) target = $region21
  $region20: #{_lambda_.23} parent=0 // pred_region
    _
  $region21: #{_lambda_.23} parent=0 // pred_fallthru
    _

// kernel: _lambda_.22
$region0: #{_lambda_.22}
  #allocation0 [shape = 'u32[]', space=smem, size = 0x4, offset = 0x4, fixed_abs, tag = 'smem constant byte address 0x4 - core index']
  #allocation1 [shape = 'u32[144,128]{1,0:T(1,128)}', space=vmem, size = 0x12000, scoped, tag = 'internal scratch']
  %s0 = inlined_call_operand.vmem [shape: f32[16,32], index: 0, kind: input, shape index: {}]
  %s1 = inlined_call_operand.vmem [shape: f32[32,32], index: 1, kind: input, shape index: {}]
  %s2 = inlined_call_operand.vmem [shape: f32[1,32], index: 2, kind: input, shape index: {}]
  %s3 = inlined_call_operand.vmem [shape: f32[16,32], index: 3, kind: output, shape index: {}]
  %s4 = sld [smem:[#allocation0]]
  $region22: #{_lambda_.22} parent=0
    _
  %s6 = ssub.s32 1, %s4
  %s7 = scalar_select 0, %s6, %s4
  // Predicated region
  $region2: #{_lambda_.22} parent=0 // pred_check
    _
  $region3: #{_lambda_.22} parent=0 // pred_check_branch
    %9 = sbr.rel (0) target = $region5
  $region4: #{_lambda_.22} parent=0 // pred_region
    _
  $region5: #{_lambda_.22} parent=0 // pred_fallthru
    _
  // Predicated region
  $region6: #{_lambda_.22} parent=0 // pred_check
    _
  $region7: #{_lambda_.22} parent=0 // pred_check_branch
    %11 = sbr.rel (0) target = $region9
  $region8: #{_lambda_.22} parent=0 // pred_region
    _
  $region9: #{_lambda_.22} parent=0 // pred_fallthru
    _
  // Predicated region
  $region10: #{_lambda_.22} parent=0 // pred_check
    _
  $region11: #{_lambda_.22} parent=0 // pred_check_branch
    %13 = sbr.rel (0) target = $region13
  $region12: #{_lambda_.22} parent=0 // pred_region
    _
  $region13: #{_lambda_.22} parent=0 // pred_fallthru
    _
  %v14 = vld [vmem:[%s0] sm:$0xff]
  %v15 = vld [vmem:[%s0 + $0x8] sm:$0xff]
  %v16 = vld [vmem:[%s1] sm:$0xff]
  %v17 = vld [vmem:[%s1 + $0x8] sm:$0xff]
  %v18 = vld [vmem:[%s1 + $0x10] sm:$0xff]
  %v19 = vld [vmem:[%s1 + $0x18] sm:$0xff]
  %v20 = vld [vmem:[%s2] sm:$0x1]
  %v22 = vlaneseq
  %v23 = vshrl.u32 %v22, 7
  %v24 = vsub.s32 0, %v23
  %v25 = vrot.slane %v20, %v24
  %vm27 = vcmask 261120
  %v29 = vsel %vm27, %v14, 0
  %v32 = vsel %vm27, %v15, 0
  %34 = vmatprep.subr.mxu0 0.0
  %35 = vmatpush1.msra.mxu0 %v16
  %36 = vmatprep.subr.mxu0 0.0
  %37 = vmatpush1.msra.mxu0 %v17
  %38 = vmatprep.subr.mxu0 0.0
  %39 = vmatpush1.msra.mxu0 %v18
  %40 = vmatprep.subr.mxu0 0.0
  %41 = vmatpush1.msra.mxu0 %v19
  %42 = vmatprep.subr.mxu0 0.0
  %43 = vmatpush1.msra.mxu0 0.0
  %44 = vmatprep.subr.mxu0 0.0
  %45 = vmatpush1.msra.mxu0 0.0
  %46 = vmatprep.subr.mxu0 0.0
  %47 = vmatpush1.msra.mxu0 0.0
  %48 = vmatprep.subr.mxu0 0.0
  %49 = vmatpush1.msra.mxu0 0.0
  %50 = vmatprep.subr.mxu0 0.0
  %51 = vmatpush1.msra.mxu0 0.0
  %52 = vmatprep.subr.mxu0 0.0
  %53 = vmatpush1.msra.mxu0 0.0
  %54 = vmatprep.subr.mxu0 0.0
  %55 = vmatpush1.msra.mxu0 0.0
  %56 = vmatprep.subr.mxu0 0.0
  %57 = vmatpush1.msra.mxu0 0.0
  %58 = vmatprep.subr.mxu0 0.0
  %59 = vmatpush1.msra.mxu0 0.0
  %60 = vmatprep.subr.mxu0 0.0
  %61 = vmatpush1.msra.mxu0 0.0
  %62 = vmatprep.subr.mxu0 0.0
  %63 = vmatpush1.msra.mxu0 0.0
  %64 = vmatprep.subr.mxu0 0.0
  %65 = vmatpush1.msra.mxu0 0.0
  %66 = vmatprep.subr.mxu0 0.0
  %67 = vmatpush1.msra.mxu0 0.0
  %68 = vmatprep.subr.mxu0 0.0
  %69 = vmatpush1.msra.mxu0 0.0
  %70 = vmatprep.subr.mxu0 0.0
  %71 = vmatpush1.msra.mxu0 0.0
  %72 = vmatprep.subr.mxu0 0.0
  %73 = vmatpush1.msra.mxu0 0.0
  %74 = vmatprep.subr.mxu0 0.0
  %75 = vmatpush1.msra.mxu0 0.0
  %76 = vmatprep.subr.mxu0 0.0
  %77 = vmatpush1.msra.mxu0 0.0
  %78 = vmatprep.subr.mxu0 0.0
  %79 = vmatpush1.msra.mxu0 0.0
  %80 = vmatprep.subr.mxu0 0.0
  %81 = vmatpush1.msra.mxu0 0.0
  %82 = vmatprep.subr.mxu0 0.0
  %83 = vmatpush1.msra.mxu0 0.0
  %84 = vmatprep.subr.mxu0 0.0
  %85 = vmatpush1.msra.mxu0 0.0
  %86 = vmatprep.subr.mxu0 0.0
  %87 = vmatpush1.msra.mxu0 0.0
  %88 = vmatprep.subr.mxu0 0.0
  %89 = vmatpush1.msra.mxu0 0.0
  %90 = vmatprep.subr.mxu0 0.0
  %91 = vmatpush1.msra.mxu0 0.0
  %92 = vmatprep.subr.mxu0 0.0
  %93 = vmatpush1.msra.mxu0 0.0
  %94 = vmatprep.subr.mxu0 0.0
  %95 = vmatpush1.msra.mxu0 0.0
  %96 = vmatprep.subr.mxu0 0.0
  %97 = vmatpush1.msra.mxu0 0.0
  %98 = vmatprep.mubr.f32.mxu0 0.0
  %99 = vmatmul.mubr.f32.gmra.mrb[0].mxu0 %v29
  %v100 = vpop.f32.mrb[0].mxu0
  %v101 = vadd.f32 %v25, %v100
  %v102 = vpop.f32.mrb[0].mxu0
  %103 = vmatprep.mubr.f32.mxu0 0.0
  %104 = vmatmul.mubr.f32.gmra.mrb[0].mxu0 %v32
  %v105 = vpop.f32.mrb[0].mxu0
  %v106 = vadd.f32 %v25, %v105
  %v107 = vpop.f32.mrb[0].mxu0
  %108 = vdwg.mxu0
  %109 = vst.msk [vmem:[%s3] sm:$0xff] %vm27, %v101
  %110 = vst.msk [vmem:[%s3 + $0x8] sm:$0xff] %vm27, %v106
  // Predicated region
  $region14: #{_lambda_.22} parent=0 // pred_check
    _
  $region15: #{_lambda_.22} parent=0 // pred_check_branch
    %112 = sbr.rel (0) target = $region17
  $region16: #{_lambda_.22} parent=0 // pred_region
    _
  $region17: #{_lambda_.22} parent=0 // pred_fallthru
    _
  // Predicated region
  $region18: #{_lambda_.22} parent=0 // pred_check
    _
  $region19: #{_lambda_.22} parent=0 // pred_check_branch
    %114 = sbr.rel (0) target = $region21
  $region20: #{_lambda_.22} parent=0 // pred_region
    _
  $region21: #{_lambda_.22} parent=0 // pred_fallthru
    _

// kernel: _lambda_.35
$region0: #{_lambda_.35}
  #allocation0 [shape = 'u32[]', space=smem, size = 0x4, offset = 0x4, fixed_abs, tag = 'smem constant byte address 0x4 - core index']
  #allocation1 [shape = 'u32[144,128]{1,0:T(1,128)}', space=vmem, size = 0x12000, scoped, tag = 'internal scratch']
  %s0 = inlined_call_operand.vmem [shape: f32[16,32], index: 0, kind: input, shape index: {}]
  %s1 = inlined_call_operand.vmem [shape: f32[32,8], index: 1, kind: input, shape index: {}]
  %s2 = inlined_call_operand.vmem [shape: f32[1,8], index: 2, kind: input, shape index: {}]
  %s3 = inlined_call_operand.hbm [shape: f32[16,8], index: 3, kind: output, shape index: {}]
  %s4 = sld [smem:[#allocation0]]
  $region22: #{_lambda_.35} parent=0
    _
  %s6 = ssub.s32 1, %s4
  %s7 = scalar_select 0, %s6, %s4
  $region1: #{_lambda_.35} parent=0
    #allocation2 [shape = 'u8[8192]{0}', space=vmem, size = 0x2000, scoped, tag = 'output window, operand 0, single buffered']
    #allocation3 [shape = 's32[1]{0}', space=sflag, size = 0x4, scoped, tag = 'scoped memory for _lambda_.35']
    %8 = vsyncpa [#allocation3], 0
    // Predicated region
    $region2: #{_lambda_.35} parent=1 // pred_check
      _
    $region3: #{_lambda_.35} parent=1 // pred_check_branch
      %10 = sbr.rel (0) target = $region5
    $region4: #{_lambda_.35} parent=1 // pred_region
      _
    $region5: #{_lambda_.35} parent=1 // pred_fallthru
      _
    // Predicated region
    $region6: #{_lambda_.35} parent=1 // pred_check
      _
    $region7: #{_lambda_.35} parent=1 // pred_check_branch
      %12 = sbr.rel (0) target = $region9
    $region8: #{_lambda_.35} parent=1 // pred_region
      _
    $region9: #{_lambda_.35} parent=1 // pred_fallthru
      _
    // Predicated region
    $region10: #{_lambda_.35} parent=1 // pred_check
      _
    $region11: #{_lambda_.35} parent=1 // pred_check_branch
      %14 = sbr.rel (0) target = $region13
    $region12: #{_lambda_.35} parent=1 // pred_region
      _
    $region13: #{_lambda_.35} parent=1 // pred_fallthru
      _
    %v15 = vld [vmem:[%s0] sm:$0xff]
    %v16 = vld [vmem:[%s0 + $0x8] sm:$0xff]
    %v17 = vld [vmem:[%s1] sm:$0xff]
    %v18 = vld [vmem:[%s1 + $0x8] sm:$0xff]
    %v19 = vld [vmem:[%s1 + $0x10] sm:$0xff]
    %v20 = vld [vmem:[%s1 + $0x18] sm:$0xff]
    %v21 = vld [vmem:[%s2] sm:$0x1]
    %v23 = vlaneseq
    %v24 = vshrl.u32 %v23, 7
    %v25 = vsub.s32 0, %v24
    %v26 = vrot.slane %v21, %v25
    %vm28 = vcmask 261120
    %v30 = vsel %vm28, %v15, 0
    %v33 = vsel %vm28, %v16, 0
    %35 = vmatprep.subr.mxu0 0.0
    %36 = vmatpush1.msra.mxu0 %v17
    %37 = vmatprep.subr.mxu0 0.0
    %38 = vmatpush1.msra.mxu0 %v18
    %39 = vmatprep.subr.mxu0 0.0
    %40 = vmatpush1.msra.mxu0 %v19
    %41 = vmatprep.subr.mxu0 0.0
    %42 = vmatpush1.msra.mxu0 %v20
    %43 = vmatprep.subr.mxu0 0.0
    %44 = vmatpush1.msra.mxu0 0.0
    %45 = vmatprep.subr.mxu0 0.0
    %46 = vmatpush1.msra.mxu0 0.0
    %47 = vmatprep.subr.mxu0 0.0
    %48 = vmatpush1.msra.mxu0 0.0
    %49 = vmatprep.subr.mxu0 0.0
    %50 = vmatpush1.msra.mxu0 0.0
    %51 = vmatprep.subr.mxu0 0.0
    %52 = vmatpush1.msra.mxu0 0.0
    %53 = vmatprep.subr.mxu0 0.0
    %54 = vmatpush1.msra.mxu0 0.0
    %55 = vmatprep.subr.mxu0 0.0
    %56 = vmatpush1.msra.mxu0 0.0
    %57 = vmatprep.subr.mxu0 0.0
    %58 = vmatpush1.msra.mxu0 0.0
    %59 = vmatprep.subr.mxu0 0.0
    %60 = vmatpush1.msra.mxu0 0.0
    %61 = vmatprep.subr.mxu0 0.0
    %62 = vmatpush1.msra.mxu0 0.0
    %63 = vmatprep.subr.mxu0 0.0
    %64 = vmatpush1.msra.mxu0 0.0
    %65 = vmatprep.subr.mxu0 0.0
    %66 = vmatpush1.msra.mxu0 0.0
    %67 = vmatprep.subr.mxu0 0.0
    %68 = vmatpush1.msra.mxu0 0.0
    %69 = vmatprep.subr.mxu0 0.0
    %70 = vmatpush1.msra.mxu0 0.0
    %71 = vmatprep.subr.mxu0 0.0
    %72 = vmatpush1.msra.mxu0 0.0
    %73 = vmatprep.subr.mxu0 0.0
    %74 = vmatpush1.msra.mxu0 0.0
    %75 = vmatprep.subr.mxu0 0.0
    %76 = vmatpush1.msra.mxu0 0.0
    %77 = vmatprep.subr.mxu0 0.0
    %78 = vmatpush1.msra.mxu0 0.0
    %79 = vmatprep.subr.mxu0 0.0
    %80 = vmatpush1.msra.mxu0 0.0
    %81 = vmatprep.subr.mxu0 0.0
    %82 = vmatpush1.msra.mxu0 0.0
    %83 = vmatprep.subr.mxu0 0.0
    %84 = vmatpush1.msra.mxu0 0.0
    %85 = vmatprep.subr.mxu0 0.0
    %86 = vmatpush1.msra.mxu0 0.0
    %87 = vmatprep.subr.mxu0 0.0
    %88 = vmatpush1.msra.mxu0 0.0
    %89 = vmatprep.subr.mxu0 0.0
    %90 = vmatpush1.msra.mxu0 0.0
    %91 = vmatprep.subr.mxu0 0.0
    %92 = vmatpush1.msra.mxu0 0.0
    %93 = vmatprep.subr.mxu0 0.0
    %94 = vmatpush1.msra.mxu0 0.0
    %95 = vmatprep.subr.mxu0 0.0
    %96 = vmatpush1.msra.mxu0 0.0
    %97 = vmatprep.subr.mxu0 0.0
    %98 = vmatpush1.msra.mxu0 0.0
    %99 = vmatprep.mubr.f32.mxu0 0.0
    %100 = vmatmul.mubr.f32.gmra.mrb[0].mxu0 %v30
    %v101 = vpop.f32.mrb[0].mxu0
    %v102 = vadd.f32 %v26, %v101
    %v103 = vpop.f32.mrb[0].mxu0
    %104 = vmatprep.mubr.f32.mxu0 0.0
    %105 = vmatmul.mubr.f32.gmra.mrb[0].mxu0 %v33
    %v106 = vpop.f32.mrb[0].mxu0
    %v107 = vadd.f32 %v26, %v106
    %v108 = vpop.f32.mrb[0].mxu0
    %109 = vdwg.mxu0
    %vm110 = vcmask 64512
    %111 = vst.msk [vmem:[#allocation2] sm:$0xff] %vm110, %v102
    %112 = vst.msk [vmem:[#allocation2 + $0x8] sm:$0xff] %vm110, %v107
    // Predicated region
    $region14: #{_lambda_.35} parent=1 // pred_check
      _
    $region15: #{_lambda_.35} parent=1 // pred_check_branch
      %114 = sbr.rel (0) target = $region17
    $region16: #{_lambda_.35} parent=1 // pred_region
      %s116 = ssub.s32 256, 256
      %117 = vsyncadd [#allocation3], %s116
      %s118 = sshll.u32 [#allocation2], 4
      %s119 = int_to_ptr.vmem [resolvable:$true] %s118
      %124 = dma.vmem_to_hbm [thread:$0]  %s119, 256, %s3, [#allocation3], 128, 128, 8
    $region17: #{_lambda_.35} parent=1 // pred_fallthru
      _
    // Predicated region
    $region18: #{_lambda_.35} parent=1 // pred_check
      _
    $region19: #{_lambda_.35} parent=1 // pred_check_branch
      %126 = sbr.rel (0) target = $region21
    $region20: #{_lambda_.35} parent=1 // pred_region
      %127 = dma.done [#allocation3], 256
    $region21: #{_lambda_.35} parent=1 // pred_fallthru
      _
    %128 = vsyncpa [#allocation3], 1

// kernel: _lambda_.26
$region0: #{_lambda_.26}
  #allocation0 [shape = 'u32[]', space=smem, size = 0x4, offset = 0x4, fixed_abs, tag = 'smem constant byte address 0x4 - core index']
  #allocation1 [shape = 'u32[144,128]{1,0:T(1,128)}', space=vmem, size = 0x12000, scoped, tag = 'internal scratch']
  %s0 = inlined_call_operand.vmem [shape: f32[16,32], index: 0, kind: input, shape index: {}]
  %s1 = inlined_call_operand.vmem [shape: f32[32,128], index: 1, kind: input, shape index: {}]
  %s2 = inlined_call_operand.vmem [shape: f32[1,128], index: 2, kind: input, shape index: {}]
  %s3 = inlined_call_operand.vmem [shape: f32[128,32], index: 3, kind: input, shape index: {}]
  %s4 = inlined_call_operand.vmem [shape: f32[1,32], index: 4, kind: input, shape index: {}, may-alias: {4,6}]
  %s5 = inlined_call_operand.vmem [shape: f32[1,32], index: 5, kind: input, shape index: {}]
  %s6 = inlined_call_operand.vmem [shape: f32[1,32], index: 6, kind: input, shape index: {}, may-alias: {4,6}]
  %s7 = inlined_call_operand.vmem [shape: f32[16,32], index: 7, kind: output, shape index: {}]
  %s8 = sld [smem:[#allocation0]]
  $region38: #{_lambda_.26} parent=0
    _
  %s10 = ssub.s32 1, %s8
  %s11 = scalar_select 0, %s10, %s8
  // Predicated region
  $region2: #{_lambda_.26} parent=0 // pred_check
    _
  $region3: #{_lambda_.26} parent=0 // pred_check_branch
    %13 = sbr.rel (0) target = $region5
  $region4: #{_lambda_.26} parent=0 // pred_region
    _
  $region5: #{_lambda_.26} parent=0 // pred_fallthru
    _
  // Predicated region
  $region6: #{_lambda_.26} parent=0 // pred_check
    _
  $region7: #{_lambda_.26} parent=0 // pred_check_branch
    %15 = sbr.rel (0) target = $region9
  $region8: #{_lambda_.26} parent=0 // pred_region
    _
  $region9: #{_lambda_.26} parent=0 // pred_fallthru
    _
  // Predicated region
  $region10: #{_lambda_.26} parent=0 // pred_check
    _
  $region11: #{_lambda_.26} parent=0 // pred_check_branch
    %17 = sbr.rel (0) target = $region13
  $region12: #{_lambda_.26} parent=0 // pred_region
    _
  $region13: #{_lambda_.26} parent=0 // pred_fallthru
    _
  // Predicated region
  $region14: #{_lambda_.26} parent=0 // pred_check
    _
  $region15: #{_lambda_.26} parent=0 // pred_check_branch
    %19 = sbr.rel (0) target = $region17
  $region16: #{_lambda_.26} parent=0 // pred_region
    _
  $region17: #{_lambda_.26} parent=0 // pred_fallthru
    _
  // Predicated region
  $region18: #{_lambda_.26} parent=0 // pred_check
    _
  $region19: #{_lambda_.26} parent=0 // pred_check_branch
    %21 = sbr.rel (0) target = $region21
  $region20: #{_lambda_.26} parent=0 // pred_region
    _
  $region21: #{_lambda_.26} parent=0 // pred_fallthru
    _
  // Predicated region
  $region22: #{_lambda_.26} parent=0 // pred_check
    _
  $region23: #{_lambda_.26} parent=0 // pred_check_branch
    %23 = sbr.rel (0) target = $region25
  $region24: #{_lambda_.26} parent=0 // pred_region
    _
  $region25: #{_lambda_.26} parent=0 // pred_fallthru
    _
  // Predicated region
  $region26: #{_lambda_.26} parent=0 // pred_check
    _
  $region27: #{_lambda_.26} parent=0 // pred_check_branch
    %25 = sbr.rel (0) target = $region29
  $region28: #{_lambda_.26} parent=0 // pred_region
    _
  $region29: #{_lambda_.26} parent=0 // pred_fallthru
    _
  %v26 = vld [vmem:[%s0] sm:$0xff]
  %v27 = vld [vmem:[%s0 + $0x8] sm:$0xff]
  %v28 = vld [vmem:[%s1] sm:$0xff]
  %v29 = vld [vmem:[%s1 + $0x8] sm:$0xff]
  %v30 = vld [vmem:[%s1 + $0x10] sm:$0xff]
  %v31 = vld [vmem:[%s1 + $0x18] sm:$0xff]
  %v32 = vld [vmem:[%s2] sm:$0x1]
  %v34 = vlaneseq
  %v35 = vshrl.u32 %v34, 7
  %v36 = vsub.s32 0, %v35
  %v37 = vrot.slane %v32, %v36
  %vm39 = vcmask 261120
  %v41 = vsel %vm39, %v26, 0
  %v44 = vsel %vm39, %v27, 0
  %46 = vmatprep.subr.mxu0 0.0
  %47 = vmatpush1.msra.mxu0 %v28
  %48 = vmatprep.subr.mxu0 0.0
  %49 = vmatpush1.msra.mxu0 %v29
  %50 = vmatprep.subr.mxu0 0.0
  %51 = vmatpush1.msra.mxu0 %v30
  %52 = vmatprep.subr.mxu0 0.0
  %53 = vmatpush1.msra.mxu0 %v31
  %54 = vmatprep.subr.mxu0 0.0
  %55 = vmatpush1.msra.mxu0 0.0
  %56 = vmatprep.subr.mxu0 0.0
  %57 = vmatpush1.msra.mxu0 0.0
  %58 = vmatprep.subr.mxu0 0.0
  %59 = vmatpush1.msra.mxu0 0.0
  %60 = vmatprep.subr.mxu0 0.0
  %61 = vmatpush1.msra.mxu0 0.0
  %62 = vmatprep.subr.mxu0 0.0
  %63 = vmatpush1.msra.mxu0 0.0
  %64 = vmatprep.subr.mxu0 0.0
  %65 = vmatpush1.msra.mxu0 0.0
  %66 = vmatprep.subr.mxu0 0.0
  %67 = vmatpush1.msra.mxu0 0.0
  %68 = vmatprep.subr.mxu0 0.0
  %69 = vmatpush1.msra.mxu0 0.0
  %70 = vmatprep.subr.mxu0 0.0
  %71 = vmatpush1.msra.mxu0 0.0
  %72 = vmatprep.subr.mxu0 0.0
  %73 = vmatpush1.msra.mxu0 0.0
  %74 = vmatprep.subr.mxu0 0.0
  %75 = vmatpush1.msra.mxu0 0.0
  %76 = vmatprep.subr.mxu0 0.0
  %77 = vmatpush1.msra.mxu0 0.0
  %78 = vmatprep.subr.mxu0 0.0
  %79 = vmatpush1.msra.mxu0 0.0
  %80 = vmatprep.subr.mxu0 0.0
  %81 = vmatpush1.msra.mxu0 0.0
  %82 = vmatprep.subr.mxu0 0.0
  %83 = vmatpush1.msra.mxu0 0.0
  %84 = vmatprep.subr.mxu0 0.0
  %85 = vmatpush1.msra.mxu0 0.0
  %86 = vmatprep.subr.mxu0 0.0
  %87 = vmatpush1.msra.mxu0 0.0
  %88 = vmatprep.subr.mxu0 0.0
  %89 = vmatpush1.msra.mxu0 0.0
  %90 = vmatprep.subr.mxu0 0.0
  %91 = vmatpush1.msra.mxu0 0.0
  %92 = vmatprep.subr.mxu0 0.0
  %93 = vmatpush1.msra.mxu0 0.0
  %94 = vmatprep.subr.mxu0 0.0
  %95 = vmatpush1.msra.mxu0 0.0
  %96 = vmatprep.subr.mxu0 0.0
  %97 = vmatpush1.msra.mxu0 0.0
  %98 = vmatprep.subr.mxu0 0.0
  %99 = vmatpush1.msra.mxu0 0.0
  %100 = vmatprep.subr.mxu0 0.0
  %101 = vmatpush1.msra.mxu0 0.0
  %102 = vmatprep.subr.mxu0 0.0
  %103 = vmatpush1.msra.mxu0 0.0
  %104 = vmatprep.subr.mxu0 0.0
  %105 = vmatpush1.msra.mxu0 0.0
  %106 = vmatprep.subr.mxu0 0.0
  %107 = vmatpush1.msra.mxu0 0.0
  %108 = vmatprep.subr.mxu0 0.0
  %109 = vmatpush1.msra.mxu0 0.0
  %110 = vmatprep.mubr.f32.mxu0 0.0
  %111 = vmatmul.mubr.f32.gmra.mrb[0].mxu0 %v41
  %v112 = vpop.f32.mrb[0].mxu0
  %v113 = vadd.f32 %v37, %v112
  %v114 = vpop.f32.mrb[0].mxu0
  %115 = vmatprep.mubr.f32.mxu0 0.0
  %116 = vmatmul.mubr.f32.gmra.mrb[0].mxu0 %v44
  %v117 = vpop.f32.mrb[0].mxu0
  %v118 = vadd.f32 %v37, %v117
  %v119 = vpop.f32.mrb[0].mxu0
  %120 = vdwg.mxu0
  %v121 = vmax.f32 %v113, 0.0
  %v122 = vmax.f32 %v118, 0.0
  %v123 = vld [vmem:[%s3] sm:$0xff]
  %v124 = vld [vmem:[%s3 + $0x8] sm:$0xff]
  %v125 = vld [vmem:[%s3 + $0x10] sm:$0xff]
  %v126 = vld [vmem:[%s3 + $0x18] sm:$0xff]
  %v127 = vld [vmem:[%s3 + $0x20] sm:$0xff]
  %v128 = vld [vmem:[%s3 + $0x28] sm:$0xff]
  %v129 = vld [vmem:[%s3 + $0x30] sm:$0xff]
  %v130 = vld [vmem:[%s3 + $0x38] sm:$0xff]
  %v131 = vld [vmem:[%s3 + $0x40] sm:$0xff]
  %v132 = vld [vmem:[%s3 + $0x48] sm:$0xff]
  %v133 = vld [vmem:[%s3 + $0x50] sm:$0xff]
  %v134 = vld [vmem:[%s3 + $0x58] sm:$0xff]
  %v135 = vld [vmem:[%s3 + $0x60] sm:$0xff]
  %v136 = vld [vmem:[%s3 + $0x68] sm:$0xff]
  %v137 = vld [vmem:[%s3 + $0x70] sm:$0xff]
  %v138 = vld [vmem:[%s3 + $0x78] sm:$0xff]
  %v139 = vld [vmem:[%s4] sm:$0x1]
  %v141 = vlaneseq
  %v142 = vshrl.u32 %v141, 7
  %v143 = vsub.s32 0, %v142
  %v144 = vrot.slane %v139, %v143
  %146 = vmatprep.subr.mxu0 0.0
  %147 = vmatpush1.msra.mxu0 %v123
  %148 = vmatprep.subr.mxu0 0.0
  %149 = vmatpush1.msra.mxu0 %v124
  %150 = vmatprep.subr.mxu0 0.0
  %151 = vmatpush1.msra.mxu0 %v125
  %152 = vmatprep.subr.mxu0 0.0
  %153 = vmatpush1.msra.mxu0 %v126
  %154 = vmatprep.subr.mxu0 0.0
  %155 = vmatpush1.msra.mxu0 %v127
  %156 = vmatprep.subr.mxu0 0.0
  %157 = vmatpush1.msra.mxu0 %v128
  %158 = vmatprep.subr.mxu0 0.0
  %159 = vmatpush1.msra.mxu0 %v129
  %160 = vmatprep.subr.mxu0 0.0
  %161 = vmatpush1.msra.mxu0 %v130
  %162 = vmatprep.subr.mxu0 0.0
  %163 = vmatpush1.msra.mxu0 %v131
  %164 = vmatprep.subr.mxu0 0.0
  %165 = vmatpush1.msra.mxu0 %v132
  %166 = vmatprep.subr.mxu0 0.0
  %167 = vmatpush1.msra.mxu0 %v133
  %168 = vmatprep.subr.mxu0 0.0
  %169 = vmatpush1.msra.mxu0 %v134
  %170 = vmatprep.subr.mxu0 0.0
  %171 = vmatpush1.msra.mxu0 %v135
  %172 = vmatprep.subr.mxu0 0.0
  %173 = vmatpush1.msra.mxu0 %v136
  %174 = vmatprep.subr.mxu0 0.0
  %175 = vmatpush1.msra.mxu0 %v137
  %176 = vmatprep.subr.mxu0 0.0
  %177 = vmatpush1.msra.mxu0 %v138
  %178 = vmatprep.subr.mxu0 0.0
  %179 = vmatpush1.msra.mxu0 0.0
  %180 = vmatprep.subr.mxu0 0.0
  %181 = vmatpush1.msra.mxu0 0.0
  %182 = vmatprep.subr.mxu0 0.0
  %183 = vmatpush1.msra.mxu0 0.0
  %184 = vmatprep.subr.mxu0 0.0
  %185 = vmatpush1.msra.mxu0 0.0
  %186 = vmatprep.subr.mxu0 0.0
  %187 = vmatpush1.msra.mxu0 0.0
  %188 = vmatprep.subr.mxu0 0.0
  %189 = vmatpush1.msra.mxu0 0.0
  %190 = vmatprep.subr.mxu0 0.0
  %191 = vmatpush1.msra.mxu0 0.0
  %192 = vmatprep.subr.mxu0 0.0
  %193 = vmatpush1.msra.mxu0 0.0
  %194 = vmatprep.subr.mxu0 0.0
  %195 = vmatpush1.msra.mxu0 0.0
  %196 = vmatprep.subr.mxu0 0.0
  %197 = vmatpush1.msra.mxu0 0.0
  %198 = vmatprep.subr.mxu0 0.0
  %199 = vmatpush1.msra.mxu0 0.0
  %200 = vmatprep.subr.mxu0 0.0
  %201 = vmatpush1.msra.mxu0 0.0
  %202 = vmatprep.subr.mxu0 0.0
  %203 = vmatpush1.msra.mxu0 0.0
  %204 = vmatprep.subr.mxu0 0.0
  %205 = vmatpush1.msra.mxu0 0.0
  %206 = vmatprep.subr.mxu0 0.0
  %207 = vmatpush1.msra.mxu0 0.0
  %208 = vmatprep.subr.mxu0 0.0
  %209 = vmatpush1.msra.mxu0 0.0
  %210 = vmatprep.mubr.f32.mxu0 0.0
  %211 = vmatmul.mubr.f32.gmra.mrb[0].mxu0 %v121
  %v212 = vpop.f32.mrb[0].mxu0
  %v213 = vadd.f32 %v144, %v212
  %v214 = vpop.f32.mrb[0].mxu0
  %215 = vmatprep.mubr.f32.mxu0 0.0
  %216 = vmatmul.mubr.f32.gmra.mrb[0].mxu0 %v122
  %v217 = vpop.f32.mrb[0].mxu0
  %v218 = vadd.f32 %v144, %v217
  %v219 = vpop.f32.mrb[0].mxu0
  %220 = vdwg.mxu0
  %v221 = vadd.f32 %v26, %v213
  %v222 = vadd.f32 %v27, %v218
  %v223 = vsel %vm39, %v221, 0.0
  %224 = vadd.xlane.f32.xlu0 %v223
  %v225 = vpop.xlane.xlu0 %224
  %v226 = vsel %vm39, %v222, 0.0
  %227 = vadd.xlane.f32.xlu0 %v226
  %v228 = vpop.xlane.xlu0 %227
  %v229 = vrcp.pop 32.0
  %v230 = vmul.f32 %v225, %v229
  %v231 = vmul.f32 %v228, %v229
  %v232 = vsub.f32 %v221, %v230
  %v233 = vsub.f32 %v222, %v231
  %v234 = vmul.f32 %v232, %v232
  %v235 = vmul.f32 %v233, %v233
  %v236 = vsel %vm39, %v234, 0.0
  %237 = vadd.xlane.f32.xlu0 %v236
  %v238 = vpop.xlane.xlu0 %237
  %v239 = vsel %vm39, %v235, 0.0
  %240 = vadd.xlane.f32.xlu0 %v239
  %v241 = vpop.xlane.xlu0 %240
  %v242 = vmul.f32 %v238, %v229
  %v243 = vmul.f32 %v241, %v229
  %v244 = vadd.f32 %v242, 1e-05
  %v245 = vadd.f32 %v243, 1e-05
  %v246 = vrsqrt.pop %v244
  %v247 = vrsqrt.pop %v245
  %v248 = vmul.f32 %v232, %v246
  %v249 = vmul.f32 %v233, %v247
  %v250 = vld [vmem:[%s5] sm:$0x1]
  %v252 = vlaneseq
  %v253 = vshrl.u32 %v252, 7
  %v254 = vsub.s32 0, %v253
  %v255 = vrot.slane %v250, %v254
  %v257 = vmul.f32 %v248, %v255
  %v258 = vmul.f32 %v249, %v255
  %v259 = vld [vmem:[%s6] sm:$0x1]
  %v261 = vlaneseq
  %v262 = vshrl.u32 %v261, 7
  %v263 = vsub.s32 0, %v262
  %v264 = vrot.slane %v259, %v263
  %v266 = vadd.f32 %v257, %v264
  %v267 = vadd.f32 %v258, %v264
  %268 = vst.msk [vmem:[%s7] sm:$0xff] %vm39, %v266
  %269 = vst.msk [vmem:[%s7 + $0x8] sm:$0xff] %vm39, %v267
  // Predicated region
  $region30: #{_lambda_.26} parent=0 // pred_check
    _
  $region31: #{_lambda_.26} parent=0 // pred_check_branch
    %271 = sbr.rel (0) target = $region33
  $region32: #{_lambda_.26} parent=0 // pred_region
    _
  $region33: #{_lambda_.26} parent=0 // pred_fallthru
    _
  // Predicated region
  $region34: #{_lambda_.26} parent=0 // pred_check
    _
  $region35: #{_lambda_.26} parent=0 // pred_check_branch
    %273 = sbr.rel (0) target = $region37
  $region36: #{_lambda_.26} parent=0 // pred_region
    _
  $region37: #{_lambda_.26} parent=0 // pred_fallthru
    _

// kernel: _lambda_.20
$region0: #{_lambda_.20}
  #allocation0 [shape = 'u32[]', space=smem, size = 0x4, offset = 0x4, fixed_abs, tag = 'smem constant byte address 0x4 - core index']
  #allocation1 [shape = 'u32[144,128]{1,0:T(1,128)}', space=vmem, size = 0x12000, scoped, tag = 'internal scratch']
  %s0 = inlined_call_operand.vmem [shape: f32[64,8,1], index: 0, kind: input, shape index: {}]
  %s1 = inlined_call_operand.vmem [shape: f32[64,8,1], index: 1, kind: input, shape index: {}]
  %s2 = inlined_call_operand.vmem [shape: f32[64,8,1], index: 2, kind: input, shape index: {}]
  %s3 = inlined_call_operand.vmem [shape: f32[8,8], index: 3, kind: input, shape index: {}]
  %s4 = inlined_call_operand.vmem [shape: f32[64,8,1], index: 4, kind: output, shape index: {}]
  %s5 = sld [smem:[#allocation0]]
  $region26: #{_lambda_.20} parent=0
    _
  %s7 = ssub.s32 1, %s5
  %s8 = scalar_select 0, %s7, %s5
  // Predicated region
  $region2: #{_lambda_.20} parent=0 // pred_check
    _
  $region3: #{_lambda_.20} parent=0 // pred_check_branch
    %10 = sbr.rel (0) target = $region5
  $region4: #{_lambda_.20} parent=0 // pred_region
    _
  $region5: #{_lambda_.20} parent=0 // pred_fallthru
    _
  // Predicated region
  $region6: #{_lambda_.20} parent=0 // pred_check
    _
  $region7: #{_lambda_.20} parent=0 // pred_check_branch
    %12 = sbr.rel (0) target = $region9
  $region8: #{_lambda_.20} parent=0 // pred_region
    _
  $region9: #{_lambda_.20} parent=0 // pred_fallthru
    _
  // Predicated region
  $region10: #{_lambda_.20} parent=0 // pred_check
    _
  $region11: #{_lambda_.20} parent=0 // pred_check_branch
    %14 = sbr.rel (0) target = $region13
  $region12: #{_lambda_.20} parent=0 // pred_region
    _
  $region13: #{_lambda_.20} parent=0 // pred_fallthru
    _
  // Predicated region
  $region14: #{_lambda_.20} parent=0 // pred_check
    _
  $region15: #{_lambda_.20} parent=0 // pred_check_branch
    %16 = sbr.rel (0) target = $region17
  $region16: #{_lambda_.20} parent=0 // pred_region
    _
  $region17: #{_lambda_.20} parent=0 // pred_fallthru
    _
  %v17 = vld [vmem:[%s0] sm:$0xff]
  %v18 = vld [vmem:[%s0 + $0x8] sm:$0xff]
  %v19 = vld [vmem:[%s0 + $0x10] sm:$0xff]
  %v20 = vld [vmem:[%s0 + $0x18] sm:$0xff]
  %v21 = vld [vmem:[%s0 + $0x20] sm:$0xff]
  %v22 = vld [vmem:[%s0 + $0x28] sm:$0xff]
  %v23 = vld [vmem:[%s0 + $0x30] sm:$0xff]
  %v24 = vld [vmem:[%s0 + $0x38] sm:$0xff]
  %v25 = vld [vmem:[%s0 + $0x40] sm:$0xff]
  %v26 = vld [vmem:[%s0 + $0x48] sm:$0xff]
  %v27 = vld [vmem:[%s0 + $0x50] sm:$0xff]
  %v28 = vld [vmem:[%s0 + $0x58] sm:$0xff]
  %v29 = vld [vmem:[%s0 + $0x60] sm:$0xff]
  %v30 = vld [vmem:[%s0 + $0x68] sm:$0xff]
  %v31 = vld [vmem:[%s0 + $0x70] sm:$0xff]
  %v32 = vld [vmem:[%s0 + $0x78] sm:$0xff]
  %v33 = vld [vmem:[%s0 + $0x80] sm:$0xff]
  %v34 = vld [vmem:[%s0 + $0x88] sm:$0xff]
  %v35 = vld [vmem:[%s0 + $0x90] sm:$0xff]
  %v36 = vld [vmem:[%s0 + $0x98] sm:$0xff]
  %v37 = vld [vmem:[%s0 + $0xa0] sm:$0xff]
  %v38 = vld [vmem:[%s0 + $0xa8] sm:$0xff]
  %v39 = vld [vmem:[%s0 + $0xb0] sm:$0xff]
  %v40 = vld [vmem:[%s0 + $0xb8] sm:$0xff]
  %v41 = vld [vmem:[%s0 + $0xc0] sm:$0xff]
  %v42 = vld [vmem:[%s0 + $0xc8] sm:$0xff]
  %v43 = vld [vmem:[%s0 + $0xd0] sm:$0xff]
  %v44 = vld [vmem:[%s0 + $0xd8] sm:$0xff]
  %v45 = vld [vmem:[%s0 + $0xe0] sm:$0xff]
  %v46 = vld [vmem:[%s0 + $0xe8] sm:$0xff]
  %v47 = vld [vmem:[%s0 + $0xf0] sm:$0xff]
  %v48 = vld [vmem:[%s0 + $0xf8] sm:$0xff]
  %v49 = vld [vmem:[%s0 + $0x100] sm:$0xff]
  %v50 = vld [vmem:[%s0 + $0x108] sm:$0xff]
  %v51 = vld [vmem:[%s0 + $0x110] sm:$0xff]
  %v52 = vld [vmem:[%s0 + $0x118] sm:$0xff]
  %v53 = vld [vmem:[%s0 + $0x120] sm:$0xff]
  %v54 = vld [vmem:[%s0 + $0x128] sm:$0xff]
  %v55 = vld [vmem:[%s0 + $0x130] sm:$0xff]
  %v56 = vld [vmem:[%s0 + $0x138] sm:$0xff]
  %v57 = vld [vmem:[%s0 + $0x140] sm:$0xff]
  %v58 = vld [vmem:[%s0 + $0x148] sm:$0xff]
  %v59 = vld [vmem:[%s0 + $0x150] sm:$0xff]
  %v60 = vld [vmem:[%s0 + $0x158] sm:$0xff]
  %v61 = vld [vmem:[%s0 + $0x160] sm:$0xff]
  %v62 = vld [vmem:[%s0 + $0x168] sm:$0xff]
  %v63 = vld [vmem:[%s0 + $0x170] sm:$0xff]
  %v64 = vld [vmem:[%s0 + $0x178] sm:$0xff]
  %v65 = vld [vmem:[%s0 + $0x180] sm:$0xff]
  %v66 = vld [vmem:[%s0 + $0x188] sm:$0xff]
  %v67 = vld [vmem:[%s0 + $0x190] sm:$0xff]
  %v68 = vld [vmem:[%s0 + $0x198] sm:$0xff]
  %v69 = vld [vmem:[%s0 + $0x1a0] sm:$0xff]
  %v70 = vld [vmem:[%s0 + $0x1a8] sm:$0xff]
  %v71 = vld [vmem:[%s0 + $0x1b0] sm:$0xff]
  %v72 = vld [vmem:[%s0 + $0x1b8] sm:$0xff]
  %v73 = vld [vmem:[%s0 + $0x1c0] sm:$0xff]
  %v74 = vld [vmem:[%s0 + $0x1c8] sm:$0xff]
  %v75 = vld [vmem:[%s0 + $0x1d0] sm:$0xff]
  %v76 = vld [vmem:[%s0 + $0x1d8] sm:$0xff]
  %v77 = vld [vmem:[%s0 + $0x1e0] sm:$0xff]
  %v78 = vld [vmem:[%s0 + $0x1e8] sm:$0xff]
  %v79 = vld [vmem:[%s0 + $0x1f0] sm:$0xff]
  %v80 = vld [vmem:[%s0 + $0x1f8] sm:$0xff]
  %v81 = vld [vmem:[%s1] sm:$0xff]
  %v82 = vld [vmem:[%s1 + $0x8] sm:$0xff]
  %v83 = vld [vmem:[%s1 + $0x10] sm:$0xff]
  %v84 = vld [vmem:[%s1 + $0x18] sm:$0xff]
  %v85 = vld [vmem:[%s1 + $0x20] sm:$0xff]
  %v86 = vld [vmem:[%s1 + $0x28] sm:$0xff]
  %v87 = vld [vmem:[%s1 + $0x30] sm:$0xff]
  %v88 = vld [vmem:[%s1 + $0x38] sm:$0xff]
  %v89 = vld [vmem:[%s1 + $0x40] sm:$0xff]
  %v90 = vld [vmem:[%s1 + $0x48] sm:$0xff]
  %v91 = vld [vmem:[%s1 + $0x50] sm:$0xff]
  %v92 = vld [vmem:[%s1 + $0x58] sm:$0xff]
  %v93 = vld [vmem:[%s1 + $0x60] sm:$0xff]
  %v94 = vld [vmem:[%s1 + $0x68] sm:$0xff]
  %v95 = vld [vmem:[%s1 + $0x70] sm:$0xff]
  %v96 = vld [vmem:[%s1 + $0x78] sm:$0xff]
  %v97 = vld [vmem:[%s1 + $0x80] sm:$0xff]
  %v98 = vld [vmem:[%s1 + $0x88] sm:$0xff]
  %v99 = vld [vmem:[%s1 + $0x90] sm:$0xff]
  %v100 = vld [vmem:[%s1 + $0x98] sm:$0xff]
  %v101 = vld [vmem:[%s1 + $0xa0] sm:$0xff]
  %v102 = vld [vmem:[%s1 + $0xa8] sm:$0xff]
  %v103 = vld [vmem:[%s1 + $0xb0] sm:$0xff]
  %v104 = vld [vmem:[%s1 + $0xb8] sm:$0xff]
  %v105 = vld [vmem:[%s1 + $0xc0] sm:$0xff]
  %v106 = vld [vmem:[%s1 + $0xc8] sm:$0xff]
  %v107 = vld [vmem:[%s1 + $0xd0] sm:$0xff]
  %v108 = vld [vmem:[%s1 + $0xd8] sm:$0xff]
  %v109 = vld [vmem:[%s1 + $0xe0] sm:$0xff]
  %v110 = vld [vmem:[%s1 + $0xe8] sm:$0xff]
  %v111 = vld [vmem:[%s1 + $0xf0] sm:$0xff]
  %v112 = vld [vmem:[%s1 + $0xf8] sm:$0xff]
  %v113 = vld [vmem:[%s1 + $0x100] sm:$0xff]
  %v114 = vld [vmem:[%s1 + $0x108] sm:$0xff]
  %v115 = vld [vmem:[%s1 + $0x110] sm:$0xff]
  %v116 = vld [vmem:[%s1 + $0x118] sm:$0xff]
  %v117 = vld [vmem:[%s1 + $0x120] sm:$0xff]
  %v118 = vld [vmem:[%s1 + $0x128] sm:$0xff]
  %v119 = vld [vmem:[%s1 + $0x130] sm:$0xff]
  %v120 = vld [vmem:[%s1 + $0x138] sm:$0xff]
  %v121 = vld [vmem:[%s1 + $0x140] sm:$0xff]
  %v122 = vld [vmem:[%s1 + $0x148] sm:$0xff]
  %v123 = vld [vmem:[%s1 + $0x150] sm:$0xff]
  %v124 = vld [vmem:[%s1 + $0x158] sm:$0xff]
  %v125 = vld [vmem:[%s1 + $0x160] sm:$0xff]
  %v126 = vld [vmem:[%s1 + $0x168] sm:$0xff]
  %v127 = vld [vmem:[%s1 + $0x170] sm:$0xff]
  %v128 = vld [vmem:[%s1 + $0x178] sm:$0xff]
  %v129 = vld [vmem:[%s1 + $0x180] sm:$0xff]
  %v130 = vld [vmem:[%s1 + $0x188] sm:$0xff]
  %v131 = vld [vmem:[%s1 + $0x190] sm:$0xff]
  %v132 = vld [vmem:[%s1 + $0x198] sm:$0xff]
  %v133 = vld [vmem:[%s1 + $0x1a0] sm:$0xff]
  %v134 = vld [vmem:[%s1 + $0x1a8] sm:$0xff]
  %v135 = vld [vmem:[%s1 + $0x1b0] sm:$0xff]
  %v136 = vld [vmem:[%s1 + $0x1b8] sm:$0xff]
  %v137 = vld [vmem:[%s1 + $0x1c0] sm:$0xff]
  %v138 = vld [vmem:[%s1 + $0x1c8] sm:$0xff]
  %v139 = vld [vmem:[%s1 + $0x1d0] sm:$0xff]
  %v140 = vld [vmem:[%s1 + $0x1d8] sm:$0xff]
  %v141 = vld [vmem:[%s1 + $0x1e0] sm:$0xff]
  %v142 = vld [vmem:[%s1 + $0x1e8] sm:$0xff]
  %v143 = vld [vmem:[%s1 + $0x1f0] sm:$0xff]
  %v144 = vld [vmem:[%s1 + $0x1f8] sm:$0xff]
  %v145 = vld [vmem:[%s2] sm:$0xff]
  %v146 = vld [vmem:[%s2 + $0x8] sm:$0xff]
  %v147 = vld [vmem:[%s2 + $0x10] sm:$0xff]
  %v148 = vld [vmem:[%s2 + $0x18] sm:$0xff]
  %v149 = vld [vmem:[%s2 + $0x20] sm:$0xff]
  %v150 = vld [vmem:[%s2 + $0x28] sm:$0xff]
  %v151 = vld [vmem:[%s2 + $0x30] sm:$0xff]
  %v152 = vld [vmem:[%s2 + $0x38] sm:$0xff]
  %v153 = vld [vmem:[%s2 + $0x40] sm:$0xff]
  %v154 = vld [vmem:[%s2 + $0x48] sm:$0xff]
  %v155 = vld [vmem:[%s2 + $0x50] sm:$0xff]
  %v156 = vld [vmem:[%s2 + $0x58] sm:$0xff]
  %v157 = vld [vmem:[%s2 + $0x60] sm:$0xff]
  %v158 = vld [vmem:[%s2 + $0x68] sm:$0xff]
  %v159 = vld [vmem:[%s2 + $0x70] sm:$0xff]
  %v160 = vld [vmem:[%s2 + $0x78] sm:$0xff]
  %v161 = vld [vmem:[%s2 + $0x80] sm:$0xff]
  %v162 = vld [vmem:[%s2 + $0x88] sm:$0xff]
  %v163 = vld [vmem:[%s2 + $0x90] sm:$0xff]
  %v164 = vld [vmem:[%s2 + $0x98] sm:$0xff]
  %v165 = vld [vmem:[%s2 + $0xa0] sm:$0xff]
  %v166 = vld [vmem:[%s2 + $0xa8] sm:$0xff]
  %v167 = vld [vmem:[%s2 + $0xb0] sm:$0xff]
  %v168 = vld [vmem:[%s2 + $0xb8] sm:$0xff]
  %v169 = vld [vmem:[%s2 + $0xc0] sm:$0xff]
  %v170 = vld [vmem:[%s2 + $0xc8] sm:$0xff]
  %v171 = vld [vmem:[%s2 + $0xd0] sm:$0xff]
  %v172 = vld [vmem:[%s2 + $0xd8] sm:$0xff]
  %v173 = vld [vmem:[%s2 + $0xe0] sm:$0xff]
  %v174 = vld [vmem:[%s2 + $0xe8] sm:$0xff]
  %v175 = vld [vmem:[%s2 + $0xf0] sm:$0xff]
  %v176 = vld [vmem:[%s2 + $0xf8] sm:$0xff]
  %v177 = vld [vmem:[%s2 + $0x100] sm:$0xff]
  %v178 = vld [vmem:[%s2 + $0x108] sm:$0xff]
  %v179 = vld [vmem:[%s2 + $0x110] sm:$0xff]
  %v180 = vld [vmem:[%s2 + $0x118] sm:$0xff]
  %v181 = vld [vmem:[%s2 + $0x120] sm:$0xff]
  %v182 = vld [vmem:[%s2 + $0x128] sm:$0xff]
  %v183 = vld [vmem:[%s2 + $0x130] sm:$0xff]
  %v184 = vld [vmem:[%s2 + $0x138] sm:$0xff]
  %v185 = vld [vmem:[%s2 + $0x140] sm:$0xff]
  %v186 = vld [vmem:[%s2 + $0x148] sm:$0xff]
  %v187 = vld [vmem:[%s2 + $0x150] sm:$0xff]
  %v188 = vld [vmem:[%s2 + $0x158] sm:$0xff]
  %v189 = vld [vmem:[%s2 + $0x160] sm:$0xff]
  %v190 = vld [vmem:[%s2 + $0x168] sm:$0xff]
  %v191 = vld [vmem:[%s2 + $0x170] sm:$0xff]
  %v192 = vld [vmem:[%s2 + $0x178] sm:$0xff]
  %v193 = vld [vmem:[%s2 + $0x180] sm:$0xff]
  %v194 = vld [vmem:[%s2 + $0x188] sm:$0xff]
  %v195 = vld [vmem:[%s2 + $0x190] sm:$0xff]
  %v196 = vld [vmem:[%s2 + $0x198] sm:$0xff]
  %v197 = vld [vmem:[%s2 + $0x1a0] sm:$0xff]
  %v198 = vld [vmem:[%s2 + $0x1a8] sm:$0xff]
  %v199 = vld [vmem:[%s2 + $0x1b0] sm:$0xff]
  %v200 = vld [vmem:[%s2 + $0x1b8] sm:$0xff]
  %v201 = vld [vmem:[%s2 + $0x1c0] sm:$0xff]
  %v202 = vld [vmem:[%s2 + $0x1c8] sm:$0xff]
  %v203 = vld [vmem:[%s2 + $0x1d0] sm:$0xff]
  %v204 = vld [vmem:[%s2 + $0x1d8] sm:$0xff]
  %v205 = vld [vmem:[%s2 + $0x1e0] sm:$0xff]
  %v206 = vld [vmem:[%s2 + $0x1e8] sm:$0xff]
  %v207 = vld [vmem:[%s2 + $0x1f0] sm:$0xff]
  %v208 = vld [vmem:[%s2 + $0x1f8] sm:$0xff]
  %v209 = vld [vmem:[%s3] sm:$0xff]
  %vm210 = vcmask 7168
  %v212 = vsel %vm210, %v17, 0
  %v215 = vsel %vm210, %v81, 0
  %217 = vmatprep.subr.mxu0 0.0
  %218 = vmatpush1.xpose.msra.mxu0 %v215
  %219 = vmatprep.subr.mxu0 0.0
  %220 = vmatpush1.xpose.msra.mxu0 0.0
  %221 = vmatprep.subr.mxu0 0.0
  %222 = vmatpush1.xpose.msra.mxu0 0.0
  %223 = vmatprep.subr.mxu0 0.0
  %224 = vmatpush1.xpose.msra.mxu0 0.0
  %225 = vmatprep.subr.mxu0 0.0
  %226 = vmatpush1.xpose.msra.mxu0 0.0
  %227 = vmatprep.subr.mxu0 0.0
  %228 = vmatpush1.xpose.msra.mxu0 0.0
  %229 = vmatprep.subr.mxu0 0.0
  %230 = vmatpush1.xpose.msra.mxu0 0.0
  %231 = vmatprep.subr.mxu0 0.0
  %232 = vmatpush1.xpose.msra.mxu0 0.0
  %233 = vmatprep.subr.mxu0 0.0
  %234 = vmatpush1.xpose.msra.mxu0 0.0
  %235 = vmatprep.subr.mxu0 0.0
  %236 = vmatpush1.xpose.msra.mxu0 0.0
  %237 = vmatprep.subr.mxu0 0.0
  %238 = vmatpush1.xpose.msra.mxu0 0.0
  %239 = vmatprep.subr.mxu0 0.0
  %240 = vmatpush1.xpose.msra.mxu0 0.0
  %241 = vmatprep.subr.mxu0 0.0
  %242 = vmatpush1.xpose.msra.mxu0 0.0
  %243 = vmatprep.subr.mxu0 0.0
  %244 = vmatpush1.xpose.msra.mxu0 0.0
  %245 = vmatprep.subr.mxu0 0.0
  %246 = vmatpush1.xpose.msra.mxu0 0.0
  %247 = vmatprep.subr.mxu0 0.0
  %248 = vmatpush1.xpose.msra.mxu0 0.0
  %249 = vmatprep.subr.mxu0 0.0
  %250 = vmatpush1.xpose.msra.mxu0 0.0
  %251 = vmatprep.subr.mxu0 0.0
  %252 = vmatpush1.xpose.msra.mxu0 0.0
  %253 = vmatprep.subr.mxu0 0.0
  %254 = vmatpush1.xpose.msra.mxu0 0.0
  %255 = vmatprep.subr.mxu0 0.0
  %256 = vmatpush1.xpose.msra.mxu0 0.0
  %257 = vmatprep.subr.mxu0 0.0
  %258 = vmatpush1.xpose.msra.mxu0 0.0
  %259 = vmatprep.subr.mxu0 0.0
  %260 = vmatpush1.xpose.msra.mxu0 0.0
  %261 = vmatprep.subr.mxu0 0.0
  %262 = vmatpush1.xpose.msra.mxu0 0.0
  %263 = vmatprep.subr.mxu0 0.0
  %264 = vmatpush1.xpose.msra.mxu0 0.0
  %265 = vmatprep.subr.mxu0 0.0
  %266 = vmatpush1.xpose.msra.mxu0 0.0
  %267 = vmatprep.subr.mxu0 0.0
  %268 = vmatpush1.xpose.msra.mxu0 0.0
  %269 = vmatprep.subr.mxu0 0.0
  %270 = vmatpush1.xpose.msra.mxu0 0.0
  %271 = vmatprep.subr.mxu0 0.0
  %272 = vmatpush1.xpose.msra.mxu0 0.0
  %273 = vmatprep.subr.mxu0 0.0
  %274 = vmatpush1.xpose.msra.mxu0 0.0
  %275 = vmatprep.subr.mxu0 0.0
  %276 = vmatpush1.xpose.msra.mxu0 0.0
  %277 = vmatprep.subr.mxu0 0.0
  %278 = vmatpush1.xpose.msra.mxu0 0.0
  %279 = vmatprep.subr.mxu0 0.0
  %280 = vmatpush1.xpose.msra.mxu0 0.0
  %281 = vmatprep.mubr.f32.mxu0 0.0
  %282 = vmatmul.mubr.f32.gmra.mrb[0].mxu0 %v212
  %v283 = vpop.f32.mrb[0].mxu0
  %v284 = vadd.f32 %v209, %v283
  %v285 = vpop.f32.mrb[0].mxu0
  %286 = vdwg.mxu0
  %v288 = vsel %vm210, %v18, 0
  %v291 = vsel %vm210, %v82, 0
  %293 = vmatprep.subr.mxu0 0.0
  %294 = vmatpush1.xpose.msra.mxu0 %v291
  %295 = vmatprep.subr.mxu0 0.0
  %296 = vmatpush1.xpose.msra.mxu0 0.0
  %297 = vmatprep.subr.mxu0 0.0
  %298 = vmatpush1.xpose.msra.mxu0 0.0
  %299 = vmatprep.subr.mxu0 0.0
  %300 = vmatpush1.xpose.msra.mxu0 0.0
  %301 = vmatprep.subr.mxu0 0.0
  %302 = vmatpush1.xpose.msra.mxu0 0.0
  %303 = vmatprep.subr.mxu0 0.0
  %304 = vmatpush1.xpose.msra.mxu0 0.0
  %305 = vmatprep.subr.mxu0 0.0
  %306 = vmatpush1.xpose.msra.mxu0 0.0
  %307 = vmatprep.subr.mxu0 0.0
  %308 = vmatpush1.xpose.msra.mxu0 0.0
  %309 = vmatprep.subr.mxu0 0.0
  %310 = vmatpush1.xpose.msra.mxu0 0.0
  %311 = vmatprep.subr.mxu0 0.0
  %312 = vmatpush1.xpose.msra.mxu0 0.0
  %313 = vmatprep.subr.mxu0 0.0
  %314 = vmatpush1.xpose.msra.mxu0 0.0
  %315 = vmatprep.subr.mxu0 0.0
  %316 = vmatpush1.xpose.msra.mxu0 0.0
  %317 = vmatprep.subr.mxu0 0.0
  %318 = vmatpush1.xpose.msra.mxu0 0.0
  %319 = vmatprep.subr.mxu0 0.0
  %320 = vmatpush1.xpose.msra.mxu0 0.0
  %321 = vmatprep.subr.mxu0 0.0
  %322 = vmatpush1.xpose.msra.mxu0 0.0
  %323 = vmatprep.subr.mxu0 0.0
  %324 = vmatpush1.xpose.msra.mxu0 0.0
  %325 = vmatprep.subr.mxu0 0.0
  %326 = vmatpush1.xpose.msra.mxu0 0.0
  %327 = vmatprep.subr.mxu0 0.0
  %328 = vmatpush1.xpose.msra.mxu0 0.0
  %329 = vmatprep.subr.mxu0 0.0
  %330 = vmatpush1.xpose.msra.mxu0 0.0
  %331 = vmatprep.subr.mxu0 0.0
  %332 = vmatpush1.xpose.msra.mxu0 0.0
  %333 = vmatprep.subr.mxu0 0.0
  %334 = vmatpush1.xpose.msra.mxu0 0.0
  %335 = vmatprep.subr.mxu0 0.0
  %336 = vmatpush1.xpose.msra.mxu0 0.0
  %337 = vmatprep.subr.mxu0 0.0
  %338 = vmatpush1.xpose.msra.mxu0 0.0
  %339 = vmatprep.subr.mxu0 0.0
  %340 = vmatpush1.xpose.msra.mxu0 0.0
  %341 = vmatprep.subr.mxu0 0.0
  %342 = vmatpush1.xpose.msra.mxu0 0.0
  %343 = vmatprep.subr.mxu0 0.0
  %344 = vmatpush1.xpose.msra.mxu0 0.0
  %345 = vmatprep.subr.mxu0 0.0
  %346 = vmatpush1.xpose.msra.mxu0 0.0
  %347 = vmatprep.subr.mxu0 0.0
  %348 = vmatpush1.xpose.msra.mxu0 0.0
  %349 = vmatprep.subr.mxu0 0.0
  %350 = vmatpush1.xpose.msra.mxu0 0.0
  %351 = vmatprep.subr.mxu0 0.0
  %352 = vmatpush1.xpose.msra.mxu0 0.0
  %353 = vmatprep.subr.mxu0 0.0
  %354 = vmatpush1.xpose.msra.mxu0 0.0
  %355 = vmatprep.subr.mxu0 0.0
  %356 = vmatpush1.xpose.msra.mxu0 0.0
  %357 = vmatprep.mubr.f32.mxu0 0.0
  %358 = vmatmul.mubr.f32.gmra.mrb[0].mxu0 %v288
  %v359 = vpop.f32.mrb[0].mxu0
  %v360 = vadd.f32 %v209, %v359
  %v361 = vpop.f32.mrb[0].mxu0
  %362 = vdwg.mxu0
  %v364 = vsel %vm210, %v19, 0
  %v367 = vsel %vm210, %v83, 0
  %369 = vmatprep.subr.mxu0 0.0
  %370 = vmatpush1.xpose.msra.mxu0 %v367
  %371 = vmatprep.subr.mxu0 0.0
  %372 = vmatpush1.xpose.msra.mxu0 0.0
  %373 = vmatprep.subr.mxu0 0.0
  %374 = vmatpush1.xpose.msra.mxu0 0.0
  %375 = vmatprep.subr.mxu0 0.0
  %376 = vmatpush1.xpose.msra.mxu0 0.0
  %377 = vmatprep.subr.mxu0 0.0
  %378 = vmatpush1.xpose.msra.mxu0 0.0
  %379 = vmatprep.subr.mxu0 0.0
  %380 = vmatpush1.xpose.msra.mxu0 0.0
  %381 = vmatprep.subr.mxu0 0.0
  %382 = vmatpush1.xpose.msra.mxu0 0.0
  %383 = vmatprep.subr.mxu0 0.0
  %384 = vmatpush1.xpose.msra.mxu0 0.0
  %385 = vmatprep.subr.mxu0 0.0
  %386 = vmatpush1.xpose.msra.mxu0 0.0
  %387 = vmatprep.subr.mxu0 0.0
  %388 = vmatpush1.xpose.msra.mxu0 0.0
  %389 = vmatprep.subr.mxu0 0.0
  %390 = vmatpush1.xpose.msra.mxu0 0.0
  %391 = vmatprep.subr.mxu0 0.0
  %392 = vmatpush1.xpose.msra.mxu0 0.0
  %393 = vmatprep.subr.mxu0 0.0
  %394 = vmatpush1.xpose.msra.mxu0 0.0
  %395 = vmatprep.subr.mxu0 0.0
  %396 = vmatpush1.xpose.msra.mxu0 0.0
  %397 = vmatprep.subr.mxu0 0.0
  %398 = vmatpush1.xpose.msra.mxu0 0.0
  %399 = vmatprep.subr.mxu0 0.0
  %400 = vmatpush1.xpose.msra.mxu0 0.0
  %401 = vmatprep.subr.mxu0 0.0
  %402 = vmatpush1.xpose.msra.mxu0 0.0
  %403 = vmatprep.subr.mxu0 0.0
  %404 = vmatpush1.xpose.msra.mxu0 0.0
  %405 = vmatprep.subr.mxu0 0.0
  %406 = vmatpush1.xpose.msra.mxu0 0.0
  %407 = vmatprep.subr.mxu0 0.0
  %408 = vmatpush1.xpose.msra.mxu0 0.0
  %409 = vmatprep.subr.mxu0 0.0
  %410 = vmatpush1.xpose.msra.mxu0 0.0
  %411 = vmatprep.subr.mxu0 0.0
  %412 = vmatpush1.xpose.msra.mxu0 0.0
  %413 = vmatprep.subr.mxu0 0.0
  %414 = vmatpush1.xpose.msra.mxu0 0.0
  %415 = vmatprep.subr.mxu0 0.0
  %416 = vmatpush1.xpose.msra.mxu0 0.0
  %417 = vmatprep.subr.mxu0 0.0
  %418 = vmatpush1.xpose.msra.mxu0 0.0
  %419 = vmatprep.subr.mxu0 0.0
  %420 = vmatpush1.xpose.msra.mxu0 0.0
  %421 = vmatprep.subr.mxu0 0.0
  %422 = vmatpush1.xpose.msra.mxu0 0.0
  %423 = vmatprep.subr.mxu0 0.0
  %424 = vmatpush1.xpose.msra.mxu0 0.0
  %425 = vmatprep.subr.mxu0 0.0
  %426 = vmatpush1.xpose.msra.mxu0 0.0
  %427 = vmatprep.subr.mxu0 0.0
  %428 = vmatpush1.xpose.msra.mxu0 0.0
  %429 = vmatprep.subr.mxu0 0.0
  %430 = vmatpush1.xpose.msra.mxu0 0.0
  %431 = vmatprep.subr.mxu0 0.0
  %432 = vmatpush1.xpose.msra.mxu0 0.0
  %433 = vmatprep.mubr.f32.mxu0 0.0
  %434 = vmatmul.mubr.f32.gmra.mrb[0].mxu0 %v364
  %v435 = vpop.f32.mrb[0].mxu0
  %v436 = vadd.f32 %v209, %v435
  %v437 = vpop.f32.mrb[0].mxu0
  %438 = vdwg.mxu0
  %v440 = vsel %vm210, %v20, 0
  %v443 = vsel %vm210, %v84, 0
  %445 = vmatprep.subr.mxu0 0.0
  %446 = vmatpush1.xpose.msra.mxu0 %v443
  %447 = vmatprep.subr.mxu0 0.0
  %448 = vmatpush1.xpose.msra.mxu0 0.0
  %449 = vmatprep.subr.mxu0 0.0
  %450 = vmatpush1.xpose.msra.mxu0 0.0
  %451 = vmatprep.subr.mxu0 0.0
  %452 = vmatpush1.xpose.msra.mxu0 0.0
  %453 = vmatprep.subr.mxu0 0.0
  %454 = vmatpush1.xpose.msra.mxu0 0.0
  %455 = vmatprep.subr.mxu0 0.0
  %456 = vmatpush1.xpose.msra.mxu0 0.0
  %457 = vmatprep.subr.mxu0 0.0
  %458 = vmatpush1.xpose.msra.mxu0 0.0
  %459 = vmatprep.subr.mxu0 0.0
  %460 = vmatpush1.xpose.msra.mxu0 0.0
  %461 = vmatprep.subr.mxu0 0.0
  %462 = vmatpush1.xpose.msra.mxu0 0.0
  %463 = vmatprep.subr.mxu0 0.0
  %464 = vmatpush1.xpose.msra.mxu0 0.0
  %465 = vmatprep.subr.mxu0 0.0
  %466 = vmatpush1.xpose.msra.mxu0 0.0
  %467 = vmatprep.subr.mxu0 0.0
  %468 = vmatpush1.xpose.msra.mxu0 0.0
  %469 = vmatprep.subr.mxu0 0.0
  %470 = vmatpush1.xpose.msra.mxu0 0.0
  %471 = vmatprep.subr.mxu0 0.0
  %472 = vmatpush1.xpose.msra.mxu0 0.0
  %473 = vmatprep.subr.mxu0 0.0
  %474 = vmatpush1.xpose.msra.mxu0 0.0
  %475 = vmatprep.subr.mxu0 0.0
  %476 = vmatpush1.xpose.msra.mxu0 0.0
  %477 = vmatprep.subr.mxu0 0.0
  %478 = vmatpush1.xpose.msra.mxu0 0.0
  %479 = vmatprep.subr.mxu0 0.0
  %480 = vmatpush1.xpose.msra.mxu0 0.0
  %481 = vmatprep.subr.mxu0 0.0
  %482 = vmatpush1.xpose.msra.mxu0 0.0
  %483 = vmatprep.subr.mxu0 0.0
  %484 = vmatpush1.xpose.msra.mxu0 0.0
  %485 = vmatprep.subr.mxu0 0.0
  %486 = vmatpush1.xpose.msra.mxu0 0.0
  %487 = vmatprep.subr.mxu0 0.0
  %488 = vmatpush1.xpose.msra.mxu0 0.0
  %489 = vmatprep.subr.mxu0 0.0
  %490 = vmatpush1.xpose.msra.mxu0 0.0
  %491 = vmatprep.subr.mxu0 0.0
  %492 = vmatpush1.xpose.msra.mxu0 0.0
  %493 = vmatprep.subr.mxu0 0.0
  %494 = vmatpush1.xpose.msra.mxu0 0.0
  %495 = vmatprep.subr.mxu0 0.0
  %496 = vmatpush1.xpose.msra.mxu0 0.0
  %497 = vmatprep.subr.mxu0 0.0
  %498 = vmatpush1.xpose.msra.mxu0 0.0
  %499 = vmatprep.subr.mxu0 0.0
  %500 = vmatpush1.xpose.msra.mxu0 0.0
  %501 = vmatprep.subr.mxu0 0.0
  %502 = vmatpush1.xpose.msra.mxu0 0.0
  %503 = vmatprep.subr.mxu0 0.0
  %504 = vmatpush1.xpose.msra.mxu0 0.0
  %505 = vmatprep.subr.mxu0 0.0
  %506 = vmatpush1.xpose.msra.mxu0 0.0
  %507 = vmatprep.subr.mxu0 0.0
  %508 = vmatpush1.xpose.msra.mxu0 0.0
  %509 = vmatprep.mubr.f32.mxu0 0.0
  %510 = vmatmul.mubr.f32.gmra.mrb[0].mxu0 %v440
  %v511 = vpop.f32.mrb[0].mxu0
  %v512 = vadd.f32 %v209, %v511
  %v513 = vpop.f32.mrb[0].mxu0
  %514 = vdwg.mxu0
  %v516 = vsel %vm210, %v21, 0
  %v519 = vsel %vm210, %v85, 0
  %521 = vmatprep.subr.mxu0 0.0
  %522 = vmatpush1.xpose.msra.mxu0 %v519
  %523 = vmatprep.subr.mxu0 0.0
  %524 = vmatpush1.xpose.msra.mxu0 0.0
  %525 = vmatprep.subr.mxu0 0.0
  %526 = vmatpush1.xpose.msra.mxu0 0.0
  %527 = vmatprep.subr.mxu0 0.0
  %528 = vmatpush1.xpose.msra.mxu0 0.0
  %529 = vmatprep.subr.mxu0 0.0
  %530 = vmatpush1.xpose.msra.mxu0 0.0
  %531 = vmatprep.subr.mxu0 0.0
  %532 = vmatpush1.xpose.msra.mxu0 0.0
  %533 = vmatprep.subr.mxu0 0.0
  %534 = vmatpush1.xpose.msra.mxu0 0.0
  %535 = vmatprep.subr.mxu0 0.0
  %536 = vmatpush1.xpose.msra.mxu0 0.0
  %537 = vmatprep.subr.mxu0 0.0
  %538 = vmatpush1.xpose.msra.mxu0 0.0
  %539 = vmatprep.subr.mxu0 0.0
  %540 = vmatpush1.xpose.msra.mxu0 0.0
  %541 = vmatprep.subr.mxu0 0.0
  %542 = vmatpush1.xpose.msra.mxu0 0.0
  %543 = vmatprep.subr.mxu0 0.0
  %544 = vmatpush1.xpose.msra.mxu0 0.0
  %545 = vmatprep.subr.mxu0 0.0
  %546 = vmatpush1.xpose.msra.mxu0 0.0
  %547 = vmatprep.subr.mxu0 0.0
  %548 = vmatpush1.xpose.msra.mxu0 0.0
  %549 = vmatprep.subr.mxu0 0.0
  %550 = vmatpush1.xpose.msra.mxu0 0.0
  %551 = vmatprep.subr.mxu0 0.0
  %552 = vmatpush1.xpose.msra.mxu0 0.0
  %553 = vmatprep.subr.mxu0 0.0
  %554 = vmatpush1.xpose.msra.mxu0 0.0
  %555 = vmatprep.subr.mxu0 0.0
  %556 = vmatpush1.xpose.msra.mxu0 0.0
  %557 = vmatprep.subr.mxu0 0.0
  %558 = vmatpush1.xpose.msra.mxu0 0.0
  %559 = vmatprep.subr.mxu0 0.0
  %560 = vmatpush1.xpose.msra.mxu0 0.0
  %561 = vmatprep.subr.mxu0 0.0
  %562 = vmatpush1.xpose.msra.mxu0 0.0
  %563 = vmatprep.subr.mxu0 0.0
  %564 = vmatpush1.xpose.msra.mxu0 0.0
  %565 = vmatprep.subr.mxu0 0.0
  %566 = vmatpush1.xpose.msra.mxu0 0.0
  %567 = vmatprep.subr.mxu0 0.0
  %568 = vmatpush1.xpose.msra.mxu0 0.0
  %569 = vmatprep.subr.mxu0 0.0
  %570 = vmatpush1.xpose.msra.mxu0 0.0
  %571 = vmatprep.subr.mxu0 0.0
  %572 = vmatpush1.xpose.msra.mxu0 0.0
  %573 = vmatprep.subr.mxu0 0.0
  %574 = vmatpush1.xpose.msra.mxu0 0.0
  %575 = vmatprep.subr.mxu0 0.0
  %576 = vmatpush1.xpose.msra.mxu0 0.0
  %577 = vmatprep.subr.mxu0 0.0
  %578 = vmatpush1.xpose.msra.mxu0 0.0
  %579 = vmatprep.subr.mxu0 0.0
  %580 = vmatpush1.xpose.msra.mxu0 0.0
  %581 = vmatprep.subr.mxu0 0.0
  %582 = vmatpush1.xpose.msra.mxu0 0.0
  %583 = vmatprep.subr.mxu0 0.0
  %584 = vmatpush1.xpose.msra.mxu0 0.0
  %585 = vmatprep.mubr.f32.mxu0 0.0
  %586 = vmatmul.mubr.f32.gmra.mrb[0].mxu0 %v516
  %v587 = vpop.f32.mrb[0].mxu0
  %v588 = vadd.f32 %v209, %v587
  %v589 = vpop.f32.mrb[0].mxu0
  %590 = vdwg.mxu0
  %v592 = vsel %vm210, %v22, 0
  %v595 = vsel %vm210, %v86, 0
  %597 = vmatprep.subr.mxu0 0.0
  %598 = vmatpush1.xpose.msra.mxu0 %v595
  %599 = vmatprep.subr.mxu0 0.0
  %600 = vmatpush1.xpose.msra.mxu0 0.0
  %601 = vmatprep.subr.mxu0 0.0
  %602 = vmatpush1.xpose.msra.mxu0 0.0
  %603 = vmatprep.subr.mxu0 0.0
  %604 = vmatpush1.xpose.msra.mxu0 0.0
  %605 = vmatprep.subr.mxu0 0.0
  %606 = vmatpush1.xpose.msra.mxu0 0.0
  %607 = vmatprep.subr.mxu0 0.0
  %608 = vmatpush1.xpose.msra.mxu0 0.0
  %609 = vmatprep.subr.mxu0 0.0
  %610 = vmatpush1.xpose.msra.mxu0 0.0
  %611 = vmatprep.subr.mxu0 0.0
  %612 = vmatpush1.xpose.msra.mxu0 0.0
  %613 = vmatprep.subr.mxu0 0.0
  %614 = vmatpush1.xpose.msra.mxu0 0.0
  %615 = vmatprep.subr.mxu0 0.0
  %616 = vmatpush1.xpose.msra.mxu0 0.0
  %617 = vmatprep.subr.mxu0 0.0
  %618 = vmatpush1.xpose.msra.mxu0 0.0
  %619 = vmatprep.subr.mxu0 0.0
  %620 = vmatpush1.xpose.msra.mxu0 0.0
  %621 = vmatprep.subr.mxu0 0.0
  %622 = vmatpush1.xpose.msra.mxu0 0.0
  %623 = vmatprep.subr.mxu0 0.0
  %624 = vmatpush1.xpose.msra.mxu0 0.0
  %625 = vmatprep.subr.mxu0 0.0
  %626 = vmatpush1.xpose.msra.mxu0 0.0
  %627 = vmatprep.subr.mxu0 0.0
  %628 = vmatpush1.xpose.msra.mxu0 0.0
  %629 = vmatprep.subr.mxu0 0.0
  %630 = vmatpush1.xpose.msra.mxu0 0.0
  %631 = vmatprep.subr.mxu0 0.0
  %632 = vmatpush1.xpose.msra.mxu0 0.0
  %633 = vmatprep.subr.mxu0 0.0
  %634 = vmatpush1.xpose.msra.mxu0 0.0
  %635 = vmatprep.subr.mxu0 0.0
  %636 = vmatpush1.xpose.msra.mxu0 0.0
  %637 = vmatprep.subr.mxu0 0.0
  %638 = vmatpush1.xpose.msra.mxu0 0.0
  %639 = vmatprep.subr.mxu0 0.0
  %640 = vmatpush1.xpose.msra.mxu0 0.0
  %641 = vmatprep.subr.mxu0 0.0
  %642 = vmatpush1.xpose.msra.mxu0 0.0
  %643 = vmatprep.subr.mxu0 0.0
  %644 = vmatpush1.xpose.msra.mxu0 0.0
  %645 = vmatprep.subr.mxu0 0.0
  %646 = vmatpush1.xpose.msra.mxu0 0.0
  %647 = vmatprep.subr.mxu0 0.0
  %648 = vmatpush1.xpose.msra.mxu0 0.0
  %649 = vmatprep.subr.mxu0 0.0
  %650 = vmatpush1.xpose.msra.mxu0 0.0
  %651 = vmatprep.subr.mxu0 0.0
  %652 = vmatpush1.xpose.msra.mxu0 0.0
  %653 = vmatprep.subr.mxu0 0.0
  %654 = vmatpush1.xpose.msra.mxu0 0.0
  %655 = vmatprep.subr.mxu0 0.0
  %656 = vmatpush1.xpose.msra.mxu0 0.0
  %657 = vmatprep.subr.mxu0 0.0
  %658 = vmatpush1.xpose.msra.mxu0 0.0
  %659 = vmatprep.subr.mxu0 0.0
  %660 = vmatpush1.xpose.msra.mxu0 0.0
  %661 = vmatprep.mubr.f32.mxu0 0.0
  %662 = vmatmul.mubr.f32.gmra.mrb[0].mxu0 %v592
  %v663 = vpop.f32.mrb[0].mxu0
  %v664 = vadd.f32 %v209, %v663
  %v665 = vpop.f32.mrb[0].mxu0
  %666 = vdwg.mxu0
  %v668 = vsel %vm210, %v23, 0
  %v671 = vsel %vm210, %v87, 0
  %673 = vmatprep.subr.mxu0 0.0
  %674 = vmatpush1.xpose.msra.mxu0 %v671
  %675 = vmatprep.subr.mxu0 0.0
  %676 = vmatpush1.xpose.msra.mxu0 0.0
  %677 = vmatprep.subr.mxu0 0.0
  %678 = vmatpush1.xpose.msra.mxu0 0.0
  %679 = vmatprep.subr.mxu0 0.0
  %680 = vmatpush1.xpose.msra.mxu0 0.0
  %681 = vmatprep.subr.mxu0 0.0
  %682 = vmatpush1.xpose.msra.mxu0 0.0
  %683 = vmatprep.subr.mxu0 0.0
  %684 = vmatpush1.xpose.msra.mxu0 0.0
  %685 = vmatprep.subr.mxu0 0.0
  %686 = vmatpush1.xpose.msra.mxu0 0.0
  %687 = vmatprep.subr.mxu0 0.0
  %688 = vmatpush1.xpose.msra.mxu0 0.0
  %689 = vmatprep.subr.mxu0 0.0
  %690 = vmatpush1.xpose.msra.mxu0 0.0
  %691 = vmatprep.subr.mxu0 0.0
  %692 = vmatpush1.xpose.msra.mxu0 0.0
  %693 = vmatprep.subr.mxu0 0.0
  %694 = vmatpush1.xpose.msra.mxu0 0.0
  %695 = vmatprep.subr.mxu0 0.0
  %696 = vmatpush1.xpose.msra.mxu0 0.0
  %697 = vmatprep.subr.mxu0 0.0
  %698 = vmatpush1.xpose.msra.mxu0 0.0
  %699 = vmatprep.subr.mxu0 0.0
  %700 = vmatpush1.xpose.msra.mxu0 0.0
  %701 = vmatprep.subr.mxu0 0.0
  %702 = vmatpush1.xpose.msra.mxu0 0.0
  %703 = vmatprep.subr.mxu0 0.0
  %704 = vmatpush1.xpose.msra.mxu0 0.0
  %705 = vmatprep.subr.mxu0 0.0
  %706 = vmatpush1.xpose.msra.mxu0 0.0
  %707 = vmatprep.subr.mxu0 0.0
  %708 = vmatpush1.xpose.msra.mxu0 0.0
  %709 = vmatprep.subr.mxu0 0.0
  %710 = vmatpush1.xpose.msra.mxu0 0.0
  %711 = vmatprep.subr.mxu0 0.0
  %712 = vmatpush1.xpose.msra.mxu0 0.0
  %713 = vmatprep.subr.mxu0 0.0
  %714 = vmatpush1.xpose.msra.mxu0 0.0
  %715 = vmatprep.subr.mxu0 0.0
  %716 = vmatpush1.xpose.msra.mxu0 0.0
  %717 = vmatprep.subr.mxu0 0.0
  %718 = vmatpush1.xpose.msra.mxu0 0.0
  %719 = vmatprep.subr.mxu0 0.0
  %720 = vmatpush1.xpose.msra.mxu0 0.0
  %721 = vmatprep.subr.mxu0 0.0
  %722 = vmatpush1.xpose.msra.mxu0 0.0
  %723 = vmatprep.subr.mxu0 0.0
  %724 = vmatpush1.xpose.msra.mxu0 0.0
  %725 = vmatprep.subr.mxu0 0.0
  %726 = vmatpush1.xpose.msra.mxu0 0.0
  %727 = vmatprep.subr.mxu0 0.0
  %728 = vmatpush1.xpose.msra.mxu0 0.0
  %729 = vmatprep.subr.mxu0 0.0
  %730 = vmatpush1.xpose.msra.mxu0 0.0
  %731 = vmatprep.subr.mxu0 0.0
  %732 = vmatpush1.xpose.msra.mxu0 0.0
  %733 = vmatprep.subr.mxu0 0.0
  %734 = vmatpush1.xpose.msra.mxu0 0.0
  %735 = vmatprep.subr.mxu0 0.0
  %736 = vmatpush1.xpose.msra.mxu0 0.0
  %737 = vmatprep.mubr.f32.mxu0 0.0
  %738 = vmatmul.mubr.f32.gmra.mrb[0].mxu0 %v668
  %v739 = vpop.f32.mrb[0].mxu0
  %v740 = vadd.f32 %v209, %v739
  %v741 = vpop.f32.mrb[0].mxu0
  %742 = vdwg.mxu0
  %v744 = vsel %vm210, %v24, 0
  %v747 = vsel %vm210, %v88, 0
  %749 = vmatprep.subr.mxu0 0.0
  %750 = vmatpush1.xpose.msra.mxu0 %v747
  %751 = vmatprep.subr.mxu0 0.0
  %752 = vmatpush1.xpose.msra.mxu0 0.0
  %753 = vmatprep.subr.mxu0 0.0
  %754 = vmatpush1.xpose.msra.mxu0 0.0
  %755 = vmatprep.subr.mxu0 0.0
  %756 = vmatpush1.xpose.msra.mxu0 0.0
  %757 = vmatprep.subr.mxu0 0.0
  %758 = vmatpush1.xpose.msra.mxu0 0.0
  %759 = vmatprep.subr.mxu0 0.0
  %760 = vmatpush1.xpose.msra.mxu0 0.0
  %761 = vmatprep.subr.mxu0 0.0
  %762 = vmatpush1.xpose.msra.mxu0 0.0
  %763 = vmatprep.subr.mxu0 0.0
  %764 = vmatpush1.xpose.msra.mxu0 0.0
  %765 = vmatprep.subr.mxu0 0.0
  %766 = vmatpush1.xpose.msra.mxu0 0.0
  %767 = vmatprep.subr.mxu0 0.0
  %768 = vmatpush1.xpose.msra.mxu0 0.0
  %769 = vmatprep.subr.mxu0 0.0
  %770 = vmatpush1.xpose.msra.mxu0 0.0
  %771 = vmatprep.subr.mxu0 0.0
  %772 = vmatpush1.xpose.msra.mxu0 0.0
  %773 = vmatprep.subr.mxu0 0.0
  %774 = vmatpush1.xpose.msra.mxu0 0.0
  %775 = vmatprep.subr.mxu0 0.0
  %776 = vmatpush1.xpose.msra.mxu0 0.0
  %777 = vmatprep.subr.mxu0 0.0
  %778 = vmatpush1.xpose.msra.mxu0 0.0
  %779 = vmatprep.subr.mxu0 0.0
  %780 = vmatpush1.xpose.msra.mxu0 0.0
  %781 = vmatprep.subr.mxu0 0.0
  %782 = vmatpush1.xpose.msra.mxu0 0.0
  %783 = vmatprep.subr.mxu0 0.0
  %784 = vmatpush1.xpose.msra.mxu0 0.0
  %785 = vmatprep.subr.mxu0 0.0
  %786 = vmatpush1.xpose.msra.mxu0 0.0
  %787 = vmatprep.subr.mxu0 0.0
  %788 = vmatpush1.xpose.msra.mxu0 0.0
  %789 = vmatprep.subr.mxu0 0.0
  %790 = vmatpush1.xpose.msra.mxu0 0.0
  %791 = vmatprep.subr.mxu0 0.0
  %792 = vmatpush1.xpose.msra.mxu0 0.0
  %793 = vmatprep.subr.mxu0 0.0
  %794 = vmatpush1.xpose.msra.mxu0 0.0
  %795 = vmatprep.subr.mxu0 0.0
  %796 = vmatpush1.xpose.msra.mxu0 0.0
  %797 = vmatprep.subr.mxu0 0.0
  %798 = vmatpush1.xpose.msra.mxu0 0.0
  %799 = vmatprep.subr.mxu0 0.0
  %800 = vmatpush1.xpose.msra.mxu0 0.0
  %801 = vmatprep.subr.mxu0 0.0
  %802 = vmatpush1.xpose.msra.mxu0 0.0
  %803 = vmatprep.subr.mxu0 0.0
  %804 = vmatpush1.xpose.msra.mxu0 0.0
  %805 = vmatprep.subr.mxu0 0.0
  %806 = vmatpush1.xpose.msra.mxu0 0.0
  %807 = vmatprep.subr.mxu0 0.0
  %808 = vmatpush1.xpose.msra.mxu0 0.0
  %809 = vmatprep.subr.mxu0 0.0
  %810 = vmatpush1.xpose.msra.mxu0 0.0
  %811 = vmatprep.subr.mxu0 0.0
  %812 = vmatpush1.xpose.msra.mxu0 0.0
  %813 = vmatprep.mubr.f32.mxu0 0.0
  %814 = vmatmul.mubr.f32.gmra.mrb[0].mxu0 %v744
  %v815 = vpop.f32.mrb[0].mxu0
  %v816 = vadd.f32 %v209, %v815
  %v817 = vpop.f32.mrb[0].mxu0
  %818 = vdwg.mxu0
  %v820 = vsel %vm210, %v25, 0
  %v823 = vsel %vm210, %v89, 0
  %825 = vmatprep.subr.mxu0 0.0
  %826 = vmatpush1.xpose.msra.mxu0 %v823
  %827 = vmatprep.subr.mxu0 0.0
  %828 = vmatpush1.xpose.msra.mxu0 0.0
  %829 = vmatprep.subr.mxu0 0.0
  %830 = vmatpush1.xpose.msra.mxu0 0.0
  %831 = vmatprep.subr.mxu0 0.0
  %832 = vmatpush1.xpose.msra.mxu0 0.0
  %833 = vmatprep.subr.mxu0 0.0
  %834 = vmatpush1.xpose.msra.mxu0 0.0
  %835 = vmatprep.subr.mxu0 0.0
  %836 = vmatpush1.xpose.msra.mxu0 0.0
  %837 = vmatprep.subr.mxu0 0.0
  %838 = vmatpush1.xpose.msra.mxu0 0.0
  %839 = vmatprep.subr.mxu0 0.0
  %840 = vmatpush1.xpose.msra.mxu0 0.0
  %841 = vmatprep.subr.mxu0 0.0
  %842 = vmatpush1.xpose.msra.mxu0 0.0
  %843 = vmatprep.subr.mxu0 0.0
  %844 = vmatpush1.xpose.msra.mxu0 0.0
  %845 = vmatprep.subr.mxu0 0.0
  %846 = vmatpush1.xpose.msra.mxu0 0.0
  %847 = vmatprep.subr.mxu0 0.0
  %848 = vmatpush1.xpose.msra.mxu0 0.0
  %849 = vmatprep.subr.mxu0 0.0
  %850 = vmatpush1.xpose.msra.mxu0 0.0
  %851 = vmatprep.subr.mxu0 0.0
  %852 = vmatpush1.xpose.msra.mxu0 0.0
  %853 = vmatprep.subr.mxu0 0.0
  %854 = vmatpush1.xpose.msra.mxu0 0.0
  %855 = vmatprep.subr.mxu0 0.0
  %856 = vmatpush1.xpose.msra.mxu0 0.0
  %857 = vmatprep.subr.mxu0 0.0
  %858 = vmatpush1.xpose.msra.mxu0 0.0
  %859 = vmatprep.subr.mxu0 0.0
  %860 = vmatpush1.xpose.msra.mxu0 0.0
  %861 = vmatprep.subr.mxu0 0.0
  %862 = vmatpush1.xpose.msra.mxu0 0.0
  %863 = vmatprep.subr.mxu0 0.0
  %864 = vmatpush1.xpose.msra.mxu0 0.0
  %865 = vmatprep.subr.mxu0 0.0
  %866 = vmatpush1.xpose.msra.mxu0 0.0
  %867 = vmatprep.subr.mxu0 0.0
  %868 = vmatpush1.xpose.msra.mxu0 0.0
  %869 = vmatprep.subr.mxu0 0.0
  %870 = vmatpush1.xpose.msra.mxu0 0.0
  %871 = vmatprep.subr.mxu0 0.0
  %872 = vmatpush1.xpose.msra.mxu0 0.0
  %873 = vmatprep.subr.mxu0 0.0
  %874 = vmatpush1.xpose.msra.mxu0 0.0
  %875 = vmatprep.subr.mxu0 0.0
  %876 = vmatpush1.xpose.msra.mxu0 0.0
  %877 = vmatprep.subr.mxu0 0.0
  %878 = vmatpush1.xpose.msra.mxu0 0.0
  %879 = vmatprep.subr.mxu0 0.0
  %880 = vmatpush1.xpose.msra.mxu0 0.0
  %881 = vmatprep.subr.mxu0 0.0
  %882 = vmatpush1.xpose.msra.mxu0 0.0
  %883 = vmatprep.subr.mxu0 0.0
  %884 = vmatpush1.xpose.msra.mxu0 0.0
  %885 = vmatprep.subr.mxu0 0.0
  %886 = vmatpush1.xpose.msra.mxu0 0.0
  %887 = vmatprep.subr.mxu0 0.0
  %888 = vmatpush1.xpose.msra.mxu0 0.0
  %889 = vmatprep.mubr.f32.mxu0 0.0
  %890 = vmatmul.mubr.f32.gmra.mrb[0].mxu0 %v820
  %v891 = vpop.f32.mrb[0].mxu0
  %v892 = vadd.f32 %v209, %v891
  %v893 = vpop.f32.mrb[0].mxu0
  %894 = vdwg.mxu0
  %v896 = vsel %vm210, %v26, 0
  %v899 = vsel %vm210, %v90, 0
  %901 = vmatprep.subr.mxu0 0.0
  %902 = vmatpush1.xpose.msra.mxu0 %v899
  %903 = vmatprep.subr.mxu0 0.0
  %904 = vmatpush1.xpose.msra.mxu0 0.0
  %905 = vmatprep.subr.mxu0 0.0
  %906 = vmatpush1.xpose.msra.mxu0 0.0
  %907 = vmatprep.subr.mxu0 0.0
  %908 = vmatpush1.xpose.msra.mxu0 0.0
  %909 = vmatprep.subr.mxu0 0.0
  %910 = vmatpush1.xpose.msra.mxu0 0.0
  %911 = vmatprep.subr.mxu0 0.0
  %912 = vmatpush1.xpose.msra.mxu0 0.0
  %913 = vmatprep.subr.mxu0 0.0
  %914 = vmatpush1.xpose.msra.mxu0 0.0
  %915 = vmatprep.subr.mxu0 0.0
  %916 = vmatpush1.xpose.msra.mxu0 0.0
  %917 = vmatprep.subr.mxu0 0.0
  %918 = vmatpush1.xpose.msra.mxu0 0.0
  %919 = vmatprep.subr.mxu0 0.0
  %920 = vmatpush1.xpose.msra.mxu0 0.0
  %921 = vmatprep.subr.mxu0 0.0
  %922 = vmatpush1.xpose.msra.mxu0 0.0
  %923 = vmatprep.subr.mxu0 0.0
  %924 = vmatpush1.xpose.msra.mxu0 0.0
  %925 = vmatprep.subr.mxu0 0.0
  %926 = vmatpush1.xpose.msra.mxu0 0.0
  %927 = vmatprep.subr.mxu0 0.0
  %928 = vmatpush1.xpose.msra.mxu0 0.0
  %929 = vmatprep.subr.mxu0 0.0
  %930 = vmatpush1.xpose.msra.mxu0 0.0
  %931 = vmatprep.subr.mxu0 0.0
  %932 = vmatpush1.xpose.msra.mxu0 0.0
  %933 = vmatprep.subr.mxu0 0.0
  %934 = vmatpush1.xpose.msra.mxu0 0.0
  %935 = vmatprep.subr.mxu0 0.0
  %936 = vmatpush1.xpose.msra.mxu0 0.0
  %937 = vmatprep.subr.mxu0 0.0
  %938 = vmatpush1.xpose.msra.mxu0 0.0
  %939 = vmatprep.subr.mxu0 0.0
  %940 = vmatpush1.xpose.msra.mxu0 0.0
  %941 = vmatprep.subr.mxu0 0.0
  %942 = vmatpush1.xpose.msra.mxu0 0.0
  %943 = vmatprep.subr.mxu0 0.0
  %944 = vmatpush1.xpose.msra.mxu0 0.0
  %945 = vmatprep.subr.mxu0 0.0
  %946 = vmatpush1.xpose.msra.mxu0 0.0
  %947 = vmatprep.subr.mxu0 0.0
  %948 = vmatpush1.xpose.msra.mxu0 0.0
  %949 = vmatprep.subr.mxu0 0.0
  %950 = vmatpush1.xpose.msra.mxu0 0.0
  %951 = vmatprep.subr.mxu0 0.0
  %952 = vmatpush1.xpose.msra.mxu0 0.0
  %953 = vmatprep.subr.mxu0 0.0
  %954 = vmatpush1.xpose.msra.mxu0 0.0
  %955 = vmatprep.subr.mxu0 0.0
  %956 = vmatpush1.xpose.msra.mxu0 0.0
  %957 = vmatprep.subr.mxu0 0.0
  %958 = vmatpush1.xpose.msra.mxu0 0.0
  %959 = vmatprep.subr.mxu0 0.0
  %960 = vmatpush1.xpose.msra.mxu0 0.0
  %961 = vmatprep.subr.mxu0 0.0
  %962 = vmatpush1.xpose.msra.mxu0 0.0
  %963 = vmatprep.subr.mxu0 0.0
  %964 = vmatpush1.xpose.msra.mxu0 0.0
  %965 = vmatprep.mubr.f32.mxu0 0.0
  %966 = vmatmul.mubr.f32.gmra.mrb[0].mxu0 %v896
  %v967 = vpop.f32.mrb[0].mxu0
  %v968 = vadd.f32 %v209, %v967
  %v969 = vpop.f32.mrb[0].mxu0
  %970 = vdwg.mxu0
  %v972 = vsel %vm210, %v27, 0
  %v975 = vsel %vm210, %v91, 0
  %977 = vmatprep.subr.mxu0 0.0
  %978 = vmatpush1.xpose.msra.mxu0 %v975
  %979 = vmatprep.subr.mxu0 0.0
  %980 = vmatpush1.xpose.msra.mxu0 0.0
  %981 = vmatprep.subr.mxu0 0.0
  %982 = vmatpush1.xpose.msra.mxu0 0.0
  %983 = vmatprep.subr.mxu0 0.0
  %984 = vmatpush1.xpose.msra.mxu0 0.0
  %985 = vmatprep.subr.mxu0 0.0
  %986 = vmatpush1.xpose.msra.mxu0 0.0
  %987 = vmatprep.subr.mxu0 0.0
  %988 = vmatpush1.xpose.msra.mxu0 0.0
  %989 = vmatprep.subr.mxu0 0.0
  %990 = vmatpush1.xpose.msra.mxu0 0.0
  %991 = vmatprep.subr.mxu0 0.0
  %992 = vmatpush1.xpose.msra.mxu0 0.0
  %993 = vmatprep.subr.mxu0 0.0
  %994 = vmatpush1.xpose.msra.mxu0 0.0
  %995 = vmatprep.subr.mxu0 0.0
  %996 = vmatpush1.xpose.msra.mxu0 0.0
  %997 = vmatprep.subr.mxu0 0.0
  %998 = vmatpush1.xpose.msra.mxu0 0.0
  %999 = vmatprep.subr.mxu0 0.0
  %1000 = vmatpush1.xpose.msra.mxu0 0.0
  %1001 = vmatprep.subr.mxu0 0.0
  %1002 = vmatpush1.xpose.msra.mxu0 0.0
  %1003 = vmatprep.subr.mxu0 0.0
  %1004 = vmatpush1.xpose.msra.mxu0 0.0
  %1005 = vmatprep.subr.mxu0 0.0
  %1006 = vmatpush1.xpose.msra.mxu0 0.0
  %1007 = vmatprep.subr.mxu0 0.0
  %1008 = vmatpush1.xpose.msra.mxu0 0.0
  %1009 = vmatprep.subr.mxu0 0.0
  %1010 = vmatpush1.xpose.msra.mxu0 0.0
  %1011 = vmatprep.subr.mxu0 0.0
  %1012 = vmatpush1.xpose.msra.mxu0 0.0
  %1013 = vmatprep.subr.mxu0 0.0
  %1014 = vmatpush1.xpose.msra.mxu0 0.0
  %1015 = vmatprep.subr.mxu0 0.0
  %1016 = vmatpush1.xpose.msra.mxu0 0.0
  %1017 = vmatprep.subr.mxu0 0.0
  %1018 = vmatpush1.xpose.msra.mxu0 0.0
  %1019 = vmatprep.subr.mxu0 0.0
  %1020 = vmatpush1.xpose.msra.mxu0 0.0
  %1021 = vmatprep.subr.mxu0 0.0
  %1022 = vmatpush1.xpose.msra.mxu0 0.0
  %1023 = vmatprep.subr.mxu0 0.0
  %1024 = vmatpush1.xpose.msra.mxu0 0.0
  %1025 = vmatprep.subr.mxu0 0.0
  %1026 = vmatpush1.xpose.msra.mxu0 0.0
  %1027 = vmatprep.subr.mxu0 0.0
  %1028 = vmatpush1.xpose.msra.mxu0 0.0
  %1029 = vmatprep.subr.mxu0 0.0
  %1030 = vmatpush1.xpose.msra.mxu0 0.0
  %1031 = vmatprep.subr.mxu0 0.0
  %1032 = vmatpush1.xpose.msra.mxu0 0.0
  %1033 = vmatprep.subr.mxu0 0.0
  %1034 = vmatpush1.xpose.msra.mxu0 0.0
  %1035 = vmatprep.subr.mxu0 0.0
  %1036 = vmatpush1.xpose.msra.mxu0 0.0
  %1037 = vmatprep.subr.mxu0 0.0
  %1038 = vmatpush1.xpose.msra.mxu0 0.0
  %1039 = vmatprep.subr.mxu0 0.0
  %1040 = vmatpush1.xpose.msra.mxu0 0.0
  %1041 = vmatprep.mubr.f32.mxu0 0.0
  %1042 = vmatmul.mubr.f32.gmra.mrb[0].mxu0 %v972
  %v1043 = vpop.f32.mrb[0].mxu0
  %v1044 = vadd.f32 %v209, %v1043
  %v1045 = vpop.f32.mrb[0].mxu0
  %1046 = vdwg.mxu0
  %v1048 = vsel %vm210, %v28, 0
  %v1051 = vsel %vm210, %v92, 0
  %1053 = vmatprep.subr.mxu0 0.0
  %1054 = vmatpush1.xpose.msra.mxu0 %v1051
  %1055 = vmatprep.subr.mxu0 0.0
  %1056 = vmatpush1.xpose.msra.mxu0 0.0
  %1057 = vmatprep.subr.mxu0 0.0
  %1058 = vmatpush1.xpose.msra.mxu0 0.0
  %1059 = vmatprep.subr.mxu0 0.0
  %1060 = vmatpush1.xpose.msra.mxu0 0.0
  %1061 = vmatprep.subr.mxu0 0.0
  %1062 = vmatpush1.xpose.msra.mxu0 0.0
  %1063 = vmatprep.subr.mxu0 0.0
  %1064 = vmatpush1.xpose.msra.mxu0 0.0
  %1065 = vmatprep.subr.mxu0 0.0
  %1066 = vmatpush1.xpose.msra.mxu0 0.0
  %1067 = vmatprep.subr.mxu0 0.0
  %1068 = vmatpush1.xpose.msra.mxu0 0.0
  %1069 = vmatprep.subr.mxu0 0.0
  %1070 = vmatpush1.xpose.msra.mxu0 0.0
  %1071 = vmatprep.subr.mxu0 0.0
  %1072 = vmatpush1.xpose.msra.mxu0 0.0
  %1073 = vmatprep.subr.mxu0 0.0
  %1074 = vmatpush1.xpose.msra.mxu0 0.0
  %1075 = vmatprep.subr.mxu0 0.0
  %1076 = vmatpush1.xpose.msra.mxu0 0.0
  %1077 = vmatprep.subr.mxu0 0.0
  %1078 = vmatpush1.xpose.msra.mxu0 0.0
  %1079 = vmatprep.subr.mxu0 0.0
  %1080 = vmatpush1.xpose.msra.mxu0 0.0
  %1081 = vmatprep.subr.mxu0 0.0
  %1082 = vmatpush1.xpose.msra.mxu0 0.0
  %1083 = vmatprep.subr.mxu0 0.0
  %1084 = vmatpush1.xpose.msra.mxu0 0.0
  %1085 = vmatprep.subr.mxu0 0.0
  %1086 = vmatpush1.xpose.msra.mxu0 0.0
  %1087 = vmatprep.subr.mxu0 0.0
  %1088 = vmatpush1.xpose.msra.mxu0 0.0
  %1089 = vmatprep.subr.mxu0 0.0
  %1090 = vmatpush1.xpose.msra.mxu0 0.0
  %1091 = vmatprep.subr.mxu0 0.0
  %1092 = vmatpush1.xpose.msra.mxu0 0.0
  %1093 = vmatprep.subr.mxu0 0.0
  %1094 = vmatpush1.xpose.msra.mxu0 0.0
  %1095 = vmatprep.subr.mxu0 0.0
  %1096 = vmatpush1.xpose.msra.mxu0 0.0
  %1097 = vmatprep.subr.mxu0 0.0
  %1098 = vmatpush1.xpose.msra.mxu0 0.0
  %1099 = vmatprep.subr.mxu0 0.0
  %1100 = vmatpush1.xpose.msra.mxu0 0.0
  %1101 = vmatprep.subr.mxu0 0.0
  %1102 = vmatpush1.xpose.msra.mxu0 0.0
  %1103 = vmatprep.subr.mxu0 0.0
  %1104 = vmatpush1.xpose.msra.mxu0 0.0
  %1105 = vmatprep.subr.mxu0 0.0
  %1106 = vmatpush1.xpose.msra.mxu0 0.0
  %1107 = vmatprep.subr.mxu0 0.0
  %1108 = vmatpush1.xpose.msra.mxu0 0.0
  %1109 = vmatprep.subr.mxu0 0.0
  %1110 = vmatpush1.xpose.msra.mxu0 0.0
  %1111 = vmatprep.subr.mxu0 0.0
  %1112 = vmatpush1.xpose.msra.mxu0 0.0
  %1113 = vmatprep.subr.mxu0 0.0
  %1114 = vmatpush1.xpose.msra.mxu0 0.0
  %1115 = vmatprep.subr.mxu0 0.0
  %1116 = vmatpush1.xpose.msra.mxu0 0.0
  %1117 = vmatprep.mubr.f32.mxu0 0.0
  %1118 = vmatmul.mubr.f32.gmra.mrb[0].mxu0 %v1048
  %v1119 = vpop.f32.mrb[0].mxu0
  %v1120 = vadd.f32 %v209, %v1119
  %v1121 = vpop.f32.mrb[0].mxu0
  %1122 = vdwg.mxu0
  %v1124 = vsel %vm210, %v29, 0
  %v1127 = vsel %vm210, %v93, 0
  %1129 = vmatprep.subr.mxu0 0.0
  %1130 = vmatpush1.xpose.msra.mxu0 %v1127
  %1131 = vmatprep.subr.mxu0 0.0
  %1132 = vmatpush1.xpose.msra.mxu0 0.0
  %1133 = vmatprep.subr.mxu0 0.0
  %1134 = vmatpush1.xpose.msra.mxu0 0.0
  %1135 = vmatprep.subr.mxu0 0.0
  %1136 = vmatpush1.xpose.msra.mxu0 0.0
  %1137 = vmatprep.subr.mxu0 0.0
  %1138 = vmatpush1.xpose.msra.mxu0 0.0
  %1139 = vmatprep.subr.mxu0 0.0
  %1140 = vmatpush1.xpose.msra.mxu0 0.0
  %1141 = vmatprep.subr.mxu0 0.0
  %1142 = vmatpush1.xpose.msra.mxu0 0.0
  %1143 = vmatprep.subr.mxu0 0.0
  %1144 = vmatpush1.xpose.msra.mxu0 0.0
  %1145 = vmatprep.subr.mxu0 0.0
  %1146 = vmatpush1.xpose.msra.mxu0 0.0
  %1147 = vmatprep.subr.mxu0 0.0
  %1148 = vmatpush1.xpose.msra.mxu0 0.0
  %1149 = vmatprep.subr.mxu0 0.0
  %1150 = vmatpush1.xpose.msra.mxu0 0.0
  %1151 = vmatprep.subr.mxu0 0.0
  %1152 = vmatpush1.xpose.msra.mxu0 0.0
  %1153 = vmatprep.subr.mxu0 0.0
  %1154 = vmatpush1.xpose.msra.mxu0 0.0
  %1155 = vmatprep.subr.mxu0 0.0
  %1156 = vmatpush1.xpose.msra.mxu0 0.0
  %1157 = vmatprep.subr.mxu0 0.0
  %1158 = vmatpush1.xpose.msra.mxu0 0.0
  %1159 = vmatprep.subr.mxu0 0.0
  %1160 = vmatpush1.xpose.msra.mxu0 0.0
  %1161 = vmatprep.subr.mxu0 0.0
  %1162 = vmatpush1.xpose.msra.mxu0 0.0
  %1163 = vmatprep.subr.mxu0 0.0
  %1164 = vmatpush1.xpose.msra.mxu0 0.0
  %1165 = vmatprep.subr.mxu0 0.0
  %1166 = vmatpush1.xpose.msra.mxu0 0.0
  %1167 = vmatprep.subr.mxu0 0.0
  %1168 = vmatpush1.xpose.msra.mxu0 0.0
  %1169 = vmatprep.subr.mxu0 0.0
  %1170 = vmatpush1.xpose.msra.mxu0 0.0
  %1171 = vmatprep.subr.mxu0 0.0
  %1172 = vmatpush1.xpose.msra.mxu0 0.0
  %1173 = vmatprep.subr.mxu0 0.0
  %1174 = vmatpush1.xpose.msra.mxu0 0.0
  %1175 = vmatprep.subr.mxu0 0.0
  %1176 = vmatpush1.xpose.msra.mxu0 0.0
  %1177 = vmatprep.subr.mxu0 0.0
  %1178 = vmatpush1.xpose.msra.mxu0 0.0
  %1179 = vmatprep.subr.mxu0 0.0
  %1180 = vmatpush1.xpose.msra.mxu0 0.0
  %1181 = vmatprep.subr.mxu0 0.0
  %1182 = vmatpush1.xpose.msra.mxu0 0.0
  %1183 = vmatprep.subr.mxu0 0.0
  %1184 = vmatpush1.xpose.msra.mxu0 0.0
  %1185 = vmatprep.subr.mxu0 0.0
  %1186 = vmatpush1.xpose.msra.mxu0 0.0
  %1187 = vmatprep.subr.mxu0 0.0
  %1188 = vmatpush1.xpose.msra.mxu0 0.0
  %1189 = vmatprep.subr.mxu0 0.0
  %1190 = vmatpush1.xpose.msra.mxu0 0.0
  %1191 = vmatprep.subr.mxu0 0.0
  %1192 = vmatpush1.xpose.msra.mxu0 0.0
  %1193 = vmatprep.mubr.f32.mxu0 0.0
  %1194 = vmatmul.mubr.f32.gmra.mrb[0].mxu0 %v1124
  %v1195 = vpop.f32.mrb[0].mxu0
  %v1196 = vadd.f32 %v209, %v1195
  %v1197 = vpop.f32.mrb[0].mxu0
  %1198 = vdwg.mxu0
  %v1200 = vsel %vm210, %v30, 0
  %v1203 = vsel %vm210, %v94, 0
  %1205 = vmatprep.subr.mxu0 0.0
  %1206 = vmatpush1.xpose.msra.mxu0 %v1203
  %1207 = vmatprep.subr.mxu0 0.0
  %1208 = vmatpush1.xpose.msra.mxu0 0.0
  %1209 = vmatprep.subr.mxu0 0.0
  %1210 = vmatpush1.xpose.msra.mxu0 0.0
  %1211 = vmatprep.subr.mxu0 0.0
  %1212 = vmatpush1.xpose.msra.mxu0 0.0
  %1213 = vmatprep.subr.mxu0 0.0
  %1214 = vmatpush1.xpose.msra.mxu0 0.0
  %1215 = vmatprep.subr.mxu0 0.0
  %1216 = vmatpush1.xpose.msra.mxu0 0.0
  %1217 = vmatprep.subr.mxu0 0.0
  %1218 = vmatpush1.xpose.msra.mxu0 0.0
  %1219 = vmatprep.subr.mxu0 0.0
  %1220 = vmatpush1.xpose.msra.mxu0 0.0
  %1221 = vmatprep.subr.mxu0 0.0
  %1222 = vmatpush1.xpose.msra.mxu0 0.0
  %1223 = vmatprep.subr.mxu0 0.0
  %1224 = vmatpush1.xpose.msra.mxu0 0.0
  %1225 = vmatprep.subr.mxu0 0.0
  %1226 = vmatpush1.xpose.msra.mxu0 0.0
  %1227 = vmatprep.subr.mxu0 0.0
  %1228 = vmatpush1.xpose.msra.mxu0 0.0
  %1229 = vmatprep.subr.mxu0 0.0
  %1230 = vmatpush1.xpose.msra.mxu0 0.0
  %1231 = vmatprep.subr.mxu0 0.0
  %1232 = vmatpush1.xpose.msra.mxu0 0.0
  %1233 = vmatprep.subr.mxu0 0.0
  %1234 = vmatpush1.xpose.msra.mxu0 0.0
  %1235 = vmatprep.subr.mxu0 0.0
  %1236 = vmatpush1.xpose.msra.mxu0 0.0
  %1237 = vmatprep.subr.mxu0 0.0
  %1238 = vmatpush1.xpose.msra.mxu0 0.0
  %1239 = vmatprep.subr.mxu0 0.0
  %1240 = vmatpush1.xpose.msra.mxu0 0.0
  %1241 = vmatprep.subr.mxu0 0.0
  %1242 = vmatpush1.xpose.msra.mxu0 0.0
  %1243 = vmatprep.subr.mxu0 0.0
  %1244 = vmatpush1.xpose.msra.mxu0 0.0
  %1245 = vmatprep.subr.mxu0 0.0
  %1246 = vmatpush1.xpose.msra.mxu0 0.0
  %1247 = vmatprep.subr.mxu0 0.0
  %1248 = vmatpush1.xpose.msra.mxu0 0.0
  %1249 = vmatprep.subr.mxu0 0.0
  %1250 = vmatpush1.xpose.msra.mxu0 0.0
  %1251 = vmatprep.subr.mxu0 0.0
  %1252 = vmatpush1.xpose.msra.mxu0 0.0
  %1253 = vmatprep.subr.mxu0 0.0
  %1254 = vmatpush1.xpose.msra.mxu0 0.0
  %1255 = vmatprep.subr.mxu0 0.0
  %1256 = vmatpush1.xpose.msra.mxu0 0.0
  %1257 = vmatprep.subr.mxu0 0.0
  %1258 = vmatpush1.xpose.msra.mxu0 0.0
  %1259 = vmatprep.subr.mxu0 0.0
  %1260 = vmatpush1.xpose.msra.mxu0 0.0
  %1261 = vmatprep.subr.mxu0 0.0
  %1262 = vmatpush1.xpose.msra.mxu0 0.0
  %1263 = vmatprep.subr.mxu0 0.0
  %1264 = vmatpush1.xpose.msra.mxu0 0.0
  %1265 = vmatprep.subr.mxu0 0.0
  %1266 = vmatpush1.xpose.msra.mxu0 0.0
  %1267 = vmatprep.subr.mxu0 0.0
  %1268 = vmatpush1.xpose.msra.mxu0 0.0
  %1269 = vmatprep.mubr.f32.mxu0 0.0
  %1270 = vmatmul.mubr.f32.gmra.mrb[0].mxu0 %v1200
  %v1271 = vpop.f32.mrb[0].mxu0
  %v1272 = vadd.f32 %v209, %v1271
  %v1273 = vpop.f32.mrb[0].mxu0
  %1274 = vdwg.mxu0
  %v1276 = vsel %vm210, %v31, 0
  %v1279 = vsel %vm210, %v95, 0
  %1281 = vmatprep.subr.mxu0 0.0
  %1282 = vmatpush1.xpose.msra.mxu0 %v1279
  %1283 = vmatprep.subr.mxu0 0.0
  %1284 = vmatpush1.xpose.msra.mxu0 0.0
  %1285 = vmatprep.subr.mxu0 0.0
  %1286 = vmatpush1.xpose.msra.mxu0 0.0
  %1287 = vmatprep.subr.mxu0 0.0
  %1288 = vmatpush1.xpose.msra.mxu0 0.0
  %1289 = vmatprep.subr.mxu0 0.0
  %1290 = vmatpush1.xpose.msra.mxu0 0.0
  %1291 = vmatprep.subr.mxu0 0.0
  %1292 = vmatpush1.xpose.msra.mxu0 0.0
  %1293 = vmatprep.subr.mxu0 0.0
  %1294 = vmatpush1.xpose.msra.mxu0 0.0
  %1295 = vmatprep.subr.mxu0 0.0
  %1296 = vmatpush1.xpose.msra.mxu0 0.0
  %1297 = vmatprep.subr.mxu0 0.0
  %1298 = vmatpush1.xpose.msra.mxu0 0.0
  %1299 = vmatprep.subr.mxu0 0.0
  %1300 = vmatpush1.xpose.msra.mxu0 0.0
  %1301 = vmatprep.subr.mxu0 0.0
  %1302 = vmatpush1.xpose.msra.mxu0 0.0
  %1303 = vmatprep.subr.mxu0 0.0
  %1304 = vmatpush1.xpose.msra.mxu0 0.0
  %1305 = vmatprep.subr.mxu0 0.0
  %1306 = vmatpush1.xpose.msra.mxu0 0.0
  %1307 = vmatprep.subr.mxu0 0.0
  %1308 = vmatpush1.xpose.msra.mxu0 0.0
  %1309 = vmatprep.subr.mxu0 0.0
  %1310 = vmatpush1.xpose.msra.mxu0 0.0
  %1311 = vmatprep.subr.mxu0 0.0
  %1312 = vmatpush1.xpose.msra.mxu0 0.0
  %1313 = vmatprep.subr.mxu0 0.0
  %1314 = vmatpush1.xpose.msra.mxu0 0.0
  %1315 = vmatprep.subr.mxu0 0.0
  %1316 = vmatpush1.xpose.msra.mxu0 0.0
  %1317 = vmatprep.subr.mxu0 0.0
  %1318 = vmatpush1.xpose.msra.mxu0 0.0
  %1319 = vmatprep.subr.mxu0 0.0
  %1320 = vmatpush1.xpose.msra.mxu0 0.0
  %1321 = vmatprep.subr.mxu0 0.0
  %1322 = vmatpush1.xpose.msra.mxu0 0.0
  %1323 = vmatprep.subr.mxu0 0.0
  %1324 = vmatpush1.xpose.msra.mxu0 0.0
  %1325 = vmatprep.subr.mxu0 0.0
  %1326 = vmatpush1.xpose.msra.mxu0 0.0
  %1327 = vmatprep.subr.mxu0 0.0
  %1328 = vmatpush1.xpose.msra.mxu0 0.0
  %1329 = vmatprep.subr.mxu0 0.0
  %1330 = vmatpush1.xpose.msra.mxu0 0.0
  %1331 = vmatprep.subr.mxu0 0.0
  %1332 = vmatpush1.xpose.msra.mxu0 0.0
  %1333 = vmatprep.subr.mxu0 0.0
  %1334 = vmatpush1.xpose.msra.mxu0 0.0
  %1335 = vmatprep.subr.mxu0 0.0
  %1336 = vmatpush1.xpose.msra.mxu0 0.0
  %1337 = vmatprep.subr.mxu0 0.0
  %1338 = vmatpush1.xpose.msra.mxu0 0.0
  %1339 = vmatprep.subr.mxu0 0.0
  %1340 = vmatpush1.xpose.msra.mxu0 0.0
  %1341 = vmatprep.subr.mxu0 0.0
  %1342 = vmatpush1.xpose.msra.mxu0 0.0
  %1343 = vmatprep.subr.mxu0 0.0
  %1344 = vmatpush1.xpose.msra.mxu0 0.0
  %1345 = vmatprep.mubr.f32.mxu0 0.0
  %1346 = vmatmul.mubr.f32.gmra.mrb[0].mxu0 %v1276
  %v1347 = vpop.f32.mrb[0].mxu0
  %v1348 = vadd.f32 %v209, %v1347
  %v1349 = vpop.f32.mrb[0].mxu0
  %1350 = vdwg.mxu0
  %v1352 = vsel %vm210, %v32, 0
  %v1355 = vsel %vm210, %v96, 0
  %1357 = vmatprep.subr.mxu0 0.0
  %1358 = vmatpush1.xpose.msra.mxu0 %v1355
  %1359 = vmatprep.subr.mxu0 0.0
  %1360 = vmatpush1.xpose.msra.mxu0 0.0
  %1361 = vmatprep.subr.mxu0 0.0
  %1362 = vmatpush1.xpose.msra.mxu0 0.0
  %1363 = vmatprep.subr.mxu0 0.0
  %1364 = vmatpush1.xpose.msra.mxu0 0.0
  %1365 = vmatprep.subr.mxu0 0.0
  %1366 = vmatpush1.xpose.msra.mxu0 0.0
  %1367 = vmatprep.subr.mxu0 0.0
  %1368 = vmatpush1.xpose.msra.mxu0 0.0
  %1369 = vmatprep.subr.mxu0 0.0
  %1370 = vmatpush1.xpose.msra.mxu0 0.0
  %1371 = vmatprep.subr.mxu0 0.0
  %1372 = vmatpush1.xpose.msra.mxu0 0.0
  %1373 = vmatprep.subr.mxu0 0.0
  %1374 = vmatpush1.xpose.msra.mxu0 0.0
  %1375 = vmatprep.subr.mxu0 0.0
  %1376 = vmatpush1.xpose.msra.mxu0 0.0
  %1377 = vmatprep.subr.mxu0 0.0
  %1378 = vmatpush1.xpose.msra.mxu0 0.0
  %1379 = vmatprep.subr.mxu0 0.0
  %1380 = vmatpush1.xpose.msra.mxu0 0.0
  %1381 = vmatprep.subr.mxu0 0.0
  %1382 = vmatpush1.xpose.msra.mxu0 0.0
  %1383 = vmatprep.subr.mxu0 0.0
  %1384 = vmatpush1.xpose.msra.mxu0 0.0
  %1385 = vmatprep.subr.mxu0 0.0
  %1386 = vmatpush1.xpose.msra.mxu0 0.0
  %1387 = vmatprep.subr.mxu0 0.0
  %1388 = vmatpush1.xpose.msra.mxu0 0.0
  %1389 = vmatprep.subr.mxu0 0.0
  %1390 = vmatpush1.xpose.msra.mxu0 0.0
  %1391 = vmatprep.subr.mxu0 0.0
  %1392 = vmatpush1.xpose.msra.mxu0 0.0
  %1393 = vmatprep.subr.mxu0 0.0
  %1394 = vmatpush1.xpose.msra.mxu0 0.0
  %1395 = vmatprep.subr.mxu0 0.0
  %1396 = vmatpush1.xpose.msra.mxu0 0.0
  %1397 = vmatprep.subr.mxu0 0.0
  %1398 = vmatpush1.xpose.msra.mxu0 0.0
  %1399 = vmatprep.subr.mxu0 0.0
  %1400 = vmatpush1.xpose.msra.mxu0 0.0
  %1401 = vmatprep.subr.mxu0 0.0
  %1402 = vmatpush1.xpose.msra.mxu0 0.0
  %1403 = vmatprep.subr.mxu0 0.0
  %1404 = vmatpush1.xpose.msra.mxu0 0.0
  %1405 = vmatprep.subr.mxu0 0.0
  %1406 = vmatpush1.xpose.msra.mxu0 0.0
  %1407 = vmatprep.subr.mxu0 0.0
  %1408 = vmatpush1.xpose.msra.mxu0 0.0
  %1409 = vmatprep.subr.mxu0 0.0
  %1410 = vmatpush1.xpose.msra.mxu0 0.0
  %1411 = vmatprep.subr.mxu0 0.0
  %1412 = vmatpush1.xpose.msra.mxu0 0.0
  %1413 = vmatprep.subr.mxu0 0.0
  %1414 = vmatpush1.xpose.msra.mxu0 0.0
  %1415 = vmatprep.subr.mxu0 0.0
  %1416 = vmatpush1.xpose.msra.mxu0 0.0
  %1417 = vmatprep.subr.mxu0 0.0
  %1418 = vmatpush1.xpose.msra.mxu0 0.0
  %1419 = vmatprep.subr.mxu0 0.0
  %1420 = vmatpush1.xpose.msra.mxu0 0.0
  %1421 = vmatprep.mubr.f32.mxu0 0.0
  %1422 = vmatmul.mubr.f32.gmra.mrb[0].mxu0 %v1352
  %v1423 = vpop.f32.mrb[0].mxu0
  %v1424 = vadd.f32 %v209, %v1423
  %v1425 = vpop.f32.mrb[0].mxu0
  %1426 = vdwg.mxu0
  %v1428 = vsel %vm210, %v33, 0
  %v1431 = vsel %vm210, %v97, 0
  %1433 = vmatprep.subr.mxu0 0.0
  %1434 = vmatpush1.xpose.msra.mxu0 %v1431
  %1435 = vmatprep.subr.mxu0 0.0
  %1436 = vmatpush1.xpose.msra.mxu0 0.0
  %1437 = vmatprep.subr.mxu0 0.0
  %1438 = vmatpush1.xpose.msra.mxu0 0.0
  %1439 = vmatprep.subr.mxu0 0.0
  %1440 = vmatpush1.xpose.msra.mxu0 0.0
  %1441 = vmatprep.subr.mxu0 0.0
  %1442 = vmatpush1.xpose.msra.mxu0 0.0
  %1443 = vmatprep.subr.mxu0 0.0
  %1444 = vmatpush1.xpose.msra.mxu0 0.0
  %1445 = vmatprep.subr.mxu0 0.0
  %1446 = vmatpush1.xpose.msra.mxu0 0.0
  %1447 = vmatprep.subr.mxu0 0.0
  %1448 = vmatpush1.xpose.msra.mxu0 0.0
  %1449 = vmatprep.subr.mxu0 0.0
  %1450 = vmatpush1.xpose.msra.mxu0 0.0
  %1451 = vmatprep.subr.mxu0 0.0
  %1452 = vmatpush1.xpose.msra.mxu0 0.0
  %1453 = vmatprep.subr.mxu0 0.0
  %1454 = vmatpush1.xpose.msra.mxu0 0.0
  %1455 = vmatprep.subr.mxu0 0.0
  %1456 = vmatpush1.xpose.msra.mxu0 0.0
  %1457 = vmatprep.subr.mxu0 0.0
  %1458 = vmatpush1.xpose.msra.mxu0 0.0
  %1459 = vmatprep.subr.mxu0 0.0
  %1460 = vmatpush1.xpose.msra.mxu0 0.0
  %1461 = vmatprep.subr.mxu0 0.0
  %1462 = vmatpush1.xpose.msra.mxu0 0.0
  %1463 = vmatprep.subr.mxu0 0.0
  %1464 = vmatpush1.xpose.msra.mxu0 0.0
  %1465 = vmatprep.subr.mxu0 0.0
  %1466 = vmatpush1.xpose.msra.mxu0 0.0
  %1467 = vmatprep.subr.mxu0 0.0
  %1468 = vmatpush1.xpose.msra.mxu0 0.0
  %1469 = vmatprep.subr.mxu0 0.0
  %1470 = vmatpush1.xpose.msra.mxu0 0.0
  %1471 = vmatprep.subr.mxu0 0.0
  %1472 = vmatpush1.xpose.msra.mxu0 0.0
  %1473 = vmatprep.subr.mxu0 0.0
  %1474 = vmatpush1.xpose.msra.mxu0 0.0
  %1475 = vmatprep.subr.mxu0 0.0
  %1476 = vmatpush1.xpose.msra.mxu0 0.0
  %1477 = vmatprep.subr.mxu0 0.0
  %1478 = vmatpush1.xpose.msra.mxu0 0.0
  %1479 = vmatprep.subr.mxu0 0.0
  %1480 = vmatpush1.xpose.msra.mxu0 0.0
  %1481 = vmatprep.subr.mxu0 0.0
  %1482 = vmatpush1.xpose.msra.mxu0 0.0
  %1483 = vmatprep.subr.mxu0 0.0
  %1484 = vmatpush1.xpose.msra.mxu0 0.0
  %1485 = vmatprep.subr.mxu0 0.0
  %1486 = vmatpush1.xpose.msra.mxu0 0.0
  %1487 = vmatprep.subr.mxu0 0.0
  %1488 = vmatpush1.xpose.msra.mxu0 0.0
  %1489 = vmatprep.subr.mxu0 0.0
  %1490 = vmatpush1.xpose.msra.mxu0 0.0
  %1491 = vmatprep.subr.mxu0 0.0
  %1492 = vmatpush1.xpose.msra.mxu0 0.0
  %1493 = vmatprep.subr.mxu0 0.0
  %1494 = vmatpush1.xpose.msra.mxu0 0.0
  %1495 = vmatprep.subr.mxu0 0.0
  %1496 = vmatpush1.xpose.msra.mxu0 0.0
  %1497 = vmatprep.mubr.f32.mxu0 0.0
  %1498 = vmatmul.mubr.f32.gmra.mrb[0].mxu0 %v1428
  %v1499 = vpop.f32.mrb[0].mxu0
  %v1500 = vadd.f32 %v209, %v1499
  %v1501 = vpop.f32.mrb[0].mxu0
  %1502 = vdwg.mxu0
  %v1504 = vsel %vm210, %v34, 0
  %v1507 = vsel %vm210, %v98, 0
  %1509 = vmatprep.subr.mxu0 0.0
  %1510 = vmatpush1.xpose.msra.mxu0 %v1507
  %1511 = vmatprep.subr.mxu0 0.0
  %1512 = vmatpush1.xpose.msra.mxu0 0.0
  %1513 = vmatprep.subr.mxu0 0.0
  %1514 = vmatpush1.xpose.msra.mxu0 0.0
  %1515 = vmatprep.subr.mxu0 0.0
  %1516 = vmatpush1.xpose.msra.mxu0 0.0
  %1517 = vmatprep.subr.mxu0 0.0
  %1518 = vmatpush1.xpose.msra.mxu0 0.0
  %1519 = vmatprep.subr.mxu0 0.0
  %1520 = vmatpush1.xpose.msra.mxu0 0.0
  %1521 = vmatprep.subr.mxu0 0.0
  %1522 = vmatpush1.xpose.msra.mxu0 0.0
  %1523 = vmatprep.subr.mxu0 0.0
  %1524 = vmatpush1.xpose.msra.mxu0 0.0
  %1525 = vmatprep.subr.mxu0 0.0
  %1526 = vmatpush1.xpose.msra.mxu0 0.0
  %1527 = vmatprep.subr.mxu0 0.0
  %1528 = vmatpush1.xpose.msra.mxu0 0.0
  %1529 = vmatprep.subr.mxu0 0.0
  %1530 = vmatpush1.xpose.msra.mxu0 0.0
  %1531 = vmatprep.subr.mxu0 0.0
  %1532 = vmatpush1.xpose.msra.mxu0 0.0
  %1533 = vmatprep.subr.mxu0 0.0
  %1534 = vmatpush1.xpose.msra.mxu0 0.0
  %1535 = vmatprep.subr.mxu0 0.0
  %1536 = vmatpush1.xpose.msra.mxu0 0.0
  %1537 = vmatprep.subr.mxu0 0.0
  %1538 = vmatpush1.xpose.msra.mxu0 0.0
  %1539 = vmatprep.subr.mxu0 0.0
  %1540 = vmatpush1.xpose.msra.mxu0 0.0
  %1541 = vmatprep.subr.mxu0 0.0
  %1542 = vmatpush1.xpose.msra.mxu0 0.0
  %1543 = vmatprep.subr.mxu0 0.0
  %1544 = vmatpush1.xpose.msra.mxu0 0.0
  %1545 = vmatprep.subr.mxu0 0.0
  %1546 = vmatpush1.xpose.msra.mxu0 0.0
  %1547 = vmatprep.subr.mxu0 0.0
  %1548 = vmatpush1.xpose.msra.mxu0 0.0
  %1549 = vmatprep.subr.mxu0 0.0
  %1550 = vmatpush1.xpose.msra.mxu0 0.0
  %1551 = vmatprep.subr.mxu0 0.0
  %1552 = vmatpush1.xpose.msra.mxu0 0.0
  %1553 = vmatprep.subr.mxu0 0.0
  %1554 = vmatpush1.xpose.msra.mxu0 0.0
  %1555 = vmatprep.subr.mxu0 0.0
  %1556 = vmatpush1.xpose.msra.mxu0 0.0
  %1557 = vmatprep.subr.mxu0 0.0
  %1558 = vmatpush1.xpose.msra.mxu0 0.0
  %1559 = vmatprep.subr.mxu0 0.0
  %1560 = vmatpush1.xpose.msra.mxu0 0.0
  %1561 = vmatprep.subr.mxu0 0.0
  %1562 = vmatpush1.xpose.msra.mxu0 0.0
  %1563 = vmatprep.subr.mxu0 0.0
  %1564 = vmatpush1.xpose.msra.mxu0 0.0
  %1565 = vmatprep.subr.mxu0 0.0
  %1566 = vmatpush1.xpose.msra.mxu0 0.0
  %1567 = vmatprep.subr.mxu0 0.0
  %1568 = vmatpush1.xpose.msra.mxu0 0.0
  %1569 = vmatprep.subr.mxu0 0.0
  %1570 = vmatpush1.xpose.msra.mxu0 0.0
  %1571 = vmatprep.subr.mxu0 0.0
  %1572 = vmatpush1.xpose.msra.mxu0 0.0
  %1573 = vmatprep.mubr.f32.mxu0 0.0
  %1574 = vmatmul.mubr.f32.gmra.mrb[0].mxu0 %v1504
  %v1575 = vpop.f32.mrb[0].mxu0
  %v1576 = vadd.f32 %v209, %v1575
  %v1577 = vpop.f32.mrb[0].mxu0
  %1578 = vdwg.mxu0
  %v1580 = vsel %vm210, %v35, 0
  %v1583 = vsel %vm210, %v99, 0
  %1585 = vmatprep.subr.mxu0 0.0
  %1586 = vmatpush1.xpose.msra.mxu0 %v1583
  %1587 = vmatprep.subr.mxu0 0.0
  %1588 = vmatpush1.xpose.msra.mxu0 0.0
  %1589 = vmatprep.subr.mxu0 0.0
  %1590 = vmatpush1.xpose.msra.mxu0 0.0
  %1591 = vmatprep.subr.mxu0 0.0
  %1592 = vmatpush1.xpose.msra.mxu0 0.0
  %1593 = vmatprep.subr.mxu0 0.0
  %1594 = vmatpush1.xpose.msra.mxu0 0.0
  %1595 = vmatprep.subr.mxu0 0.0
  %1596 = vmatpush1.xpose.msra.mxu0 0.0
  %1597 = vmatprep.subr.mxu0 0.0
  %1598 = vmatpush1.xpose.msra.mxu0 0.0
  %1599 = vmatprep.subr.mxu0 0.0
  %1600 = vmatpush1.xpose.msra.mxu0 0.0
  %1601 = vmatprep.subr.mxu0 0.0
  %1602 = vmatpush1.xpose.msra.mxu0 0.0
  %1603 = vmatprep.subr.mxu0 0.0
  %1604 = vmatpush1.xpose.msra.mxu0 0.0
  %1605 = vmatprep.subr.mxu0 0.0
  %1606 = vmatpush1.xpose.msra.mxu0 0.0
  %1607 = vmatprep.subr.mxu0 0.0
  %1608 = vmatpush1.xpose.msra.mxu0 0.0
  %1609 = vmatprep.subr.mxu0 0.0
  %1610 = vmatpush1.xpose.msra.mxu0 0.0
  %1611 = vmatprep.subr.mxu0 0.0
  %1612 = vmatpush1.xpose.msra.mxu0 0.0
  %1613 = vmatprep.subr.mxu0 0.0
  %1614 = vmatpush1.xpose.msra.mxu0 0.0
  %1615 = vmatprep.subr.mxu0 0.0
  %1616 = vmatpush1.xpose.msra.mxu0 0.0
  %1617 = vmatprep.subr.mxu0 0.0
  %1618 = vmatpush1.xpose.msra.mxu0 0.0
  %1619 = vmatprep.subr.mxu0 0.0
  %1620 = vmatpush1.xpose.msra.mxu0 0.0
  %1621 = vmatprep.subr.mxu0 0.0
  %1622 = vmatpush1.xpose.msra.mxu0 0.0
  %1623 = vmatprep.subr.mxu0 0.0
  %1624 = vmatpush1.xpose.msra.mxu0 0.0
  %1625 = vmatprep.subr.mxu0 0.0
  %1626 = vmatpush1.xpose.msra.mxu0 0.0
  %1627 = vmatprep.subr.mxu0 0.0
  %1628 = vmatpush1.xpose.msra.mxu0 0.0
  %1629 = vmatprep.subr.mxu0 0.0
  %1630 = vmatpush1.xpose.msra.mxu0 0.0
  %1631 = vmatprep.subr.mxu0 0.0
  %1632 = vmatpush1.xpose.msra.mxu0 0.0
  %1633 = vmatprep.subr.mxu0 0.0
  %1634 = vmatpush1.xpose.msra.mxu0 0.0
  %1635 = vmatprep.subr.mxu0 0.0
  %1636 = vmatpush1.xpose.msra.mxu0 0.0
  %1637 = vmatprep.subr.mxu0 0.0
  %1638 = vmatpush1.xpose.msra.mxu0 0.0
  %1639 = vmatprep.subr.mxu0 0.0
  %1640 = vmatpush1.xpose.msra.mxu0 0.0
  %1641 = vmatprep.subr.mxu0 0.0
  %1642 = vmatpush1.xpose.msra.mxu0 0.0
  %1643 = vmatprep.subr.mxu0 0.0
  %1644 = vmatpush1.xpose.msra.mxu0 0.0
  %1645 = vmatprep.subr.mxu0 0.0
  %1646 = vmatpush1.xpose.msra.mxu0 0.0
  %1647 = vmatprep.subr.mxu0 0.0
  %1648 = vmatpush1.xpose.msra.mxu0 0.0
  %1649 = vmatprep.mubr.f32.mxu0 0.0
  %1650 = vmatmul.mubr.f32.gmra.mrb[0].mxu0 %v1580
  %v1651 = vpop.f32.mrb[0].mxu0
  %v1652 = vadd.f32 %v209, %v1651
  %v1653 = vpop.f32.mrb[0].mxu0
  %1654 = vdwg.mxu0
  %v1656 = vsel %vm210, %v36, 0
  %v1659 = vsel %vm210, %v100, 0
  %1661 = vmatprep.subr.mxu0 0.0
  %1662 = vmatpush1.xpose.msra.mxu0 %v1659
  %1663 = vmatprep.subr.mxu0 0.0
  %1664 = vmatpush1.xpose.msra.mxu0 0.0
  %1665 = vmatprep.subr.mxu0 0.0
  %1666 = vmatpush1.xpose.msra.mxu0 0.0
  %1667 = vmatprep.subr.mxu0 0.0
  %1668 = vmatpush1.xpose.msra.mxu0 0.0
  %1669 = vmatprep.subr.mxu0 0.0
  %1670 = vmatpush1.xpose.msra.mxu0 0.0
  %1671 = vmatprep.subr.mxu0 0.0
  %1672 = vmatpush1.xpose.msra.mxu0 0.0
  %1673 = vmatprep.subr.mxu0 0.0
  %1674 = vmatpush1.xpose.msra.mxu0 0.0
  %1675 = vmatprep.subr.mxu0 0.0
  %1676 = vmatpush1.xpose.msra.mxu0 0.0
  %1677 = vmatprep.subr.mxu0 0.0
  %1678 = vmatpush1.xpose.msra.mxu0 0.0
  %1679 = vmatprep.subr.mxu0 0.0
  %1680 = vmatpush1.xpose.msra.mxu0 0.0
  %1681 = vmatprep.subr.mxu0 0.0
  %1682 = vmatpush1.xpose.msra.mxu0 0.0
  %1683 = vmatprep.subr.mxu0 0.0
  %1684 = vmatpush1.xpose.msra.mxu0 0.0
  %1685 = vmatprep.subr.mxu0 0.0
  %1686 = vmatpush1.xpose.msra.mxu0 0.0
  %1687 = vmatprep.subr.mxu0 0.0
  %1688 = vmatpush1.xpose.msra.mxu0 0.0
  %1689 = vmatprep.subr.mxu0 0.0
  %1690 = vmatpush1.xpose.msra.mxu0 0.0
  %1691 = vmatprep.subr.mxu0 0.0
  %1692 = vmatpush1.xpose.msra.mxu0 0.0
  %1693 = vmatprep.subr.mxu0 0.0
  %1694 = vmatpush1.xpose.msra.mxu0 0.0
  %1695 = vmatprep.subr.mxu0 0.0
  %1696 = vmatpush1.xpose.msra.mxu0 0.0
  %1697 = vmatprep.subr.mxu0 0.0
  %1698 = vmatpush1.xpose.msra.mxu0 0.0
  %1699 = vmatprep.subr.mxu0 0.0
  %1700 = vmatpush1.xpose.msra.mxu0 0.0
  %1701 = vmatprep.subr.mxu0 0.0
  %1702 = vmatpush1.xpose.msra.mxu0 0.0
  %1703 = vmatprep.subr.mxu0 0.0
  %1704 = vmatpush1.xpose.msra.mxu0 0.0
  %1705 = vmatprep.subr.mxu0 0.0
  %1706 = vmatpush1.xpose.msra.mxu0 0.0
  %1707 = vmatprep.subr.mxu0 0.0
  %1708 = vmatpush1.xpose.msra.mxu0 0.0
  %1709 = vmatprep.subr.mxu0 0.0
  %1710 = vmatpush1.xpose.msra.mxu0 0.0
  %1711 = vmatprep.subr.mxu0 0.0
  %1712 = vmatpush1.xpose.msra.mxu0 0.0
  %1713 = vmatprep.subr.mxu0 0.0
  %1714 = vmatpush1.xpose.msra.mxu0 0.0
  %1715 = vmatprep.subr.mxu0 0.0
  %1716 = vmatpush1.xpose.msra.mxu0 0.0
  %1717 = vmatprep.subr.mxu0 0.0
  %1718 = vmatpush1.xpose.msra.mxu0 0.0
  %1719 = vmatprep.subr.mxu0 0.0
  %1720 = vmatpush1.xpose.msra.mxu0 0.0
  %1721 = vmatprep.subr.mxu0 0.0
  %1722 = vmatpush1.xpose.msra.mxu0 0.0
  %1723 = vmatprep.subr.mxu0 0.0
  %1724 = vmatpush1.xpose.msra.mxu0 0.0
  %1725 = vmatprep.mubr.f32.mxu0 0.0
  %1726 = vmatmul.mubr.f32.gmra.mrb[0].mxu0 %v1656
  %v1727 = vpop.f32.mrb[0].mxu0
  %v1728 = vadd.f32 %v209, %v1727
  %v1729 = vpop.f32.mrb[0].mxu0
  %1730 = vdwg.mxu0
  %v1732 = vsel %vm210, %v37, 0
  %v1735 = vsel %vm210, %v101, 0
  %1737 = vmatprep.subr.mxu0 0.0
  %1738 = vmatpush1.xpose.msra.mxu0 %v1735
  %1739 = vmatprep.subr.mxu0 0.0
  %1740 = vmatpush1.xpose.msra.mxu0 0.0
  %1741 = vmatprep.subr.mxu0 0.0
  %1742 = vmatpush1.xpose.msra.mxu0 0.0
  %1743 = vmatprep.subr.mxu0 0.0
  %1744 = vmatpush1.xpose.msra.mxu0 0.0
  %1745 = vmatprep.subr.mxu0 0.0
  %1746 = vmatpush1.xpose.msra.mxu0 0.0
  %1747 = vmatprep.subr.mxu0 0.0
  %1748 = vmatpush1.xpose.msra.mxu0 0.0
  %1749 = vmatprep.subr.mxu0 0.0
  %1750 = vmatpush1.xpose.msra.mxu0 0.0
  %1751 = vmatprep.subr.mxu0 0.0
  %1752 = vmatpush1.xpose.msra.mxu0 0.0
  %1753 = vmatprep.subr.mxu0 0.0
  %1754 = vmatpush1.xpose.msra.mxu0 0.0
  %1755 = vmatprep.subr.mxu0 0.0
  %1756 = vmatpush1.xpose.msra.mxu0 0.0
  %1757 = vmatprep.subr.mxu0 0.0
  %1758 = vmatpush1.xpose.msra.mxu0 0.0
  %1759 = vmatprep.subr.mxu0 0.0
  %1760 = vmatpush1.xpose.msra.mxu0 0.0
  %1761 = vmatprep.subr.mxu0 0.0
  %1762 = vmatpush1.xpose.msra.mxu0 0.0
  %1763 = vmatprep.subr.mxu0 0.0
  %1764 = vmatpush1.xpose.msra.mxu0 0.0
  %1765 = vmatprep.subr.mxu0 0.0
  %1766 = vmatpush1.xpose.msra.mxu0 0.0
  %1767 = vmatprep.subr.mxu0 0.0
  %1768 = vmatpush1.xpose.msra.mxu0 0.0
  %1769 = vmatprep.subr.mxu0 0.0
  %1770 = vmatpush1.xpose.msra.mxu0 0.0
  %1771 = vmatprep.subr.mxu0 0.0
  %1772 = vmatpush1.xpose.msra.mxu0 0.0
  %1773 = vmatprep.subr.mxu0 0.0
  %1774 = vmatpush1.xpose.msra.mxu0 0.0
  %1775 = vmatprep.subr.mxu0 0.0
  %1776 = vmatpush1.xpose.msra.mxu0 0.0
  %1777 = vmatprep.subr.mxu0 0.0
  %1778 = vmatpush1.xpose.msra.mxu0 0.0
  %1779 = vmatprep.subr.mxu0 0.0
  %1780 = vmatpush1.xpose.msra.mxu0 0.0
  %1781 = vmatprep.subr.mxu0 0.0
  %1782 = vmatpush1.xpose.msra.mxu0 0.0
  %1783 = vmatprep.subr.mxu0 0.0
  %1784 = vmatpush1.xpose.msra.mxu0 0.0
  %1785 = vmatprep.subr.mxu0 0.0
  %1786 = vmatpush1.xpose.msra.mxu0 0.0
  %1787 = vmatprep.subr.mxu0 0.0
  %1788 = vmatpush1.xpose.msra.mxu0 0.0
  %1789 = vmatprep.subr.mxu0 0.0
  %1790 = vmatpush1.xpose.msra.mxu0 0.0
  %1791 = vmatprep.subr.mxu0 0.0
  %1792 = vmatpush1.xpose.msra.mxu0 0.0
  %1793 = vmatprep.subr.mxu0 0.0
  %1794 = vmatpush1.xpose.msra.mxu0 0.0
  %1795 = vmatprep.subr.mxu0 0.0
  %1796 = vmatpush1.xpose.msra.mxu0 0.0
  %1797 = vmatprep.subr.mxu0 0.0
  %1798 = vmatpush1.xpose.msra.mxu0 0.0
  %1799 = vmatprep.subr.mxu0 0.0
  %1800 = vmatpush1.xpose.msra.mxu0 0.0
  %1801 = vmatprep.mubr.f32.mxu0 0.0
  %1802 = vmatmul.mubr.f32.gmra.mrb[0].mxu0 %v1732
  %v1803 = vpop.f32.mrb[0].mxu0
  %v1804 = vadd.f32 %v209, %v1803
  %v1805 = vpop.f32.mrb[0].mxu0
  %1806 = vdwg.mxu0
  %v1808 = vsel %vm210, %v38, 0
  %v1811 = vsel %vm210, %v102, 0
  %1813 = vmatprep.subr.mxu0 0.0
  %1814 = vmatpush1.xpose.msra.mxu0 %v1811
  %1815 = vmatprep.subr.mxu0 0.0
  %1816 = vmatpush1.xpose.msra.mxu0 0.0
  %1817 = vmatprep.subr.mxu0 0.0
  %1818 = vmatpush1.xpose.msra.mxu0 0.0
  %1819 = vmatprep.subr.mxu0 0.0
  %1820 = vmatpush1.xpose.msra.mxu0 0.0
  %1821 = vmatprep.subr.mxu0 0.0
  %1822 = vmatpush1.xpose.msra.mxu0 0.0
  %1823 = vmatprep.subr.mxu0 0.0
  %1824 = vmatpush1.xpose.msra.mxu0 0.0
  %1825 = vmatprep.subr.mxu0 0.0
  %1826 = vmatpush1.xpose.msra.mxu0 0.0
  %1827 = vmatprep.subr.mxu0 0.0
  %1828 = vmatpush1.xpose.msra.mxu0 0.0
  %1829 = vmatprep.subr.mxu0 0.0
  %1830 = vmatpush1.xpose.msra.mxu0 0.0
  %1831 = vmatprep.subr.mxu0 0.0
  %1832 = vmatpush1.xpose.msra.mxu0 0.0
  %1833 = vmatprep.subr.mxu0 0.0
  %1834 = vmatpush1.xpose.msra.mxu0 0.0
  %1835 = vmatprep.subr.mxu0 0.0
  %1836 = vmatpush1.xpose.msra.mxu0 0.0
  %1837 = vmatprep.subr.mxu0 0.0
  %1838 = vmatpush1.xpose.msra.mxu0 0.0
  %1839 = vmatprep.subr.mxu0 0.0
  %1840 = vmatpush1.xpose.msra.mxu0 0.0
  %1841 = vmatprep.subr.mxu0 0.0
  %1842 = vmatpush1.xpose.msra.mxu0 0.0
  %1843 = vmatprep.subr.mxu0 0.0
  %1844 = vmatpush1.xpose.msra.mxu0 0.0
  %1845 = vmatprep.subr.mxu0 0.0
  %1846 = vmatpush1.xpose.msra.mxu0 0.0
  %1847 = vmatprep.subr.mxu0 0.0
  %1848 = vmatpush1.xpose.msra.mxu0 0.0
  %1849 = vmatprep.subr.mxu0 0.0
  %1850 = vmatpush1.xpose.msra.mxu0 0.0
  %1851 = vmatprep.subr.mxu0 0.0
  %1852 = vmatpush1.xpose.msra.mxu0 0.0
  %1853 = vmatprep.subr.mxu0 0.0
  %1854 = vmatpush1.xpose.msra.mxu0 0.0
  %1855 = vmatprep.subr.mxu0 0.0
  %1856 = vmatpush1.xpose.msra.mxu0 0.0
  %1857 = vmatprep.subr.mxu0 0.0
  %1858 = vmatpush1.xpose.msra.mxu0 0.0
  %1859 = vmatprep.subr.mxu0 0.0
  %1860 = vmatpush1.xpose.msra.mxu0 0.0
  %1861 = vmatprep.subr.mxu0 0.0
  %1862 = vmatpush1.xpose.msra.mxu0 0.0
  %1863 = vmatprep.subr.mxu0 0.0
  %1864 = vmatpush1.xpose.msra.mxu0 0.0
  %1865 = vmatprep.subr.mxu0 0.0
  %1866 = vmatpush1.xpose.msra.mxu0 0.0
  %1867 = vmatprep.subr.mxu0 0.0
  %1868 = vmatpush1.xpose.msra.mxu0 0.0
  %1869 = vmatprep.subr.mxu0 0.0
  %1870 = vmatpush1.xpose.msra.mxu0 0.0
  %1871 = vmatprep.subr.mxu0 0.0
  %1872 = vmatpush1.xpose.msra.mxu0 0.0
  %1873 = vmatprep.subr.mxu0 0.0
  %1874 = vmatpush1.xpose.msra.mxu0 0.0
  %1875 = vmatprep.subr.mxu0 0.0
  %1876 = vmatpush1.xpose.msra.mxu0 0.0
  %1877 = vmatprep.mubr.f32.mxu0 0.0
  %1878 = vmatmul.mubr.f32.gmra.mrb[0].mxu0 %v1808
  %v1879 = vpop.f32.mrb[0].mxu0
  %v1880 = vadd.f32 %v209, %v1879
  %v1881 = vpop.f32.mrb[0].mxu0
  %1882 = vdwg.mxu0
  %v1884 = vsel %vm210, %v39, 0
  %v1887 = vsel %vm210, %v103, 0
  %1889 = vmatprep.subr.mxu0 0.0
  %1890 = vmatpush1.xpose.msra.mxu0 %v1887
  %1891 = vmatprep.subr.mxu0 0.0
  %1892 = vmatpush1.xpose.msra.mxu0 0.0
  %1893 = vmatprep.subr.mxu0 0.0
  %1894 = vmatpush1.xpose.msra.mxu0 0.0
  %1895 = vmatprep.subr.mxu0 0.0
  %1896 = vmatpush1.xpose.msra.mxu0 0.0
  %1897 = vmatprep.subr.mxu0 0.0
  %1898 = vmatpush1.xpose.msra.mxu0 0.0
  %1899 = vmatprep.subr.mxu0 0.0
  %1900 = vmatpush1.xpose.msra.mxu0 0.0
  %1901 = vmatprep.subr.mxu0 0.0
  %1902 = vmatpush1.xpose.msra.mxu0 0.0
  %1903 = vmatprep.subr.mxu0 0.0
  %1904 = vmatpush1.xpose.msra.mxu0 0.0
  %1905 = vmatprep.subr.mxu0 0.0
  %1906 = vmatpush1.xpose.msra.mxu0 0.0
  %1907 = vmatprep.subr.mxu0 0.0
  %1908 = vmatpush1.xpose.msra.mxu0 0.0
  %1909 = vmatprep.subr.mxu0 0.0
  %1910 = vmatpush1.xpose.msra.mxu0 0.0
  %1911 = vmatprep.subr.mxu0 0.0
  %1912 = vmatpush1.xpose.msra.mxu0 0.0
  %1913 = vmatprep.subr.mxu0 0.0
  %1914 = vmatpush1.xpose.msra.mxu0 0.0
  %1915 = vmatprep.subr.mxu0 0.0
  %1916 = vmatpush1.xpose.msra.mxu0 0.0
  %1917 = vmatprep.subr.mxu0 0.0
  %1918 = vmatpush1.xpose.msra.mxu0 0.0
  %1919 = vmatprep.subr.mxu0 0.0
  %1920 = vmatpush1.xpose.msra.mxu0 0.0
  %1921 = vmatprep.subr.mxu0 0.0
  %1922 = vmatpush1.xpose.msra.mxu0 0.0
  %1923 = vmatprep.subr.mxu0 0.0
  %1924 = vmatpush1.xpose.msra.mxu0 0.0
  %1925 = vmatprep.subr.mxu0 0.0
  %1926 = vmatpush1.xpose.msra.mxu0 0.0
  %1927 = vmatprep.subr.mxu0 0.0
  %1928 = vmatpush1.xpose.msra.mxu0 0.0
  %1929 = vmatprep.subr.mxu0 0.0
  %1930 = vmatpush1.xpose.msra.mxu0 0.0
  %1931 = vmatprep.subr.mxu0 0.0
  %1932 = vmatpush1.xpose.msra.mxu0 0.0
  %1933 = vmatprep.subr.mxu0 0.0
  %1934 = vmatpush1.xpose.msra.mxu0 0.0
  %1935 = vmatprep.subr.mxu0 0.0
  %1936 = vmatpush1.xpose.msra.mxu0 0.0
  %1937 = vmatprep.subr.mxu0 0.0
  %1938 = vmatpush1.xpose.msra.mxu0 0.0
  %1939 = vmatprep.subr.mxu0 0.0
  %1940 = vmatpush1.xpose.msra.mxu0 0.0
  %1941 = vmatprep.subr.mxu0 0.0
  %1942 = vmatpush1.xpose.msra.mxu0 0.0
  %1943 = vmatprep.subr.mxu0 0.0
  %1944 = vmatpush1.xpose.msra.mxu0 0.0
  %1945 = vmatprep.subr.mxu0 0.0
  %1946 = vmatpush1.xpose.msra.mxu0 0.0
  %1947 = vmatprep.subr.mxu0 0.0
  %1948 = vmatpush1.xpose.msra.mxu0 0.0
  %1949 = vmatprep.subr.mxu0 0.0
  %1950 = vmatpush1.xpose.msra.mxu0 0.0
  %1951 = vmatprep.subr.mxu0 0.0
  %1952 = vmatpush1.xpose.msra.mxu0 0.0
  %1953 = vmatprep.mubr.f32.mxu0 0.0
  %1954 = vmatmul.mubr.f32.gmra.mrb[0].mxu0 %v1884
  %v1955 = vpop.f32.mrb[0].mxu0
  %v1956 = vadd.f32 %v209, %v1955
  %v1957 = vpop.f32.mrb[0].mxu0
  %1958 = vdwg.mxu0
  %v1960 = vsel %vm210, %v40, 0
  %v1963 = vsel %vm210, %v104, 0
  %1965 = vmatprep.subr.mxu0 0.0
  %1966 = vmatpush1.xpose.msra.mxu0 %v1963
  %1967 = vmatprep.subr.mxu0 0.0
  %1968 = vmatpush1.xpose.msra.mxu0 0.0
  %1969 = vmatprep.subr.mxu0 0.0
  %1970 = vmatpush1.xpose.msra.mxu0 0.0
  %1971 = vmatprep.subr.mxu0 0.0
  %1972 = vmatpush1.xpose.msra.mxu0 0.0
  %1973 = vmatprep.subr.mxu0 0.0
  %1974 = vmatpush1.xpose.msra.mxu0 0.0
  %1975 = vmatprep.subr.mxu0 0.0
  %1976 = vmatpush1.xpose.msra.mxu0 0.0
  %1977 = vmatprep.subr.mxu0 0.0
  %1978 = vmatpush1.xpose.msra.mxu0 0.0
  %1979 = vmatprep.subr.mxu0 0.0
  %1980 = vmatpush1.xpose.msra.mxu0 0.0
  %1981 = vmatprep.subr.mxu0 0.0
  %1982 = vmatpush1.xpose.msra.mxu0 0.0
  %1983 = vmatprep.subr.mxu0 0.0
  %1984 = vmatpush1.xpose.msra.mxu0 0.0
  %1985 = vmatprep.subr.mxu0 0.0
  %1986 = vmatpush1.xpose.msra.mxu0 0.0
  %1987 = vmatprep.subr.mxu0 0.0
  %1988 = vmatpush1.xpose.msra.mxu0 0.0
  %1989 = vmatprep.subr.mxu0 0.0
  %1990 = vmatpush1.xpose.msra.mxu0 0.0
  %1991 = vmatprep.subr.mxu0 0.0
  %1992 = vmatpush1.xpose.msra.mxu0 0.0
  %1993 = vmatprep.subr.mxu0 0.0
  %1994 = vmatpush1.xpose.msra.mxu0 0.0
  %1995 = vmatprep.subr.mxu0 0.0
  %1996 = vmatpush1.xpose.msra.mxu0 0.0
  %1997 = vmatprep.subr.mxu0 0.0
  %1998 = vmatpush1.xpose.msra.mxu0 0.0
  %1999 = vmatprep.subr.mxu0 0.0
  %2000 = vmatpush1.xpose.msra.mxu0 0.0
  %2001 = vmatprep.subr.mxu0 0.0
  %2002 = vmatpush1.xpose.msra.mxu0 0.0
  %2003 = vmatprep.subr.mxu0 0.0
  %2004 = vmatpush1.xpose.msra.mxu0 0.0
  %2005 = vmatprep.subr.mxu0 0.0
  %2006 = vmatpush1.xpose.msra.mxu0 0.0
  %2007 = vmatprep.subr.mxu0 0.0
  %2008 = vmatpush1.xpose.msra.mxu0 0.0
  %2009 = vmatprep.subr.mxu0 0.0
  %2010 = vmatpush1.xpose.msra.mxu0 0.0
  %2011 = vmatprep.subr.mxu0 0.0
  %2012 = vmatpush1.xpose.msra.mxu0 0.0
  %2013 = vmatprep.subr.mxu0 0.0
  %2014 = vmatpush1.xpose.msra.mxu0 0.0
  %2015 = vmatprep.subr.mxu0 0.0
  %2016 = vmatpush1.xpose.msra.mxu0 0.0
  %2017 = vmatprep.subr.mxu0 0.0
  %2018 = vmatpush1.xpose.msra.mxu0 0.0
  %2019 = vmatprep.subr.mxu0 0.0
  %2020 = vmatpush1.xpose.msra.mxu0 0.0
  %2021 = vmatprep.subr.mxu0 0.0
  %2022 = vmatpush1.xpose.msra.mxu0 0.0
  %2023 = vmatprep.subr.mxu0 0.0
  %2024 = vmatpush1.xpose.msra.mxu0 0.0
  %2025 = vmatprep.subr.mxu0 0.0
  %2026 = vmatpush1.xpose.msra.mxu0 0.0
  %2027 = vmatprep.subr.mxu0 0.0
  %2028 = vmatpush1.xpose.msra.mxu0 0.0
  %2029 = vmatprep.mubr.f32.mxu0 0.0
  %2030 = vmatmul.mubr.f32.gmra.mrb[0].mxu0 %v1960
  %v2031 = vpop.f32.mrb[0].mxu0
  %v2032 = vadd.f32 %v209, %v2031
  %v2033 = vpop.f32.mrb[0].mxu0
  %2034 = vdwg.mxu0
  %v2036 = vsel %vm210, %v41, 0
  %v2039 = vsel %vm210, %v105, 0
  %2041 = vmatprep.subr.mxu0 0.0
  %2042 = vmatpush1.xpose.msra.mxu0 %v2039
  %2043 = vmatprep.subr.mxu0 0.0
  %2044 = vmatpush1.xpose.msra.mxu0 0.0
  %2045 = vmatprep.subr.mxu0 0.0
  %2046 = vmatpush1.xpose.msra.mxu0 0.0
  %2047 = vmatprep.subr.mxu0 0.0
  %2048 = vmatpush1.xpose.msra.mxu0 0.0
  %2049 = vmatprep.subr.mxu0 0.0
  %2050 = vmatpush1.xpose.msra.mxu0 0.0
  %2051 = vmatprep.subr.mxu0 0.0
  %2052 = vmatpush1.xpose.msra.mxu0 0.0
  %2053 = vmatprep.subr.mxu0 0.0
  %2054 = vmatpush1.xpose.msra.mxu0 0.0
  %2055 = vmatprep.subr.mxu0 0.0
  %2056 = vmatpush1.xpose.msra.mxu0 0.0
  %2057 = vmatprep.subr.mxu0 0.0
  %2058 = vmatpush1.xpose.msra.mxu0 0.0
  %2059 = vmatprep.subr.mxu0 0.0
  %2060 = vmatpush1.xpose.msra.mxu0 0.0
  %2061 = vmatprep.subr.mxu0 0.0
  %2062 = vmatpush1.xpose.msra.mxu0 0.0
  %2063 = vmatprep.subr.mxu0 0.0
  %2064 = vmatpush1.xpose.msra.mxu0 0.0
  %2065 = vmatprep.subr.mxu0 0.0
  %2066 = vmatpush1.xpose.msra.mxu0 0.0
  %2067 = vmatprep.subr.mxu0 0.0
  %2068 = vmatpush1.xpose.msra.mxu0 0.0
  %2069 = vmatprep.subr.mxu0 0.0
  %2070 = vmatpush1.xpose.msra.mxu0 0.0
  %2071 = vmatprep.subr.mxu0 0.0
  %2072 = vmatpush1.xpose.msra.mxu0 0.0
  %2073 = vmatprep.subr.mxu0 0.0
  %2074 = vmatpush1.xpose.msra.mxu0 0.0
  %2075 = vmatprep.subr.mxu0 0.0
  %2076 = vmatpush1.xpose.msra.mxu0 0.0
  %2077 = vmatprep.subr.mxu0 0.0
  %2078 = vmatpush1.xpose.msra.mxu0 0.0
  %2079 = vmatprep.subr.mxu0 0.0
  %2080 = vmatpush1.xpose.msra.mxu0 0.0
  %2081 = vmatprep.subr.mxu0 0.0
  %2082 = vmatpush1.xpose.msra.mxu0 0.0
  %2083 = vmatprep.subr.mxu0 0.0
  %2084 = vmatpush1.xpose.msra.mxu0 0.0
  %2085 = vmatprep.subr.mxu0 0.0
  %2086 = vmatpush1.xpose.msra.mxu0 0.0
  %2087 = vmatprep.subr.mxu0 0.0
  %2088 = vmatpush1.xpose.msra.mxu0 0.0
  %2089 = vmatprep.subr.mxu0 0.0
  %2090 = vmatpush1.xpose.msra.mxu0 0.0
  %2091 = vmatprep.subr.mxu0 0.0
  %2092 = vmatpush1.xpose.msra.mxu0 0.0
  %2093 = vmatprep.subr.mxu0 0.0
  %2094 = vmatpush1.xpose.msra.mxu0 0.0
  %2095 = vmatprep.subr.mxu0 0.0
  %2096 = vmatpush1.xpose.msra.mxu0 0.0
  %2097 = vmatprep.subr.mxu0 0.0
  %2098 = vmatpush1.xpose.msra.mxu0 0.0
  %2099 = vmatprep.subr.mxu0 0.0
  %2100 = vmatpush1.xpose.msra.mxu0 0.0
  %2101 = vmatprep.subr.mxu0 0.0
  %2102 = vmatpush1.xpose.msra.mxu0 0.0
  %2103 = vmatprep.subr.mxu0 0.0
  %2104 = vmatpush1.xpose.msra.mxu0 0.0
  %2105 = vmatprep.mubr.f32.mxu0 0.0
  %2106 = vmatmul.mubr.f32.gmra.mrb[0].mxu0 %v2036
  %v2107 = vpop.f32.mrb[0].mxu0
  %v2108 = vadd.f32 %v209, %v2107
  %v2109 = vpop.f32.mrb[0].mxu0
  %2110 = vdwg.mxu0
  %v2112 = vsel %vm210, %v42, 0
  %v2115 = vsel %vm210, %v106, 0
  %2117 = vmatprep.subr.mxu0 0.0
  %2118 = vmatpush1.xpose.msra.mxu0 %v2115
  %2119 = vmatprep.subr.mxu0 0.0
  %2120 = vmatpush1.xpose.msra.mxu0 0.0
  %2121 = vmatprep.subr.mxu0 0.0
  %2122 = vmatpush1.xpose.msra.mxu0 0.0
  %2123 = vmatprep.subr.mxu0 0.0
  %2124 = vmatpush1.xpose.msra.mxu0 0.0
  %2125 = vmatprep.subr.mxu0 0.0
  %2126 = vmatpush1.xpose.msra.mxu0 0.0
  %2127 = vmatprep.subr.mxu0 0.0
  %2128 = vmatpush1.xpose.msra.mxu0 0.0
  %2129 = vmatprep.subr.mxu0 0.0
  %2130 = vmatpush1.xpose.msra.mxu0 0.0
  %2131 = vmatprep.subr.mxu0 0.0
  %2132 = vmatpush1.xpose.msra.mxu0 0.0
  %2133 = vmatprep.subr.mxu0 0.0
  %2134 = vmatpush1.xpose.msra.mxu0 0.0
  %2135 = vmatprep.subr.mxu0 0.0
  %2136 = vmatpush1.xpose.msra.mxu0 0.0
  %2137 = vmatprep.subr.mxu0 0.0
  %2138 = vmatpush1.xpose.msra.mxu0 0.0
  %2139 = vmatprep.subr.mxu0 0.0
  %2140 = vmatpush1.xpose.msra.mxu0 0.0
  %2141 = vmatprep.subr.mxu0 0.0
  %2142 = vmatpush1.xpose.msra.mxu0 0.0
  %2143 = vmatprep.subr.mxu0 0.0
  %2144 = vmatpush1.xpose.msra.mxu0 0.0
  %2145 = vmatprep.subr.mxu0 0.0
  %2146 = vmatpush1.xpose.msra.mxu0 0.0
  %2147 = vmatprep.subr.mxu0 0.0
  %2148 = vmatpush1.xpose.msra.mxu0 0.0
  %2149 = vmatprep.subr.mxu0 0.0
  %2150 = vmatpush1.xpose.msra.mxu0 0.0
  %2151 = vmatprep.subr.mxu0 0.0
  %2152 = vmatpush1.xpose.msra.mxu0 0.0
  %2153 = vmatprep.subr.mxu0 0.0
  %2154 = vmatpush1.xpose.msra.mxu0 0.0
  %2155 = vmatprep.subr.mxu0 0.0
  %2156 = vmatpush1.xpose.msra.mxu0 0.0
  %2157 = vmatprep.subr.mxu0 0.0
  %2158 = vmatpush1.xpose.msra.mxu0 0.0
  %2159 = vmatprep.subr.mxu0 0.0
  %2160 = vmatpush1.xpose.msra.mxu0 0.0
  %2161 = vmatprep.subr.mxu0 0.0
  %2162 = vmatpush1.xpose.msra.mxu0 0.0
  %2163 = vmatprep.subr.mxu0 0.0
  %2164 = vmatpush1.xpose.msra.mxu0 0.0
  %2165 = vmatprep.subr.mxu0 0.0
  %2166 = vmatpush1.xpose.msra.mxu0 0.0
  %2167 = vmatprep.subr.mxu0 0.0
  %2168 = vmatpush1.xpose.msra.mxu0 0.0
  %2169 = vmatprep.subr.mxu0 0.0
  %2170 = vmatpush1.xpose.msra.mxu0 0.0
  %2171 = vmatprep.subr.mxu0 0.0
  %2172 = vmatpush1.xpose.msra.mxu0 0.0
  %2173 = vmatprep.subr.mxu0 0.0
  %2174 = vmatpush1.xpose.msra.mxu0 0.0
  %2175 = vmatprep.subr.mxu0 0.0
  %2176 = vmatpush1.xpose.msra.mxu0 0.0
  %2177 = vmatprep.subr.mxu0 0.0
  %2178 = vmatpush1.xpose.msra.mxu0 0.0
  %2179 = vmatprep.subr.mxu0 0.0
  %2180 = vmatpush1.xpose.msra.mxu0 0.0
  %2181 = vmatprep.mubr.f32.mxu0 0.0
  %2182 = vmatmul.mubr.f32.gmra.mrb[0].mxu0 %v2112
  %v2183 = vpop.f32.mrb[0].mxu0
  %v2184 = vadd.f32 %v209, %v2183
  %v2185 = vpop.f32.mrb[0].mxu0
  %2186 = vdwg.mxu0
  %v2188 = vsel %vm210, %v43, 0
  %v2191 = vsel %vm210, %v107, 0
  %2193 = vmatprep.subr.mxu0 0.0
  %2194 = vmatpush1.xpose.msra.mxu0 %v2191
  %2195 = vmatprep.subr.mxu0 0.0
  %2196 = vmatpush1.xpose.msra.mxu0 0.0
  %2197 = vmatprep.subr.mxu0 0.0
  %2198 = vmatpush1.xpose.msra.mxu0 0.0
  %2199 = vmatprep.subr.mxu0 0.0
  %2200 = vmatpush1.xpose.msra.mxu0 0.0
  %2201 = vmatprep.subr.mxu0 0.0
  %2202 = vmatpush1.xpose.msra.mxu0 0.0
  %2203 = vmatprep.subr.mxu0 0.0
  %2204 = vmatpush1.xpose.msra.mxu0 0.0
  %2205 = vmatprep.subr.mxu0 0.0
  %2206 = vmatpush1.xpose.msra.mxu0 0.0
  %2207 = vmatprep.subr.mxu0 0.0
  %2208 = vmatpush1.xpose.msra.mxu0 0.0
  %2209 = vmatprep.subr.mxu0 0.0
  %2210 = vmatpush1.xpose.msra.mxu0 0.0
  %2211 = vmatprep.subr.mxu0 0.0
  %2212 = vmatpush1.xpose.msra.mxu0 0.0
  %2213 = vmatprep.subr.mxu0 0.0
  %2214 = vmatpush1.xpose.msra.mxu0 0.0
  %2215 = vmatprep.subr.mxu0 0.0
  %2216 = vmatpush1.xpose.msra.mxu0 0.0
  %2217 = vmatprep.subr.mxu0 0.0
  %2218 = vmatpush1.xpose.msra.mxu0 0.0
  %2219 = vmatprep.subr.mxu0 0.0
  %2220 = vmatpush1.xpose.msra.mxu0 0.0
  %2221 = vmatprep.subr.mxu0 0.0
  %2222 = vmatpush1.xpose.msra.mxu0 0.0
  %2223 = vmatprep.subr.mxu0 0.0
  %2224 = vmatpush1.xpose.msra.mxu0 0.0
  %2225 = vmatprep.subr.mxu0 0.0
  %2226 = vmatpush1.xpose.msra.mxu0 0.0
  %2227 = vmatprep.subr.mxu0 0.0
  %2228 = vmatpush1.xpose.msra.mxu0 0.0
  %2229 = vmatprep.subr.mxu0 0.0
  %2230 = vmatpush1.xpose.msra.mxu0 0.0
  %2231 = vmatprep.subr.mxu0 0.0
  %2232 = vmatpush1.xpose.msra.mxu0 0.0
  %2233 = vmatprep.subr.mxu0 0.0
  %2234 = vmatpush1.xpose.msra.mxu0 0.0
  %2235 = vmatprep.subr.mxu0 0.0
  %2236 = vmatpush1.xpose.msra.mxu0 0.0
  %2237 = vmatprep.subr.mxu0 0.0
  %2238 = vmatpush1.xpose.msra.mxu0 0.0
  %2239 = vmatprep.subr.mxu0 0.0
  %2240 = vmatpush1.xpose.msra.mxu0 0.0
  %2241 = vmatprep.subr.mxu0 0.0
  %2242 = vmatpush1.xpose.msra.mxu0 0.0
  %2243 = vmatprep.subr.mxu0 0.0
  %2244 = vmatpush1.xpose.msra.mxu0 0.0
  %2245 = vmatprep.subr.mxu0 0.0
  %2246 = vmatpush1.xpose.msra.mxu0 0.0
  %2247 = vmatprep.subr.mxu0 0.0
  %2248 = vmatpush1.xpose.msra.mxu0 0.0
  %2249 = vmatprep.subr.mxu0 0.0
  %2250 = vmatpush1.xpose.msra.mxu0 0.0
  %2251 = vmatprep.subr.mxu0 0.0
  %2252 = vmatpush1.xpose.msra.mxu0 0.0
  %2253 = vmatprep.subr.mxu0 0.0
  %2254 = vmatpush1.xpose.msra.mxu0 0.0
  %2255 = vmatprep.subr.mxu0 0.0
  %2256 = vmatpush1.xpose.msra.mxu0 0.0
  %2257 = vmatprep.mubr.f32.mxu0 0.0
  %2258 = vmatmul.mubr.f32.gmra.mrb[0].mxu0 %v2188
  %v2259 = vpop.f32.mrb[0].mxu0
  %v2260 = vadd.f32 %v209, %v2259
  %v2261 = vpop.f32.mrb[0].mxu0
  %2262 = vdwg.mxu0
  %v2264 = vsel %vm210, %v44, 0
  %v2267 = vsel %vm210, %v108, 0
  %2269 = vmatprep.subr.mxu0 0.0
  %2270 = vmatpush1.xpose.msra.mxu0 %v2267
  %2271 = vmatprep.subr.mxu0 0.0
  %2272 = vmatpush1.xpose.msra.mxu0 0.0
  %2273 = vmatprep.subr.mxu0 0.0
  %2274 = vmatpush1.xpose.msra.mxu0 0.0
  %2275 = vmatprep.subr.mxu0 0.0
  %2276 = vmatpush1.xpose.msra.mxu0 0.0
  %2277 = vmatprep.subr.mxu0 0.0
  %2278 = vmatpush1.xpose.msra.mxu0 0.0
  %2279 = vmatprep.subr.mxu0 0.0
  %2280 = vmatpush1.xpose.msra.mxu0 0.0
  %2281 = vmatprep.subr.mxu0 0.0
  %2282 = vmatpush1.xpose.msra.mxu0 0.0
  %2283 = vmatprep.subr.mxu0 0.0
  %2284 = vmatpush1.xpose.msra.mxu0 0.0
  %2285 = vmatprep.subr.mxu0 0.0
  %2286 = vmatpush1.xpose.msra.mxu0 0.0
  %2287 = vmatprep.subr.mxu0 0.0
  %2288 = vmatpush1.xpose.msra.mxu0 0.0
  %2289 = vmatprep.subr.mxu0 0.0
  %2290 = vmatpush1.xpose.msra.mxu0 0.0
  %2291 = vmatprep.subr.mxu0 0.0
  %2292 = vmatpush1.xpose.msra.mxu0 0.0
  %2293 = vmatprep.subr.mxu0 0.0
  %2294 = vmatpush1.xpose.msra.mxu0 0.0
  %2295 = vmatprep.subr.mxu0 0.0
  %2296 = vmatpush1.xpose.msra.mxu0 0.0
  %2297 = vmatprep.subr.mxu0 0.0
  %2298 = vmatpush1.xpose.msra.mxu0 0.0
  %2299 = vmatprep.subr.mxu0 0.0
  %2300 = vmatpush1.xpose.msra.mxu0 0.0
  %2301 = vmatprep.subr.mxu0 0.0
  %2302 = vmatpush1.xpose.msra.mxu0 0.0
  %2303 = vmatprep.subr.mxu0 0.0
  %2304 = vmatpush1.xpose.msra.mxu0 0.0
  %2305 = vmatprep.subr.mxu0 0.0
  %2306 = vmatpush1.xpose.msra.mxu0 0.0
  %2307 = vmatprep.subr.mxu0 0.0
  %2308 = vmatpush1.xpose.msra.mxu0 0.0
  %2309 = vmatprep.subr.mxu0 0.0
  %2310 = vmatpush1.xpose.msra.mxu0 0.0
  %2311 = vmatprep.subr.mxu0 0.0
  %2312 = vmatpush1.xpose.msra.mxu0 0.0
  %2313 = vmatprep.subr.mxu0 0.0
  %2314 = vmatpush1.xpose.msra.mxu0 0.0
  %2315 = vmatprep.subr.mxu0 0.0
  %2316 = vmatpush1.xpose.msra.mxu0 0.0
  %2317 = vmatprep.subr.mxu0 0.0
  %2318 = vmatpush1.xpose.msra.mxu0 0.0
  %2319 = vmatprep.subr.mxu0 0.0
  %2320 = vmatpush1.xpose.msra.mxu0 0.0
  %2321 = vmatprep.subr.mxu0 0.0
  %2322 = vmatpush1.xpose.msra.mxu0 0.0
  %2323 = vmatprep.subr.mxu0 0.0
  %2324 = vmatpush1.xpose.msra.mxu0 0.0
  %2325 = vmatprep.subr.mxu0 0.0
  %2326 = vmatpush1.xpose.msra.mxu0 0.0
  %2327 = vmatprep.subr.mxu0 0.0
  %2328 = vmatpush1.xpose.msra.mxu0 0.0
  %2329 = vmatprep.subr.mxu0 0.0
  %2330 = vmatpush1.xpose.msra.mxu0 0.0
  %2331 = vmatprep.subr.mxu0 0.0
  %2332 = vmatpush1.xpose.msra.mxu0 0.0
  %2333 = vmatprep.mubr.f32.mxu0 0.0
  %2334 = vmatmul.mubr.f32.gmra.mrb[0].mxu0 %v2264
  %v2335 = vpop.f32.mrb[0].mxu0
  %v2336 = vadd.f32 %v209, %v2335
  %v2337 = vpop.f32.mrb[0].mxu0
  %2338 = vdwg.mxu0
  %v2340 = vsel %vm210, %v45, 0
  %v2343 = vsel %vm210, %v109, 0
  %2345 = vmatprep.subr.mxu0 0.0
  %2346 = vmatpush1.xpose.msra.mxu0 %v2343
  %2347 = vmatprep.subr.mxu0 0.0
  %2348 = vmatpush1.xpose.msra.mxu0 0.0
  %2349 = vmatprep.subr.mxu0 0.0
  %2350 = vmatpush1.xpose.msra.mxu0 0.0
  %2351 = vmatprep.subr.mxu0 0.0
  %2352 = vmatpush1.xpose.msra.mxu0 0.0
  %2353 = vmatprep.subr.mxu0 0.0
  %2354 = vmatpush1.xpose.msra.mxu0 0.0
  %2355 = vmatprep.subr.mxu0 0.0
  %2356 = vmatpush1.xpose.msra.mxu0 0.0
  %2357 = vmatprep.subr.mxu0 0.0
  %2358 = vmatpush1.xpose.msra.mxu0 0.0
  %2359 = vmatprep.subr.mxu0 0.0
  %2360 = vmatpush1.xpose.msra.mxu0 0.0
  %2361 = vmatprep.subr.mxu0 0.0
  %2362 = vmatpush1.xpose.msra.mxu0 0.0
  %2363 = vmatprep.subr.mxu0 0.0
  %2364 = vmatpush1.xpose.msra.mxu0 0.0
  %2365 = vmatprep.subr.mxu0 0.0
  %2366 = vmatpush1.xpose.msra.mxu0 0.0
  %2367 = vmatprep.subr.mxu0 0.0
  %2368 = vmatpush1.xpose.msra.mxu0 0.0
  %2369 = vmatprep.subr.mxu0 0.0
  %2370 = vmatpush1.xpose.msra.mxu0 0.0
  %2371 = vmatprep.subr.mxu0 0.0
  %2372 = vmatpush1.xpose.msra.mxu0 0.0
  %2373 = vmatprep.subr.mxu0 0.0
  %2374 = vmatpush1.xpose.msra.mxu0 0.0
  %2375 = vmatprep.subr.mxu0 0.0
  %2376 = vmatpush1.xpose.msra.mxu0 0.0
  %2377 = vmatprep.subr.mxu0 0.0
  %2378 = vmatpush1.xpose.msra.mxu0 0.0
  %2379 = vmatprep.subr.mxu0 0.0
  %2380 = vmatpush1.xpose.msra.mxu0 0.0
  %2381 = vmatprep.subr.mxu0 0.0
  %2382 = vmatpush1.xpose.msra.mxu0 0.0
  %2383 = vmatprep.subr.mxu0 0.0
  %2384 = vmatpush1.xpose.msra.mxu0 0.0
  %2385 = vmatprep.subr.mxu0 0.0
  %2386 = vmatpush1.xpose.msra.mxu0 0.0
  %2387 = vmatprep.subr.mxu0 0.0
  %2388 = vmatpush1.xpose.msra.mxu0 0.0
  %2389 = vmatprep.subr.mxu0 0.0
  %2390 = vmatpush1.xpose.msra.mxu0 0.0
  %2391 = vmatprep.subr.mxu0 0.0
  %2392 = vmatpush1.xpose.msra.mxu0 0.0
  %2393 = vmatprep.subr.mxu0 0.0
  %2394 = vmatpush1.xpose.msra.mxu0 0.0
  %2395 = vmatprep.subr.mxu0 0.0
  %2396 = vmatpush1.xpose.msra.mxu0 0.0
  %2397 = vmatprep.subr.mxu0 0.0
  %2398 = vmatpush1.xpose.msra.mxu0 0.0
  %2399 = vmatprep.subr.mxu0 0.0
  %2400 = vmatpush1.xpose.msra.mxu0 0.0
  %2401 = vmatprep.subr.mxu0 0.0
  %2402 = vmatpush1.xpose.msra.mxu0 0.0
  %2403 = vmatprep.subr.mxu0 0.0
  %2404 = vmatpush1.xpose.msra.mxu0 0.0
  %2405 = vmatprep.subr.mxu0 0.0
  %2406 = vmatpush1.xpose.msra.mxu0 0.0
  %2407 = vmatprep.subr.mxu0 0.0
  %2408 = vmatpush1.xpose.msra.mxu0 0.0
  %2409 = vmatprep.mubr.f32.mxu0 0.0
  %2410 = vmatmul.mubr.f32.gmra.mrb[0].mxu0 %v2340
  %v2411 = vpop.f32.mrb[0].mxu0
  %v2412 = vadd.f32 %v209, %v2411
  %v2413 = vpop.f32.mrb[0].mxu0
  %2414 = vdwg.mxu0
  %v2416 = vsel %vm210, %v46, 0
  %v2419 = vsel %vm210, %v110, 0
  %2421 = vmatprep.subr.mxu0 0.0
  %2422 = vmatpush1.xpose.msra.mxu0 %v2419
  %2423 = vmatprep.subr.mxu0 0.0
  %2424 = vmatpush1.xpose.msra.mxu0 0.0
  %2425 = vmatprep.subr.mxu0 0.0
  %2426 = vmatpush1.xpose.msra.mxu0 0.0
  %2427 = vmatprep.subr.mxu0 0.0
  %2428 = vmatpush1.xpose.msra.mxu0 0.0
  %2429 = vmatprep.subr.mxu0 0.0
  %2430 = vmatpush1.xpose.msra.mxu0 0.0
  %2431 = vmatprep.subr.mxu0 0.0
  %2432 = vmatpush1.xpose.msra.mxu0 0.0
  %2433 = vmatprep.subr.mxu0 0.0
  %2434 = vmatpush1.xpose.msra.mxu0 0.0
  %2435 = vmatprep.subr.mxu0 0.0
  %2436 = vmatpush1.xpose.msra.mxu0 0.0
  %2437 = vmatprep.subr.mxu0 0.0
  %2438 = vmatpush1.xpose.msra.mxu0 0.0
  %2439 = vmatprep.subr.mxu0 0.0
  %2440 = vmatpush1.xpose.msra.mxu0 0.0
  %2441 = vmatprep.subr.mxu0 0.0
  %2442 = vmatpush1.xpose.msra.mxu0 0.0
  %2443 = vmatprep.subr.mxu0 0.0
  %2444 = vmatpush1.xpose.msra.mxu0 0.0
  %2445 = vmatprep.subr.mxu0 0.0
  %2446 = vmatpush1.xpose.msra.mxu0 0.0
  %2447 = vmatprep.subr.mxu0 0.0
  %2448 = vmatpush1.xpose.msra.mxu0 0.0
  %2449 = vmatprep.subr.mxu0 0.0
  %2450 = vmatpush1.xpose.msra.mxu0 0.0
  %2451 = vmatprep.subr.mxu0 0.0
  %2452 = vmatpush1.xpose.msra.mxu0 0.0
  %2453 = vmatprep.subr.mxu0 0.0
  %2454 = vmatpush1.xpose.msra.mxu0 0.0
  %2455 = vmatprep.subr.mxu0 0.0
  %2456 = vmatpush1.xpose.msra.mxu0 0.0
  %2457 = vmatprep.subr.mxu0 0.0
  %2458 = vmatpush1.xpose.msra.mxu0 0.0
  %2459 = vmatprep.subr.mxu0 0.0
  %2460 = vmatpush1.xpose.msra.mxu0 0.0
  %2461 = vmatprep.subr.mxu0 0.0
  %2462 = vmatpush1.xpose.msra.mxu0 0.0
  %2463 = vmatprep.subr.mxu0 0.0
  %2464 = vmatpush1.xpose.msra.mxu0 0.0
  %2465 = vmatprep.subr.mxu0 0.0
  %2466 = vmatpush1.xpose.msra.mxu0 0.0
  %2467 = vmatprep.subr.mxu0 0.0
  %2468 = vmatpush1.xpose.msra.mxu0 0.0
  %2469 = vmatprep.subr.mxu0 0.0
  %2470 = vmatpush1.xpose.msra.mxu0 0.0
  %2471 = vmatprep.subr.mxu0 0.0
  %2472 = vmatpush1.xpose.msra.mxu0 0.0
  %2473 = vmatprep.subr.mxu0 0.0
  %2474 = vmatpush1.xpose.msra.mxu0 0.0
  %2475 = vmatprep.subr.mxu0 0.0
  %2476 = vmatpush1.xpose.msra.mxu0 0.0
  %2477 = vmatprep.subr.mxu0 0.0
  %2478 = vmatpush1.xpose.msra.mxu0 0.0
  %2479 = vmatprep.subr.mxu0 0.0
  %2480 = vmatpush1.xpose.msra.mxu0 0.0
  %2481 = vmatprep.subr.mxu0 0.0
  %2482 = vmatpush1.xpose.msra.mxu0 0.0
  %2483 = vmatprep.subr.mxu0 0.0
  %2484 = vmatpush1.xpose.msra.mxu0 0.0
  %2485 = vmatprep.mubr.f32.mxu0 0.0
  %2486 = vmatmul.mubr.f32.gmra.mrb[0].mxu0 %v2416
  %v2487 = vpop.f32.mrb[0].mxu0
  %v2488 = vadd.f32 %v209, %v2487
  %v2489 = vpop.f32.mrb[0].mxu0
  %2490 = vdwg.mxu0
  %v2492 = vsel %vm210, %v47, 0
  %v2495 = vsel %vm210, %v111, 0
  %2497 = vmatprep.subr.mxu0 0.0
  %2498 = vmatpush1.xpose.msra.mxu0 %v2495
  %2499 = vmatprep.subr.mxu0 0.0
  %2500 = vmatpush1.xpose.msra.mxu0 0.0
  %2501 = vmatprep.subr.mxu0 0.0
  %2502 = vmatpush1.xpose.msra.mxu0 0.0
  %2503 = vmatprep.subr.mxu0 0.0
  %2504 = vmatpush1.xpose.msra.mxu0 0.0
  %2505 = vmatprep.subr.mxu0 0.0
  %2506 = vmatpush1.xpose.msra.mxu0 0.0
  %2507 = vmatprep.subr.mxu0 0.0
  %2508 = vmatpush1.xpose.msra.mxu0 0.0
  %2509 = vmatprep.subr.mxu0 0.0
  %2510 = vmatpush1.xpose.msra.mxu0 0.0
  %2511 = vmatprep.subr.mxu0 0.0
  %2512 = vmatpush1.xpose.msra.mxu0 0.0
  %2513 = vmatprep.subr.mxu0 0.0
  %2514 = vmatpush1.xpose.msra.mxu0 0.0
  %2515 = vmatprep.subr.mxu0 0.0
  %2516 = vmatpush1.xpose.msra.mxu0 0.0
  %2517 = vmatprep.subr.mxu0 0.0
  %2518 = vmatpush1.xpose.msra.mxu0 0.0
  %2519 = vmatprep.subr.mxu0 0.0
  %2520 = vmatpush1.xpose.msra.mxu0 0.0
  %2521 = vmatprep.subr.mxu0 0.0
  %2522 = vmatpush1.xpose.msra.mxu0 0.0
  %2523 = vmatprep.subr.mxu0 0.0
  %2524 = vmatpush1.xpose.msra.mxu0 0.0
  %2525 = vmatprep.subr.mxu0 0.0
  %2526 = vmatpush1.xpose.msra.mxu0 0.0
  %2527 = vmatprep.subr.mxu0 0.0
  %2528 = vmatpush1.xpose.msra.mxu0 0.0
  %2529 = vmatprep.subr.mxu0 0.0
  %2530 = vmatpush1.xpose.msra.mxu0 0.0
  %2531 = vmatprep.subr.mxu0 0.0
  %2532 = vmatpush1.xpose.msra.mxu0 0.0
  %2533 = vmatprep.subr.mxu0 0.0
  %2534 = vmatpush1.xpose.msra.mxu0 0.0
  %2535 = vmatprep.subr.mxu0 0.0
  %2536 = vmatpush1.xpose.msra.mxu0 0.0
  %2537 = vmatprep.subr.mxu0 0.0
  %2538 = vmatpush1.xpose.msra.mxu0 0.0
  %2539 = vmatprep.subr.mxu0 0.0
  %2540 = vmatpush1.xpose.msra.mxu0 0.0
  %2541 = vmatprep.subr.mxu0 0.0
  %2542 = vmatpush1.xpose.msra.mxu0 0.0
  %2543 = vmatprep.subr.mxu0 0.0
  %2544 = vmatpush1.xpose.msra.mxu0 0.0
  %2545 = vmatprep.subr.mxu0 0.0
  %2546 = vmatpush1.xpose.msra.mxu0 0.0
  %2547 = vmatprep.subr.mxu0 0.0
  %2548 = vmatpush1.xpose.msra.mxu0 0.0
  %2549 = vmatprep.subr.mxu0 0.0
  %2550 = vmatpush1.xpose.msra.mxu0 0.0
  %2551 = vmatprep.subr.mxu0 0.0
  %2552 = vmatpush1.xpose.msra.mxu0 0.0
  %2553 = vmatprep.subr.mxu0 0.0
  %2554 = vmatpush1.xpose.msra.mxu0 0.0
  %2555 = vmatprep.subr.mxu0 0.0
  %2556 = vmatpush1.xpose.msra.mxu0 0.0
  %2557 = vmatprep.subr.mxu0 0.0
  %2558 = vmatpush1.xpose.msra.mxu0 0.0
  %2559 = vmatprep.subr.mxu0 0.0
  %2560 = vmatpush1.xpose.msra.mxu0 0.0
  %2561 = vmatprep.mubr.f32.mxu0 0.0
  %2562 = vmatmul.mubr.f32.gmra.mrb[0].mxu0 %v2492
  %v2563 = vpop.f32.mrb[0].mxu0
  %v2564 = vadd.f32 %v209, %v2563
  %v2565 = vpop.f32.mrb[0].mxu0
  %2566 = vdwg.mxu0
  %v2568 = vsel %vm210, %v48, 0
  %v2571 = vsel %vm210, %v112, 0
  %2573 = vmatprep.subr.mxu0 0.0
  %2574 = vmatpush1.xpose.msra.mxu0 %v2571
  %2575 = vmatprep.subr.mxu0 0.0
  %2576 = vmatpush1.xpose.msra.mxu0 0.0
  %2577 = vmatprep.subr.mxu0 0.0
  %2578 = vmatpush1.xpose.msra.mxu0 0.0
  %2579 = vmatprep.subr.mxu0 0.0
  %2580 = vmatpush1.xpose.msra.mxu0 0.0
  %2581 = vmatprep.subr.mxu0 0.0
  %2582 = vmatpush1.xpose.msra.mxu0 0.0
  %2583 = vmatprep.subr.mxu0 0.0
  %2584 = vmatpush1.xpose.msra.mxu0 0.0
  %2585 = vmatprep.subr.mxu0 0.0
  %2586 = vmatpush1.xpose.msra.mxu0 0.0
  %2587 = vmatprep.subr.mxu0 0.0
  %2588 = vmatpush1.xpose.msra.mxu0 0.0
  %2589 = vmatprep.subr.mxu0 0.0
  %2590 = vmatpush1.xpose.msra.mxu0 0.0
  %2591 = vmatprep.subr.mxu0 0.0
  %2592 = vmatpush1.xpose.msra.mxu0 0.0
  %2593 = vmatprep.subr.mxu0 0.0
  %2594 = vmatpush1.xpose.msra.mxu0 0.0
  %2595 = vmatprep.subr.mxu0 0.0
  %2596 = vmatpush1.xpose.msra.mxu0 0.0
  %2597 = vmatprep.subr.mxu0 0.0
  %2598 = vmatpush1.xpose.msra.mxu0 0.0
  %2599 = vmatprep.subr.mxu0 0.0
  %2600 = vmatpush1.xpose.msra.mxu0 0.0
  %2601 = vmatprep.subr.mxu0 0.0
  %2602 = vmatpush1.xpose.msra.mxu0 0.0
  %2603 = vmatprep.subr.mxu0 0.0
  %2604 = vmatpush1.xpose.msra.mxu0 0.0
  %2605 = vmatprep.subr.mxu0 0.0
  %2606 = vmatpush1.xpose.msra.mxu0 0.0
  %2607 = vmatprep.subr.mxu0 0.0
  %2608 = vmatpush1.xpose.msra.mxu0 0.0
  %2609 = vmatprep.subr.mxu0 0.0
  %2610 = vmatpush1.xpose.msra.mxu0 0.0
  %2611 = vmatprep.subr.mxu0 0.0
  %2612 = vmatpush1.xpose.msra.mxu0 0.0
  %2613 = vmatprep.subr.mxu0 0.0
  %2614 = vmatpush1.xpose.msra.mxu0 0.0
  %2615 = vmatprep.subr.mxu0 0.0
  %2616 = vmatpush1.xpose.msra.mxu0 0.0
  %2617 = vmatprep.subr.mxu0 0.0
  %2618 = vmatpush1.xpose.msra.mxu0 0.0
  %2619 = vmatprep.subr.mxu0 0.0
  %2620 = vmatpush1.xpose.msra.mxu0 0.0
  %2621 = vmatprep.subr.mxu0 0.0
  %2622 = vmatpush1.xpose.msra.mxu0 0.0
  %2623 = vmatprep.subr.mxu0 0.0
  %2624 = vmatpush1.xpose.msra.mxu0 0.0
  %2625 = vmatprep.subr.mxu0 0.0
  %2626 = vmatpush1.xpose.msra.mxu0 0.0
  %2627 = vmatprep.subr.mxu0 0.0
  %2628 = vmatpush1.xpose.msra.mxu0 0.0
  %2629 = vmatprep.subr.mxu0 0.0
  %2630 = vmatpush1.xpose.msra.mxu0 0.0
  %2631 = vmatprep.subr.mxu0 0.0
  %2632 = vmatpush1.xpose.msra.mxu0 0.0
  %2633 = vmatprep.subr.mxu0 0.0
  %2634 = vmatpush1.xpose.msra.mxu0 0.0
  %2635 = vmatprep.subr.mxu0 0.0
  %2636 = vmatpush1.xpose.msra.mxu0 0.0
  %2637 = vmatprep.mubr.f32.mxu0 0.0
  %2638 = vmatmul.mubr.f32.gmra.mrb[0].mxu0 %v2568
  %v2639 = vpop.f32.mrb[0].mxu0
  %v2640 = vadd.f32 %v209, %v2639
  %v2641 = vpop.f32.mrb[0].mxu0
  %2642 = vdwg.mxu0
  %v2644 = vsel %vm210, %v49, 0
  %v2647 = vsel %vm210, %v113, 0
  %2649 = vmatprep.subr.mxu0 0.0
  %2650 = vmatpush1.xpose.msra.mxu0 %v2647
  %2651 = vmatprep.subr.mxu0 0.0
  %2652 = vmatpush1.xpose.msra.mxu0 0.0
  %2653 = vmatprep.subr.mxu0 0.0
  %2654 = vmatpush1.xpose.msra.mxu0 0.0
  %2655 = vmatprep.subr.mxu0 0.0
  %2656 = vmatpush1.xpose.msra.mxu0 0.0
  %2657 = vmatprep.subr.mxu0 0.0
  %2658 = vmatpush1.xpose.msra.mxu0 0.0
  %2659 = vmatprep.subr.mxu0 0.0
  %2660 = vmatpush1.xpose.msra.mxu0 0.0
  %2661 = vmatprep.subr.mxu0 0.0
  %2662 = vmatpush1.xpose.msra.mxu0 0.0
  %2663 = vmatprep.subr.mxu0 0.0
  %2664 = vmatpush1.xpose.msra.mxu0 0.0
  %2665 = vmatprep.subr.mxu0 0.0
  %2666 = vmatpush1.xpose.msra.mxu0 0.0
  %2667 = vmatprep.subr.mxu0 0.0
  %2668 = vmatpush1.xpose.msra.mxu0 0.0
  %2669 = vmatprep.subr.mxu0 0.0
  %2670 = vmatpush1.xpose.msra.mxu0 0.0
  %2671 = vmatprep.subr.mxu0 0.0
  %2672 = vmatpush1.xpose.msra.mxu0 0.0
  %2673 = vmatprep.subr.mxu0 0.0
  %2674 = vmatpush1.xpose.msra.mxu0 0.0
  %2675 = vmatprep.subr.mxu0 0.0
  %2676 = vmatpush1.xpose.msra.mxu0 0.0
  %2677 = vmatprep.subr.mxu0 0.0
  %2678 = vmatpush1.xpose.msra.mxu0 0.0
  %2679 = vmatprep.subr.mxu0 0.0
  %2680 = vmatpush1.xpose.msra.mxu0 0.0
  %2681 = vmatprep.subr.mxu0 0.0
  %2682 = vmatpush1.xpose.msra.mxu0 0.0
  %2683 = vmatprep.subr.mxu0 0.0
  %2684 = vmatpush1.xpose.msra.mxu0 0.0
  %2685 = vmatprep.subr.mxu0 0.0
  %2686 = vmatpush1.xpose.msra.mxu0 0.0
  %2687 = vmatprep.subr.mxu0 0.0
  %2688 = vmatpush1.xpose.msra.mxu0 0.0
  %2689 = vmatprep.subr.mxu0 0.0
  %2690 = vmatpush1.xpose.msra.mxu0 0.0
  %2691 = vmatprep.subr.mxu0 0.0
  %2692 = vmatpush1.xpose.msra.mxu0 0.0
  %2693 = vmatprep.subr.mxu0 0.0
  %2694 = vmatpush1.xpose.msra.mxu0 0.0
  %2695 = vmatprep.subr.mxu0 0.0
  %2696 = vmatpush1.xpose.msra.mxu0 0.0
  %2697 = vmatprep.subr.mxu0 0.0
  %2698 = vmatpush1.xpose.msra.mxu0 0.0
  %2699 = vmatprep.subr.mxu0 0.0
  %2700 = vmatpush1.xpose.msra.mxu0 0.0
  %2701 = vmatprep.subr.mxu0 0.0
  %2702 = vmatpush1.xpose.msra.mxu0 0.0
  %2703 = vmatprep.subr.mxu0 0.0
  %2704 = vmatpush1.xpose.msra.mxu0 0.0
  %2705 = vmatprep.subr.mxu0 0.0
  %2706 = vmatpush1.xpose.msra.mxu0 0.0
  %2707 = vmatprep.subr.mxu0 0.0
  %2708 = vmatpush1.xpose.msra.mxu0 0.0
  %2709 = vmatprep.subr.mxu0 0.0
  %2710 = vmatpush1.xpose.msra.mxu0 0.0
  %2711 = vmatprep.subr.mxu0 0.0
  %2712 = vmatpush1.xpose.msra.mxu0 0.0
  %2713 = vmatprep.mubr.f32.mxu0 0.0
  %2714 = vmatmul.mubr.f32.gmra.mrb[0].mxu0 %v2644
  %v2715 = vpop.f32.mrb[0].mxu0
  %v2716 = vadd.f32 %v209, %v2715
  %v2717 = vpop.f32.mrb[0].mxu0
  %2718 = vdwg.mxu0
  %v2720 = vsel %vm210, %v50, 0
  %v2723 = vsel %vm210, %v114, 0
  %2725 = vmatprep.subr.mxu0 0.0
  %2726 = vmatpush1.xpose.msra.mxu0 %v2723
  %2727 = vmatprep.subr.mxu0 0.0
  %2728 = vmatpush1.xpose.msra.mxu0 0.0
  %2729 = vmatprep.subr.mxu0 0.0
  %2730 = vmatpush1.xpose.msra.mxu0 0.0
  %2731 = vmatprep.subr.mxu0 0.0
  %2732 = vmatpush1.xpose.msra.mxu0 0.0
  %2733 = vmatprep.subr.mxu0 0.0
  %2734 = vmatpush1.xpose.msra.mxu0 0.0
  %2735 = vmatprep.subr.mxu0 0.0
  %2736 = vmatpush1.xpose.msra.mxu0 0.0
  %2737 = vmatprep.subr.mxu0 0.0
  %2738 = vmatpush1.xpose.msra.mxu0 0.0
  %2739 = vmatprep.subr.mxu0 0.0
  %2740 = vmatpush1.xpose.msra.mxu0 0.0
  %2741 = vmatprep.subr.mxu0 0.0
  %2742 = vmatpush1.xpose.msra.mxu0 0.0
  %2743 = vmatprep.subr.mxu0 0.0
  %2744 = vmatpush1.xpose.msra.mxu0 0.0
  %2745 = vmatprep.subr.mxu0 0.0
  %2746 = vmatpush1.xpose.msra.mxu0 0.0
  %2747 = vmatprep.subr.mxu0 0.0
  %2748 = vmatpush1.xpose.msra.mxu0 0.0
  %2749 = vmatprep.subr.mxu0 0.0
  %2750 = vmatpush1.xpose.msra.mxu0 0.0
  %2751 = vmatprep.subr.mxu0 0.0
  %2752 = vmatpush1.xpose.msra.mxu0 0.0
  %2753 = vmatprep.subr.mxu0 0.0
  %2754 = vmatpush1.xpose.msra.mxu0 0.0
  %2755 = vmatprep.subr.mxu0 0.0
  %2756 = vmatpush1.xpose.msra.mxu0 0.0
  %2757 = vmatprep.subr.mxu0 0.0
  %2758 = vmatpush1.xpose.msra.mxu0 0.0
  %2759 = vmatprep.subr.mxu0 0.0
  %2760 = vmatpush1.xpose.msra.mxu0 0.0
  %2761 = vmatprep.subr.mxu0 0.0
  %2762 = vmatpush1.xpose.msra.mxu0 0.0
  %2763 = vmatprep.subr.mxu0 0.0
  %2764 = vmatpush1.xpose.msra.mxu0 0.0
  %2765 = vmatprep.subr.mxu0 0.0
  %2766 = vmatpush1.xpose.msra.mxu0 0.0
  %2767 = vmatprep.subr.mxu0 0.0
  %2768 = vmatpush1.xpose.msra.mxu0 0.0
  %2769 = vmatprep.subr.mxu0 0.0
  %2770 = vmatpush1.xpose.msra.mxu0 0.0
  %2771 = vmatprep.subr.mxu0 0.0
  %2772 = vmatpush1.xpose.msra.mxu0 0.0
  %2773 = vmatprep.subr.mxu0 0.0
  %2774 = vmatpush1.xpose.msra.mxu0 0.0
  %2775 = vmatprep.subr.mxu0 0.0
  %2776 = vmatpush1.xpose.msra.mxu0 0.0
  %2777 = vmatprep.subr.mxu0 0.0
  %2778 = vmatpush1.xpose.msra.mxu0 0.0
  %2779 = vmatprep.subr.mxu0 0.0
  %2780 = vmatpush1.xpose.msra.mxu0 0.0
  %2781 = vmatprep.subr.mxu0 0.0
  %2782 = vmatpush1.xpose.msra.mxu0 0.0
  %2783 = vmatprep.subr.mxu0 0.0
  %2784 = vmatpush1.xpose.msra.mxu0 0.0
  %2785 = vmatprep.subr.mxu0 0.0
  %2786 = vmatpush1.xpose.msra.mxu0 0.0
  %2787 = vmatprep.subr.mxu0 0.0
  %2788 = vmatpush1.xpose.msra.mxu0 0.0
  %2789 = vmatprep.mubr.f32.mxu0 0.0
  %2790 = vmatmul.mubr.f32.gmra.mrb[0].mxu0 %v2720
  %v2791 = vpop.f32.mrb[0].mxu0
  %v2792 = vadd.f32 %v209, %v2791
  %v2793 = vpop.f32.mrb[0].mxu0
  %2794 = vdwg.mxu0
  %v2796 = vsel %vm210, %v51, 0
  %v2799 = vsel %vm210, %v115, 0
  %2801 = vmatprep.subr.mxu0 0.0
  %2802 = vmatpush1.xpose.msra.mxu0 %v2799
  %2803 = vmatprep.subr.mxu0 0.0
  %2804 = vmatpush1.xpose.msra.mxu0 0.0
  %2805 = vmatprep.subr.mxu0 0.0
  %2806 = vmatpush1.xpose.msra.mxu0 0.0
  %2807 = vmatprep.subr.mxu0 0.0
  %2808 = vmatpush1.xpose.msra.mxu0 0.0
  %2809 = vmatprep.subr.mxu0 0.0
  %2810 = vmatpush1.xpose.msra.mxu0 0.0
  %2811 = vmatprep.subr.mxu0 0.0
  %2812 = vmatpush1.xpose.msra.mxu0 0.0
  %2813 = vmatprep.subr.mxu0 0.0
  %2814 = vmatpush1.xpose.msra.mxu0 0.0
  %2815 = vmatprep.subr.mxu0 0.0
  %2816 = vmatpush1.xpose.msra.mxu0 0.0
  %2817 = vmatprep.subr.mxu0 0.0
  %2818 = vmatpush1.xpose.msra.mxu0 0.0
  %2819 = vmatprep.subr.mxu0 0.0
  %2820 = vmatpush1.xpose.msra.mxu0 0.0
  %2821 = vmatprep.subr.mxu0 0.0
  %2822 = vmatpush1.xpose.msra.mxu0 0.0
  %2823 = vmatprep.subr.mxu0 0.0
  %2824 = vmatpush1.xpose.msra.mxu0 0.0
  %2825 = vmatprep.subr.mxu0 0.0
  %2826 = vmatpush1.xpose.msra.mxu0 0.0
  %2827 = vmatprep.subr.mxu0 0.0
  %2828 = vmatpush1.xpose.msra.mxu0 0.0
  %2829 = vmatprep.subr.mxu0 0.0
  %2830 = vmatpush1.xpose.msra.mxu0 0.0
  %2831 = vmatprep.subr.mxu0 0.0
  %2832 = vmatpush1.xpose.msra.mxu0 0.0
  %2833 = vmatprep.subr.mxu0 0.0
  %2834 = vmatpush1.xpose.msra.mxu0 0.0
  %2835 = vmatprep.subr.mxu0 0.0
  %2836 = vmatpush1.xpose.msra.mxu0 0.0
  %2837 = vmatprep.subr.mxu0 0.0
  %2838 = vmatpush1.xpose.msra.mxu0 0.0
  %2839 = vmatprep.subr.mxu0 0.0
  %2840 = vmatpush1.xpose.msra.mxu0 0.0
  %2841 = vmatprep.subr.mxu0 0.0
  %2842 = vmatpush1.xpose.msra.mxu0 0.0
  %2843 = vmatprep.subr.mxu0 0.0
  %2844 = vmatpush1.xpose.msra.mxu0 0.0
  %2845 = vmatprep.subr.mxu0 0.0
  %2846 = vmatpush1.xpose.msra.mxu0 0.0
  %2847 = vmatprep.subr.mxu0 0.0
  %2848 = vmatpush1.xpose.msra.mxu0 0.0
  %2849 = vmatprep.subr.mxu0 0.0
  %2850 = vmatpush1.xpose.msra.mxu0 0.0
  %2851 = vmatprep.subr.mxu0 0.0
  %2852 = vmatpush1.xpose.msra.mxu0 0.0
  %2853 = vmatprep.subr.mxu0 0.0
  %2854 = vmatpush1.xpose.msra.mxu0 0.0
  %2855 = vmatprep.subr.mxu0 0.0
  %2856 = vmatpush1.xpose.msra.mxu0 0.0
  %2857 = vmatprep.subr.mxu0 0.0
  %2858 = vmatpush1.xpose.msra.mxu0 0.0
  %2859 = vmatprep.subr.mxu0 0.0
  %2860 = vmatpush1.xpose.msra.mxu0 0.0
  %2861 = vmatprep.subr.mxu0 0.0
  %2862 = vmatpush1.xpose.msra.mxu0 0.0
  %2863 = vmatprep.subr.mxu0 0.0
  %2864 = vmatpush1.xpose.msra.mxu0 0.0
  %2865 = vmatprep.mubr.f32.mxu0 0.0
  %2866 = vmatmul.mubr.f32.gmra.mrb[0].mxu0 %v2796
  %v2867 = vpop.f32.mrb[0].mxu0
  %v2868 = vadd.f32 %v209, %v2867
  %v2869 = vpop.f32.mrb[0].mxu0
  %2870 = vdwg.mxu0
  %v2872 = vsel %vm210, %v52, 0
  %v2875 = vsel %vm210, %v116, 0
  %2877 = vmatprep.subr.mxu0 0.0
  %2878 = vmatpush1.xpose.msra.mxu0 %v2875
  %2879 = vmatprep.subr.mxu0 0.0
  %2880 = vmatpush1.xpose.msra.mxu0 0.0
  %2881 = vmatprep.subr.mxu0 0.0
  %2882 = vmatpush1.xpose.msra.mxu0 0.0
  %2883 = vmatprep.subr.mxu0 0.0
  %2884 = vmatpush1.xpose.msra.mxu0 0.0
  %2885 = vmatprep.subr.mxu0 0.0
  %2886 = vmatpush1.xpose.msra.mxu0 0.0
  %2887 = vmatprep.subr.mxu0 0.0
  %2888 = vmatpush1.xpose.msra.mxu0 0.0
  %2889 = vmatprep.subr.mxu0 0.0
  %2890 = vmatpush1.xpose.msra.mxu0 0.0
  %2891 = vmatprep.subr.mxu0 0.0
  %2892 = vmatpush1.xpose.msra.mxu0 0.0
  %2893 = vmatprep.subr.mxu0 0.0
  %2894 = vmatpush1.xpose.msra.mxu0 0.0
  %2895 = vmatprep.subr.mxu0 0.0
  %2896 = vmatpush1.xpose.msra.mxu0 0.0
  %2897 = vmatprep.subr.mxu0 0.0
  %2898 = vmatpush1.xpose.msra.mxu0 0.0
  %2899 = vmatprep.subr.mxu0 0.0
  %2900 = vmatpush1.xpose.msra.mxu0 0.0
  %2901 = vmatprep.subr.mxu0 0.0
  %2902 = vmatpush1.xpose.msra.mxu0 0.0
  %2903 = vmatprep.subr.mxu0 0.0
  %2904 = vmatpush1.xpose.msra.mxu0 0.0
  %2905 = vmatprep.subr.mxu0 0.0
  %2906 = vmatpush1.xpose.msra.mxu0 0.0
  %2907 = vmatprep.subr.mxu0 0.0
  %2908 = vmatpush1.xpose.msra.mxu0 0.0
  %2909 = vmatprep.subr.mxu0 0.0
  %2910 = vmatpush1.xpose.msra.mxu0 0.0
  %2911 = vmatprep.subr.mxu0 0.0
  %2912 = vmatpush1.xpose.msra.mxu0 0.0
  %2913 = vmatprep.subr.mxu0 0.0
  %2914 = vmatpush1.xpose.msra.mxu0 0.0
  %2915 = vmatprep.subr.mxu0 0.0
  %2916 = vmatpush1.xpose.msra.mxu0 0.0
  %2917 = vmatprep.subr.mxu0 0.0
  %2918 = vmatpush1.xpose.msra.mxu0 0.0
  %2919 = vmatprep.subr.mxu0 0.0
  %2920 = vmatpush1.xpose.msra.mxu0 0.0
  %2921 = vmatprep.subr.mxu0 0.0
  %2922 = vmatpush1.xpose.msra.mxu0 0.0
  %2923 = vmatprep.subr.mxu0 0.0
  %2924 = vmatpush1.xpose.msra.mxu0 0.0
  %2925 = vmatprep.subr.mxu0 0.0
  %2926 = vmatpush1.xpose.msra.mxu0 0.0
  %2927 = vmatprep.subr.mxu0 0.0
  %2928 = vmatpush1.xpose.msra.mxu0 0.0
  %2929 = vmatprep.subr.mxu0 0.0
  %2930 = vmatpush1.xpose.msra.mxu0 0.0
  %2931 = vmatprep.subr.mxu0 0.0
  %2932 = vmatpush1.xpose.msra.mxu0 0.0
  %2933 = vmatprep.subr.mxu0 0.0
  %2934 = vmatpush1.xpose.msra.mxu0 0.0
  %2935 = vmatprep.subr.mxu0 0.0
  %2936 = vmatpush1.xpose.msra.mxu0 0.0
  %2937 = vmatprep.subr.mxu0 0.0
  %2938 = vmatpush1.xpose.msra.mxu0 0.0
  %2939 = vmatprep.subr.mxu0 0.0
  %2940 = vmatpush1.xpose.msra.mxu0 0.0
  %2941 = vmatprep.mubr.f32.mxu0 0.0
  %2942 = vmatmul.mubr.f32.gmra.mrb[0].mxu0 %v2872
  %v2943 = vpop.f32.mrb[0].mxu0
  %v2944 = vadd.f32 %v209, %v2943
  %v2945 = vpop.f32.mrb[0].mxu0
  %2946 = vdwg.mxu0
  %v2948 = vsel %vm210, %v53, 0
  %v2951 = vsel %vm210, %v117, 0
  %2953 = vmatprep.subr.mxu0 0.0
  %2954 = vmatpush1.xpose.msra.mxu0 %v2951
  %2955 = vmatprep.subr.mxu0 0.0
  %2956 = vmatpush1.xpose.msra.mxu0 0.0
  %2957 = vmatprep.subr.mxu0 0.0
  %2958 = vmatpush1.xpose.msra.mxu0 0.0
  %2959 = vmatprep.subr.mxu0 0.0
  %2960 = vmatpush1.xpose.msra.mxu0 0.0
  %2961 = vmatprep.subr.mxu0 0.0
  %2962 = vmatpush1.xpose.msra.mxu0 0.0
  %2963 = vmatprep.subr.mxu0 0.0
  %2964 = vmatpush1.xpose.msra.mxu0 0.0
  %2965 = vmatprep.subr.mxu0 0.0
  %2966 = vmatpush1.xpose.msra.mxu0 0.0
  %2967 = vmatprep.subr.mxu0 0.0
  %2968 = vmatpush1.xpose.msra.mxu0 0.0
  %2969 = vmatprep.subr.mxu0 0.0
  %2970 = vmatpush1.xpose.msra.mxu0 0.0
  %2971 = vmatprep.subr.mxu0 0.0
  %2972 = vmatpush1.xpose.msra.mxu0 0.0
  %2973 = vmatprep.subr.mxu0 0.0
  %2974 = vmatpush1.xpose.msra.mxu0 0.0
  %2975 = vmatprep.subr.mxu0 0.0
  %2976 = vmatpush1.xpose.msra.mxu0 0.0
  %2977 = vmatprep.subr.mxu0 0.0
  %2978 = vmatpush1.xpose.msra.mxu0 0.0
  %2979 = vmatprep.subr.mxu0 0.0
  %2980 = vmatpush1.xpose.msra.mxu0 0.0
  %2981 = vmatprep.subr.mxu0 0.0
  %2982 = vmatpush1.xpose.msra.mxu0 0.0
  %2983 = vmatprep.subr.mxu0 0.0
  %2984 = vmatpush1.xpose.msra.mxu0 0.0
  %2985 = vmatprep.subr.mxu0 0.0
  %2986 = vmatpush1.xpose.msra.mxu0 0.0
  %2987 = vmatprep.subr.mxu0 0.0
  %2988 = vmatpush1.xpose.msra.mxu0 0.0
  %2989 = vmatprep.subr.mxu0 0.0
  %2990 = vmatpush1.xpose.msra.mxu0 0.0
  %2991 = vmatprep.subr.mxu0 0.0
  %2992 = vmatpush1.xpose.msra.mxu0 0.0
  %2993 = vmatprep.subr.mxu0 0.0
  %2994 = vmatpush1.xpose.msra.mxu0 0.0
  %2995 = vmatprep.subr.mxu0 0.0
  %2996 = vmatpush1.xpose.msra.mxu0 0.0
  %2997 = vmatprep.subr.mxu0 0.0
  %2998 = vmatpush1.xpose.msra.mxu0 0.0
  %2999 = vmatprep.subr.mxu0 0.0
  %3000 = vmatpush1.xpose.msra.mxu0 0.0
  %3001 = vmatprep.subr.mxu0 0.0
  %3002 = vmatpush1.xpose.msra.mxu0 0.0
  %3003 = vmatprep.subr.mxu0 0.0
  %3004 = vmatpush1.xpose.msra.mxu0 0.0
  %3005 = vmatprep.subr.mxu0 0.0
  %3006 = vmatpush1.xpose.msra.mxu0 0.0
  %3007 = vmatprep.subr.mxu0 0.0
  %3008 = vmatpush1.xpose.msra.mxu0 0.0
  %3009 = vmatprep.subr.mxu0 0.0
  %3010 = vmatpush1.xpose.msra.mxu0 0.0
  %3011 = vmatprep.subr.mxu0 0.0
  %3012 = vmatpush1.xpose.msra.mxu0 0.0
  %3013 = vmatprep.subr.mxu0 0.0
  %3014 = vmatpush1.xpose.msra.mxu0 0.0
  %3015 = vmatprep.subr.mxu0 0.0
  %3016 = vmatpush1.xpose.msra.mxu0 0.0
  %3017 = vmatprep.mubr.f32.mxu0 0.0
  %3018 = vmatmul.mubr.f32.gmra.mrb[0].mxu0 %v2948
  %v3019 = vpop.f32.mrb[0].mxu0
  %v3020 = vadd.f32 %v209, %v3019
  %v3021 = vpop.f32.mrb[0].mxu0
  %3022 = vdwg.mxu0
  %v3024 = vsel %vm210, %v54, 0
  %v3027 = vsel %vm210, %v118, 0
  %3029 = vmatprep.subr.mxu0 0.0
  %3030 = vmatpush1.xpose.msra.mxu0 %v3027
  %3031 = vmatprep.subr.mxu0 0.0
  %3032 = vmatpush1.xpose.msra.mxu0 0.0
  %3033 = vmatprep.subr.mxu0 0.0
  %3034 = vmatpush1.xpose.msra.mxu0 0.0
  %3035 = vmatprep.subr.mxu0 0.0
  %3036 = vmatpush1.xpose.msra.mxu0 0.0
  %3037 = vmatprep.subr.mxu0 0.0
  %3038 = vmatpush1.xpose.msra.mxu0 0.0
  %3039 = vmatprep.subr.mxu0 0.0
  %3040 = vmatpush1.xpose.msra.mxu0 0.0
  %3041 = vmatprep.subr.mxu0 0.0
  %3042 = vmatpush1.xpose.msra.mxu0 0.0
  %3043 = vmatprep.subr.mxu0 0.0
  %3044 = vmatpush1.xpose.msra.mxu0 0.0
  %3045 = vmatprep.subr.mxu0 0.0
  %3046 = vmatpush1.xpose.msra.mxu0 0.0
  %3047 = vmatprep.subr.mxu0 0.0
  %3048 = vmatpush1.xpose.msra.mxu0 0.0
  %3049 = vmatprep.subr.mxu0 0.0
  %3050 = vmatpush1.xpose.msra.mxu0 0.0
  %3051 = vmatprep.subr.mxu0 0.0
  %3052 = vmatpush1.xpose.msra.mxu0 0.0
  %3053 = vmatprep.subr.mxu0 0.0
  %3054 = vmatpush1.xpose.msra.mxu0 0.0
  %3055 = vmatprep.subr.mxu0 0.0
  %3056 = vmatpush1.xpose.msra.mxu0 0.0
  %3057 = vmatprep.subr.mxu0 0.0
  %3058 = vmatpush1.xpose.msra.mxu0 0.0
  %3059 = vmatprep.subr.mxu0 0.0
  %3060 = vmatpush1.xpose.msra.mxu0 0.0
  %3061 = vmatprep.subr.mxu0 0.0
  %3062 = vmatpush1.xpose.msra.mxu0 0.0
  %3063 = vmatprep.subr.mxu0 0.0
  %3064 = vmatpush1.xpose.msra.mxu0 0.0
  %3065 = vmatprep.subr.mxu0 0.0
  %3066 = vmatpush1.xpose.msra.mxu0 0.0
  %3067 = vmatprep.subr.mxu0 0.0
  %3068 = vmatpush1.xpose.msra.mxu0 0.0
  %3069 = vmatprep.subr.mxu0 0.0
  %3070 = vmatpush1.xpose.msra.mxu0 0.0
  %3071 = vmatprep.subr.mxu0 0.0
  %3072 = vmatpush1.xpose.msra.mxu0 0.0
  %3073 = vmatprep.subr.mxu0 0.0
  %3074 = vmatpush1.xpose.msra.mxu0 0.0
  %3075 = vmatprep.subr.mxu0 0.0
  %3076 = vmatpush1.xpose.msra.mxu0 0.0
  %3077 = vmatprep.subr.mxu0 0.0
  %3078 = vmatpush1.xpose.msra.mxu0 0.0
  %3079 = vmatprep.subr.mxu0 0.0
  %3080 = vmatpush1.xpose.msra.mxu0 0.0
  %3081 = vmatprep.subr.mxu0 0.0
  %3082 = vmatpush1.xpose.msra.mxu0 0.0
  %3083 = vmatprep.subr.mxu0 0.0
  %3084 = vmatpush1.xpose.msra.mxu0 0.0
  %3085 = vmatprep.subr.mxu0 0.0
  %3086 = vmatpush1.xpose.msra.mxu0 0.0
  %3087 = vmatprep.subr.mxu0 0.0
  %3088 = vmatpush1.xpose.msra.mxu0 0.0
  %3089 = vmatprep.subr.mxu0 0.0
  %3090 = vmatpush1.xpose.msra.mxu0 0.0
  %3091 = vmatprep.subr.mxu0 0.0
  %3092 = vmatpush1.xpose.msra.mxu0 0.0
  %3093 = vmatprep.mubr.f32.mxu0 0.0
  %3094 = vmatmul.mubr.f32.gmra.mrb[0].mxu0 %v3024
  %v3095 = vpop.f32.mrb[0].mxu0
  %v3096 = vadd.f32 %v209, %v3095
  %v3097 = vpop.f32.mrb[0].mxu0
  %3098 = vdwg.mxu0
  %v3100 = vsel %vm210, %v55, 0
  %v3103 = vsel %vm210, %v119, 0
  %3105 = vmatprep.subr.mxu0 0.0
  %3106 = vmatpush1.xpose.msra.mxu0 %v3103
  %3107 = vmatprep.subr.mxu0 0.0
  %3108 = vmatpush1.xpose.msra.mxu0 0.0
  %3109 = vmatprep.subr.mxu0 0.0
  %3110 = vmatpush1.xpose.msra.mxu0 0.0
  %3111 = vmatprep.subr.mxu0 0.0
  %3112 = vmatpush1.xpose.msra.mxu0 0.0
  %3113 = vmatprep.subr.mxu0 0.0
  %3114 = vmatpush1.xpose.msra.mxu0 0.0
  %3115 = vmatprep.subr.mxu0 0.0
  %3116 = vmatpush1.xpose.msra.mxu0 0.0
  %3117 = vmatprep.subr.mxu0 0.0
  %3118 = vmatpush1.xpose.msra.mxu0 0.0
  %3119 = vmatprep.subr.mxu0 0.0
  %3120 = vmatpush1.xpose.msra.mxu0 0.0
  %3121 = vmatprep.subr.mxu0 0.0
  %3122 = vmatpush1.xpose.msra.mxu0 0.0
  %3123 = vmatprep.subr.mxu0 0.0
  %3124 = vmatpush1.xpose.msra.mxu0 0.0
  %3125 = vmatprep.subr.mxu0 0.0
  %3126 = vmatpush1.xpose.msra.mxu0 0.0
  %3127 = vmatprep.subr.mxu0 0.0
  %3128 = vmatpush1.xpose.msra.mxu0 0.0
  %3129 = vmatprep.subr.mxu0 0.0
  %3130 = vmatpush1.xpose.msra.mxu0 0.0
  %3131 = vmatprep.subr.mxu0 0.0
  %3132 = vmatpush1.xpose.msra.mxu0 0.0
  %3133 = vmatprep.subr.mxu0 0.0
  %3134 = vmatpush1.xpose.msra.mxu0 0.0
  %3135 = vmatprep.subr.mxu0 0.0
  %3136 = vmatpush1.xpose.msra.mxu0 0.0
  %3137 = vmatprep.subr.mxu0 0.0
  %3138 = vmatpush1.xpose.msra.mxu0 0.0
  %3139 = vmatprep.subr.mxu0 0.0
  %3140 = vmatpush1.xpose.msra.mxu0 0.0
  %3141 = vmatprep.subr.mxu0 0.0
  %3142 = vmatpush1.xpose.msra.mxu0 0.0
  %3143 = vmatprep.subr.mxu0 0.0
  %3144 = vmatpush1.xpose.msra.mxu0 0.0
  %3145 = vmatprep.subr.mxu0 0.0
  %3146 = vmatpush1.xpose.msra.mxu0 0.0
  %3147 = vmatprep.subr.mxu0 0.0
  %3148 = vmatpush1.xpose.msra.mxu0 0.0
  %3149 = vmatprep.subr.mxu0 0.0
  %3150 = vmatpush1.xpose.msra.mxu0 0.0
  %3151 = vmatprep.subr.mxu0 0.0
  %3152 = vmatpush1.xpose.msra.mxu0 0.0
  %3153 = vmatprep.subr.mxu0 0.0
  %3154 = vmatpush1.xpose.msra.mxu0 0.0
  %3155 = vmatprep.subr.mxu0 0.0
  %3156 = vmatpush1.xpose.msra.mxu0 0.0
  %3157 = vmatprep.subr.mxu0 0.0
  %3158 = vmatpush1.xpose.msra.mxu0 0.0
  %3159 = vmatprep.subr.mxu0 0.0
  %3160 = vmatpush1.xpose.msra.mxu0 0.0
  %3161 = vmatprep.subr.mxu0 0.0
  %3162 = vmatpush1.xpose.msra.mxu0 0.0
  %3163 = vmatprep.subr.mxu0 0.0
  %3164 = vmatpush1.xpose.msra.mxu0 0.0
  %3165 = vmatprep.subr.mxu0 0.0
  %3166 = vmatpush1.xpose.msra.mxu0 0.0
  %3167 = vmatprep.subr.mxu0 0.0
  %3168 = vmatpush1.xpose.msra.mxu0 0.0
  %3169 = vmatprep.mubr.f32.mxu0 0.0
  %3170 = vmatmul.mubr.f32.gmra.mrb[0].mxu0 %v3100
  %v3171 = vpop.f32.mrb[0].mxu0
  %v3172 = vadd.f32 %v209, %v3171
  %v3173 = vpop.f32.mrb[0].mxu0
  %3174 = vdwg.mxu0
  %v3176 = vsel %vm210, %v56, 0
  %v3179 = vsel %vm210, %v120, 0
  %3181 = vmatprep.subr.mxu0 0.0
  %3182 = vmatpush1.xpose.msra.mxu0 %v3179
  %3183 = vmatprep.subr.mxu0 0.0
  %3184 = vmatpush1.xpose.msra.mxu0 0.0
  %3185 = vmatprep.subr.mxu0 0.0
  %3186 = vmatpush1.xpose.msra.mxu0 0.0
  %3187 = vmatprep.subr.mxu0 0.0
  %3188 = vmatpush1.xpose.msra.mxu0 0.0
  %3189 = vmatprep.subr.mxu0 0.0
  %3190 = vmatpush1.xpose.msra.mxu0 0.0
  %3191 = vmatprep.subr.mxu0 0.0
  %3192 = vmatpush1.xpose.msra.mxu0 0.0
  %3193 = vmatprep.subr.mxu0 0.0
  %3194 = vmatpush1.xpose.msra.mxu0 0.0
  %3195 = vmatprep.subr.mxu0 0.0
  %3196 = vmatpush1.xpose.msra.mxu0 0.0
  %3197 = vmatprep.subr.mxu0 0.0
  %3198 = vmatpush1.xpose.msra.mxu0 0.0
  %3199 = vmatprep.subr.mxu0 0.0
  %3200 = vmatpush1.xpose.msra.mxu0 0.0
  %3201 = vmatprep.subr.mxu0 0.0
  %3202 = vmatpush1.xpose.msra.mxu0 0.0
  %3203 = vmatprep.subr.mxu0 0.0
  %3204 = vmatpush1.xpose.msra.mxu0 0.0
  %3205 = vmatprep.subr.mxu0 0.0
  %3206 = vmatpush1.xpose.msra.mxu0 0.0
  %3207 = vmatprep.subr.mxu0 0.0
  %3208 = vmatpush1.xpose.msra.mxu0 0.0
  %3209 = vmatprep.subr.mxu0 0.0
  %3210 = vmatpush1.xpose.msra.mxu0 0.0
  %3211 = vmatprep.subr.mxu0 0.0
  %3212 = vmatpush1.xpose.msra.mxu0 0.0
  %3213 = vmatprep.subr.mxu0 0.0
  %3214 = vmatpush1.xpose.msra.mxu0 0.0
  %3215 = vmatprep.subr.mxu0 0.0
  %3216 = vmatpush1.xpose.msra.mxu0 0.0
  %3217 = vmatprep.subr.mxu0 0.0
  %3218 = vmatpush1.xpose.msra.mxu0 0.0
  %3219 = vmatprep.subr.mxu0 0.0
  %3220 = vmatpush1.xpose.msra.mxu0 0.0
  %3221 = vmatprep.subr.mxu0 0.0
  %3222 = vmatpush1.xpose.msra.mxu0 0.0
  %3223 = vmatprep.subr.mxu0 0.0
  %3224 = vmatpush1.xpose.msra.mxu0 0.0
  %3225 = vmatprep.subr.mxu0 0.0
  %3226 = vmatpush1.xpose.msra.mxu0 0.0
  %3227 = vmatprep.subr.mxu0 0.0
  %3228 = vmatpush1.xpose.msra.mxu0 0.0
  %3229 = vmatprep.subr.mxu0 0.0
  %3230 = vmatpush1.xpose.msra.mxu0 0.0
  %3231 = vmatprep.subr.mxu0 0.0
  %3232 = vmatpush1.xpose.msra.mxu0 0.0
  %3233 = vmatprep.subr.mxu0 0.0
  %3234 = vmatpush1.xpose.msra.mxu0 0.0
  %3235 = vmatprep.subr.mxu0 0.0
  %3236 = vmatpush1.xpose.msra.mxu0 0.0
  %3237 = vmatprep.subr.mxu0 0.0
  %3238 = vmatpush1.xpose.msra.mxu0 0.0
  %3239 = vmatprep.subr.mxu0 0.0
  %3240 = vmatpush1.xpose.msra.mxu0 0.0
  %3241 = vmatprep.subr.mxu0 0.0
  %3242 = vmatpush1.xpose.msra.mxu0 0.0
  %3243 = vmatprep.subr.mxu0 0.0
  %3244 = vmatpush1.xpose.msra.mxu0 0.0
  %3245 = vmatprep.mubr.f32.mxu0 0.0
  %3246 = vmatmul.mubr.f32.gmra.mrb[0].mxu0 %v3176
  %v3247 = vpop.f32.mrb[0].mxu0
  %v3248 = vadd.f32 %v209, %v3247
  %v3249 = vpop.f32.mrb[0].mxu0
  %3250 = vdwg.mxu0
  %v3252 = vsel %vm210, %v57, 0
  %v3255 = vsel %vm210, %v121, 0
  %3257 = vmatprep.subr.mxu0 0.0
  %3258 = vmatpush1.xpose.msra.mxu0 %v3255
  %3259 = vmatprep.subr.mxu0 0.0
  %3260 = vmatpush1.xpose.msra.mxu0 0.0
  %3261 = vmatprep.subr.mxu0 0.0
  %3262 = vmatpush1.xpose.msra.mxu0 0.0
  %3263 = vmatprep.subr.mxu0 0.0
  %3264 = vmatpush1.xpose.msra.mxu0 0.0
  %3265 = vmatprep.subr.mxu0 0.0
  %3266 = vmatpush1.xpose.msra.mxu0 0.0
  %3267 = vmatprep.subr.mxu0 0.0
  %3268 = vmatpush1.xpose.msra.mxu0 0.0
  %3269 = vmatprep.subr.mxu0 0.0
  %3270 = vmatpush1.xpose.msra.mxu0 0.0
  %3271 = vmatprep.subr.mxu0 0.0
  %3272 = vmatpush1.xpose.msra.mxu0 0.0
  %3273 = vmatprep.subr.mxu0 0.0
  %3274 = vmatpush1.xpose.msra.mxu0 0.0
  %3275 = vmatprep.subr.mxu0 0.0
  %3276 = vmatpush1.xpose.msra.mxu0 0.0
  %3277 = vmatprep.subr.mxu0 0.0
  %3278 = vmatpush1.xpose.msra.mxu0 0.0
  %3279 = vmatprep.subr.mxu0 0.0
  %3280 = vmatpush1.xpose.msra.mxu0 0.0
  %3281 = vmatprep.subr.mxu0 0.0
  %3282 = vmatpush1.xpose.msra.mxu0 0.0
  %3283 = vmatprep.subr.mxu0 0.0
  %3284 = vmatpush1.xpose.msra.mxu0 0.0
  %3285 = vmatprep.subr.mxu0 0.0
  %3286 = vmatpush1.xpose.msra.mxu0 0.0
  %3287 = vmatprep.subr.mxu0 0.0
  %3288 = vmatpush1.xpose.msra.mxu0 0.0
  %3289 = vmatprep.subr.mxu0 0.0
  %3290 = vmatpush1.xpose.msra.mxu0 0.0
  %3291 = vmatprep.subr.mxu0 0.0
  %3292 = vmatpush1.xpose.msra.mxu0 0.0
  %3293 = vmatprep.subr.mxu0 0.0
  %3294 = vmatpush1.xpose.msra.mxu0 0.0
  %3295 = vmatprep.subr.mxu0 0.0
  %3296 = vmatpush1.xpose.msra.mxu0 0.0
  %3297 = vmatprep.subr.mxu0 0.0
  %3298 = vmatpush1.xpose.msra.mxu0 0.0
  %3299 = vmatprep.subr.mxu0 0.0
  %3300 = vmatpush1.xpose.msra.mxu0 0.0
  %3301 = vmatprep.subr.mxu0 0.0
  %3302 = vmatpush1.xpose.msra.mxu0 0.0
  %3303 = vmatprep.subr.mxu0 0.0
  %3304 = vmatpush1.xpose.msra.mxu0 0.0
  %3305 = vmatprep.subr.mxu0 0.0
  %3306 = vmatpush1.xpose.msra.mxu0 0.0
  %3307 = vmatprep.subr.mxu0 0.0
  %3308 = vmatpush1.xpose.msra.mxu0 0.0
  %3309 = vmatprep.subr.mxu0 0.0
  %3310 = vmatpush1.xpose.msra.mxu0 0.0
  %3311 = vmatprep.subr.mxu0 0.0
  %3312 = vmatpush1.xpose.msra.mxu0 0.0
  %3313 = vmatprep.subr.mxu0 0.0
  %3314 = vmatpush1.xpose.msra.mxu0 0.0
  %3315 = vmatprep.subr.mxu0 0.0
  %3316 = vmatpush1.xpose.msra.mxu0 0.0
  %3317 = vmatprep.subr.mxu0 0.0
  %3318 = vmatpush1.xpose.msra.mxu0 0.0
  %3319 = vmatprep.subr.mxu0 0.0
  %3320 = vmatpush1.xpose.msra.mxu0 0.0
  %3321 = vmatprep.mubr.f32.mxu0 0.0
  %3322 = vmatmul.mubr.f32.gmra.mrb[0].mxu0 %v3252
  %v3323 = vpop.f32.mrb[0].mxu0
  %v3324 = vadd.f32 %v209, %v3323
  %v3325 = vpop.f32.mrb[0].mxu0
  %3326 = vdwg.mxu0
  %v3328 = vsel %vm210, %v58, 0
  %v3331 = vsel %vm210, %v122, 0
  %3333 = vmatprep.subr.mxu0 0.0
  %3334 = vmatpush1.xpose.msra.mxu0 %v3331
  %3335 = vmatprep.subr.mxu0 0.0
  %3336 = vmatpush1.xpose.msra.mxu0 0.0
  %3337 = vmatprep.subr.mxu0 0.0
  %3338 = vmatpush1.xpose.msra.mxu0 0.0
  %3339 = vmatprep.subr.mxu0 0.0
  %3340 = vmatpush1.xpose.msra.mxu0 0.0
  %3341 = vmatprep.subr.mxu0 0.0
  %3342 = vmatpush1.xpose.msra.mxu0 0.0
  %3343 = vmatprep.subr.mxu0 0.0
  %3344 = vmatpush1.xpose.msra.mxu0 0.0
  %3345 = vmatprep.subr.mxu0 0.0
  %3346 = vmatpush1.xpose.msra.mxu0 0.0
  %3347 = vmatprep.subr.mxu0 0.0
  %3348 = vmatpush1.xpose.msra.mxu0 0.0
  %3349 = vmatprep.subr.mxu0 0.0
  %3350 = vmatpush1.xpose.msra.mxu0 0.0
  %3351 = vmatprep.subr.mxu0 0.0
  %3352 = vmatpush1.xpose.msra.mxu0 0.0
  %3353 = vmatprep.subr.mxu0 0.0
  %3354 = vmatpush1.xpose.msra.mxu0 0.0
  %3355 = vmatprep.subr.mxu0 0.0
  %3356 = vmatpush1.xpose.msra.mxu0 0.0
  %3357 = vmatprep.subr.mxu0 0.0
  %3358 = vmatpush1.xpose.msra.mxu0 0.0
  %3359 = vmatprep.subr.mxu0 0.0
  %3360 = vmatpush1.xpose.msra.mxu0 0.0
  %3361 = vmatprep.subr.mxu0 0.0
  %3362 = vmatpush1.xpose.msra.mxu0 0.0
  %3363 = vmatprep.subr.mxu0 0.0
  %3364 = vmatpush1.xpose.msra.mxu0 0.0
  %3365 = vmatprep.subr.mxu0 0.0
  %3366 = vmatpush1.xpose.msra.mxu0 0.0
  %3367 = vmatprep.subr.mxu0 0.0
  %3368 = vmatpush1.xpose.msra.mxu0 0.0
  %3369 = vmatprep.subr.mxu0 0.0
  %3370 = vmatpush1.xpose.msra.mxu0 0.0
  %3371 = vmatprep.subr.mxu0 0.0
  %3372 = vmatpush1.xpose.msra.mxu0 0.0
  %3373 = vmatprep.subr.mxu0 0.0
  %3374 = vmatpush1.xpose.msra.mxu0 0.0
  %3375 = vmatprep.subr.mxu0 0.0
  %3376 = vmatpush1.xpose.msra.mxu0 0.0
  %3377 = vmatprep.subr.mxu0 0.0
  %3378 = vmatpush1.xpose.msra.mxu0 0.0
  %3379 = vmatprep.subr.mxu0 0.0
  %3380 = vmatpush1.xpose.msra.mxu0 0.0
  %3381 = vmatprep.subr.mxu0 0.0
  %3382 = vmatpush1.xpose.msra.mxu0 0.0
  %3383 = vmatprep.subr.mxu0 0.0
  %3384 = vmatpush1.xpose.msra.mxu0 0.0
  %3385 = vmatprep.subr.mxu0 0.0
  %3386 = vmatpush1.xpose.msra.mxu0 0.0
  %3387 = vmatprep.subr.mxu0 0.0
  %3388 = vmatpush1.xpose.msra.mxu0 0.0
  %3389 = vmatprep.subr.mxu0 0.0
  %3390 = vmatpush1.xpose.msra.mxu0 0.0
  %3391 = vmatprep.subr.mxu0 0.0
  %3392 = vmatpush1.xpose.msra.mxu0 0.0
  %3393 = vmatprep.subr.mxu0 0.0
  %3394 = vmatpush1.xpose.msra.mxu0 0.0
  %3395 = vmatprep.subr.mxu0 0.0
  %3396 = vmatpush1.xpose.msra.mxu0 0.0
  %3397 = vmatprep.mubr.f32.mxu0 0.0
  %3398 = vmatmul.mubr.f32.gmra.mrb[0].mxu0 %v3328
  %v3399 = vpop.f32.mrb[0].mxu0
  %v3400 = vadd.f32 %v209, %v3399
  %v3401 = vpop.f32.mrb[0].mxu0
  %3402 = vdwg.mxu0
  %v3404 = vsel %vm210, %v59, 0
  %v3407 = vsel %vm210, %v123, 0
  %3409 = vmatprep.subr.mxu0 0.0
  %3410 = vmatpush1.xpose.msra.mxu0 %v3407
  %3411 = vmatprep.subr.mxu0 0.0
  %3412 = vmatpush1.xpose.msra.mxu0 0.0
  %3413 = vmatprep.subr.mxu0 0.0
  %3414 = vmatpush1.xpose.msra.mxu0 0.0
  %3415 = vmatprep.subr.mxu0 0.0
  %3416 = vmatpush1.xpose.msra.mxu0 0.0
  %3417 = vmatprep.subr.mxu0 0.0
  %3418 = vmatpush1.xpose.msra.mxu0 0.0
  %3419 = vmatprep.subr.mxu0 0.0
  %3420 = vmatpush1.xpose.msra.mxu0 0.0
  %3421 = vmatprep.subr.mxu0 0.0
  %3422 = vmatpush1.xpose.msra.mxu0 0.0
  %3423 = vmatprep.subr.mxu0 0.0
  %3424 = vmatpush1.xpose.msra.mxu0 0.0
  %3425 = vmatprep.subr.mxu0 0.0
  %3426 = vmatpush1.xpose.msra.mxu0 0.0
  %3427 = vmatprep.subr.mxu0 0.0
  %3428 = vmatpush1.xpose.msra.mxu0 0.0
  %3429 = vmatprep.subr.mxu0 0.0
  %3430 = vmatpush1.xpose.msra.mxu0 0.0
  %3431 = vmatprep.subr.mxu0 0.0
  %3432 = vmatpush1.xpose.msra.mxu0 0.0
  %3433 = vmatprep.subr.mxu0 0.0
  %3434 = vmatpush1.xpose.msra.mxu0 0.0
  %3435 = vmatprep.subr.mxu0 0.0
  %3436 = vmatpush1.xpose.msra.mxu0 0.0
  %3437 = vmatprep.subr.mxu0 0.0
  %3438 = vmatpush1.xpose.msra.mxu0 0.0
  %3439 = vmatprep.subr.mxu0 0.0
  %3440 = vmatpush1.xpose.msra.mxu0 0.0
  %3441 = vmatprep.subr.mxu0 0.0
  %3442 = vmatpush1.xpose.msra.mxu0 0.0
  %3443 = vmatprep.subr.mxu0 0.0
  %3444 = vmatpush1.xpose.msra.mxu0 0.0
  %3445 = vmatprep.subr.mxu0 0.0
  %3446 = vmatpush1.xpose.msra.mxu0 0.0
  %3447 = vmatprep.subr.mxu0 0.0
  %3448 = vmatpush1.xpose.msra.mxu0 0.0
  %3449 = vmatprep.subr.mxu0 0.0
  %3450 = vmatpush1.xpose.msra.mxu0 0.0
  %3451 = vmatprep.subr.mxu0 0.0
  %3452 = vmatpush1.xpose.msra.mxu0 0.0
  %3453 = vmatprep.subr.mxu0 0.0
  %3454 = vmatpush1.xpose.msra.mxu0 0.0
  %3455 = vmatprep.subr.mxu0 0.0
  %3456 = vmatpush1.xpose.msra.mxu0 0.0
  %3457 = vmatprep.subr.mxu0 0.0
  %3458 = vmatpush1.xpose.msra.mxu0 0.0
  %3459 = vmatprep.subr.mxu0 0.0
  %3460 = vmatpush1.xpose.msra.mxu0 0.0
  %3461 = vmatprep.subr.mxu0 0.0
  %3462 = vmatpush1.xpose.msra.mxu0 0.0
  %3463 = vmatprep.subr.mxu0 0.0
  %3464 = vmatpush1.xpose.msra.mxu0 0.0
  %3465 = vmatprep.subr.mxu0 0.0
  %3466 = vmatpush1.xpose.msra.mxu0 0.0
  %3467 = vmatprep.subr.mxu0 0.0
  %3468 = vmatpush1.xpose.msra.mxu0 0.0
  %3469 = vmatprep.subr.mxu0 0.0
  %3470 = vmatpush1.xpose.msra.mxu0 0.0
  %3471 = vmatprep.subr.mxu0 0.0
  %3472 = vmatpush1.xpose.msra.mxu0 0.0
  %3473 = vmatprep.mubr.f32.mxu0 0.0
  %3474 = vmatmul.mubr.f32.gmra.mrb[0].mxu0 %v3404
  %v3475 = vpop.f32.mrb[0].mxu0
  %v3476 = vadd.f32 %v209, %v3475
  %v3477 = vpop.f32.mrb[0].mxu0
  %3478 = vdwg.mxu0
  %v3480 = vsel %vm210, %v60, 0
  %v3483 = vsel %vm210, %v124, 0
  %3485 = vmatprep.subr.mxu0 0.0
  %3486 = vmatpush1.xpose.msra.mxu0 %v3483
  %3487 = vmatprep.subr.mxu0 0.0
  %3488 = vmatpush1.xpose.msra.mxu0 0.0
  %3489 = vmatprep.subr.mxu0 0.0
  %3490 = vmatpush1.xpose.msra.mxu0 0.0
  %3491 = vmatprep.subr.mxu0 0.0
  %3492 = vmatpush1.xpose.msra.mxu0 0.0
  %3493 = vmatprep.subr.mxu0 0.0
  %3494 = vmatpush1.xpose.msra.mxu0 0.0
  %3495 = vmatprep.subr.mxu0 0.0
  %3496 = vmatpush1.xpose.msra.mxu0 0.0
  %3497 = vmatprep.subr.mxu0 0.0
  %3498 = vmatpush1.xpose.msra.mxu0 0.0
  %3499 = vmatprep.subr.mxu0 0.0
  %3500 = vmatpush1.xpose.msra.mxu0 0.0
  %3501 = vmatprep.subr.mxu0 0.0
  %3502 = vmatpush1.xpose.msra.mxu0 0.0
  %3503 = vmatprep.subr.mxu0 0.0
  %3504 = vmatpush1.xpose.msra.mxu0 0.0
  %3505 = vmatprep.subr.mxu0 0.0
  %3506 = vmatpush1.xpose.msra.mxu0 0.0
  %3507 = vmatprep.subr.mxu0 0.0
  %3508 = vmatpush1.xpose.msra.mxu0 0.0
  %3509 = vmatprep.subr.mxu0 0.0
  %3510 = vmatpush1.xpose.msra.mxu0 0.0
  %3511 = vmatprep.subr.mxu0 0.0
  %3512 = vmatpush1.xpose.msra.mxu0 0.0
  %3513 = vmatprep.subr.mxu0 0.0
  %3514 = vmatpush1.xpose.msra.mxu0 0.0
  %3515 = vmatprep.subr.mxu0 0.0
  %3516 = vmatpush1.xpose.msra.mxu0 0.0
  %3517 = vmatprep.subr.mxu0 0.0
  %3518 = vmatpush1.xpose.msra.mxu0 0.0
  %3519 = vmatprep.subr.mxu0 0.0
  %3520 = vmatpush1.xpose.msra.mxu0 0.0
  %3521 = vmatprep.subr.mxu0 0.0
  %3522 = vmatpush1.xpose.msra.mxu0 0.0
  %3523 = vmatprep.subr.mxu0 0.0
  %3524 = vmatpush1.xpose.msra.mxu0 0.0
  %3525 = vmatprep.subr.mxu0 0.0
  %3526 = vmatpush1.xpose.msra.mxu0 0.0
  %3527 = vmatprep.subr.mxu0 0.0
  %3528 = vmatpush1.xpose.msra.mxu0 0.0
  %3529 = vmatprep.subr.mxu0 0.0
  %3530 = vmatpush1.xpose.msra.mxu0 0.0
  %3531 = vmatprep.subr.mxu0 0.0
  %3532 = vmatpush1.xpose.msra.mxu0 0.0
  %3533 = vmatprep.subr.mxu0 0.0
  %3534 = vmatpush1.xpose.msra.mxu0 0.0
  %3535 = vmatprep.subr.mxu0 0.0
  %3536 = vmatpush1.xpose.msra.mxu0 0.0
  %3537 = vmatprep.subr.mxu0 0.0
  %3538 = vmatpush1.xpose.msra.mxu0 0.0
  %3539 = vmatprep.subr.mxu0 0.0
  %3540 = vmatpush1.xpose.msra.mxu0 0.0
  %3541 = vmatprep.subr.mxu0 0.0
  %3542 = vmatpush1.xpose.msra.mxu0 0.0
  %3543 = vmatprep.subr.mxu0 0.0
  %3544 = vmatpush1.xpose.msra.mxu0 0.0
  %3545 = vmatprep.subr.mxu0 0.0
  %3546 = vmatpush1.xpose.msra.mxu0 0.0
  %3547 = vmatprep.subr.mxu0 0.0
  %3548 = vmatpush1.xpose.msra.mxu0 0.0
  %3549 = vmatprep.mubr.f32.mxu0 0.0
  %3550 = vmatmul.mubr.f32.gmra.mrb[0].mxu0 %v3480
  %v3551 = vpop.f32.mrb[0].mxu0
  %v3552 = vadd.f32 %v209, %v3551
  %v3553 = vpop.f32.mrb[0].mxu0
  %3554 = vdwg.mxu0
  %v3556 = vsel %vm210, %v61, 0
  %v3559 = vsel %vm210, %v125, 0
  %3561 = vmatprep.subr.mxu0 0.0
  %3562 = vmatpush1.xpose.msra.mxu0 %v3559
  %3563 = vmatprep.subr.mxu0 0.0
  %3564 = vmatpush1.xpose.msra.mxu0 0.0
  %3565 = vmatprep.subr.mxu0 0.0
  %3566 = vmatpush1.xpose.msra.mxu0 0.0
  %3567 = vmatprep.subr.mxu0 0.0
  %3568 = vmatpush1.xpose.msra.mxu0 0.0
  %3569 = vmatprep.subr.mxu0 0.0
  %3570 = vmatpush1.xpose.msra.mxu0 0.0
  %3571 = vmatprep.subr.mxu0 0.0
  %3572 = vmatpush1.xpose.msra.mxu0 0.0
  %3573 = vmatprep.subr.mxu0 0.0
  %3574 = vmatpush1.xpose.msra.mxu0 0.0
  %3575 = vmatprep.subr.mxu0 0.0
  %3576 = vmatpush1.xpose.msra.mxu0 0.0
  %3577 = vmatprep.subr.mxu0 0.0
  %3578 = vmatpush1.xpose.msra.mxu0 0.0
  %3579 = vmatprep.subr.mxu0 0.0
  %3580 = vmatpush1.xpose.msra.mxu0 0.0
  %3581 = vmatprep.subr.mxu0 0.0
  %3582 = vmatpush1.xpose.msra.mxu0 0.0
  %3583 = vmatprep.subr.mxu0 0.0
  %3584 = vmatpush1.xpose.msra.mxu0 0.0
  %3585 = vmatprep.subr.mxu0 0.0
  %3586 = vmatpush1.xpose.msra.mxu0 0.0
  %3587 = vmatprep.subr.mxu0 0.0
  %3588 = vmatpush1.xpose.msra.mxu0 0.0
  %3589 = vmatprep.subr.mxu0 0.0
  %3590 = vmatpush1.xpose.msra.mxu0 0.0
  %3591 = vmatprep.subr.mxu0 0.0
  %3592 = vmatpush1.xpose.msra.mxu0 0.0
  %3593 = vmatprep.subr.mxu0 0.0
  %3594 = vmatpush1.xpose.msra.mxu0 0.0
  %3595 = vmatprep.subr.mxu0 0.0
  %3596 = vmatpush1.xpose.msra.mxu0 0.0
  %3597 = vmatprep.subr.mxu0 0.0
  %3598 = vmatpush1.xpose.msra.mxu0 0.0
  %3599 = vmatprep.subr.mxu0 0.0
  %3600 = vmatpush1.xpose.msra.mxu0 0.0
  %3601 = vmatprep.subr.mxu0 0.0
  %3602 = vmatpush1.xpose.msra.mxu0 0.0
  %3603 = vmatprep.subr.mxu0 0.0
  %3604 = vmatpush1.xpose.msra.mxu0 0.0
  %3605 = vmatprep.subr.mxu0 0.0
  %3606 = vmatpush1.xpose.msra.mxu0 0.0
  %3607 = vmatprep.subr.mxu0 0.0
  %3608 = vmatpush1.xpose.msra.mxu0 0.0
  %3609 = vmatprep.subr.mxu0 0.0
  %3610 = vmatpush1.xpose.msra.mxu0 0.0
  %3611 = vmatprep.subr.mxu0 0.0
  %3612 = vmatpush1.xpose.msra.mxu0 0.0
  %3613 = vmatprep.subr.mxu0 0.0
  %3614 = vmatpush1.xpose.msra.mxu0 0.0
  %3615 = vmatprep.subr.mxu0 0.0
  %3616 = vmatpush1.xpose.msra.mxu0 0.0
  %3617 = vmatprep.subr.mxu0 0.0
  %3618 = vmatpush1.xpose.msra.mxu0 0.0
  %3619 = vmatprep.subr.mxu0 0.0
  %3620 = vmatpush1.xpose.msra.mxu0 0.0
  %3621 = vmatprep.subr.mxu0 0.0
  %3622 = vmatpush1.xpose.msra.mxu0 0.0
  %3623 = vmatprep.subr.mxu0 0.0
  %3624 = vmatpush1.xpose.msra.mxu0 0.0
  %3625 = vmatprep.mubr.f32.mxu0 0.0
  %3626 = vmatmul.mubr.f32.gmra.mrb[0].mxu0 %v3556
  %v3627 = vpop.f32.mrb[0].mxu0
  %v3628 = vadd.f32 %v209, %v3627
  %v3629 = vpop.f32.mrb[0].mxu0
  %3630 = vdwg.mxu0
  %v3632 = vsel %vm210, %v62, 0
  %v3635 = vsel %vm210, %v126, 0
  %3637 = vmatprep.subr.mxu0 0.0
  %3638 = vmatpush1.xpose.msra.mxu0 %v3635
  %3639 = vmatprep.subr.mxu0 0.0
  %3640 = vmatpush1.xpose.msra.mxu0 0.0
  %3641 = vmatprep.subr.mxu0 0.0
  %3642 = vmatpush1.xpose.msra.mxu0 0.0
  %3643 = vmatprep.subr.mxu0 0.0
  %3644 = vmatpush1.xpose.msra.mxu0 0.0
  %3645 = vmatprep.subr.mxu0 0.0
  %3646 = vmatpush1.xpose.msra.mxu0 0.0
  %3647 = vmatprep.subr.mxu0 0.0
  %3648 = vmatpush1.xpose.msra.mxu0 0.0
  %3649 = vmatprep.subr.mxu0 0.0
  %3650 = vmatpush1.xpose.msra.mxu0 0.0
  %3651 = vmatprep.subr.mxu0 0.0
  %3652 = vmatpush1.xpose.msra.mxu0 0.0
  %3653 = vmatprep.subr.mxu0 0.0
  %3654 = vmatpush1.xpose.msra.mxu0 0.0
  %3655 = vmatprep.subr.mxu0 0.0
  %3656 = vmatpush1.xpose.msra.mxu0 0.0
  %3657 = vmatprep.subr.mxu0 0.0
  %3658 = vmatpush1.xpose.msra.mxu0 0.0
  %3659 = vmatprep.subr.mxu0 0.0
  %3660 = vmatpush1.xpose.msra.mxu0 0.0
  %3661 = vmatprep.subr.mxu0 0.0
  %3662 = vmatpush1.xpose.msra.mxu0 0.0
  %3663 = vmatprep.subr.mxu0 0.0
  %3664 = vmatpush1.xpose.msra.mxu0 0.0
  %3665 = vmatprep.subr.mxu0 0.0
  %3666 = vmatpush1.xpose.msra.mxu0 0.0
  %3667 = vmatprep.subr.mxu0 0.0
  %3668 = vmatpush1.xpose.msra.mxu0 0.0
  %3669 = vmatprep.subr.mxu0 0.0
  %3670 = vmatpush1.xpose.msra.mxu0 0.0
  %3671 = vmatprep.subr.mxu0 0.0
  %3672 = vmatpush1.xpose.msra.mxu0 0.0
  %3673 = vmatprep.subr.mxu0 0.0
  %3674 = vmatpush1.xpose.msra.mxu0 0.0
  %3675 = vmatprep.subr.mxu0 0.0
  %3676 = vmatpush1.xpose.msra.mxu0 0.0
  %3677 = vmatprep.subr.mxu0 0.0
  %3678 = vmatpush1.xpose.msra.mxu0 0.0
  %3679 = vmatprep.subr.mxu0 0.0
  %3680 = vmatpush1.xpose.msra.mxu0 0.0
  %3681 = vmatprep.subr.mxu0 0.0
  %3682 = vmatpush1.xpose.msra.mxu0 0.0
  %3683 = vmatprep.subr.mxu0 0.0
  %3684 = vmatpush1.xpose.msra.mxu0 0.0
  %3685 = vmatprep.subr.mxu0 0.0
  %3686 = vmatpush1.xpose.msra.mxu0 0.0
  %3687 = vmatprep.subr.mxu0 0.0
  %3688 = vmatpush1.xpose.msra.mxu0 0.0
  %3689 = vmatprep.subr.mxu0 0.0
  %3690 = vmatpush1.xpose.msra.mxu0 0.0
  %3691 = vmatprep.subr.mxu0 0.0
  %3692 = vmatpush1.xpose.msra.mxu0 0.0
  %3693 = vmatprep.subr.mxu0 0.0
  %3694 = vmatpush1.xpose.msra.mxu0 0.0
  %3695 = vmatprep.subr.mxu0 0.0
  %3696 = vmatpush1.xpose.msra.mxu0 0.0
  %3697 = vmatprep.subr.mxu0 0.0
  %3698 = vmatpush1.xpose.msra.mxu0 0.0
  %3699 = vmatprep.subr.mxu0 0.0
  %3700 = vmatpush1.xpose.msra.mxu0 0.0
  %3701 = vmatprep.mubr.f32.mxu0 0.0
  %3702 = vmatmul.mubr.f32.gmra.mrb[0].mxu0 %v3632
  %v3703 = vpop.f32.mrb[0].mxu0
  %v3704 = vadd.f32 %v209, %v3703
  %v3705 = vpop.f32.mrb[0].mxu0
  %3706 = vdwg.mxu0
  %v3708 = vsel %vm210, %v63, 0
  %v3711 = vsel %vm210, %v127, 0
  %3713 = vmatprep.subr.mxu0 0.0
  %3714 = vmatpush1.xpose.msra.mxu0 %v3711
  %3715 = vmatprep.subr.mxu0 0.0
  %3716 = vmatpush1.xpose.msra.mxu0 0.0
  %3717 = vmatprep.subr.mxu0 0.0
  %3718 = vmatpush1.xpose.msra.mxu0 0.0
  %3719 = vmatprep.subr.mxu0 0.0
  %3720 = vmatpush1.xpose.msra.mxu0 0.0
  %3721 = vmatprep.subr.mxu0 0.0
  %3722 = vmatpush1.xpose.msra.mxu0 0.0
  %3723 = vmatprep.subr.mxu0 0.0
  %3724 = vmatpush1.xpose.msra.mxu0 0.0
  %3725 = vmatprep.subr.mxu0 0.0
  %3726 = vmatpush1.xpose.msra.mxu0 0.0
  %3727 = vmatprep.subr.mxu0 0.0
  %3728 = vmatpush1.xpose.msra.mxu0 0.0
  %3729 = vmatprep.subr.mxu0 0.0
  %3730 = vmatpush1.xpose.msra.mxu0 0.0
  %3731 = vmatprep.subr.mxu0 0.0
  %3732 = vmatpush1.xpose.msra.mxu0 0.0
  %3733 = vmatprep.subr.mxu0 0.0
  %3734 = vmatpush1.xpose.msra.mxu0 0.0
  %3735 = vmatprep.subr.mxu0 0.0
  %3736 = vmatpush1.xpose.msra.mxu0 0.0
  %3737 = vmatprep.subr.mxu0 0.0
  %3738 = vmatpush1.xpose.msra.mxu0 0.0
  %3739 = vmatprep.subr.mxu0 0.0
  %3740 = vmatpush1.xpose.msra.mxu0 0.0
  %3741 = vmatprep.subr.mxu0 0.0
  %3742 = vmatpush1.xpose.msra.mxu0 0.0
  %3743 = vmatprep.subr.mxu0 0.0
  %3744 = vmatpush1.xpose.msra.mxu0 0.0
  %3745 = vmatprep.subr.mxu0 0.0
  %3746 = vmatpush1.xpose.msra.mxu0 0.0
  %3747 = vmatprep.subr.mxu0 0.0
  %3748 = vmatpush1.xpose.msra.mxu0 0.0
  %3749 = vmatprep.subr.mxu0 0.0
  %3750 = vmatpush1.xpose.msra.mxu0 0.0
  %3751 = vmatprep.subr.mxu0 0.0
  %3752 = vmatpush1.xpose.msra.mxu0 0.0
  %3753 = vmatprep.subr.mxu0 0.0
  %3754 = vmatpush1.xpose.msra.mxu0 0.0
  %3755 = vmatprep.subr.mxu0 0.0
  %3756 = vmatpush1.xpose.msra.mxu0 0.0
  %3757 = vmatprep.subr.mxu0 0.0
  %3758 = vmatpush1.xpose.msra.mxu0 0.0
  %3759 = vmatprep.subr.mxu0 0.0
  %3760 = vmatpush1.xpose.msra.mxu0 0.0
  %3761 = vmatprep.subr.mxu0 0.0
  %3762 = vmatpush1.xpose.msra.mxu0 0.0
  %3763 = vmatprep.subr.mxu0 0.0
  %3764 = vmatpush1.xpose.msra.mxu0 0.0
  %3765 = vmatprep.subr.mxu0 0.0
  %3766 = vmatpush1.xpose.msra.mxu0 0.0
  %3767 = vmatprep.subr.mxu0 0.0
  %3768 = vmatpush1.xpose.msra.mxu0 0.0
  %3769 = vmatprep.subr.mxu0 0.0
  %3770 = vmatpush1.xpose.msra.mxu0 0.0
  %3771 = vmatprep.subr.mxu0 0.0
  %3772 = vmatpush1.xpose.msra.mxu0 0.0
  %3773 = vmatprep.subr.mxu0 0.0
  %3774 = vmatpush1.xpose.msra.mxu0 0.0
  %3775 = vmatprep.subr.mxu0 0.0
  %3776 = vmatpush1.xpose.msra.mxu0 0.0
  %3777 = vmatprep.mubr.f32.mxu0 0.0
  %3778 = vmatmul.mubr.f32.gmra.mrb[0].mxu0 %v3708
  %v3779 = vpop.f32.mrb[0].mxu0
  %v3780 = vadd.f32 %v209, %v3779
  %v3781 = vpop.f32.mrb[0].mxu0
  %3782 = vdwg.mxu0
  %v3784 = vsel %vm210, %v64, 0
  %v3787 = vsel %vm210, %v128, 0
  %3789 = vmatprep.subr.mxu0 0.0
  %3790 = vmatpush1.xpose.msra.mxu0 %v3787
  %3791 = vmatprep.subr.mxu0 0.0
  %3792 = vmatpush1.xpose.msra.mxu0 0.0
  %3793 = vmatprep.subr.mxu0 0.0
  %3794 = vmatpush1.xpose.msra.mxu0 0.0
  %3795 = vmatprep.subr.mxu0 0.0
  %3796 = vmatpush1.xpose.msra.mxu0 0.0
  %3797 = vmatprep.subr.mxu0 0.0
  %3798 = vmatpush1.xpose.msra.mxu0 0.0
  %3799 = vmatprep.subr.mxu0 0.0
  %3800 = vmatpush1.xpose.msra.mxu0 0.0
  %3801 = vmatprep.subr.mxu0 0.0
  %3802 = vmatpush1.xpose.msra.mxu0 0.0
  %3803 = vmatprep.subr.mxu0 0.0
  %3804 = vmatpush1.xpose.msra.mxu0 0.0
  %3805 = vmatprep.subr.mxu0 0.0
  %3806 = vmatpush1.xpose.msra.mxu0 0.0
  %3807 = vmatprep.subr.mxu0 0.0
  %3808 = vmatpush1.xpose.msra.mxu0 0.0
  %3809 = vmatprep.subr.mxu0 0.0
  %3810 = vmatpush1.xpose.msra.mxu0 0.0
  %3811 = vmatprep.subr.mxu0 0.0
  %3812 = vmatpush1.xpose.msra.mxu0 0.0
  %3813 = vmatprep.subr.mxu0 0.0
  %3814 = vmatpush1.xpose.msra.mxu0 0.0
  %3815 = vmatprep.subr.mxu0 0.0
  %3816 = vmatpush1.xpose.msra.mxu0 0.0
  %3817 = vmatprep.subr.mxu0 0.0
  %3818 = vmatpush1.xpose.msra.mxu0 0.0
  %3819 = vmatprep.subr.mxu0 0.0
  %3820 = vmatpush1.xpose.msra.mxu0 0.0
  %3821 = vmatprep.subr.mxu0 0.0
  %3822 = vmatpush1.xpose.msra.mxu0 0.0
  %3823 = vmatprep.subr.mxu0 0.0
  %3824 = vmatpush1.xpose.msra.mxu0 0.0
  %3825 = vmatprep.subr.mxu0 0.0
  %3826 = vmatpush1.xpose.msra.mxu0 0.0
  %3827 = vmatprep.subr.mxu0 0.0
  %3828 = vmatpush1.xpose.msra.mxu0 0.0
  %3829 = vmatprep.subr.mxu0 0.0
  %3830 = vmatpush1.xpose.msra.mxu0 0.0
  %3831 = vmatprep.subr.mxu0 0.0
  %3832 = vmatpush1.xpose.msra.mxu0 0.0
  %3833 = vmatprep.subr.mxu0 0.0
  %3834 = vmatpush1.xpose.msra.mxu0 0.0
  %3835 = vmatprep.subr.mxu0 0.0
  %3836 = vmatpush1.xpose.msra.mxu0 0.0
  %3837 = vmatprep.subr.mxu0 0.0
  %3838 = vmatpush1.xpose.msra.mxu0 0.0
  %3839 = vmatprep.subr.mxu0 0.0
  %3840 = vmatpush1.xpose.msra.mxu0 0.0
  %3841 = vmatprep.subr.mxu0 0.0
  %3842 = vmatpush1.xpose.msra.mxu0 0.0
  %3843 = vmatprep.subr.mxu0 0.0
  %3844 = vmatpush1.xpose.msra.mxu0 0.0
  %3845 = vmatprep.subr.mxu0 0.0
  %3846 = vmatpush1.xpose.msra.mxu0 0.0
  %3847 = vmatprep.subr.mxu0 0.0
  %3848 = vmatpush1.xpose.msra.mxu0 0.0
  %3849 = vmatprep.subr.mxu0 0.0
  %3850 = vmatpush1.xpose.msra.mxu0 0.0
  %3851 = vmatprep.subr.mxu0 0.0
  %3852 = vmatpush1.xpose.msra.mxu0 0.0
  %3853 = vmatprep.mubr.f32.mxu0 0.0
  %3854 = vmatmul.mubr.f32.gmra.mrb[0].mxu0 %v3784
  %v3855 = vpop.f32.mrb[0].mxu0
  %v3856 = vadd.f32 %v209, %v3855
  %v3857 = vpop.f32.mrb[0].mxu0
  %3858 = vdwg.mxu0
  %v3860 = vsel %vm210, %v65, 0
  %v3863 = vsel %vm210, %v129, 0
  %3865 = vmatprep.subr.mxu0 0.0
  %3866 = vmatpush1.xpose.msra.mxu0 %v3863
  %3867 = vmatprep.subr.mxu0 0.0
  %3868 = vmatpush1.xpose.msra.mxu0 0.0
  %3869 = vmatprep.subr.mxu0 0.0
  %3870 = vmatpush1.xpose.msra.mxu0 0.0
  %3871 = vmatprep.subr.mxu0 0.0
  %3872 = vmatpush1.xpose.msra.mxu0 0.0
  %3873 = vmatprep.subr.mxu0 0.0
  %3874 = vmatpush1.xpose.msra.mxu0 0.0
  %3875 = vmatprep.subr.mxu0 0.0
  %3876 = vmatpush1.xpose.msra.mxu0 0.0
  %3877 = vmatprep.subr.mxu0 0.0
  %3878 = vmatpush1.xpose.msra.mxu0 0.0
  %3879 = vmatprep.subr.mxu0 0.0
  %3880 = vmatpush1.xpose.msra.mxu0 0.0
  %3881 = vmatprep.subr.mxu0 0.0
  %3882 = vmatpush1.xpose.msra.mxu0 0.0
  %3883 = vmatprep.subr.mxu0 0.0
  %3884 = vmatpush1.xpose.msra.mxu0 0.0
  %3885 = vmatprep.subr.mxu0 0.0
  %3886 = vmatpush1.xpose.msra.mxu0 0.0
  %3887 = vmatprep.subr.mxu0 0.0
  %3888 = vmatpush1.xpose.msra.mxu0 0.0
  %3889 = vmatprep.subr.mxu0 0.0
  %3890 = vmatpush1.xpose.msra.mxu0 0.0
  %3891 = vmatprep.subr.mxu0 0.0
  %3892 = vmatpush1.xpose.msra.mxu0 0.0
  %3893 = vmatprep.subr.mxu0 0.0
  %3894 = vmatpush1.xpose.msra.mxu0 0.0
  %3895 = vmatprep.subr.mxu0 0.0
  %3896 = vmatpush1.xpose.msra.mxu0 0.0
  %3897 = vmatprep.subr.mxu0 0.0
  %3898 = vmatpush1.xpose.msra.mxu0 0.0
  %3899 = vmatprep.subr.mxu0 0.0
  %3900 = vmatpush1.xpose.msra.mxu0 0.0
  %3901 = vmatprep.subr.mxu0 0.0
  %3902 = vmatpush1.xpose.msra.mxu0 0.0
  %3903 = vmatprep.subr.mxu0 0.0
  %3904 = vmatpush1.xpose.msra.mxu0 0.0
  %3905 = vmatprep.subr.mxu0 0.0
  %3906 = vmatpush1.xpose.msra.mxu0 0.0
  %3907 = vmatprep.subr.mxu0 0.0
  %3908 = vmatpush1.xpose.msra.mxu0 0.0
  %3909 = vmatprep.subr.mxu0 0.0
  %3910 = vmatpush1.xpose.msra.mxu0 0.0
  %3911 = vmatprep.subr.mxu0 0.0
  %3912 = vmatpush1.xpose.msra.mxu0 0.0
  %3913 = vmatprep.subr.mxu0 0.0
  %3914 = vmatpush1.xpose.msra.mxu0 0.0
  %3915 = vmatprep.subr.mxu0 0.0
  %3916 = vmatpush1.xpose.msra.mxu0 0.0
  %3917 = vmatprep.subr.mxu0 0.0
  %3918 = vmatpush1.xpose.msra.mxu0 0.0
  %3919 = vmatprep.subr.mxu0 0.0
  %3920 = vmatpush1.xpose.msra.mxu0 0.0
  %3921 = vmatprep.subr.mxu0 0.0
  %3922 = vmatpush1.xpose.msra.mxu0 0.0
  %3923 = vmatprep.subr.mxu0 0.0
  %3924 = vmatpush1.xpose.msra.mxu0 0.0
  %3925 = vmatprep.subr.mxu0 0.0
  %3926 = vmatpush1.xpose.msra.mxu0 0.0
  %3927 = vmatprep.subr.mxu0 0.0
  %3928 = vmatpush1.xpose.msra.mxu0 0.0
  %3929 = vmatprep.mubr.f32.mxu0 0.0
  %3930 = vmatmul.mubr.f32.gmra.mrb[0].mxu0 %v3860
  %v3931 = vpop.f32.mrb[0].mxu0
  %v3932 = vadd.f32 %v209, %v3931
  %v3933 = vpop.f32.mrb[0].mxu0
  %3934 = vdwg.mxu0
  %v3936 = vsel %vm210, %v66, 0
  %v3939 = vsel %vm210, %v130, 0
  %3941 = vmatprep.subr.mxu0 0.0
  %3942 = vmatpush1.xpose.msra.mxu0 %v3939
  %3943 = vmatprep.subr.mxu0 0.0
  %3944 = vmatpush1.xpose.msra.mxu0 0.0
  %3945 = vmatprep.subr.mxu0 0.0
  %3946 = vmatpush1.xpose.msra.mxu0 0.0
  %3947 = vmatprep.subr.mxu0 0.0
  %3948 = vmatpush1.xpose.msra.mxu0 0.0
  %3949 = vmatprep.subr.mxu0 0.0
  %3950 = vmatpush1.xpose.msra.mxu0 0.0
  %3951 = vmatprep.subr.mxu0 0.0
  %3952 = vmatpush1.xpose.msra.mxu0 0.0
  %3953 = vmatprep.subr.mxu0 0.0
  %3954 = vmatpush1.xpose.msra.mxu0 0.0
  %3955 = vmatprep.subr.mxu0 0.0
  %3956 = vmatpush1.xpose.msra.mxu0 0.0
  %3957 = vmatprep.subr.mxu0 0.0
  %3958 = vmatpush1.xpose.msra.mxu0 0.0
  %3959 = vmatprep.subr.mxu0 0.0
  %3960 = vmatpush1.xpose.msra.mxu0 0.0
  %3961 = vmatprep.subr.mxu0 0.0
  %3962 = vmatpush1.xpose.msra.mxu0 0.0
  %3963 = vmatprep.subr.mxu0 0.0
  %3964 = vmatpush1.xpose.msra.mxu0 0.0
  %3965 = vmatprep.subr.mxu0 0.0
  %3966 = vmatpush1.xpose.msra.mxu0 0.0
  %3967 = vmatprep.subr.mxu0 0.0
  %3968 = vmatpush1.xpose.msra.mxu0 0.0
  %3969 = vmatprep.subr.mxu0 0.0
  %3970 = vmatpush1.xpose.msra.mxu0 0.0
  %3971 = vmatprep.subr.mxu0 0.0
  %3972 = vmatpush1.xpose.msra.mxu0 0.0
  %3973 = vmatprep.subr.mxu0 0.0
  %3974 = vmatpush1.xpose.msra.mxu0 0.0
  %3975 = vmatprep.subr.mxu0 0.0
  %3976 = vmatpush1.xpose.msra.mxu0 0.0
  %3977 = vmatprep.subr.mxu0 0.0
  %3978 = vmatpush1.xpose.msra.mxu0 0.0
  %3979 = vmatprep.subr.mxu0 0.0
  %3980 = vmatpush1.xpose.msra.mxu0 0.0
  %3981 = vmatprep.subr.mxu0 0.0
  %3982 = vmatpush1.xpose.msra.mxu0 0.0
  %3983 = vmatprep.subr.mxu0 0.0
  %3984 = vmatpush1.xpose.msra.mxu0 0.0
  %3985 = vmatprep.subr.mxu0 0.0
  %3986 = vmatpush1.xpose.msra.mxu0 0.0
  %3987 = vmatprep.subr.mxu0 0.0
  %3988 = vmatpush1.xpose.msra.mxu0 0.0
  %3989 = vmatprep.subr.mxu0 0.0
  %3990 = vmatpush1.xpose.msra.mxu0 0.0
  %3991 = vmatprep.subr.mxu0 0.0
  %3992 = vmatpush1.xpose.msra.mxu0 0.0
  %3993 = vmatprep.subr.mxu0 0.0
  %3994 = vmatpush1.xpose.msra.mxu0 0.0
  %3995 = vmatprep.subr.mxu0 0.0
  %3996 = vmatpush1.xpose.msra.mxu0 0.0
  %3997 = vmatprep.subr.mxu0 0.0
  %3998 = vmatpush1.xpose.msra.mxu0 0.0
  %3999 = vmatprep.subr.mxu0 0.0
  %4000 = vmatpush1.xpose.msra.mxu0 0.0
  %4001 = vmatprep.subr.mxu0 0.0
  %4002 = vmatpush1.xpose.msra.mxu0 0.0
  %4003 = vmatprep.subr.mxu0 0.0
  %4004 = vmatpush1.xpose.msra.mxu0 0.0
  %4005 = vmatprep.mubr.f32.mxu0 0.0
  %4006 = vmatmul.mubr.f32.gmra.mrb[0].mxu0 %v3936
  %v4007 = vpop.f32.mrb[0].mxu0
  %v4008 = vadd.f32 %v209, %v4007
  %v4009 = vpop.f32.mrb[0].mxu0
  %4010 = vdwg.mxu0
  %v4012 = vsel %vm210, %v67, 0
  %v4015 = vsel %vm210, %v131, 0
  %4017 = vmatprep.subr.mxu0 0.0
  %4018 = vmatpush1.xpose.msra.mxu0 %v4015
  %4019 = vmatprep.subr.mxu0 0.0
  %4020 = vmatpush1.xpose.msra.mxu0 0.0
  %4021 = vmatprep.subr.mxu0 0.0
  %4022 = vmatpush1.xpose.msra.mxu0 0.0
  %4023 = vmatprep.subr.mxu0 0.0
  %4024 = vmatpush1.xpose.msra.mxu0 0.0
  %4025 = vmatprep.subr.mxu0 0.0
  %4026 = vmatpush1.xpose.msra.mxu0 0.0
  %4027 = vmatprep.subr.mxu0 0.0
  %4028 = vmatpush1.xpose.msra.mxu0 0.0
  %4029 = vmatprep.subr.mxu0 0.0
  %4030 = vmatpush1.xpose.msra.mxu0 0.0
  %4031 = vmatprep.subr.mxu0 0.0
  %4032 = vmatpush1.xpose.msra.mxu0 0.0
  %4033 = vmatprep.subr.mxu0 0.0
  %4034 = vmatpush1.xpose.msra.mxu0 0.0
  %4035 = vmatprep.subr.mxu0 0.0
  %4036 = vmatpush1.xpose.msra.mxu0 0.0
  %4037 = vmatprep.subr.mxu0 0.0
  %4038 = vmatpush1.xpose.msra.mxu0 0.0
  %4039 = vmatprep.subr.mxu0 0.0
  %4040 = vmatpush1.xpose.msra.mxu0 0.0
  %4041 = vmatprep.subr.mxu0 0.0
  %4042 = vmatpush1.xpose.msra.mxu0 0.0
  %4043 = vmatprep.subr.mxu0 0.0
  %4044 = vmatpush1.xpose.msra.mxu0 0.0
  %4045 = vmatprep.subr.mxu0 0.0
  %4046 = vmatpush1.xpose.msra.mxu0 0.0
  %4047 = vmatprep.subr.mxu0 0.0
  %4048 = vmatpush1.xpose.msra.mxu0 0.0
  %4049 = vmatprep.subr.mxu0 0.0
  %4050 = vmatpush1.xpose.msra.mxu0 0.0
  %4051 = vmatprep.subr.mxu0 0.0
  %4052 = vmatpush1.xpose.msra.mxu0 0.0
  %4053 = vmatprep.subr.mxu0 0.0
  %4054 = vmatpush1.xpose.msra.mxu0 0.0
  %4055 = vmatprep.subr.mxu0 0.0
  %4056 = vmatpush1.xpose.msra.mxu0 0.0
  %4057 = vmatprep.subr.mxu0 0.0
  %4058 = vmatpush1.xpose.msra.mxu0 0.0
  %4059 = vmatprep.subr.mxu0 0.0
  %4060 = vmatpush1.xpose.msra.mxu0 0.0
  %4061 = vmatprep.subr.mxu0 0.0
  %4062 = vmatpush1.xpose.msra.mxu0 0.0
  %4063 = vmatprep.subr.mxu0 0.0
  %4064 = vmatpush1.xpose.msra.mxu0 0.0
  %4065 = vmatprep.subr.mxu0 0.0
  %4066 = vmatpush1.xpose.msra.mxu0 0.0
  %4067 = vmatprep.subr.mxu0 0.0
  %4068 = vmatpush1.xpose.msra.mxu0 0.0
  %4069 = vmatprep.subr.mxu0 0.0
  %4070 = vmatpush1.xpose.msra.mxu0 0.0
  %4071 = vmatprep.subr.mxu0 0.0
  %4072 = vmatpush1.xpose.msra.mxu0 0.0
  %4073 = vmatprep.subr.mxu0 0.0
  %4074 = vmatpush1.xpose.msra.mxu0 0.0
  %4075 = vmatprep.subr.mxu0 0.0
  %4076 = vmatpush1.xpose.msra.mxu0 0.0
  %4077 = vmatprep.subr.mxu0 0.0
  %4078 = vmatpush1.xpose.msra.mxu0 0.0
  %4079 = vmatprep.subr.mxu0 0.0
  %4080 = vmatpush1.xpose.msra.mxu0 0.0
  %4081 = vmatprep.mubr.f32.mxu0 0.0
  %4082 = vmatmul.mubr.f32.gmra.mrb[0].mxu0 %v4012
  %v4083 = vpop.f32.mrb[0].mxu0
  %v4084 = vadd.f32 %v209, %v4083
  %v4085 = vpop.f32.mrb[0].mxu0
  %4086 = vdwg.mxu0
  %v4088 = vsel %vm210, %v68, 0
  %v4091 = vsel %vm210, %v132, 0
  %4093 = vmatprep.subr.mxu0 0.0
  %4094 = vmatpush1.xpose.msra.mxu0 %v4091
  %4095 = vmatprep.subr.mxu0 0.0
  %4096 = vmatpush1.xpose.msra.mxu0 0.0
  %4097 = vmatprep.subr.mxu0 0.0
  %4098 = vmatpush1.xpose.msra.mxu0 0.0
  %4099 = vmatprep.subr.mxu0 0.0
  %4100 = vmatpush1.xpose.msra.mxu0 0.0
  %4101 = vmatprep.subr.mxu0 0.0
  %4102 = vmatpush1.xpose.msra.mxu0 0.0
  %4103 = vmatprep.subr.mxu0 0.0
  %4104 = vmatpush1.xpose.msra.mxu0 0.0
  %4105 = vmatprep.subr.mxu0 0.0
  %4106 = vmatpush1.xpose.msra.mxu0 0.0
  %4107 = vmatprep.subr.mxu0 0.0
  %4108 = vmatpush1.xpose.msra.mxu0 0.0
  %4109 = vmatprep.subr.mxu0 0.0
  %4110 = vmatpush1.xpose.msra.mxu0 0.0
  %4111 = vmatprep.subr.mxu0 0.0
  %4112 = vmatpush1.xpose.msra.mxu0 0.0
  %4113 = vmatprep.subr.mxu0 0.0
  %4114 = vmatpush1.xpose.msra.mxu0 0.0
  %4115 = vmatprep.subr.mxu0 0.0
  %4116 = vmatpush1.xpose.msra.mxu0 0.0
  %4117 = vmatprep.subr.mxu0 0.0
  %4118 = vmatpush1.xpose.msra.mxu0 0.0
  %4119 = vmatprep.subr.mxu0 0.0
  %4120 = vmatpush1.xpose.msra.mxu0 0.0
  %4121 = vmatprep.subr.mxu0 0.0
  %4122 = vmatpush1.xpose.msra.mxu0 0.0
  %4123 = vmatprep.subr.mxu0 0.0
  %4124 = vmatpush1.xpose.msra.mxu0 0.0
  %4125 = vmatprep.subr.mxu0 0.0
  %4126 = vmatpush1.xpose.msra.mxu0 0.0
  %4127 = vmatprep.subr.mxu0 0.0
  %4128 = vmatpush1.xpose.msra.mxu0 0.0
  %4129 = vmatprep.subr.mxu0 0.0
  %4130 = vmatpush1.xpose.msra.mxu0 0.0
  %4131 = vmatprep.subr.mxu0 0.0
  %4132 = vmatpush1.xpose.msra.mxu0 0.0
  %4133 = vmatprep.subr.mxu0 0.0
  %4134 = vmatpush1.xpose.msra.mxu0 0.0
  %4135 = vmatprep.subr.mxu0 0.0
  %4136 = vmatpush1.xpose.msra.mxu0 0.0
  %4137 = vmatprep.subr.mxu0 0.0
  %4138 = vmatpush1.xpose.msra.mxu0 0.0
  %4139 = vmatprep.subr.mxu0 0.0
  %4140 = vmatpush1.xpose.msra.mxu0 0.0
  %4141 = vmatprep.subr.mxu0 0.0
  %4142 = vmatpush1.xpose.msra.mxu0 0.0
  %4143 = vmatprep.subr.mxu0 0.0
  %4144 = vmatpush1.xpose.msra.mxu0 0.0
  %4145 = vmatprep.subr.mxu0 0.0
  %4146 = vmatpush1.xpose.msra.mxu0 0.0
  %4147 = vmatprep.subr.mxu0 0.0
  %4148 = vmatpush1.xpose.msra.mxu0 0.0
  %4149 = vmatprep.subr.mxu0 0.0
  %4150 = vmatpush1.xpose.msra.mxu0 0.0
  %4151 = vmatprep.subr.mxu0 0.0
  %4152 = vmatpush1.xpose.msra.mxu0 0.0
  %4153 = vmatprep.subr.mxu0 0.0
  %4154 = vmatpush1.xpose.msra.mxu0 0.0
  %4155 = vmatprep.subr.mxu0 0.0
  %4156 = vmatpush1.xpose.msra.mxu0 0.0
  %4157 = vmatprep.mubr.f32.mxu0 0.0
  %4158 = vmatmul.mubr.f32.gmra.mrb[0].mxu0 %v4088
  %v4159 = vpop.f32.mrb[0].mxu0
  %v4160 = vadd.f32 %v209, %v4159
  %v4161 = vpop.f32.mrb[0].mxu0
  %4162 = vdwg.mxu0
  %v4164 = vsel %vm210, %v69, 0
  %v4167 = vsel %vm210, %v133, 0
  %4169 = vmatprep.subr.mxu0 0.0
  %4170 = vmatpush1.xpose.msra.mxu0 %v4167
  %4171 = vmatprep.subr.mxu0 0.0
  %4172 = vmatpush1.xpose.msra.mxu0 0.0
  %4173 = vmatprep.subr.mxu0 0.0
  %4174 = vmatpush1.xpose.msra.mxu0 0.0
  %4175 = vmatprep.subr.mxu0 0.0
  %4176 = vmatpush1.xpose.msra.mxu0 0.0
  %4177 = vmatprep.subr.mxu0 0.0
  %4178 = vmatpush1.xpose.msra.mxu0 0.0
  %4179 = vmatprep.subr.mxu0 0.0
  %4180 = vmatpush1.xpose.msra.mxu0 0.0
  %4181 = vmatprep.subr.mxu0 0.0
  %4182 = vmatpush1.xpose.msra.mxu0 0.0
  %4183 = vmatprep.subr.mxu0 0.0
  %4184 = vmatpush1.xpose.msra.mxu0 0.0
  %4185 = vmatprep.subr.mxu0 0.0
  %4186 = vmatpush1.xpose.msra.mxu0 0.0
  %4187 = vmatprep.subr.mxu0 0.0
  %4188 = vmatpush1.xpose.msra.mxu0 0.0
  %4189 = vmatprep.subr.mxu0 0.0
  %4190 = vmatpush1.xpose.msra.mxu0 0.0
  %4191 = vmatprep.subr.mxu0 0.0
  %4192 = vmatpush1.xpose.msra.mxu0 0.0
  %4193 = vmatprep.subr.mxu0 0.0
  %4194 = vmatpush1.xpose.msra.mxu0 0.0
  %4195 = vmatprep.subr.mxu0 0.0
  %4196 = vmatpush1.xpose.msra.mxu0 0.0
  %4197 = vmatprep.subr.mxu0 0.0
  %4198 = vmatpush1.xpose.msra.mxu0 0.0
  %4199 = vmatprep.subr.mxu0 0.0
  %4200 = vmatpush1.xpose.msra.mxu0 0.0
  %4201 = vmatprep.subr.mxu0 0.0
  %4202 = vmatpush1.xpose.msra.mxu0 0.0
  %4203 = vmatprep.subr.mxu0 0.0
  %4204 = vmatpush1.xpose.msra.mxu0 0.0
  %4205 = vmatprep.subr.mxu0 0.0
  %4206 = vmatpush1.xpose.msra.mxu0 0.0
  %4207 = vmatprep.subr.mxu0 0.0
  %4208 = vmatpush1.xpose.msra.mxu0 0.0
  %4209 = vmatprep.subr.mxu0 0.0
  %4210 = vmatpush1.xpose.msra.mxu0 0.0
  %4211 = vmatprep.subr.mxu0 0.0
  %4212 = vmatpush1.xpose.msra.mxu0 0.0
  %4213 = vmatprep.subr.mxu0 0.0
  %4214 = vmatpush1.xpose.msra.mxu0 0.0
  %4215 = vmatprep.subr.mxu0 0.0
  %4216 = vmatpush1.xpose.msra.mxu0 0.0
  %4217 = vmatprep.subr.mxu0 0.0
  %4218 = vmatpush1.xpose.msra.mxu0 0.0
  %4219 = vmatprep.subr.mxu0 0.0
  %4220 = vmatpush1.xpose.msra.mxu0 0.0
  %4221 = vmatprep.subr.mxu0 0.0
  %4222 = vmatpush1.xpose.msra.mxu0 0.0
  %4223 = vmatprep.subr.mxu0 0.0
  %4224 = vmatpush1.xpose.msra.mxu0 0.0
  %4225 = vmatprep.subr.mxu0 0.0
  %4226 = vmatpush1.xpose.msra.mxu0 0.0
  %4227 = vmatprep.subr.mxu0 0.0
  %4228 = vmatpush1.xpose.msra.mxu0 0.0
  %4229 = vmatprep.subr.mxu0 0.0
  %4230 = vmatpush1.xpose.msra.mxu0 0.0
  %4231 = vmatprep.subr.mxu0 0.0
  %4232 = vmatpush1.xpose.msra.mxu0 0.0
  %4233 = vmatprep.mubr.f32.mxu0 0.0
  %4234 = vmatmul.mubr.f32.gmra.mrb[0].mxu0 %v4164
  %v4235 = vpop.f32.mrb[0].mxu0
  %v4236 = vadd.f32 %v209, %v4235
  %v4237 = vpop.f32.mrb[0].mxu0
  %4238 = vdwg.mxu0
  %v4240 = vsel %vm210, %v70, 0
  %v4243 = vsel %vm210, %v134, 0
  %4245 = vmatprep.subr.mxu0 0.0
  %4246 = vmatpush1.xpose.msra.mxu0 %v4243
  %4247 = vmatprep.subr.mxu0 0.0
  %4248 = vmatpush1.xpose.msra.mxu0 0.0
  %4249 = vmatprep.subr.mxu0 0.0
  %4250 = vmatpush1.xpose.msra.mxu0 0.0
  %4251 = vmatprep.subr.mxu0 0.0
  %4252 = vmatpush1.xpose.msra.mxu0 0.0
  %4253 = vmatprep.subr.mxu0 0.0
  %4254 = vmatpush1.xpose.msra.mxu0 0.0
  %4255 = vmatprep.subr.mxu0 0.0
  %4256 = vmatpush1.xpose.msra.mxu0 0.0
  %4257 = vmatprep.subr.mxu0 0.0
  %4258 = vmatpush1.xpose.msra.mxu0 0.0
  %4259 = vmatprep.subr.mxu0 0.0
  %4260 = vmatpush1.xpose.msra.mxu0 0.0
  %4261 = vmatprep.subr.mxu0 0.0
  %4262 = vmatpush1.xpose.msra.mxu0 0.0
  %4263 = vmatprep.subr.mxu0 0.0
  %4264 = vmatpush1.xpose.msra.mxu0 0.0
  %4265 = vmatprep.subr.mxu0 0.0
  %4266 = vmatpush1.xpose.msra.mxu0 0.0
  %4267 = vmatprep.subr.mxu0 0.0
  %4268 = vmatpush1.xpose.msra.mxu0 0.0
  %4269 = vmatprep.subr.mxu0 0.0
  %4270 = vmatpush1.xpose.msra.mxu0 0.0
  %4271 = vmatprep.subr.mxu0 0.0
  %4272 = vmatpush1.xpose.msra.mxu0 0.0
  %4273 = vmatprep.subr.mxu0 0.0
  %4274 = vmatpush1.xpose.msra.mxu0 0.0
  %4275 = vmatprep.subr.mxu0 0.0
  %4276 = vmatpush1.xpose.msra.mxu0 0.0
  %4277 = vmatprep.subr.mxu0 0.0
  %4278 = vmatpush1.xpose.msra.mxu0 0.0
  %4279 = vmatprep.subr.mxu0 0.0
  %4280 = vmatpush1.xpose.msra.mxu0 0.0
  %4281 = vmatprep.subr.mxu0 0.0
  %4282 = vmatpush1.xpose.msra.mxu0 0.0
  %4283 = vmatprep.subr.mxu0 0.0
  %4284 = vmatpush1.xpose.msra.mxu0 0.0
  %4285 = vmatprep.subr.mxu0 0.0
  %4286 = vmatpush1.xpose.msra.mxu0 0.0
  %4287 = vmatprep.subr.mxu0 0.0
  %4288 = vmatpush1.xpose.msra.mxu0 0.0
  %4289 = vmatprep.subr.mxu0 0.0
  %4290 = vmatpush1.xpose.msra.mxu0 0.0
  %4291 = vmatprep.subr.mxu0 0.0
  %4292 = vmatpush1.xpose.msra.mxu0 0.0
  %4293 = vmatprep.subr.mxu0 0.0
  %4294 = vmatpush1.xpose.msra.mxu0 0.0
  %4295 = vmatprep.subr.mxu0 0.0
  %4296 = vmatpush1.xpose.msra.mxu0 0.0
  %4297 = vmatprep.subr.mxu0 0.0
  %4298 = vmatpush1.xpose.msra.mxu0 0.0
  %4299 = vmatprep.subr.mxu0 0.0
  %4300 = vmatpush1.xpose.msra.mxu0 0.0
  %4301 = vmatprep.subr.mxu0 0.0
  %4302 = vmatpush1.xpose.msra.mxu0 0.0
  %4303 = vmatprep.subr.mxu0 0.0
  %4304 = vmatpush1.xpose.msra.mxu0 0.0
  %4305 = vmatprep.subr.mxu0 0.0
  %4306 = vmatpush1.xpose.msra.mxu0 0.0
  %4307 = vmatprep.subr.mxu0 0.0
  %4308 = vmatpush1.xpose.msra.mxu0 0.0
  %4309 = vmatprep.mubr.f32.mxu0 0.0
  %4310 = vmatmul.mubr.f32.gmra.mrb[0].mxu0 %v4240
  %v4311 = vpop.f32.mrb[0].mxu0
  %v4312 = vadd.f32 %v209, %v4311
  %v4313 = vpop.f32.mrb[0].mxu0
  %4314 = vdwg.mxu0
  %v4316 = vsel %vm210, %v71, 0
  %v4319 = vsel %vm210, %v135, 0
  %4321 = vmatprep.subr.mxu0 0.0
  %4322 = vmatpush1.xpose.msra.mxu0 %v4319
  %4323 = vmatprep.subr.mxu0 0.0
  %4324 = vmatpush1.xpose.msra.mxu0 0.0
  %4325 = vmatprep.subr.mxu0 0.0
  %4326 = vmatpush1.xpose.msra.mxu0 0.0
  %4327 = vmatprep.subr.mxu0 0.0
  %4328 = vmatpush1.xpose.msra.mxu0 0.0
  %4329 = vmatprep.subr.mxu0 0.0
  %4330 = vmatpush1.xpose.msra.mxu0 0.0
  %4331 = vmatprep.subr.mxu0 0.0
  %4332 = vmatpush1.xpose.msra.mxu0 0.0
  %4333 = vmatprep.subr.mxu0 0.0
  %4334 = vmatpush1.xpose.msra.mxu0 0.0
  %4335 = vmatprep.subr.mxu0 0.0
  %4336 = vmatpush1.xpose.msra.mxu0 0.0
  %4337 = vmatprep.subr.mxu0 0.0
  %4338 = vmatpush1.xpose.msra.mxu0 0.0
  %4339 = vmatprep.subr.mxu0 0.0
  %4340 = vmatpush1.xpose.msra.mxu0 0.0
  %4341 = vmatprep.subr.mxu0 0.0
  %4342 = vmatpush1.xpose.msra.mxu0 0.0
  %4343 = vmatprep.subr.mxu0 0.0
  %4344 = vmatpush1.xpose.msra.mxu0 0.0
  %4345 = vmatprep.subr.mxu0 0.0
  %4346 = vmatpush1.xpose.msra.mxu0 0.0
  %4347 = vmatprep.subr.mxu0 0.0
  %4348 = vmatpush1.xpose.msra.mxu0 0.0
  %4349 = vmatprep.subr.mxu0 0.0
  %4350 = vmatpush1.xpose.msra.mxu0 0.0
  %4351 = vmatprep.subr.mxu0 0.0
  %4352 = vmatpush1.xpose.msra.mxu0 0.0
  %4353 = vmatprep.subr.mxu0 0.0
  %4354 = vmatpush1.xpose.msra.mxu0 0.0
  %4355 = vmatprep.subr.mxu0 0.0
  %4356 = vmatpush1.xpose.msra.mxu0 0.0
  %4357 = vmatprep.subr.mxu0 0.0
  %4358 = vmatpush1.xpose.msra.mxu0 0.0
  %4359 = vmatprep.subr.mxu0 0.0
  %4360 = vmatpush1.xpose.msra.mxu0 0.0
  %4361 = vmatprep.subr.mxu0 0.0
  %4362 = vmatpush1.xpose.msra.mxu0 0.0
  %4363 = vmatprep.subr.mxu0 0.0
  %4364 = vmatpush1.xpose.msra.mxu0 0.0
  %4365 = vmatprep.subr.mxu0 0.0
  %4366 = vmatpush1.xpose.msra.mxu0 0.0
  %4367 = vmatprep.subr.mxu0 0.0
  %4368 = vmatpush1.xpose.msra.mxu0 0.0
  %4369 = vmatprep.subr.mxu0 0.0
  %4370 = vmatpush1.xpose.msra.mxu0 0.0
  %4371 = vmatprep.subr.mxu0 0.0
  %4372 = vmatpush1.xpose.msra.mxu0 0.0
  %4373 = vmatprep.subr.mxu0 0.0
  %4374 = vmatpush1.xpose.msra.mxu0 0.0
  %4375 = vmatprep.subr.mxu0 0.0
  %4376 = vmatpush1.xpose.msra.mxu0 0.0
  %4377 = vmatprep.subr.mxu0 0.0
  %4378 = vmatpush1.xpose.msra.mxu0 0.0
  %4379 = vmatprep.subr.mxu0 0.0
  %4380 = vmatpush1.xpose.msra.mxu0 0.0
  %4381 = vmatprep.subr.mxu0 0.0
  %4382 = vmatpush1.xpose.msra.mxu0 0.0
  %4383 = vmatprep.subr.mxu0 0.0
  %4384 = vmatpush1.xpose.msra.mxu0 0.0
  %4385 = vmatprep.mubr.f32.mxu0 0.0
  %4386 = vmatmul.mubr.f32.gmra.mrb[0].mxu0 %v4316
  %v4387 = vpop.f32.mrb[0].mxu0
  %v4388 = vadd.f32 %v209, %v4387
  %v4389 = vpop.f32.mrb[0].mxu0
  %4390 = vdwg.mxu0
  %v4392 = vsel %vm210, %v72, 0
  %v4395 = vsel %vm210, %v136, 0
  %4397 = vmatprep.subr.mxu0 0.0
  %4398 = vmatpush1.xpose.msra.mxu0 %v4395
  %4399 = vmatprep.subr.mxu0 0.0
  %4400 = vmatpush1.xpose.msra.mxu0 0.0
  %4401 = vmatprep.subr.mxu0 0.0
  %4402 = vmatpush1.xpose.msra.mxu0 0.0
  %4403 = vmatprep.subr.mxu0 0.0
  %4404 = vmatpush1.xpose.msra.mxu0 0.0
  %4405 = vmatprep.subr.mxu0 0.0
  %4406 = vmatpush1.xpose.msra.mxu0 0.0
  %4407 = vmatprep.subr.mxu0 0.0
  %4408 = vmatpush1.xpose.msra.mxu0 0.0
  %4409 = vmatprep.subr.mxu0 0.0
  %4410 = vmatpush1.xpose.msra.mxu0 0.0
  %4411 = vmatprep.subr.mxu0 0.0
  %4412 = vmatpush1.xpose.msra.mxu0 0.0
  %4413 = vmatprep.subr.mxu0 0.0
  %4414 = vmatpush1.xpose.msra.mxu0 0.0
  %4415 = vmatprep.subr.mxu0 0.0
  %4416 = vmatpush1.xpose.msra.mxu0 0.0
  %4417 = vmatprep.subr.mxu0 0.0
  %4418 = vmatpush1.xpose.msra.mxu0 0.0
  %4419 = vmatprep.subr.mxu0 0.0
  %4420 = vmatpush1.xpose.msra.mxu0 0.0
  %4421 = vmatprep.subr.mxu0 0.0
  %4422 = vmatpush1.xpose.msra.mxu0 0.0
  %4423 = vmatprep.subr.mxu0 0.0
  %4424 = vmatpush1.xpose.msra.mxu0 0.0
  %4425 = vmatprep.subr.mxu0 0.0
  %4426 = vmatpush1.xpose.msra.mxu0 0.0
  %4427 = vmatprep.subr.mxu0 0.0
  %4428 = vmatpush1.xpose.msra.mxu0 0.0
  %4429 = vmatprep.subr.mxu0 0.0
  %4430 = vmatpush1.xpose.msra.mxu0 0.0
  %4431 = vmatprep.subr.mxu0 0.0
  %4432 = vmatpush1.xpose.msra.mxu0 0.0
  %4433 = vmatprep.subr.mxu0 0.0
  %4434 = vmatpush1.xpose.msra.mxu0 0.0
  %4435 = vmatprep.subr.mxu0 0.0
  %4436 = vmatpush1.xpose.msra.mxu0 0.0
  %4437 = vmatprep.subr.mxu0 0.0
  %4438 = vmatpush1.xpose.msra.mxu0 0.0
  %4439 = vmatprep.subr.mxu0 0.0
  %4440 = vmatpush1.xpose.msra.mxu0 0.0
  %4441 = vmatprep.subr.mxu0 0.0
  %4442 = vmatpush1.xpose.msra.mxu0 0.0
  %4443 = vmatprep.subr.mxu0 0.0
  %4444 = vmatpush1.xpose.msra.mxu0 0.0
  %4445 = vmatprep.subr.mxu0 0.0
  %4446 = vmatpush1.xpose.msra.mxu0 0.0
  %4447 = vmatprep.subr.mxu0 0.0
  %4448 = vmatpush1.xpose.msra.mxu0 0.0
  %4449 = vmatprep.subr.mxu0 0.0
  %4450 = vmatpush1.xpose.msra.mxu0 0.0
  %4451 = vmatprep.subr.mxu0 0.0
  %4452 = vmatpush1.xpose.msra.mxu0 0.0
  %4453 = vmatprep.subr.mxu0 0.0
  %4454 = vmatpush1.xpose.msra.mxu0 0.0
  %4455 = vmatprep.subr.mxu0 0.0
  %4456 = vmatpush1.xpose.msra.mxu0 0.0
  %4457 = vmatprep.subr.mxu0 0.0
  %4458 = vmatpush1.xpose.msra.mxu0 0.0
  %4459 = vmatprep.subr.mxu0 0.0
  %4460 = vmatpush1.xpose.msra.mxu0 0.0
  %4461 = vmatprep.mubr.f32.mxu0 0.0
  %4462 = vmatmul.mubr.f32.gmra.mrb[0].mxu0 %v4392
  %v4463 = vpop.f32.mrb[0].mxu0
  %v4464 = vadd.f32 %v209, %v4463
  %v4465 = vpop.f32.mrb[0].mxu0
  %4466 = vdwg.mxu0
  %v4468 = vsel %vm210, %v73, 0
  %v4471 = vsel %vm210, %v137, 0
  %4473 = vmatprep.subr.mxu0 0.0
  %4474 = vmatpush1.xpose.msra.mxu0 %v4471
  %4475 = vmatprep.subr.mxu0 0.0
  %4476 = vmatpush1.xpose.msra.mxu0 0.0
  %4477 = vmatprep.subr.mxu0 0.0
  %4478 = vmatpush1.xpose.msra.mxu0 0.0
  %4479 = vmatprep.subr.mxu0 0.0
  %4480 = vmatpush1.xpose.msra.mxu0 0.0
  %4481 = vmatprep.subr.mxu0 0.0
  %4482 = vmatpush1.xpose.msra.mxu0 0.0
  %4483 = vmatprep.subr.mxu0 0.0
  %4484 = vmatpush1.xpose.msra.mxu0 0.0
  %4485 = vmatprep.subr.mxu0 0.0
  %4486 = vmatpush1.xpose.msra.mxu0 0.0
  %4487 = vmatprep.subr.mxu0 0.0
  %4488 = vmatpush1.xpose.msra.mxu0 0.0
  %4489 = vmatprep.subr.mxu0 0.0
  %4490 = vmatpush1.xpose.msra.mxu0 0.0
  %4491 = vmatprep.subr.mxu0 0.0
  %4492 = vmatpush1.xpose.msra.mxu0 0.0
  %4493 = vmatprep.subr.mxu0 0.0
  %4494 = vmatpush1.xpose.msra.mxu0 0.0
  %4495 = vmatprep.subr.mxu0 0.0
  %4496 = vmatpush1.xpose.msra.mxu0 0.0
  %4497 = vmatprep.subr.mxu0 0.0
  %4498 = vmatpush1.xpose.msra.mxu0 0.0
  %4499 = vmatprep.subr.mxu0 0.0
  %4500 = vmatpush1.xpose.msra.mxu0 0.0
  %4501 = vmatprep.subr.mxu0 0.0
  %4502 = vmatpush1.xpose.msra.mxu0 0.0
  %4503 = vmatprep.subr.mxu0 0.0
  %4504 = vmatpush1.xpose.msra.mxu0 0.0
  %4505 = vmatprep.subr.mxu0 0.0
  %4506 = vmatpush1.xpose.msra.mxu0 0.0
  %4507 = vmatprep.subr.mxu0 0.0
  %4508 = vmatpush1.xpose.msra.mxu0 0.0
  %4509 = vmatprep.subr.mxu0 0.0
  %4510 = vmatpush1.xpose.msra.mxu0 0.0
  %4511 = vmatprep.subr.mxu0 0.0
  %4512 = vmatpush1.xpose.msra.mxu0 0.0
  %4513 = vmatprep.subr.mxu0 0.0
  %4514 = vmatpush1.xpose.msra.mxu0 0.0
  %4515 = vmatprep.subr.mxu0 0.0
  %4516 = vmatpush1.xpose.msra.mxu0 0.0
  %4517 = vmatprep.subr.mxu0 0.0
  %4518 = vmatpush1.xpose.msra.mxu0 0.0
  %4519 = vmatprep.subr.mxu0 0.0
  %4520 = vmatpush1.xpose.msra.mxu0 0.0
  %4521 = vmatprep.subr.mxu0 0.0
  %4522 = vmatpush1.xpose.msra.mxu0 0.0
  %4523 = vmatprep.subr.mxu0 0.0
  %4524 = vmatpush1.xpose.msra.mxu0 0.0
  %4525 = vmatprep.subr.mxu0 0.0
  %4526 = vmatpush1.xpose.msra.mxu0 0.0
  %4527 = vmatprep.subr.mxu0 0.0
  %4528 = vmatpush1.xpose.msra.mxu0 0.0
  %4529 = vmatprep.subr.mxu0 0.0
  %4530 = vmatpush1.xpose.msra.mxu0 0.0
  %4531 = vmatprep.subr.mxu0 0.0
  %4532 = vmatpush1.xpose.msra.mxu0 0.0
  %4533 = vmatprep.subr.mxu0 0.0
  %4534 = vmatpush1.xpose.msra.mxu0 0.0
  %4535 = vmatprep.subr.mxu0 0.0
  %4536 = vmatpush1.xpose.msra.mxu0 0.0
  %4537 = vmatprep.mubr.f32.mxu0 0.0
  %4538 = vmatmul.mubr.f32.gmra.mrb[0].mxu0 %v4468
  %v4539 = vpop.f32.mrb[0].mxu0
  %v4540 = vadd.f32 %v209, %v4539
  %v4541 = vpop.f32.mrb[0].mxu0
  %4542 = vdwg.mxu0
  %v4544 = vsel %vm210, %v74, 0
  %v4547 = vsel %vm210, %v138, 0
  %4549 = vmatprep.subr.mxu0 0.0
  %4550 = vmatpush1.xpose.msra.mxu0 %v4547
  %4551 = vmatprep.subr.mxu0 0.0
  %4552 = vmatpush1.xpose.msra.mxu0 0.0
  %4553 = vmatprep.subr.mxu0 0.0
  %4554 = vmatpush1.xpose.msra.mxu0 0.0
  %4555 = vmatprep.subr.mxu0 0.0
  %4556 = vmatpush1.xpose.msra.mxu0 0.0
  %4557 = vmatprep.subr.mxu0 0.0
  %4558 = vmatpush1.xpose.msra.mxu0 0.0
  %4559 = vmatprep.subr.mxu0 0.0
  %4560 = vmatpush1.xpose.msra.mxu0 0.0
  %4561 = vmatprep.subr.mxu0 0.0
  %4562 = vmatpush1.xpose.msra.mxu0 0.0
  %4563 = vmatprep.subr.mxu0 0.0
  %4564 = vmatpush1.xpose.msra.mxu0 0.0
  %4565 = vmatprep.subr.mxu0 0.0
  %4566 = vmatpush1.xpose.msra.mxu0 0.0
  %4567 = vmatprep.subr.mxu0 0.0
  %4568 = vmatpush1.xpose.msra.mxu0 0.0
  %4569 = vmatprep.subr.mxu0 0.0
  %4570 = vmatpush1.xpose.msra.mxu0 0.0
  %4571 = vmatprep.subr.mxu0 0.0
  %4572 = vmatpush1.xpose.msra.mxu0 0.0
  %4573 = vmatprep.subr.mxu0 0.0
  %4574 = vmatpush1.xpose.msra.mxu0 0.0
  %4575 = vmatprep.subr.mxu0 0.0
  %4576 = vmatpush1.xpose.msra.mxu0 0.0
  %4577 = vmatprep.subr.mxu0 0.0
  %4578 = vmatpush1.xpose.msra.mxu0 0.0
  %4579 = vmatprep.subr.mxu0 0.0
  %4580 = vmatpush1.xpose.msra.mxu0 0.0
  %4581 = vmatprep.subr.mxu0 0.0
  %4582 = vmatpush1.xpose.msra.mxu0 0.0
  %4583 = vmatprep.subr.mxu0 0.0
  %4584 = vmatpush1.xpose.msra.mxu0 0.0
  %4585 = vmatprep.subr.mxu0 0.0
  %4586 = vmatpush1.xpose.msra.mxu0 0.0
  %4587 = vmatprep.subr.mxu0 0.0
  %4588 = vmatpush1.xpose.msra.mxu0 0.0
  %4589 = vmatprep.subr.mxu0 0.0
  %4590 = vmatpush1.xpose.msra.mxu0 0.0
  %4591 = vmatprep.subr.mxu0 0.0
  %4592 = vmatpush1.xpose.msra.mxu0 0.0
  %4593 = vmatprep.subr.mxu0 0.0
  %4594 = vmatpush1.xpose.msra.mxu0 0.0
  %4595 = vmatprep.subr.mxu0 0.0
  %4596 = vmatpush1.xpose.msra.mxu0 0.0
  %4597 = vmatprep.subr.mxu0 0.0
  %4598 = vmatpush1.xpose.msra.mxu0 0.0
  %4599 = vmatprep.subr.mxu0 0.0
  %4600 = vmatpush1.xpose.msra.mxu0 0.0
  %4601 = vmatprep.subr.mxu0 0.0
  %4602 = vmatpush1.xpose.msra.mxu0 0.0
  %4603 = vmatprep.subr.mxu0 0.0
  %4604 = vmatpush1.xpose.msra.mxu0 0.0
  %4605 = vmatprep.subr.mxu0 0.0
  %4606 = vmatpush1.xpose.msra.mxu0 0.0
  %4607 = vmatprep.subr.mxu0 0.0
  %4608 = vmatpush1.xpose.msra.mxu0 0.0
  %4609 = vmatprep.subr.mxu0 0.0
  %4610 = vmatpush1.xpose.msra.mxu0 0.0
  %4611 = vmatprep.subr.mxu0 0.0
  %4612 = vmatpush1.xpose.msra.mxu0 0.0
  %4613 = vmatprep.mubr.f32.mxu0 0.0
  %4614 = vmatmul.mubr.f32.gmra.mrb[0].mxu0 %v4544
  %v4615 = vpop.f32.mrb[0].mxu0
  %v4616 = vadd.f32 %v209, %v4615
  %v4617 = vpop.f32.mrb[0].mxu0
  %4618 = vdwg.mxu0
  %v4620 = vsel %vm210, %v75, 0
  %v4623 = vsel %vm210, %v139, 0
  %4625 = vmatprep.subr.mxu0 0.0
  %4626 = vmatpush1.xpose.msra.mxu0 %v4623
  %4627 = vmatprep.subr.mxu0 0.0
  %4628 = vmatpush1.xpose.msra.mxu0 0.0
  %4629 = vmatprep.subr.mxu0 0.0
  %4630 = vmatpush1.xpose.msra.mxu0 0.0
  %4631 = vmatprep.subr.mxu0 0.0
  %4632 = vmatpush1.xpose.msra.mxu0 0.0
  %4633 = vmatprep.subr.mxu0 0.0
  %4634 = vmatpush1.xpose.msra.mxu0 0.0
  %4635 = vmatprep.subr.mxu0 0.0
  %4636 = vmatpush1.xpose.msra.mxu0 0.0
  %4637 = vmatprep.subr.mxu0 0.0
  %4638 = vmatpush1.xpose.msra.mxu0 0.0
  %4639 = vmatprep.subr.mxu0 0.0
  %4640 = vmatpush1.xpose.msra.mxu0 0.0
  %4641 = vmatprep.subr.mxu0 0.0
  %4642 = vmatpush1.xpose.msra.mxu0 0.0
  %4643 = vmatprep.subr.mxu0 0.0
  %4644 = vmatpush1.xpose.msra.mxu0 0.0
  %4645 = vmatprep.subr.mxu0 0.0
  %4646 = vmatpush1.xpose.msra.mxu0 0.0
  %4647 = vmatprep.subr.mxu0 0.0
  %4648 = vmatpush1.xpose.msra.mxu0 0.0
  %4649 = vmatprep.subr.mxu0 0.0
  %4650 = vmatpush1.xpose.msra.mxu0 0.0
  %4651 = vmatprep.subr.mxu0 0.0
  %4652 = vmatpush1.xpose.msra.mxu0 0.0
  %4653 = vmatprep.subr.mxu0 0.0
  %4654 = vmatpush1.xpose.msra.mxu0 0.0
  %4655 = vmatprep.subr.mxu0 0.0
  %4656 = vmatpush1.xpose.msra.mxu0 0.0
  %4657 = vmatprep.subr.mxu0 0.0
  %4658 = vmatpush1.xpose.msra.mxu0 0.0
  %4659 = vmatprep.subr.mxu0 0.0
  %4660 = vmatpush1.xpose.msra.mxu0 0.0
  %4661 = vmatprep.subr.mxu0 0.0
  %4662 = vmatpush1.xpose.msra.mxu0 0.0
  %4663 = vmatprep.subr.mxu0 0.0
  %4664 = vmatpush1.xpose.msra.mxu0 0.0
  %4665 = vmatprep.subr.mxu0 0.0
  %4666 = vmatpush1.xpose.msra.mxu0 0.0
  %4667 = vmatprep.subr.mxu0 0.0
  %4668 = vmatpush1.xpose.msra.mxu0 0.0
  %4669 = vmatprep.subr.mxu0 0.0
  %4670 = vmatpush1.xpose.msra.mxu0 0.0
  %4671 = vmatprep.subr.mxu0 0.0
  %4672 = vmatpush1.xpose.msra.mxu0 0.0
  %4673 = vmatprep.subr.mxu0 0.0
  %4674 = vmatpush1.xpose.msra.mxu0 0.0
  %4675 = vmatprep.subr.mxu0 0.0
  %4676 = vmatpush1.xpose.msra.mxu0 0.0
  %4677 = vmatprep.subr.mxu0 0.0
  %4678 = vmatpush1.xpose.msra.mxu0 0.0
  %4679 = vmatprep.subr.mxu0 0.0
  %4680 = vmatpush1.xpose.msra.mxu0 0.0
  %4681 = vmatprep.subr.mxu0 0.0
  %4682 = vmatpush1.xpose.msra.mxu0 0.0
  %4683 = vmatprep.subr.mxu0 0.0
  %4684 = vmatpush1.xpose.msra.mxu0 0.0
  %4685 = vmatprep.subr.mxu0 0.0
  %4686 = vmatpush1.xpose.msra.mxu0 0.0
  %4687 = vmatprep.subr.mxu0 0.0
  %4688 = vmatpush1.xpose.msra.mxu0 0.0
  %4689 = vmatprep.mubr.f32.mxu0 0.0
  %4690 = vmatmul.mubr.f32.gmra.mrb[0].mxu0 %v4620
  %v4691 = vpop.f32.mrb[0].mxu0
  %v4692 = vadd.f32 %v209, %v4691
  %v4693 = vpop.f32.mrb[0].mxu0
  %4694 = vdwg.mxu0
  %v4696 = vsel %vm210, %v76, 0
  %v4699 = vsel %vm210, %v140, 0
  %4701 = vmatprep.subr.mxu0 0.0
  %4702 = vmatpush1.xpose.msra.mxu0 %v4699
  %4703 = vmatprep.subr.mxu0 0.0
  %4704 = vmatpush1.xpose.msra.mxu0 0.0
  %4705 = vmatprep.subr.mxu0 0.0
  %4706 = vmatpush1.xpose.msra.mxu0 0.0
  %4707 = vmatprep.subr.mxu0 0.0
  %4708 = vmatpush1.xpose.msra.mxu0 0.0
  %4709 = vmatprep.subr.mxu0 0.0
  %4710 = vmatpush1.xpose.msra.mxu0 0.0
  %4711 = vmatprep.subr.mxu0 0.0
  %4712 = vmatpush1.xpose.msra.mxu0 0.0
  %4713 = vmatprep.subr.mxu0 0.0
  %4714 = vmatpush1.xpose.msra.mxu0 0.0
  %4715 = vmatprep.subr.mxu0 0.0
  %4716 = vmatpush1.xpose.msra.mxu0 0.0
  %4717 = vmatprep.subr.mxu0 0.0
  %4718 = vmatpush1.xpose.msra.mxu0 0.0
  %4719 = vmatprep.subr.mxu0 0.0
  %4720 = vmatpush1.xpose.msra.mxu0 0.0
  %4721 = vmatprep.subr.mxu0 0.0
  %4722 = vmatpush1.xpose.msra.mxu0 0.0
  %4723 = vmatprep.subr.mxu0 0.0
  %4724 = vmatpush1.xpose.msra.mxu0 0.0
  %4725 = vmatprep.subr.mxu0 0.0
  %4726 = vmatpush1.xpose.msra.mxu0 0.0
  %4727 = vmatprep.subr.mxu0 0.0
  %4728 = vmatpush1.xpose.msra.mxu0 0.0
  %4729 = vmatprep.subr.mxu0 0.0
  %4730 = vmatpush1.xpose.msra.mxu0 0.0
  %4731 = vmatprep.subr.mxu0 0.0
  %4732 = vmatpush1.xpose.msra.mxu0 0.0
  %4733 = vmatprep.subr.mxu0 0.0
  %4734 = vmatpush1.xpose.msra.mxu0 0.0
  %4735 = vmatprep.subr.mxu0 0.0
  %4736 = vmatpush1.xpose.msra.mxu0 0.0
  %4737 = vmatprep.subr.mxu0 0.0
  %4738 = vmatpush1.xpose.msra.mxu0 0.0
  %4739 = vmatprep.subr.mxu0 0.0
  %4740 = vmatpush1.xpose.msra.mxu0 0.0
  %4741 = vmatprep.subr.mxu0 0.0
  %4742 = vmatpush1.xpose.msra.mxu0 0.0
  %4743 = vmatprep.subr.mxu0 0.0
  %4744 = vmatpush1.xpose.msra.mxu0 0.0
  %4745 = vmatprep.subr.mxu0 0.0
  %4746 = vmatpush1.xpose.msra.mxu0 0.0
  %4747 = vmatprep.subr.mxu0 0.0
  %4748 = vmatpush1.xpose.msra.mxu0 0.0
  %4749 = vmatprep.subr.mxu0 0.0
  %4750 = vmatpush1.xpose.msra.mxu0 0.0
  %4751 = vmatprep.subr.mxu0 0.0
  %4752 = vmatpush1.xpose.msra.mxu0 0.0
  %4753 = vmatprep.subr.mxu0 0.0
  %4754 = vmatpush1.xpose.msra.mxu0 0.0
  %4755 = vmatprep.subr.mxu0 0.0
  %4756 = vmatpush1.xpose.msra.mxu0 0.0
  %4757 = vmatprep.subr.mxu0 0.0
  %4758 = vmatpush1.xpose.msra.mxu0 0.0
  %4759 = vmatprep.subr.mxu0 0.0
  %4760 = vmatpush1.xpose.msra.mxu0 0.0
  %4761 = vmatprep.subr.mxu0 0.0
  %4762 = vmatpush1.xpose.msra.mxu0 0.0
  %4763 = vmatprep.subr.mxu0 0.0
  %4764 = vmatpush1.xpose.msra.mxu0 0.0
  %4765 = vmatprep.mubr.f32.mxu0 0.0
  %4766 = vmatmul.mubr.f32.gmra.mrb[0].mxu0 %v4696
  %v4767 = vpop.f32.mrb[0].mxu0
  %v4768 = vadd.f32 %v209, %v4767
  %v4769 = vpop.f32.mrb[0].mxu0
  %4770 = vdwg.mxu0
  %v4772 = vsel %vm210, %v77, 0
  %v4775 = vsel %vm210, %v141, 0
  %4777 = vmatprep.subr.mxu0 0.0
  %4778 = vmatpush1.xpose.msra.mxu0 %v4775
  %4779 = vmatprep.subr.mxu0 0.0
  %4780 = vmatpush1.xpose.msra.mxu0 0.0
  %4781 = vmatprep.subr.mxu0 0.0
  %4782 = vmatpush1.xpose.msra.mxu0 0.0
  %4783 = vmatprep.subr.mxu0 0.0
  %4784 = vmatpush1.xpose.msra.mxu0 0.0
  %4785 = vmatprep.subr.mxu0 0.0
  %4786 = vmatpush1.xpose.msra.mxu0 0.0
  %4787 = vmatprep.subr.mxu0 0.0
  %4788 = vmatpush1.xpose.msra.mxu0 0.0
  %4789 = vmatprep.subr.mxu0 0.0
  %4790 = vmatpush1.xpose.msra.mxu0 0.0
  %4791 = vmatprep.subr.mxu0 0.0
  %4792 = vmatpush1.xpose.msra.mxu0 0.0
  %4793 = vmatprep.subr.mxu0 0.0
  %4794 = vmatpush1.xpose.msra.mxu0 0.0
  %4795 = vmatprep.subr.mxu0 0.0
  %4796 = vmatpush1.xpose.msra.mxu0 0.0
  %4797 = vmatprep.subr.mxu0 0.0
  %4798 = vmatpush1.xpose.msra.mxu0 0.0
  %4799 = vmatprep.subr.mxu0 0.0
  %4800 = vmatpush1.xpose.msra.mxu0 0.0
  %4801 = vmatprep.subr.mxu0 0.0
  %4802 = vmatpush1.xpose.msra.mxu0 0.0
  %4803 = vmatprep.subr.mxu0 0.0
  %4804 = vmatpush1.xpose.msra.mxu0 0.0
  %4805 = vmatprep.subr.mxu0 0.0
  %4806 = vmatpush1.xpose.msra.mxu0 0.0
  %4807 = vmatprep.subr.mxu0 0.0
  %4808 = vmatpush1.xpose.msra.mxu0 0.0
  %4809 = vmatprep.subr.mxu0 0.0
  %4810 = vmatpush1.xpose.msra.mxu0 0.0
  %4811 = vmatprep.subr.mxu0 0.0
  %4812 = vmatpush1.xpose.msra.mxu0 0.0
  %4813 = vmatprep.subr.mxu0 0.0
  %4814 = vmatpush1.xpose.msra.mxu0 0.0
  %4815 = vmatprep.subr.mxu0 0.0
  %4816 = vmatpush1.xpose.msra.mxu0 0.0
  %4817 = vmatprep.subr.mxu0 0.0
  %4818 = vmatpush1.xpose.msra.mxu0 0.0
  %4819 = vmatprep.subr.mxu0 0.0
  %4820 = vmatpush1.xpose.msra.mxu0 0.0
  %4821 = vmatprep.subr.mxu0 0.0
  %4822 = vmatpush1.xpose.msra.mxu0 0.0
  %4823 = vmatprep.subr.mxu0 0.0
  %4824 = vmatpush1.xpose.msra.mxu0 0.0
  %4825 = vmatprep.subr.mxu0 0.0
  %4826 = vmatpush1.xpose.msra.mxu0 0.0
  %4827 = vmatprep.subr.mxu0 0.0
  %4828 = vmatpush1.xpose.msra.mxu0 0.0
  %4829 = vmatprep.subr.mxu0 0.0
  %4830 = vmatpush1.xpose.msra.mxu0 0.0
  %4831 = vmatprep.subr.mxu0 0.0
  %4832 = vmatpush1.xpose.msra.mxu0 0.0
  %4833 = vmatprep.subr.mxu0 0.0
  %4834 = vmatpush1.xpose.msra.mxu0 0.0
  %4835 = vmatprep.subr.mxu0 0.0
  %4836 = vmatpush1.xpose.msra.mxu0 0.0
  %4837 = vmatprep.subr.mxu0 0.0
  %4838 = vmatpush1.xpose.msra.mxu0 0.0
  %4839 = vmatprep.subr.mxu0 0.0
  %4840 = vmatpush1.xpose.msra.mxu0 0.0
  %4841 = vmatprep.mubr.f32.mxu0 0.0
  %4842 = vmatmul.mubr.f32.gmra.mrb[0].mxu0 %v4772
  %v4843 = vpop.f32.mrb[0].mxu0
  %v4844 = vadd.f32 %v209, %v4843
  %v4845 = vpop.f32.mrb[0].mxu0
  %4846 = vdwg.mxu0
  %v4848 = vsel %vm210, %v78, 0
  %v4851 = vsel %vm210, %v142, 0
  %4853 = vmatprep.subr.mxu0 0.0
  %4854 = vmatpush1.xpose.msra.mxu0 %v4851
  %4855 = vmatprep.subr.mxu0 0.0
  %4856 = vmatpush1.xpose.msra.mxu0 0.0
  %4857 = vmatprep.subr.mxu0 0.0
  %4858 = vmatpush1.xpose.msra.mxu0 0.0
  %4859 = vmatprep.subr.mxu0 0.0
  %4860 = vmatpush1.xpose.msra.mxu0 0.0
  %4861 = vmatprep.subr.mxu0 0.0
  %4862 = vmatpush1.xpose.msra.mxu0 0.0
  %4863 = vmatprep.subr.mxu0 0.0
  %4864 = vmatpush1.xpose.msra.mxu0 0.0
  %4865 = vmatprep.subr.mxu0 0.0
  %4866 = vmatpush1.xpose.msra.mxu0 0.0
  %4867 = vmatprep.subr.mxu0 0.0
  %4868 = vmatpush1.xpose.msra.mxu0 0.0
  %4869 = vmatprep.subr.mxu0 0.0
  %4870 = vmatpush1.xpose.msra.mxu0 0.0
  %4871 = vmatprep.subr.mxu0 0.0
  %4872 = vmatpush1.xpose.msra.mxu0 0.0
  %4873 = vmatprep.subr.mxu0 0.0
  %4874 = vmatpush1.xpose.msra.mxu0 0.0
  %4875 = vmatprep.subr.mxu0 0.0
  %4876 = vmatpush1.xpose.msra.mxu0 0.0
  %4877 = vmatprep.subr.mxu0 0.0
  %4878 = vmatpush1.xpose.msra.mxu0 0.0
  %4879 = vmatprep.subr.mxu0 0.0
  %4880 = vmatpush1.xpose.msra.mxu0 0.0
  %4881 = vmatprep.subr.mxu0 0.0
  %4882 = vmatpush1.xpose.msra.mxu0 0.0
  %4883 = vmatprep.subr.mxu0 0.0
  %4884 = vmatpush1.xpose.msra.mxu0 0.0
  %4885 = vmatprep.subr.mxu0 0.0
  %4886 = vmatpush1.xpose.msra.mxu0 0.0
  %4887 = vmatprep.subr.mxu0 0.0
  %4888 = vmatpush1.xpose.msra.mxu0 0.0
  %4889 = vmatprep.subr.mxu0 0.0
  %4890 = vmatpush1.xpose.msra.mxu0 0.0
  %4891 = vmatprep.subr.mxu0 0.0
  %4892 = vmatpush1.xpose.msra.mxu0 0.0
  %4893 = vmatprep.subr.mxu0 0.0
  %4894 = vmatpush1.xpose.msra.mxu0 0.0
  %4895 = vmatprep.subr.mxu0 0.0
  %4896 = vmatpush1.xpose.msra.mxu0 0.0
  %4897 = vmatprep.subr.mxu0 0.0
  %4898 = vmatpush1.xpose.msra.mxu0 0.0
  %4899 = vmatprep.subr.mxu0 0.0
  %4900 = vmatpush1.xpose.msra.mxu0 0.0
  %4901 = vmatprep.subr.mxu0 0.0
  %4902 = vmatpush1.xpose.msra.mxu0 0.0
  %4903 = vmatprep.subr.mxu0 0.0
  %4904 = vmatpush1.xpose.msra.mxu0 0.0
  %4905 = vmatprep.subr.mxu0 0.0
  %4906 = vmatpush1.xpose.msra.mxu0 0.0
  %4907 = vmatprep.subr.mxu0 0.0
  %4908 = vmatpush1.xpose.msra.mxu0 0.0
  %4909 = vmatprep.subr.mxu0 0.0
  %4910 = vmatpush1.xpose.msra.mxu0 0.0
  %4911 = vmatprep.subr.mxu0 0.0
  %4912 = vmatpush1.xpose.msra.mxu0 0.0
  %4913 = vmatprep.subr.mxu0 0.0
  %4914 = vmatpush1.xpose.msra.mxu0 0.0
  %4915 = vmatprep.subr.mxu0 0.0
  %4916 = vmatpush1.xpose.msra.mxu0 0.0
  %4917 = vmatprep.mubr.f32.mxu0 0.0
  %4918 = vmatmul.mubr.f32.gmra.mrb[0].mxu0 %v4848
  %v4919 = vpop.f32.mrb[0].mxu0
  %v4920 = vadd.f32 %v209, %v4919
  %v4921 = vpop.f32.mrb[0].mxu0
  %4922 = vdwg.mxu0
  %v4924 = vsel %vm210, %v79, 0
  %v4927 = vsel %vm210, %v143, 0
  %4929 = vmatprep.subr.mxu0 0.0
  %4930 = vmatpush1.xpose.msra.mxu0 %v4927
  %4931 = vmatprep.subr.mxu0 0.0
  %4932 = vmatpush1.xpose.msra.mxu0 0.0
  %4933 = vmatprep.subr.mxu0 0.0
  %4934 = vmatpush1.xpose.msra.mxu0 0.0
  %4935 = vmatprep.subr.mxu0 0.0
  %4936 = vmatpush1.xpose.msra.mxu0 0.0
  %4937 = vmatprep.subr.mxu0 0.0
  %4938 = vmatpush1.xpose.msra.mxu0 0.0
  %4939 = vmatprep.subr.mxu0 0.0
  %4940 = vmatpush1.xpose.msra.mxu0 0.0
  %4941 = vmatprep.subr.mxu0 0.0
  %4942 = vmatpush1.xpose.msra.mxu0 0.0
  %4943 = vmatprep.subr.mxu0 0.0
  %4944 = vmatpush1.xpose.msra.mxu0 0.0
  %4945 = vmatprep.subr.mxu0 0.0
  %4946 = vmatpush1.xpose.msra.mxu0 0.0
  %4947 = vmatprep.subr.mxu0 0.0
  %4948 = vmatpush1.xpose.msra.mxu0 0.0
  %4949 = vmatprep.subr.mxu0 0.0
  %4950 = vmatpush1.xpose.msra.mxu0 0.0
  %4951 = vmatprep.subr.mxu0 0.0
  %4952 = vmatpush1.xpose.msra.mxu0 0.0
  %4953 = vmatprep.subr.mxu0 0.0
  %4954 = vmatpush1.xpose.msra.mxu0 0.0
  %4955 = vmatprep.subr.mxu0 0.0
  %4956 = vmatpush1.xpose.msra.mxu0 0.0
  %4957 = vmatprep.subr.mxu0 0.0
  %4958 = vmatpush1.xpose.msra.mxu0 0.0
  %4959 = vmatprep.subr.mxu0 0.0
  %4960 = vmatpush1.xpose.msra.mxu0 0.0
  %4961 = vmatprep.subr.mxu0 0.0
  %4962 = vmatpush1.xpose.msra.mxu0 0.0
  %4963 = vmatprep.subr.mxu0 0.0
  %4964 = vmatpush1.xpose.msra.mxu0 0.0
  %4965 = vmatprep.subr.mxu0 0.0
  %4966 = vmatpush1.xpose.msra.mxu0 0.0
  %4967 = vmatprep.subr.mxu0 0.0
  %4968 = vmatpush1.xpose.msra.mxu0 0.0
  %4969 = vmatprep.subr.mxu0 0.0
  %4970 = vmatpush1.xpose.msra.mxu0 0.0
  %4971 = vmatprep.subr.mxu0 0.0
  %4972 = vmatpush1.xpose.msra.mxu0 0.0
  %4973 = vmatprep.subr.mxu0 0.0
  %4974 = vmatpush1.xpose.msra.mxu0 0.0
  %4975 = vmatprep.subr.mxu0 0.0
  %4976 = vmatpush1.xpose.msra.mxu0 0.0
  %4977 = vmatprep.subr.mxu0 0.0
  %4978 = vmatpush1.xpose.msra.mxu0 0.0
  %4979 = vmatprep.subr.mxu0 0.0
  %4980 = vmatpush1.xpose.msra.mxu0 0.0
  %4981 = vmatprep.subr.mxu0 0.0
  %4982 = vmatpush1.xpose.msra.mxu0 0.0
  %4983 = vmatprep.subr.mxu0 0.0
  %4984 = vmatpush1.xpose.msra.mxu0 0.0
  %4985 = vmatprep.subr.mxu0 0.0
  %4986 = vmatpush1.xpose.msra.mxu0 0.0
  %4987 = vmatprep.subr.mxu0 0.0
  %4988 = vmatpush1.xpose.msra.mxu0 0.0
  %4989 = vmatprep.subr.mxu0 0.0
  %4990 = vmatpush1.xpose.msra.mxu0 0.0
  %4991 = vmatprep.subr.mxu0 0.0
  %4992 = vmatpush1.xpose.msra.mxu0 0.0
  %4993 = vmatprep.mubr.f32.mxu0 0.0
  %4994 = vmatmul.mubr.f32.gmra.mrb[0].mxu0 %v4924
  %v4995 = vpop.f32.mrb[0].mxu0
  %v4996 = vadd.f32 %v209, %v4995
  %v4997 = vpop.f32.mrb[0].mxu0
  %4998 = vdwg.mxu0
  %v5000 = vsel %vm210, %v80, 0
  %v5003 = vsel %vm210, %v144, 0
  %5005 = vmatprep.subr.mxu0 0.0
  %5006 = vmatpush1.xpose.msra.mxu0 %v5003
  %5007 = vmatprep.subr.mxu0 0.0
  %5008 = vmatpush1.xpose.msra.mxu0 0.0
  %5009 = vmatprep.subr.mxu0 0.0
  %5010 = vmatpush1.xpose.msra.mxu0 0.0
  %5011 = vmatprep.subr.mxu0 0.0
  %5012 = vmatpush1.xpose.msra.mxu0 0.0
  %5013 = vmatprep.subr.mxu0 0.0
  %5014 = vmatpush1.xpose.msra.mxu0 0.0
  %5015 = vmatprep.subr.mxu0 0.0
  %5016 = vmatpush1.xpose.msra.mxu0 0.0
  %5017 = vmatprep.subr.mxu0 0.0
  %5018 = vmatpush1.xpose.msra.mxu0 0.0
  %5019 = vmatprep.subr.mxu0 0.0
  %5020 = vmatpush1.xpose.msra.mxu0 0.0
  %5021 = vmatprep.subr.mxu0 0.0
  %5022 = vmatpush1.xpose.msra.mxu0 0.0
  %5023 = vmatprep.subr.mxu0 0.0
  %5024 = vmatpush1.xpose.msra.mxu0 0.0
  %5025 = vmatprep.subr.mxu0 0.0
  %5026 = vmatpush1.xpose.msra.mxu0 0.0
  %5027 = vmatprep.subr.mxu0 0.0
  %5028 = vmatpush1.xpose.msra.mxu0 0.0
  %5029 = vmatprep.subr.mxu0 0.0
  %5030 = vmatpush1.xpose.msra.mxu0 0.0
  %5031 = vmatprep.subr.mxu0 0.0
  %5032 = vmatpush1.xpose.msra.mxu0 0.0
  %5033 = vmatprep.subr.mxu0 0.0
  %5034 = vmatpush1.xpose.msra.mxu0 0.0
  %5035 = vmatprep.subr.mxu0 0.0
  %5036 = vmatpush1.xpose.msra.mxu0 0.0
  %5037 = vmatprep.subr.mxu0 0.0
  %5038 = vmatpush1.xpose.msra.mxu0 0.0
  %5039 = vmatprep.subr.mxu0 0.0
  %5040 = vmatpush1.xpose.msra.mxu0 0.0
  %5041 = vmatprep.subr.mxu0 0.0
  %5042 = vmatpush1.xpose.msra.mxu0 0.0
  %5043 = vmatprep.subr.mxu0 0.0
  %5044 = vmatpush1.xpose.msra.mxu0 0.0
  %5045 = vmatprep.subr.mxu0 0.0
  %5046 = vmatpush1.xpose.msra.mxu0 0.0
  %5047 = vmatprep.subr.mxu0 0.0
  %5048 = vmatpush1.xpose.msra.mxu0 0.0
  %5049 = vmatprep.subr.mxu0 0.0
  %5050 = vmatpush1.xpose.msra.mxu0 0.0
  %5051 = vmatprep.subr.mxu0 0.0
  %5052 = vmatpush1.xpose.msra.mxu0 0.0
  %5053 = vmatprep.subr.mxu0 0.0
  %5054 = vmatpush1.xpose.msra.mxu0 0.0
  %5055 = vmatprep.subr.mxu0 0.0
  %5056 = vmatpush1.xpose.msra.mxu0 0.0
  %5057 = vmatprep.subr.mxu0 0.0
  %5058 = vmatpush1.xpose.msra.mxu0 0.0
  %5059 = vmatprep.subr.mxu0 0.0
  %5060 = vmatpush1.xpose.msra.mxu0 0.0
  %5061 = vmatprep.subr.mxu0 0.0
  %5062 = vmatpush1.xpose.msra.mxu0 0.0
  %5063 = vmatprep.subr.mxu0 0.0
  %5064 = vmatpush1.xpose.msra.mxu0 0.0
  %5065 = vmatprep.subr.mxu0 0.0
  %5066 = vmatpush1.xpose.msra.mxu0 0.0
  %5067 = vmatprep.subr.mxu0 0.0
  %5068 = vmatpush1.xpose.msra.mxu0 0.0
  %5069 = vmatprep.mubr.f32.mxu0 0.0
  %5070 = vmatmul.mubr.f32.gmra.mrb[0].mxu0 %v5000
  %v5071 = vpop.f32.mrb[0].mxu0
  %v5072 = vadd.f32 %v209, %v5071
  %v5073 = vpop.f32.mrb[0].mxu0
  %5074 = vdwg.mxu0
  %vm5075 = vcmask 64512
  %v5076 = vsel %vm5075, %v284, -inf
  %5077 = vmax.xlane.f32.xlu0 %v5076
  %v5078 = vpop.xlane.xlu0 %5077
  %v5079 = vsel %vm5075, %v360, -inf
  %5080 = vmax.xlane.f32.xlu0 %v5079
  %v5081 = vpop.xlane.xlu0 %5080
  %v5082 = vsel %vm5075, %v436, -inf
  %5083 = vmax.xlane.f32.xlu0 %v5082
  %v5084 = vpop.xlane.xlu0 %5083
  %v5085 = vsel %vm5075, %v512, -inf
  %5086 = vmax.xlane.f32.xlu0 %v5085
  %v5087 = vpop.xlane.xlu0 %5086
  %v5088 = vsel %vm5075, %v588, -inf
  %5089 = vmax.xlane.f32.xlu0 %v5088
  %v5090 = vpop.xlane.xlu0 %5089
  %v5091 = vsel %vm5075, %v664, -inf
  %5092 = vmax.xlane.f32.xlu0 %v5091
  %v5093 = vpop.xlane.xlu0 %5092
  %v5094 = vsel %vm5075, %v740, -inf
  %5095 = vmax.xlane.f32.xlu0 %v5094
  %v5096 = vpop.xlane.xlu0 %5095
  %v5097 = vsel %vm5075, %v816, -inf
  %5098 = vmax.xlane.f32.xlu0 %v5097
  %v5099 = vpop.xlane.xlu0 %5098
  %v5100 = vsel %vm5075, %v892, -inf
  %5101 = vmax.xlane.f32.xlu0 %v5100
  %v5102 = vpop.xlane.xlu0 %5101
  %v5103 = vsel %vm5075, %v968, -inf
  %5104 = vmax.xlane.f32.xlu0 %v5103
  %v5105 = vpop.xlane.xlu0 %5104
  %v5106 = vsel %vm5075, %v1044, -inf
  %5107 = vmax.xlane.f32.xlu0 %v5106
  %v5108 = vpop.xlane.xlu0 %5107
  %v5109 = vsel %vm5075, %v1120, -inf
  %5110 = vmax.xlane.f32.xlu0 %v5109
  %v5111 = vpop.xlane.xlu0 %5110
  %v5112 = vsel %vm5075, %v1196, -inf
  %5113 = vmax.xlane.f32.xlu0 %v5112
  %v5114 = vpop.xlane.xlu0 %5113
  %v5115 = vsel %vm5075, %v1272, -inf
  %5116 = vmax.xlane.f32.xlu0 %v5115
  %v5117 = vpop.xlane.xlu0 %5116
  %v5118 = vsel %vm5075, %v1348, -inf
  %5119 = vmax.xlane.f32.xlu0 %v5118
  %v5120 = vpop.xlane.xlu0 %5119
  %v5121 = vsel %vm5075, %v1424, -inf
  %5122 = vmax.xlane.f32.xlu0 %v5121
  %v5123 = vpop.xlane.xlu0 %5122
  %v5124 = vsel %vm5075, %v1500, -inf
  %5125 = vmax.xlane.f32.xlu0 %v5124
  %v5126 = vpop.xlane.xlu0 %5125
  %v5127 = vsel %vm5075, %v1576, -inf
  %5128 = vmax.xlane.f32.xlu0 %v5127
  %v5129 = vpop.xlane.xlu0 %5128
  %v5130 = vsel %vm5075, %v1652, -inf
  %5131 = vmax.xlane.f32.xlu0 %v5130
  %v5132 = vpop.xlane.xlu0 %5131
  %v5133 = vsel %vm5075, %v1728, -inf
  %5134 = vmax.xlane.f32.xlu0 %v5133
  %v5135 = vpop.xlane.xlu0 %5134
  %v5136 = vsel %vm5075, %v1804, -inf
  %5137 = vmax.xlane.f32.xlu0 %v5136
  %v5138 = vpop.xlane.xlu0 %5137
  %v5139 = vsel %vm5075, %v1880, -inf
  %5140 = vmax.xlane.f32.xlu0 %v5139
  %v5141 = vpop.xlane.xlu0 %5140
  %v5142 = vsel %vm5075, %v1956, -inf
  %5143 = vmax.xlane.f32.xlu0 %v5142
  %v5144 = vpop.xlane.xlu0 %5143
  %v5145 = vsel %vm5075, %v2032, -inf
  %5146 = vmax.xlane.f32.xlu0 %v5145
  %v5147 = vpop.xlane.xlu0 %5146
  %v5148 = vsel %vm5075, %v2108, -inf
  %5149 = vmax.xlane.f32.xlu0 %v5148
  %v5150 = vpop.xlane.xlu0 %5149
  %v5151 = vsel %vm5075, %v2184, -inf
  %5152 = vmax.xlane.f32.xlu0 %v5151
  %v5153 = vpop.xlane.xlu0 %5152
  %v5154 = vsel %vm5075, %v2260, -inf
  %5155 = vmax.xlane.f32.xlu0 %v5154
  %v5156 = vpop.xlane.xlu0 %5155
  %v5157 = vsel %vm5075, %v2336, -inf
  %5158 = vmax.xlane.f32.xlu0 %v5157
  %v5159 = vpop.xlane.xlu0 %5158
  %v5160 = vsel %vm5075, %v2412, -inf
  %5161 = vmax.xlane.f32.xlu0 %v5160
  %v5162 = vpop.xlane.xlu0 %5161
  %v5163 = vsel %vm5075, %v2488, -inf
  %5164 = vmax.xlane.f32.xlu0 %v5163
  %v5165 = vpop.xlane.xlu0 %5164
  %v5166 = vsel %vm5075, %v2564, -inf
  %5167 = vmax.xlane.f32.xlu0 %v5166
  %v5168 = vpop.xlane.xlu0 %5167
  %v5169 = vsel %vm5075, %v2640, -inf
  %5170 = vmax.xlane.f32.xlu0 %v5169
  %v5171 = vpop.xlane.xlu0 %5170
  %v5172 = vsel %vm5075, %v2716, -inf
  %5173 = vmax.xlane.f32.xlu0 %v5172
  %v5174 = vpop.xlane.xlu0 %5173
  %v5175 = vsel %vm5075, %v2792, -inf
  %5176 = vmax.xlane.f32.xlu0 %v5175
  %v5177 = vpop.xlane.xlu0 %5176
  %v5178 = vsel %vm5075, %v2868, -inf
  %5179 = vmax.xlane.f32.xlu0 %v5178
  %v5180 = vpop.xlane.xlu0 %5179
  %v5181 = vsel %vm5075, %v2944, -inf
  %5182 = vmax.xlane.f32.xlu0 %v5181
  %v5183 = vpop.xlane.xlu0 %5182
  %v5184 = vsel %vm5075, %v3020, -inf
  %5185 = vmax.xlane.f32.xlu0 %v5184
  %v5186 = vpop.xlane.xlu0 %5185
  %v5187 = vsel %vm5075, %v3096, -inf
  %5188 = vmax.xlane.f32.xlu0 %v5187
  %v5189 = vpop.xlane.xlu0 %5188
  %v5190 = vsel %vm5075, %v3172, -inf
  %5191 = vmax.xlane.f32.xlu0 %v5190
  %v5192 = vpop.xlane.xlu0 %5191
  %v5193 = vsel %vm5075, %v3248, -inf
  %5194 = vmax.xlane.f32.xlu0 %v5193
  %v5195 = vpop.xlane.xlu0 %5194
  %v5196 = vsel %vm5075, %v3324, -inf
  %5197 = vmax.xlane.f32.xlu0 %v5196
  %v5198 = vpop.xlane.xlu0 %5197
  %v5199 = vsel %vm5075, %v3400, -inf
  %5200 = vmax.xlane.f32.xlu0 %v5199
  %v5201 = vpop.xlane.xlu0 %5200
  %v5202 = vsel %vm5075, %v3476, -inf
  %5203 = vmax.xlane.f32.xlu0 %v5202
  %v5204 = vpop.xlane.xlu0 %5203
  %v5205 = vsel %vm5075, %v3552, -inf
  %5206 = vmax.xlane.f32.xlu0 %v5205
  %v5207 = vpop.xlane.xlu0 %5206
  %v5208 = vsel %vm5075, %v3628, -inf
  %5209 = vmax.xlane.f32.xlu0 %v5208
  %v5210 = vpop.xlane.xlu0 %5209
  %v5211 = vsel %vm5075, %v3704, -inf
  %5212 = vmax.xlane.f32.xlu0 %v5211
  %v5213 = vpop.xlane.xlu0 %5212
  %v5214 = vsel %vm5075, %v3780, -inf
  %5215 = vmax.xlane.f32.xlu0 %v5214
  %v5216 = vpop.xlane.xlu0 %5215
  %v5217 = vsel %vm5075, %v3856, -inf
  %5218 = vmax.xlane.f32.xlu0 %v5217
  %v5219 = vpop.xlane.xlu0 %5218
  %v5220 = vsel %vm5075, %v3932, -inf
  %5221 = vmax.xlane.f32.xlu0 %v5220
  %v5222 = vpop.xlane.xlu0 %5221
  %v5223 = vsel %vm5075, %v4008, -inf
  %5224 = vmax.xlane.f32.xlu0 %v5223
  %v5225 = vpop.xlane.xlu0 %5224
  %v5226 = vsel %vm5075, %v4084, -inf
  %5227 = vmax.xlane.f32.xlu0 %v5226
  %v5228 = vpop.xlane.xlu0 %5227
  %v5229 = vsel %vm5075, %v4160, -inf
  %5230 = vmax.xlane.f32.xlu0 %v5229
  %v5231 = vpop.xlane.xlu0 %5230
  %v5232 = vsel %vm5075, %v4236, -inf
  %5233 = vmax.xlane.f32.xlu0 %v5232
  %v5234 = vpop.xlane.xlu0 %5233
  %v5235 = vsel %vm5075, %v4312, -inf
  %5236 = vmax.xlane.f32.xlu0 %v5235
  %v5237 = vpop.xlane.xlu0 %5236
  %v5238 = vsel %vm5075, %v4388, -inf
  %5239 = vmax.xlane.f32.xlu0 %v5238
  %v5240 = vpop.xlane.xlu0 %5239
  %v5241 = vsel %vm5075, %v4464, -inf
  %5242 = vmax.xlane.f32.xlu0 %v5241
  %v5243 = vpop.xlane.xlu0 %5242
  %v5244 = vsel %vm5075, %v4540, -inf
  %5245 = vmax.xlane.f32.xlu0 %v5244
  %v5246 = vpop.xlane.xlu0 %5245
  %v5247 = vsel %vm5075, %v4616, -inf
  %5248 = vmax.xlane.f32.xlu0 %v5247
  %v5249 = vpop.xlane.xlu0 %5248
  %v5250 = vsel %vm5075, %v4692, -inf
  %5251 = vmax.xlane.f32.xlu0 %v5250
  %v5252 = vpop.xlane.xlu0 %5251
  %v5253 = vsel %vm5075, %v4768, -inf
  %5254 = vmax.xlane.f32.xlu0 %v5253
  %v5255 = vpop.xlane.xlu0 %5254
  %v5256 = vsel %vm5075, %v4844, -inf
  %5257 = vmax.xlane.f32.xlu0 %v5256
  %v5258 = vpop.xlane.xlu0 %5257
  %v5259 = vsel %vm5075, %v4920, -inf
  %5260 = vmax.xlane.f32.xlu0 %v5259
  %v5261 = vpop.xlane.xlu0 %5260
  %v5262 = vsel %vm5075, %v4996, -inf
  %5263 = vmax.xlane.f32.xlu0 %v5262
  %v5264 = vpop.xlane.xlu0 %5263
  %v5265 = vsel %vm5075, %v5072, -inf
  %5266 = vmax.xlane.f32.xlu0 %v5265
  %v5267 = vpop.xlane.xlu0 %5266
  %v5268 = vsub.f32 %v284, %v5078
  %v5269 = vsub.f32 %v360, %v5081
  %v5270 = vsub.f32 %v436, %v5084
  %v5271 = vsub.f32 %v512, %v5087
  %v5272 = vsub.f32 %v588, %v5090
  %v5273 = vsub.f32 %v664, %v5093
  %v5274 = vsub.f32 %v740, %v5096
  %v5275 = vsub.f32 %v816, %v5099
  %v5276 = vsub.f32 %v892, %v5102
  %v5277 = vsub.f32 %v968, %v5105
  %v5278 = vsub.f32 %v1044, %v5108
  %v5279 = vsub.f32 %v1120, %v5111
  %v5280 = vsub.f32 %v1196, %v5114
  %v5281 = vsub.f32 %v1272, %v5117
  %v5282 = vsub.f32 %v1348, %v5120
  %v5283 = vsub.f32 %v1424, %v5123
  %v5284 = vsub.f32 %v1500, %v5126
  %v5285 = vsub.f32 %v1576, %v5129
  %v5286 = vsub.f32 %v1652, %v5132
  %v5287 = vsub.f32 %v1728, %v5135
  %v5288 = vsub.f32 %v1804, %v5138
  %v5289 = vsub.f32 %v1880, %v5141
  %v5290 = vsub.f32 %v1956, %v5144
  %v5291 = vsub.f32 %v2032, %v5147
  %v5292 = vsub.f32 %v2108, %v5150
  %v5293 = vsub.f32 %v2184, %v5153
  %v5294 = vsub.f32 %v2260, %v5156
  %v5295 = vsub.f32 %v2336, %v5159
  %v5296 = vsub.f32 %v2412, %v5162
  %v5297 = vsub.f32 %v2488, %v5165
  %v5298 = vsub.f32 %v2564, %v5168
  %v5299 = vsub.f32 %v2640, %v5171
  %v5300 = vsub.f32 %v2716, %v5174
  %v5301 = vsub.f32 %v2792, %v5177
  %v5302 = vsub.f32 %v2868, %v5180
  %v5303 = vsub.f32 %v2944, %v5183
  %v5304 = vsub.f32 %v3020, %v5186
  %v5305 = vsub.f32 %v3096, %v5189
  %v5306 = vsub.f32 %v3172, %v5192
  %v5307 = vsub.f32 %v3248, %v5195
  %v5308 = vsub.f32 %v3324, %v5198
  %v5309 = vsub.f32 %v3400, %v5201
  %v5310 = vsub.f32 %v3476, %v5204
  %v5311 = vsub.f32 %v3552, %v5207
  %v5312 = vsub.f32 %v3628, %v5210
  %v5313 = vsub.f32 %v3704, %v5213
  %v5314 = vsub.f32 %v3780, %v5216
  %v5315 = vsub.f32 %v3856, %v5219
  %v5316 = vsub.f32 %v3932, %v5222
  %v5317 = vsub.f32 %v4008, %v5225
  %v5318 = vsub.f32 %v4084, %v5228
  %v5319 = vsub.f32 %v4160, %v5231
  %v5320 = vsub.f32 %v4236, %v5234
  %v5321 = vsub.f32 %v4312, %v5237
  %v5322 = vsub.f32 %v4388, %v5240
  %v5323 = vsub.f32 %v4464, %v5243
  %v5324 = vsub.f32 %v4540, %v5246
  %v5325 = vsub.f32 %v4616, %v5249
  %v5326 = vsub.f32 %v4692, %v5252
  %v5327 = vsub.f32 %v4768, %v5255
  %v5328 = vsub.f32 %v4844, %v5258
  %v5329 = vsub.f32 %v4920, %v5261
  %v5330 = vsub.f32 %v4996, %v5264
  %v5331 = vsub.f32 %v5072, %v5267
  %v5332 = vmul.f32 %v5268, 1.442695
  %v5333 = vpow.pop %v5332
  %v5334 = vmul.f32 %v5269, 1.442695
  %v5335 = vpow.pop %v5334
  %v5336 = vmul.f32 %v5270, 1.442695
  %v5337 = vpow.pop %v5336
  %v5338 = vmul.f32 %v5271, 1.442695
  %v5339 = vpow.pop %v5338
  %v5340 = vmul.f32 %v5272, 1.442695
  %v5341 = vpow.pop %v5340
  %v5342 = vmul.f32 %v5273, 1.442695
  %v5343 = vpow.pop %v5342
  %v5344 = vmul.f32 %v5274, 1.442695
  %v5345 = vpow.pop %v5344
  %v5346 = vmul.f32 %v5275, 1.442695
  %v5347 = vpow.pop %v5346
  %v5348 = vmul.f32 %v5276, 1.442695
  %v5349 = vpow.pop %v5348
  %v5350 = vmul.f32 %v5277, 1.442695
  %v5351 = vpow.pop %v5350
  %v5352 = vmul.f32 %v5278, 1.442695
  %v5353 = vpow.pop %v5352
  %v5354 = vmul.f32 %v5279, 1.442695
  %v5355 = vpow.pop %v5354
  %v5356 = vmul.f32 %v5280, 1.442695
  %v5357 = vpow.pop %v5356
  %v5358 = vmul.f32 %v5281, 1.442695
  %v5359 = vpow.pop %v5358
  %v5360 = vmul.f32 %v5282, 1.442695
  %v5361 = vpow.pop %v5360
  %v5362 = vmul.f32 %v5283, 1.442695
  %v5363 = vpow.pop %v5362
  %v5364 = vmul.f32 %v5284, 1.442695
  %v5365 = vpow.pop %v5364
  %v5366 = vmul.f32 %v5285, 1.442695
  %v5367 = vpow.pop %v5366
  %v5368 = vmul.f32 %v5286, 1.442695
  %v5369 = vpow.pop %v5368
  %v5370 = vmul.f32 %v5287, 1.442695
  %v5371 = vpow.pop %v5370
  %v5372 = vmul.f32 %v5288, 1.442695
  %v5373 = vpow.pop %v5372
  %v5374 = vmul.f32 %v5289, 1.442695
  %v5375 = vpow.pop %v5374
  %v5376 = vmul.f32 %v5290, 1.442695
  %v5377 = vpow.pop %v5376
  %v5378 = vmul.f32 %v5291, 1.442695
  %v5379 = vpow.pop %v5378
  %v5380 = vmul.f32 %v5292, 1.442695
  %v5381 = vpow.pop %v5380
  %v5382 = vmul.f32 %v5293, 1.442695
  %v5383 = vpow.pop %v5382
  %v5384 = vmul.f32 %v5294, 1.442695
  %v5385 = vpow.pop %v5384
  %v5386 = vmul.f32 %v5295, 1.442695
  %v5387 = vpow.pop %v5386
  %v5388 = vmul.f32 %v5296, 1.442695
  %v5389 = vpow.pop %v5388
  %v5390 = vmul.f32 %v5297, 1.442695
  %v5391 = vpow.pop %v5390
  %v5392 = vmul.f32 %v5298, 1.442695
  %v5393 = vpow.pop %v5392
  %v5394 = vmul.f32 %v5299, 1.442695
  %v5395 = vpow.pop %v5394
  %v5396 = vmul.f32 %v5300, 1.442695
  %v5397 = vpow.pop %v5396
  %v5398 = vmul.f32 %v5301, 1.442695
  %v5399 = vpow.pop %v5398
  %v5400 = vmul.f32 %v5302, 1.442695
  %v5401 = vpow.pop %v5400
  %v5402 = vmul.f32 %v5303, 1.442695
  %v5403 = vpow.pop %v5402
  %v5404 = vmul.f32 %v5304, 1.442695
  %v5405 = vpow.pop %v5404
  %v5406 = vmul.f32 %v5305, 1.442695
  %v5407 = vpow.pop %v5406
  %v5408 = vmul.f32 %v5306, 1.442695
  %v5409 = vpow.pop %v5408
  %v5410 = vmul.f32 %v5307, 1.442695
  %v5411 = vpow.pop %v5410
  %v5412 = vmul.f32 %v5308, 1.442695
  %v5413 = vpow.pop %v5412
  %v5414 = vmul.f32 %v5309, 1.442695
  %v5415 = vpow.pop %v5414
  %v5416 = vmul.f32 %v5310, 1.442695
  %v5417 = vpow.pop %v5416
  %v5418 = vmul.f32 %v5311, 1.442695
  %v5419 = vpow.pop %v5418
  %v5420 = vmul.f32 %v5312, 1.442695
  %v5421 = vpow.pop %v5420
  %v5422 = vmul.f32 %v5313, 1.442695
  %v5423 = vpow.pop %v5422
  %v5424 = vmul.f32 %v5314, 1.442695
  %v5425 = vpow.pop %v5424
  %v5426 = vmul.f32 %v5315, 1.442695
  %v5427 = vpow.pop %v5426
  %v5428 = vmul.f32 %v5316, 1.442695
  %v5429 = vpow.pop %v5428
  %v5430 = vmul.f32 %v5317, 1.442695
  %v5431 = vpow.pop %v5430
  %v5432 = vmul.f32 %v5318, 1.442695
  %v5433 = vpow.pop %v5432
  %v5434 = vmul.f32 %v5319, 1.442695
  %v5435 = vpow.pop %v5434
  %v5436 = vmul.f32 %v5320, 1.442695
  %v5437 = vpow.pop %v5436
  %v5438 = vmul.f32 %v5321, 1.442695
  %v5439 = vpow.pop %v5438
  %v5440 = vmul.f32 %v5322, 1.442695
  %v5441 = vpow.pop %v5440
  %v5442 = vmul.f32 %v5323, 1.442695
  %v5443 = vpow.pop %v5442
  %v5444 = vmul.f32 %v5324, 1.442695
  %v5445 = vpow.pop %v5444
  %v5446 = vmul.f32 %v5325, 1.442695
  %v5447 = vpow.pop %v5446
  %v5448 = vmul.f32 %v5326, 1.442695
  %v5449 = vpow.pop %v5448
  %v5450 = vmul.f32 %v5327, 1.442695
  %v5451 = vpow.pop %v5450
  %v5452 = vmul.f32 %v5328, 1.442695
  %v5453 = vpow.pop %v5452
  %v5454 = vmul.f32 %v5329, 1.442695
  %v5455 = vpow.pop %v5454
  %v5456 = vmul.f32 %v5330, 1.442695
  %v5457 = vpow.pop %v5456
  %v5458 = vmul.f32 %v5331, 1.442695
  %v5459 = vpow.pop %v5458
  %v5460 = vsel %vm5075, %v5333, 0.0
  %5461 = vadd.xlane.f32.xlu0 %v5460
  %v5462 = vpop.xlane.xlu0 %5461
  %v5463 = vsel %vm5075, %v5335, 0.0
  %5464 = vadd.xlane.f32.xlu0 %v5463
  %v5465 = vpop.xlane.xlu0 %5464
  %v5466 = vsel %vm5075, %v5337, 0.0
  %5467 = vadd.xlane.f32.xlu0 %v5466
  %v5468 = vpop.xlane.xlu0 %5467
  %v5469 = vsel %vm5075, %v5339, 0.0
  %5470 = vadd.xlane.f32.xlu0 %v5469
  %v5471 = vpop.xlane.xlu0 %5470
  %v5472 = vsel %vm5075, %v5341, 0.0
  %5473 = vadd.xlane.f32.xlu0 %v5472
  %v5474 = vpop.xlane.xlu0 %5473
  %v5475 = vsel %vm5075, %v5343, 0.0
  %5476 = vadd.xlane.f32.xlu0 %v5475
  %v5477 = vpop.xlane.xlu0 %5476
  %v5478 = vsel %vm5075, %v5345, 0.0
  %5479 = vadd.xlane.f32.xlu0 %v5478
  %v5480 = vpop.xlane.xlu0 %5479
  %v5481 = vsel %vm5075, %v5347, 0.0
  %5482 = vadd.xlane.f32.xlu0 %v5481
  %v5483 = vpop.xlane.xlu0 %5482
  %v5484 = vsel %vm5075, %v5349, 0.0
  %5485 = vadd.xlane.f32.xlu0 %v5484
  %v5486 = vpop.xlane.xlu0 %5485
  %v5487 = vsel %vm5075, %v5351, 0.0
  %5488 = vadd.xlane.f32.xlu0 %v5487
  %v5489 = vpop.xlane.xlu0 %5488
  %v5490 = vsel %vm5075, %v5353, 0.0
  %5491 = vadd.xlane.f32.xlu0 %v5490
  %v5492 = vpop.xlane.xlu0 %5491
  %v5493 = vsel %vm5075, %v5355, 0.0
  %5494 = vadd.xlane.f32.xlu0 %v5493
  %v5495 = vpop.xlane.xlu0 %5494
  %v5496 = vsel %vm5075, %v5357, 0.0
  %5497 = vadd.xlane.f32.xlu0 %v5496
  %v5498 = vpop.xlane.xlu0 %5497
  %v5499 = vsel %vm5075, %v5359, 0.0
  %5500 = vadd.xlane.f32.xlu0 %v5499
  %v5501 = vpop.xlane.xlu0 %5500
  %v5502 = vsel %vm5075, %v5361, 0.0
  %5503 = vadd.xlane.f32.xlu0 %v5502
  %v5504 = vpop.xlane.xlu0 %5503
  %v5505 = vsel %vm5075, %v5363, 0.0
  %5506 = vadd.xlane.f32.xlu0 %v5505
  %v5507 = vpop.xlane.xlu0 %5506
  %v5508 = vsel %vm5075, %v5365, 0.0
  %5509 = vadd.xlane.f32.xlu0 %v5508
  %v5510 = vpop.xlane.xlu0 %5509
  %v5511 = vsel %vm5075, %v5367, 0.0
  %5512 = vadd.xlane.f32.xlu0 %v5511
  %v5513 = vpop.xlane.xlu0 %5512
  %v5514 = vsel %vm5075, %v5369, 0.0
  %5515 = vadd.xlane.f32.xlu0 %v5514
  %v5516 = vpop.xlane.xlu0 %5515
  %v5517 = vsel %vm5075, %v5371, 0.0
  %5518 = vadd.xlane.f32.xlu0 %v5517
  %v5519 = vpop.xlane.xlu0 %5518
  %v5520 = vsel %vm5075, %v5373, 0.0
  %5521 = vadd.xlane.f32.xlu0 %v5520
  %v5522 = vpop.xlane.xlu0 %5521
  %v5523 = vsel %vm5075, %v5375, 0.0
  %5524 = vadd.xlane.f32.xlu0 %v5523
  %v5525 = vpop.xlane.xlu0 %5524
  %v5526 = vsel %vm5075, %v5377, 0.0
  %5527 = vadd.xlane.f32.xlu0 %v5526
  %v5528 = vpop.xlane.xlu0 %5527
  %v5529 = vsel %vm5075, %v5379, 0.0
  %5530 = vadd.xlane.f32.xlu0 %v5529
  %v5531 = vpop.xlane.xlu0 %5530
  %v5532 = vsel %vm5075, %v5381, 0.0
  %5533 = vadd.xlane.f32.xlu0 %v5532
  %v5534 = vpop.xlane.xlu0 %5533
  %v5535 = vsel %vm5075, %v5383, 0.0
  %5536 = vadd.xlane.f32.xlu0 %v5535
  %v5537 = vpop.xlane.xlu0 %5536
  %v5538 = vsel %vm5075, %v5385, 0.0
  %5539 = vadd.xlane.f32.xlu0 %v5538
  %v5540 = vpop.xlane.xlu0 %5539
  %v5541 = vsel %vm5075, %v5387, 0.0
  %5542 = vadd.xlane.f32.xlu0 %v5541
  %v5543 = vpop.xlane.xlu0 %5542
  %v5544 = vsel %vm5075, %v5389, 0.0
  %5545 = vadd.xlane.f32.xlu0 %v5544
  %v5546 = vpop.xlane.xlu0 %5545
  %v5547 = vsel %vm5075, %v5391, 0.0
  %5548 = vadd.xlane.f32.xlu0 %v5547
  %v5549 = vpop.xlane.xlu0 %5548
  %v5550 = vsel %vm5075, %v5393, 0.0
  %5551 = vadd.xlane.f32.xlu0 %v5550
  %v5552 = vpop.xlane.xlu0 %5551
  %v5553 = vsel %vm5075, %v5395, 0.0
  %5554 = vadd.xlane.f32.xlu0 %v5553
  %v5555 = vpop.xlane.xlu0 %5554
  %v5556 = vsel %vm5075, %v5397, 0.0
  %5557 = vadd.xlane.f32.xlu0 %v5556
  %v5558 = vpop.xlane.xlu0 %5557
  %v5559 = vsel %vm5075, %v5399, 0.0
  %5560 = vadd.xlane.f32.xlu0 %v5559
  %v5561 = vpop.xlane.xlu0 %5560
  %v5562 = vsel %vm5075, %v5401, 0.0
  %5563 = vadd.xlane.f32.xlu0 %v5562
  %v5564 = vpop.xlane.xlu0 %5563
  %v5565 = vsel %vm5075, %v5403, 0.0
  %5566 = vadd.xlane.f32.xlu0 %v5565
  %v5567 = vpop.xlane.xlu0 %5566
  %v5568 = vsel %vm5075, %v5405, 0.0
  %5569 = vadd.xlane.f32.xlu0 %v5568
  %v5570 = vpop.xlane.xlu0 %5569
  %v5571 = vsel %vm5075, %v5407, 0.0
  %5572 = vadd.xlane.f32.xlu0 %v5571
  %v5573 = vpop.xlane.xlu0 %5572
  %v5574 = vsel %vm5075, %v5409, 0.0
  %5575 = vadd.xlane.f32.xlu0 %v5574
  %v5576 = vpop.xlane.xlu0 %5575
  %v5577 = vsel %vm5075, %v5411, 0.0
  %5578 = vadd.xlane.f32.xlu0 %v5577
  %v5579 = vpop.xlane.xlu0 %5578
  %v5580 = vsel %vm5075, %v5413, 0.0
  %5581 = vadd.xlane.f32.xlu0 %v5580
  %v5582 = vpop.xlane.xlu0 %5581
  %v5583 = vsel %vm5075, %v5415, 0.0
  %5584 = vadd.xlane.f32.xlu0 %v5583
  %v5585 = vpop.xlane.xlu0 %5584
  %v5586 = vsel %vm5075, %v5417, 0.0
  %5587 = vadd.xlane.f32.xlu0 %v5586
  %v5588 = vpop.xlane.xlu0 %5587
  %v5589 = vsel %vm5075, %v5419, 0.0
  %5590 = vadd.xlane.f32.xlu0 %v5589
  %v5591 = vpop.xlane.xlu0 %5590
  %v5592 = vsel %vm5075, %v5421, 0.0
  %5593 = vadd.xlane.f32.xlu0 %v5592
  %v5594 = vpop.xlane.xlu0 %5593
  %v5595 = vsel %vm5075, %v5423, 0.0
  %5596 = vadd.xlane.f32.xlu0 %v5595
  %v5597 = vpop.xlane.xlu0 %5596
  %v5598 = vsel %vm5075, %v5425, 0.0
  %5599 = vadd.xlane.f32.xlu0 %v5598
  %v5600 = vpop.xlane.xlu0 %5599
  %v5601 = vsel %vm5075, %v5427, 0.0
  %5602 = vadd.xlane.f32.xlu0 %v5601
  %v5603 = vpop.xlane.xlu0 %5602
  %v5604 = vsel %vm5075, %v5429, 0.0
  %5605 = vadd.xlane.f32.xlu0 %v5604
  %v5606 = vpop.xlane.xlu0 %5605
  %v5607 = vsel %vm5075, %v5431, 0.0
  %5608 = vadd.xlane.f32.xlu0 %v5607
  %v5609 = vpop.xlane.xlu0 %5608
  %v5610 = vsel %vm5075, %v5433, 0.0
  %5611 = vadd.xlane.f32.xlu0 %v5610
  %v5612 = vpop.xlane.xlu0 %5611
  %v5613 = vsel %vm5075, %v5435, 0.0
  %5614 = vadd.xlane.f32.xlu0 %v5613
  %v5615 = vpop.xlane.xlu0 %5614
  %v5616 = vsel %vm5075, %v5437, 0.0
  %5617 = vadd.xlane.f32.xlu0 %v5616
  %v5618 = vpop.xlane.xlu0 %5617
  %v5619 = vsel %vm5075, %v5439, 0.0
  %5620 = vadd.xlane.f32.xlu0 %v5619
  %v5621 = vpop.xlane.xlu0 %5620
  %v5622 = vsel %vm5075, %v5441, 0.0
  %5623 = vadd.xlane.f32.xlu0 %v5622
  %v5624 = vpop.xlane.xlu0 %5623
  %v5625 = vsel %vm5075, %v5443, 0.0
  %5626 = vadd.xlane.f32.xlu0 %v5625
  %v5627 = vpop.xlane.xlu0 %5626
  %v5628 = vsel %vm5075, %v5445, 0.0
  %5629 = vadd.xlane.f32.xlu0 %v5628
  %v5630 = vpop.xlane.xlu0 %5629
  %v5631 = vsel %vm5075, %v5447, 0.0
  %5632 = vadd.xlane.f32.xlu0 %v5631
  %v5633 = vpop.xlane.xlu0 %5632
  %v5634 = vsel %vm5075, %v5449, 0.0
  %5635 = vadd.xlane.f32.xlu0 %v5634
  %v5636 = vpop.xlane.xlu0 %5635
  %v5637 = vsel %vm5075, %v5451, 0.0
  %5638 = vadd.xlane.f32.xlu0 %v5637
  %v5639 = vpop.xlane.xlu0 %5638
  %v5640 = vsel %vm5075, %v5453, 0.0
  %5641 = vadd.xlane.f32.xlu0 %v5640
  %v5642 = vpop.xlane.xlu0 %5641
  %v5643 = vsel %vm5075, %v5455, 0.0
  %5644 = vadd.xlane.f32.xlu0 %v5643
  %v5645 = vpop.xlane.xlu0 %5644
  %v5646 = vsel %vm5075, %v5457, 0.0
  %5647 = vadd.xlane.f32.xlu0 %v5646
  %v5648 = vpop.xlane.xlu0 %5647
  %v5649 = vsel %vm5075, %v5459, 0.0
  %5650 = vadd.xlane.f32.xlu0 %v5649
  %v5651 = vpop.xlane.xlu0 %5650
  %v5652 = vrcp.pop %v5462
  %v5653 = vmul.f32 %v5333, %v5652
  %v5654 = vrcp.pop %v5465
  %v5655 = vmul.f32 %v5335, %v5654
  %v5656 = vrcp.pop %v5468
  %v5657 = vmul.f32 %v5337, %v5656
  %v5658 = vrcp.pop %v5471
  %v5659 = vmul.f32 %v5339, %v5658
  %v5660 = vrcp.pop %v5474
  %v5661 = vmul.f32 %v5341, %v5660
  %v5662 = vrcp.pop %v5477
  %v5663 = vmul.f32 %v5343, %v5662
  %v5664 = vrcp.pop %v5480
  %v5665 = vmul.f32 %v5345, %v5664
  %v5666 = vrcp.pop %v5483
  %v5667 = vmul.f32 %v5347, %v5666
  %v5668 = vrcp.pop %v5486
  %v5669 = vmul.f32 %v5349, %v5668
  %v5670 = vrcp.pop %v5489
  %v5671 = vmul.f32 %v5351, %v5670
  %v5672 = vrcp.pop %v5492
  %v5673 = vmul.f32 %v5353, %v5672
  %v5674 = vrcp.pop %v5495
  %v5675 = vmul.f32 %v5355, %v5674
  %v5676 = vrcp.pop %v5498
  %v5677 = vmul.f32 %v5357, %v5676
  %v5678 = vrcp.pop %v5501
  %v5679 = vmul.f32 %v5359, %v5678
  %v5680 = vrcp.pop %v5504
  %v5681 = vmul.f32 %v5361, %v5680
  %v5682 = vrcp.pop %v5507
  %v5683 = vmul.f32 %v5363, %v5682
  %v5684 = vrcp.pop %v5510
  %v5685 = vmul.f32 %v5365, %v5684
  %v5686 = vrcp.pop %v5513
  %v5687 = vmul.f32 %v5367, %v5686
  %v5688 = vrcp.pop %v5516
  %v5689 = vmul.f32 %v5369, %v5688
  %v5690 = vrcp.pop %v5519
  %v5691 = vmul.f32 %v5371, %v5690
  %v5692 = vrcp.pop %v5522
  %v5693 = vmul.f32 %v5373, %v5692
  %v5694 = vrcp.pop %v5525
  %v5695 = vmul.f32 %v5375, %v5694
  %v5696 = vrcp.pop %v5528
  %v5697 = vmul.f32 %v5377, %v5696
  %v5698 = vrcp.pop %v5531
  %v5699 = vmul.f32 %v5379, %v5698
  %v5700 = vrcp.pop %v5534
  %v5701 = vmul.f32 %v5381, %v5700
  %v5702 = vrcp.pop %v5537
  %v5703 = vmul.f32 %v5383, %v5702
  %v5704 = vrcp.pop %v5540
  %v5705 = vmul.f32 %v5385, %v5704
  %v5706 = vrcp.pop %v5543
  %v5707 = vmul.f32 %v5387, %v5706
  %v5708 = vrcp.pop %v5546
  %v5709 = vmul.f32 %v5389, %v5708
  %v5710 = vrcp.pop %v5549
  %v5711 = vmul.f32 %v5391, %v5710
  %v5712 = vrcp.pop %v5552
  %v5713 = vmul.f32 %v5393, %v5712
  %v5714 = vrcp.pop %v5555
  %v5715 = vmul.f32 %v5395, %v5714
  %v5716 = vrcp.pop %v5558
  %v5717 = vmul.f32 %v5397, %v5716
  %v5718 = vrcp.pop %v5561
  %v5719 = vmul.f32 %v5399, %v5718
  %v5720 = vrcp.pop %v5564
  %v5721 = vmul.f32 %v5401, %v5720
  %v5722 = vrcp.pop %v5567
  %v5723 = vmul.f32 %v5403, %v5722
  %v5724 = vrcp.pop %v5570
  %v5725 = vmul.f32 %v5405, %v5724
  %v5726 = vrcp.pop %v5573
  %v5727 = vmul.f32 %v5407, %v5726
  %v5728 = vrcp.pop %v5576
  %v5729 = vmul.f32 %v5409, %v5728
  %v5730 = vrcp.pop %v5579
  %v5731 = vmul.f32 %v5411, %v5730
  %v5732 = vrcp.pop %v5582
  %v5733 = vmul.f32 %v5413, %v5732
  %v5734 = vrcp.pop %v5585
  %v5735 = vmul.f32 %v5415, %v5734
  %v5736 = vrcp.pop %v5588
  %v5737 = vmul.f32 %v5417, %v5736
  %v5738 = vrcp.pop %v5591
  %v5739 = vmul.f32 %v5419, %v5738
  %v5740 = vrcp.pop %v5594
  %v5741 = vmul.f32 %v5421, %v5740
  %v5742 = vrcp.pop %v5597
  %v5743 = vmul.f32 %v5423, %v5742
  %v5744 = vrcp.pop %v5600
  %v5745 = vmul.f32 %v5425, %v5744
  %v5746 = vrcp.pop %v5603
  %v5747 = vmul.f32 %v5427, %v5746
  %v5748 = vrcp.pop %v5606
  %v5749 = vmul.f32 %v5429, %v5748
  %v5750 = vrcp.pop %v5609
  %v5751 = vmul.f32 %v5431, %v5750
  %v5752 = vrcp.pop %v5612
  %v5753 = vmul.f32 %v5433, %v5752
  %v5754 = vrcp.pop %v5615
  %v5755 = vmul.f32 %v5435, %v5754
  %v5756 = vrcp.pop %v5618
  %v5757 = vmul.f32 %v5437, %v5756
  %v5758 = vrcp.pop %v5621
  %v5759 = vmul.f32 %v5439, %v5758
  %v5760 = vrcp.pop %v5624
  %v5761 = vmul.f32 %v5441, %v5760
  %v5762 = vrcp.pop %v5627
  %v5763 = vmul.f32 %v5443, %v5762
  %v5764 = vrcp.pop %v5630
  %v5765 = vmul.f32 %v5445, %v5764
  %v5766 = vrcp.pop %v5633
  %v5767 = vmul.f32 %v5447, %v5766
  %v5768 = vrcp.pop %v5636
  %v5769 = vmul.f32 %v5449, %v5768
  %v5770 = vrcp.pop %v5639
  %v5771 = vmul.f32 %v5451, %v5770
  %v5772 = vrcp.pop %v5642
  %v5773 = vmul.f32 %v5453, %v5772
  %v5774 = vrcp.pop %v5645
  %v5775 = vmul.f32 %v5455, %v5774
  %v5776 = vrcp.pop %v5648
  %v5777 = vmul.f32 %v5457, %v5776
  %v5778 = vrcp.pop %v5651
  %v5779 = vmul.f32 %v5459, %v5778
  %v5781 = vsel %vm5075, %v5653, 0
  %5783 = vmatprep.subr.mxu0 0.0
  %5784 = vmatpush1.msra.mxu0 %v145
  %5785 = vmatprep.subr.mxu0 0.0
  %5786 = vmatpush1.msra.mxu0 0.0
  %5787 = vmatprep.subr.mxu0 0.0
  %5788 = vmatpush1.msra.mxu0 0.0
  %5789 = vmatprep.subr.mxu0 0.0
  %5790 = vmatpush1.msra.mxu0 0.0
  %5791 = vmatprep.subr.mxu0 0.0
  %5792 = vmatpush1.msra.mxu0 0.0
  %5793 = vmatprep.subr.mxu0 0.0
  %5794 = vmatpush1.msra.mxu0 0.0
  %5795 = vmatprep.subr.mxu0 0.0
  %5796 = vmatpush1.msra.mxu0 0.0
  %5797 = vmatprep.subr.mxu0 0.0
  %5798 = vmatpush1.msra.mxu0 0.0
  %5799 = vmatprep.subr.mxu0 0.0
  %5800 = vmatpush1.msra.mxu0 0.0
  %5801 = vmatprep.subr.mxu0 0.0
  %5802 = vmatpush1.msra.mxu0 0.0
  %5803 = vmatprep.subr.mxu0 0.0
  %5804 = vmatpush1.msra.mxu0 0.0
  %5805 = vmatprep.subr.mxu0 0.0
  %5806 = vmatpush1.msra.mxu0 0.0
  %5807 = vmatprep.subr.mxu0 0.0
  %5808 = vmatpush1.msra.mxu0 0.0
  %5809 = vmatprep.subr.mxu0 0.0
  %5810 = vmatpush1.msra.mxu0 0.0
  %5811 = vmatprep.subr.mxu0 0.0
  %5812 = vmatpush1.msra.mxu0 0.0
  %5813 = vmatprep.subr.mxu0 0.0
  %5814 = vmatpush1.msra.mxu0 0.0
  %5815 = vmatprep.subr.mxu0 0.0
  %5816 = vmatpush1.msra.mxu0 0.0
  %5817 = vmatprep.subr.mxu0 0.0
  %5818 = vmatpush1.msra.mxu0 0.0
  %5819 = vmatprep.subr.mxu0 0.0
  %5820 = vmatpush1.msra.mxu0 0.0
  %5821 = vmatprep.subr.mxu0 0.0
  %5822 = vmatpush1.msra.mxu0 0.0
  %5823 = vmatprep.subr.mxu0 0.0
  %5824 = vmatpush1.msra.mxu0 0.0
  %5825 = vmatprep.subr.mxu0 0.0
  %5826 = vmatpush1.msra.mxu0 0.0
  %5827 = vmatprep.subr.mxu0 0.0
  %5828 = vmatpush1.msra.mxu0 0.0
  %5829 = vmatprep.subr.mxu0 0.0
  %5830 = vmatpush1.msra.mxu0 0.0
  %5831 = vmatprep.subr.mxu0 0.0
  %5832 = vmatpush1.msra.mxu0 0.0
  %5833 = vmatprep.subr.mxu0 0.0
  %5834 = vmatpush1.msra.mxu0 0.0
  %5835 = vmatprep.subr.mxu0 0.0
  %5836 = vmatpush1.msra.mxu0 0.0
  %5837 = vmatprep.subr.mxu0 0.0
  %5838 = vmatpush1.msra.mxu0 0.0
  %5839 = vmatprep.subr.mxu0 0.0
  %5840 = vmatpush1.msra.mxu0 0.0
  %5841 = vmatprep.subr.mxu0 0.0
  %5842 = vmatpush1.msra.mxu0 0.0
  %5843 = vmatprep.subr.mxu0 0.0
  %5844 = vmatpush1.msra.mxu0 0.0
  %5845 = vmatprep.subr.mxu0 0.0
  %5846 = vmatpush1.msra.mxu0 0.0
  %5847 = vmatprep.mubr.f32.mxu0 0.0
  %5848 = vmatmul.mubr.f32.gmra.mrb[0].mxu0 %v5781
  %v5849 = vpop.f32.mrb[0].mxu0
  %v5850 = vadd.f32 0.0, %v5849
  %v5851 = vpop.f32.mrb[0].mxu0
  %5852 = vdwg.mxu0
  %v5854 = vsel %vm5075, %v5655, 0
  %5856 = vmatprep.subr.mxu0 0.0
  %5857 = vmatpush1.msra.mxu0 %v146
  %5858 = vmatprep.subr.mxu0 0.0
  %5859 = vmatpush1.msra.mxu0 0.0
  %5860 = vmatprep.subr.mxu0 0.0
  %5861 = vmatpush1.msra.mxu0 0.0
  %5862 = vmatprep.subr.mxu0 0.0
  %5863 = vmatpush1.msra.mxu0 0.0
  %5864 = vmatprep.subr.mxu0 0.0
  %5865 = vmatpush1.msra.mxu0 0.0
  %5866 = vmatprep.subr.mxu0 0.0
  %5867 = vmatpush1.msra.mxu0 0.0
  %5868 = vmatprep.subr.mxu0 0.0
  %5869 = vmatpush1.msra.mxu0 0.0
  %5870 = vmatprep.subr.mxu0 0.0
  %5871 = vmatpush1.msra.mxu0 0.0
  %5872 = vmatprep.subr.mxu0 0.0
  %5873 = vmatpush1.msra.mxu0 0.0
  %5874 = vmatprep.subr.mxu0 0.0
  %5875 = vmatpush1.msra.mxu0 0.0
  %5876 = vmatprep.subr.mxu0 0.0
  %5877 = vmatpush1.msra.mxu0 0.0
  %5878 = vmatprep.subr.mxu0 0.0
  %5879 = vmatpush1.msra.mxu0 0.0
  %5880 = vmatprep.subr.mxu0 0.0
  %5881 = vmatpush1.msra.mxu0 0.0
  %5882 = vmatprep.subr.mxu0 0.0
  %5883 = vmatpush1.msra.mxu0 0.0
  %5884 = vmatprep.subr.mxu0 0.0
  %5885 = vmatpush1.msra.mxu0 0.0
  %5886 = vmatprep.subr.mxu0 0.0
  %5887 = vmatpush1.msra.mxu0 0.0
  %5888 = vmatprep.subr.mxu0 0.0
  %5889 = vmatpush1.msra.mxu0 0.0
  %5890 = vmatprep.subr.mxu0 0.0
  %5891 = vmatpush1.msra.mxu0 0.0
  %5892 = vmatprep.subr.mxu0 0.0
  %5893 = vmatpush1.msra.mxu0 0.0
  %5894 = vmatprep.subr.mxu0 0.0
  %5895 = vmatpush1.msra.mxu0 0.0
  %5896 = vmatprep.subr.mxu0 0.0
  %5897 = vmatpush1.msra.mxu0 0.0
  %5898 = vmatprep.subr.mxu0 0.0
  %5899 = vmatpush1.msra.mxu0 0.0
  %5900 = vmatprep.subr.mxu0 0.0
  %5901 = vmatpush1.msra.mxu0 0.0
  %5902 = vmatprep.subr.mxu0 0.0
  %5903 = vmatpush1.msra.mxu0 0.0
  %5904 = vmatprep.subr.mxu0 0.0
  %5905 = vmatpush1.msra.mxu0 0.0
  %5906 = vmatprep.subr.mxu0 0.0
  %5907 = vmatpush1.msra.mxu0 0.0
  %5908 = vmatprep.subr.mxu0 0.0
  %5909 = vmatpush1.msra.mxu0 0.0
  %5910 = vmatprep.subr.mxu0 0.0
  %5911 = vmatpush1.msra.mxu0 0.0
  %5912 = vmatprep.subr.mxu0 0.0
  %5913 = vmatpush1.msra.mxu0 0.0
  %5914 = vmatprep.subr.mxu0 0.0
  %5915 = vmatpush1.msra.mxu0 0.0
  %5916 = vmatprep.subr.mxu0 0.0
  %5917 = vmatpush1.msra.mxu0 0.0
  %5918 = vmatprep.subr.mxu0 0.0
  %5919 = vmatpush1.msra.mxu0 0.0
  %5920 = vmatprep.mubr.f32.mxu0 0.0
  %5921 = vmatmul.mubr.f32.gmra.mrb[0].mxu0 %v5854
  %v5922 = vpop.f32.mrb[0].mxu0
  %v5923 = vadd.f32 0.0, %v5922
  %v5924 = vpop.f32.mrb[0].mxu0
  %5925 = vdwg.mxu0
  %v5927 = vsel %vm5075, %v5657, 0
  %5929 = vmatprep.subr.mxu0 0.0
  %5930 = vmatpush1.msra.mxu0 %v147
  %5931 = vmatprep.subr.mxu0 0.0
  %5932 = vmatpush1.msra.mxu0 0.0
  %5933 = vmatprep.subr.mxu0 0.0
  %5934 = vmatpush1.msra.mxu0 0.0
  %5935 = vmatprep.subr.mxu0 0.0
  %5936 = vmatpush1.msra.mxu0 0.0
  %5937 = vmatprep.subr.mxu0 0.0
  %5938 = vmatpush1.msra.mxu0 0.0
  %5939 = vmatprep.subr.mxu0 0.0
  %5940 = vmatpush1.msra.mxu0 0.0
  %5941 = vmatprep.subr.mxu0 0.0
  %5942 = vmatpush1.msra.mxu0 0.0
  %5943 = vmatprep.subr.mxu0 0.0
  %5944 = vmatpush1.msra.mxu0 0.0
  %5945 = vmatprep.subr.mxu0 0.0
  %5946 = vmatpush1.msra.mxu0 0.0
  %5947 = vmatprep.subr.mxu0 0.0
  %5948 = vmatpush1.msra.mxu0 0.0
  %5949 = vmatprep.subr.mxu0 0.0
  %5950 = vmatpush1.msra.mxu0 0.0
  %5951 = vmatprep.subr.mxu0 0.0
  %5952 = vmatpush1.msra.mxu0 0.0
  %5953 = vmatprep.subr.mxu0 0.0
  %5954 = vmatpush1.msra.mxu0 0.0
  %5955 = vmatprep.subr.mxu0 0.0
  %5956 = vmatpush1.msra.mxu0 0.0
  %5957 = vmatprep.subr.mxu0 0.0
  %5958 = vmatpush1.msra.mxu0 0.0
  %5959 = vmatprep.subr.mxu0 0.0
  %5960 = vmatpush1.msra.mxu0 0.0
  %5961 = vmatprep.subr.mxu0 0.0
  %5962 = vmatpush1.msra.mxu0 0.0
  %5963 = vmatprep.subr.mxu0 0.0
  %5964 = vmatpush1.msra.mxu0 0.0
  %5965 = vmatprep.subr.mxu0 0.0
  %5966 = vmatpush1.msra.mxu0 0.0
  %5967 = vmatprep.subr.mxu0 0.0
  %5968 = vmatpush1.msra.mxu0 0.0
  %5969 = vmatprep.subr.mxu0 0.0
  %5970 = vmatpush1.msra.mxu0 0.0
  %5971 = vmatprep.subr.mxu0 0.0
  %5972 = vmatpush1.msra.mxu0 0.0
  %5973 = vmatprep.subr.mxu0 0.0
  %5974 = vmatpush1.msra.mxu0 0.0
  %5975 = vmatprep.subr.mxu0 0.0
  %5976 = vmatpush1.msra.mxu0 0.0
  %5977 = vmatprep.subr.mxu0 0.0
  %5978 = vmatpush1.msra.mxu0 0.0
  %5979 = vmatprep.subr.mxu0 0.0
  %5980 = vmatpush1.msra.mxu0 0.0
  %5981 = vmatprep.subr.mxu0 0.0
  %5982 = vmatpush1.msra.mxu0 0.0
  %5983 = vmatprep.subr.mxu0 0.0
  %5984 = vmatpush1.msra.mxu0 0.0
  %5985 = vmatprep.subr.mxu0 0.0
  %5986 = vmatpush1.msra.mxu0 0.0
  %5987 = vmatprep.subr.mxu0 0.0
  %5988 = vmatpush1.msra.mxu0 0.0
  %5989 = vmatprep.subr.mxu0 0.0
  %5990 = vmatpush1.msra.mxu0 0.0
  %5991 = vmatprep.subr.mxu0 0.0
  %5992 = vmatpush1.msra.mxu0 0.0
  %5993 = vmatprep.mubr.f32.mxu0 0.0
  %5994 = vmatmul.mubr.f32.gmra.mrb[0].mxu0 %v5927
  %v5995 = vpop.f32.mrb[0].mxu0
  %v5996 = vadd.f32 0.0, %v5995
  %v5997 = vpop.f32.mrb[0].mxu0
  %5998 = vdwg.mxu0
  %v6000 = vsel %vm5075, %v5659, 0
  %6002 = vmatprep.subr.mxu0 0.0
  %6003 = vmatpush1.msra.mxu0 %v148
  %6004 = vmatprep.subr.mxu0 0.0
  %6005 = vmatpush1.msra.mxu0 0.0
  %6006 = vmatprep.subr.mxu0 0.0
  %6007 = vmatpush1.msra.mxu0 0.0
  %6008 = vmatprep.subr.mxu0 0.0
  %6009 = vmatpush1.msra.mxu0 0.0
  %6010 = vmatprep.subr.mxu0 0.0
  %6011 = vmatpush1.msra.mxu0 0.0
  %6012 = vmatprep.subr.mxu0 0.0
  %6013 = vmatpush1.msra.mxu0 0.0
  %6014 = vmatprep.subr.mxu0 0.0
  %6015 = vmatpush1.msra.mxu0 0.0
  %6016 = vmatprep.subr.mxu0 0.0
  %6017 = vmatpush1.msra.mxu0 0.0
  %6018 = vmatprep.subr.mxu0 0.0
  %6019 = vmatpush1.msra.mxu0 0.0
  %6020 = vmatprep.subr.mxu0 0.0
  %6021 = vmatpush1.msra.mxu0 0.0
  %6022 = vmatprep.subr.mxu0 0.0
  %6023 = vmatpush1.msra.mxu0 0.0
  %6024 = vmatprep.subr.mxu0 0.0
  %6025 = vmatpush1.msra.mxu0 0.0
  %6026 = vmatprep.subr.mxu0 0.0
  %6027 = vmatpush1.msra.mxu0 0.0
  %6028 = vmatprep.subr.mxu0 0.0
  %6029 = vmatpush1.msra.mxu0 0.0
  %6030 = vmatprep.subr.mxu0 0.0
  %6031 = vmatpush1.msra.mxu0 0.0
  %6032 = vmatprep.subr.mxu0 0.0
  %6033 = vmatpush1.msra.mxu0 0.0
  %6034 = vmatprep.subr.mxu0 0.0
  %6035 = vmatpush1.msra.mxu0 0.0
  %6036 = vmatprep.subr.mxu0 0.0
  %6037 = vmatpush1.msra.mxu0 0.0
  %6038 = vmatprep.subr.mxu0 0.0
  %6039 = vmatpush1.msra.mxu0 0.0
  %6040 = vmatprep.subr.mxu0 0.0
  %6041 = vmatpush1.msra.mxu0 0.0
  %6042 = vmatprep.subr.mxu0 0.0
  %6043 = vmatpush1.msra.mxu0 0.0
  %6044 = vmatprep.subr.mxu0 0.0
  %6045 = vmatpush1.msra.mxu0 0.0
  %6046 = vmatprep.subr.mxu0 0.0
  %6047 = vmatpush1.msra.mxu0 0.0
  %6048 = vmatprep.subr.mxu0 0.0
  %6049 = vmatpush1.msra.mxu0 0.0
  %6050 = vmatprep.subr.mxu0 0.0
  %6051 = vmatpush1.msra.mxu0 0.0
  %6052 = vmatprep.subr.mxu0 0.0
  %6053 = vmatpush1.msra.mxu0 0.0
  %6054 = vmatprep.subr.mxu0 0.0
  %6055 = vmatpush1.msra.mxu0 0.0
  %6056 = vmatprep.subr.mxu0 0.0
  %6057 = vmatpush1.msra.mxu0 0.0
  %6058 = vmatprep.subr.mxu0 0.0
  %6059 = vmatpush1.msra.mxu0 0.0
  %6060 = vmatprep.subr.mxu0 0.0
  %6061 = vmatpush1.msra.mxu0 0.0
  %6062 = vmatprep.subr.mxu0 0.0
  %6063 = vmatpush1.msra.mxu0 0.0
  %6064 = vmatprep.subr.mxu0 0.0
  %6065 = vmatpush1.msra.mxu0 0.0
  %6066 = vmatprep.mubr.f32.mxu0 0.0
  %6067 = vmatmul.mubr.f32.gmra.mrb[0].mxu0 %v6000
  %v6068 = vpop.f32.mrb[0].mxu0
  %v6069 = vadd.f32 0.0, %v6068
  %v6070 = vpop.f32.mrb[0].mxu0
  %6071 = vdwg.mxu0
  %v6073 = vsel %vm5075, %v5661, 0
  %6075 = vmatprep.subr.mxu0 0.0
  %6076 = vmatpush1.msra.mxu0 %v149
  %6077 = vmatprep.subr.mxu0 0.0
  %6078 = vmatpush1.msra.mxu0 0.0
  %6079 = vmatprep.subr.mxu0 0.0
  %6080 = vmatpush1.msra.mxu0 0.0
  %6081 = vmatprep.subr.mxu0 0.0
  %6082 = vmatpush1.msra.mxu0 0.0
  %6083 = vmatprep.subr.mxu0 0.0
  %6084 = vmatpush1.msra.mxu0 0.0
  %6085 = vmatprep.subr.mxu0 0.0
  %6086 = vmatpush1.msra.mxu0 0.0
  %6087 = vmatprep.subr.mxu0 0.0
  %6088 = vmatpush1.msra.mxu0 0.0
  %6089 = vmatprep.subr.mxu0 0.0
  %6090 = vmatpush1.msra.mxu0 0.0
  %6091 = vmatprep.subr.mxu0 0.0
  %6092 = vmatpush1.msra.mxu0 0.0
  %6093 = vmatprep.subr.mxu0 0.0
  %6094 = vmatpush1.msra.mxu0 0.0
  %6095 = vmatprep.subr.mxu0 0.0
  %6096 = vmatpush1.msra.mxu0 0.0
  %6097 = vmatprep.subr.mxu0 0.0
  %6098 = vmatpush1.msra.mxu0 0.0
  %6099 = vmatprep.subr.mxu0 0.0
  %6100 = vmatpush1.msra.mxu0 0.0
  %6101 = vmatprep.subr.mxu0 0.0
  %6102 = vmatpush1.msra.mxu0 0.0
  %6103 = vmatprep.subr.mxu0 0.0
  %6104 = vmatpush1.msra.mxu0 0.0
  %6105 = vmatprep.subr.mxu0 0.0
  %6106 = vmatpush1.msra.mxu0 0.0
  %6107 = vmatprep.subr.mxu0 0.0
  %6108 = vmatpush1.msra.mxu0 0.0
  %6109 = vmatprep.subr.mxu0 0.0
  %6110 = vmatpush1.msra.mxu0 0.0
  %6111 = vmatprep.subr.mxu0 0.0
  %6112 = vmatpush1.msra.mxu0 0.0
  %6113 = vmatprep.subr.mxu0 0.0
  %6114 = vmatpush1.msra.mxu0 0.0
  %6115 = vmatprep.subr.mxu0 0.0
  %6116 = vmatpush1.msra.mxu0 0.0
  %6117 = vmatprep.subr.mxu0 0.0
  %6118 = vmatpush1.msra.mxu0 0.0
  %6119 = vmatprep.subr.mxu0 0.0
  %6120 = vmatpush1.msra.mxu0 0.0
  %6121 = vmatprep.subr.mxu0 0.0
  %6122 = vmatpush1.msra.mxu0 0.0
  %6123 = vmatprep.subr.mxu0 0.0
  %6124 = vmatpush1.msra.mxu0 0.0
  %6125 = vmatprep.subr.mxu0 0.0
  %6126 = vmatpush1.msra.mxu0 0.0
  %6127 = vmatprep.subr.mxu0 0.0
  %6128 = vmatpush1.msra.mxu0 0.0
  %6129 = vmatprep.subr.mxu0 0.0
  %6130 = vmatpush1.msra.mxu0 0.0
  %6131 = vmatprep.subr.mxu0 0.0
  %6132 = vmatpush1.msra.mxu0 0.0
  %6133 = vmatprep.subr.mxu0 0.0
  %6134 = vmatpush1.msra.mxu0 0.0
  %6135 = vmatprep.subr.mxu0 0.0
  %6136 = vmatpush1.msra.mxu0 0.0
  %6137 = vmatprep.subr.mxu0 0.0
  %6138 = vmatpush1.msra.mxu0 0.0
  %6139 = vmatprep.mubr.f32.mxu0 0.0
  %6140 = vmatmul.mubr.f32.gmra.mrb[0].mxu0 %v6073
  %v6141 = vpop.f32.mrb[0].mxu0
  %v6142 = vadd.f32 0.0, %v6141
  %v6143 = vpop.f32.mrb[0].mxu0
  %6144 = vdwg.mxu0
  %v6146 = vsel %vm5075, %v5663, 0
  %6148 = vmatprep.subr.mxu0 0.0
  %6149 = vmatpush1.msra.mxu0 %v150
  %6150 = vmatprep.subr.mxu0 0.0
  %6151 = vmatpush1.msra.mxu0 0.0
  %6152 = vmatprep.subr.mxu0 0.0
  %6153 = vmatpush1.msra.mxu0 0.0
  %6154 = vmatprep.subr.mxu0 0.0
  %6155 = vmatpush1.msra.mxu0 0.0
  %6156 = vmatprep.subr.mxu0 0.0
  %6157 = vmatpush1.msra.mxu0 0.0
  %6158 = vmatprep.subr.mxu0 0.0
  %6159 = vmatpush1.msra.mxu0 0.0
  %6160 = vmatprep.subr.mxu0 0.0
  %6161 = vmatpush1.msra.mxu0 0.0
  %6162 = vmatprep.subr.mxu0 0.0
  %6163 = vmatpush1.msra.mxu0 0.0
  %6164 = vmatprep.subr.mxu0 0.0
  %6165 = vmatpush1.msra.mxu0 0.0
  %6166 = vmatprep.subr.mxu0 0.0
  %6167 = vmatpush1.msra.mxu0 0.0
  %6168 = vmatprep.subr.mxu0 0.0
  %6169 = vmatpush1.msra.mxu0 0.0
  %6170 = vmatprep.subr.mxu0 0.0
  %6171 = vmatpush1.msra.mxu0 0.0
  %6172 = vmatprep.subr.mxu0 0.0
  %6173 = vmatpush1.msra.mxu0 0.0
  %6174 = vmatprep.subr.mxu0 0.0
  %6175 = vmatpush1.msra.mxu0 0.0
  %6176 = vmatprep.subr.mxu0 0.0
  %6177 = vmatpush1.msra.mxu0 0.0
  %6178 = vmatprep.subr.mxu0 0.0
  %6179 = vmatpush1.msra.mxu0 0.0
  %6180 = vmatprep.subr.mxu0 0.0
  %6181 = vmatpush1.msra.mxu0 0.0
  %6182 = vmatprep.subr.mxu0 0.0
  %6183 = vmatpush1.msra.mxu0 0.0
  %6184 = vmatprep.subr.mxu0 0.0
  %6185 = vmatpush1.msra.mxu0 0.0
  %6186 = vmatprep.subr.mxu0 0.0
  %6187 = vmatpush1.msra.mxu0 0.0
  %6188 = vmatprep.subr.mxu0 0.0
  %6189 = vmatpush1.msra.mxu0 0.0
  %6190 = vmatprep.subr.mxu0 0.0
  %6191 = vmatpush1.msra.mxu0 0.0
  %6192 = vmatprep.subr.mxu0 0.0
  %6193 = vmatpush1.msra.mxu0 0.0
  %6194 = vmatprep.subr.mxu0 0.0
  %6195 = vmatpush1.msra.mxu0 0.0
  %6196 = vmatprep.subr.mxu0 0.0
  %6197 = vmatpush1.msra.mxu0 0.0
  %6198 = vmatprep.subr.mxu0 0.0
  %6199 = vmatpush1.msra.mxu0 0.0
  %6200 = vmatprep.subr.mxu0 0.0
  %6201 = vmatpush1.msra.mxu0 0.0
  %6202 = vmatprep.subr.mxu0 0.0
  %6203 = vmatpush1.msra.mxu0 0.0
  %6204 = vmatprep.subr.mxu0 0.0
  %6205 = vmatpush1.msra.mxu0 0.0
  %6206 = vmatprep.subr.mxu0 0.0
  %6207 = vmatpush1.msra.mxu0 0.0
  %6208 = vmatprep.subr.mxu0 0.0
  %6209 = vmatpush1.msra.mxu0 0.0
  %6210 = vmatprep.subr.mxu0 0.0
  %6211 = vmatpush1.msra.mxu0 0.0
  %6212 = vmatprep.mubr.f32.mxu0 0.0
  %6213 = vmatmul.mubr.f32.gmra.mrb[0].mxu0 %v6146
  %v6214 = vpop.f32.mrb[0].mxu0
  %v6215 = vadd.f32 0.0, %v6214
  %v6216 = vpop.f32.mrb[0].mxu0
  %6217 = vdwg.mxu0
  %v6219 = vsel %vm5075, %v5665, 0
  %6221 = vmatprep.subr.mxu0 0.0
  %6222 = vmatpush1.msra.mxu0 %v151
  %6223 = vmatprep.subr.mxu0 0.0
  %6224 = vmatpush1.msra.mxu0 0.0
  %6225 = vmatprep.subr.mxu0 0.0
  %6226 = vmatpush1.msra.mxu0 0.0
  %6227 = vmatprep.subr.mxu0 0.0
  %6228 = vmatpush1.msra.mxu0 0.0
  %6229 = vmatprep.subr.mxu0 0.0
  %6230 = vmatpush1.msra.mxu0 0.0
  %6231 = vmatprep.subr.mxu0 0.0
  %6232 = vmatpush1.msra.mxu0 0.0
  %6233 = vmatprep.subr.mxu0 0.0
  %6234 = vmatpush1.msra.mxu0 0.0
  %6235 = vmatprep.subr.mxu0 0.0
  %6236 = vmatpush1.msra.mxu0 0.0
  %6237 = vmatprep.subr.mxu0 0.0
  %6238 = vmatpush1.msra.mxu0 0.0
  %6239 = vmatprep.subr.mxu0 0.0
  %6240 = vmatpush1.msra.mxu0 0.0
  %6241 = vmatprep.subr.mxu0 0.0
  %6242 = vmatpush1.msra.mxu0 0.0
  %6243 = vmatprep.subr.mxu0 0.0
  %6244 = vmatpush1.msra.mxu0 0.0
  %6245 = vmatprep.subr.mxu0 0.0
  %6246 = vmatpush1.msra.mxu0 0.0
  %6247 = vmatprep.subr.mxu0 0.0
  %6248 = vmatpush1.msra.mxu0 0.0
  %6249 = vmatprep.subr.mxu0 0.0
  %6250 = vmatpush1.msra.mxu0 0.0
  %6251 = vmatprep.subr.mxu0 0.0
  %6252 = vmatpush1.msra.mxu0 0.0
  %6253 = vmatprep.subr.mxu0 0.0
  %6254 = vmatpush1.msra.mxu0 0.0
  %6255 = vmatprep.subr.mxu0 0.0
  %6256 = vmatpush1.msra.mxu0 0.0
  %6257 = vmatprep.subr.mxu0 0.0
  %6258 = vmatpush1.msra.mxu0 0.0
  %6259 = vmatprep.subr.mxu0 0.0
  %6260 = vmatpush1.msra.mxu0 0.0
  %6261 = vmatprep.subr.mxu0 0.0
  %6262 = vmatpush1.msra.mxu0 0.0
  %6263 = vmatprep.subr.mxu0 0.0
  %6264 = vmatpush1.msra.mxu0 0.0
  %6265 = vmatprep.subr.mxu0 0.0
  %6266 = vmatpush1.msra.mxu0 0.0
  %6267 = vmatprep.subr.mxu0 0.0
  %6268 = vmatpush1.msra.mxu0 0.0
  %6269 = vmatprep.subr.mxu0 0.0
  %6270 = vmatpush1.msra.mxu0 0.0
  %6271 = vmatprep.subr.mxu0 0.0
  %6272 = vmatpush1.msra.mxu0 0.0
  %6273 = vmatprep.subr.mxu0 0.0
  %6274 = vmatpush1.msra.mxu0 0.0
  %6275 = vmatprep.subr.mxu0 0.0
  %6276 = vmatpush1.msra.mxu0 0.0
  %6277 = vmatprep.subr.mxu0 0.0
  %6278 = vmatpush1.msra.mxu0 0.0
  %6279 = vmatprep.subr.mxu0 0.0
  %6280 = vmatpush1.msra.mxu0 0.0
  %6281 = vmatprep.subr.mxu0 0.0
  %6282 = vmatpush1.msra.mxu0 0.0
  %6283 = vmatprep.subr.mxu0 0.0
  %6284 = vmatpush1.msra.mxu0 0.0
  %6285 = vmatprep.mubr.f32.mxu0 0.0
  %6286 = vmatmul.mubr.f32.gmra.mrb[0].mxu0 %v6219
  %v6287 = vpop.f32.mrb[0].mxu0
  %v6288 = vadd.f32 0.0, %v6287
  %v6289 = vpop.f32.mrb[0].mxu0
  %6290 = vdwg.mxu0
  %v6292 = vsel %vm5075, %v5667, 0
  %6294 = vmatprep.subr.mxu0 0.0
  %6295 = vmatpush1.msra.mxu0 %v152
  %6296 = vmatprep.subr.mxu0 0.0
  %6297 = vmatpush1.msra.mxu0 0.0
  %6298 = vmatprep.subr.mxu0 0.0
  %6299 = vmatpush1.msra.mxu0 0.0
  %6300 = vmatprep.subr.mxu0 0.0
  %6301 = vmatpush1.msra.mxu0 0.0
  %6302 = vmatprep.subr.mxu0 0.0
  %6303 = vmatpush1.msra.mxu0 0.0
  %6304 = vmatprep.subr.mxu0 0.0
  %6305 = vmatpush1.msra.mxu0 0.0
  %6306 = vmatprep.subr.mxu0 0.0
  %6307 = vmatpush1.msra.mxu0 0.0
  %6308 = vmatprep.subr.mxu0 0.0
  %6309 = vmatpush1.msra.mxu0 0.0
  %6310 = vmatprep.subr.mxu0 0.0
  %6311 = vmatpush1.msra.mxu0 0.0
  %6312 = vmatprep.subr.mxu0 0.0
  %6313 = vmatpush1.msra.mxu0 0.0
  %6314 = vmatprep.subr.mxu0 0.0
  %6315 = vmatpush1.msra.mxu0 0.0
  %6316 = vmatprep.subr.mxu0 0.0
  %6317 = vmatpush1.msra.mxu0 0.0
  %6318 = vmatprep.subr.mxu0 0.0
  %6319 = vmatpush1.msra.mxu0 0.0
  %6320 = vmatprep.subr.mxu0 0.0
  %6321 = vmatpush1.msra.mxu0 0.0
  %6322 = vmatprep.subr.mxu0 0.0
  %6323 = vmatpush1.msra.mxu0 0.0
  %6324 = vmatprep.subr.mxu0 0.0
  %6325 = vmatpush1.msra.mxu0 0.0
  %6326 = vmatprep.subr.mxu0 0.0
  %6327 = vmatpush1.msra.mxu0 0.0
  %6328 = vmatprep.subr.mxu0 0.0
  %6329 = vmatpush1.msra.mxu0 0.0
  %6330 = vmatprep.subr.mxu0 0.0
  %6331 = vmatpush1.msra.mxu0 0.0
  %6332 = vmatprep.subr.mxu0 0.0
  %6333 = vmatpush1.msra.mxu0 0.0
  %6334 = vmatprep.subr.mxu0 0.0
  %6335 = vmatpush1.msra.mxu0 0.0
  %6336 = vmatprep.subr.mxu0 0.0
  %6337 = vmatpush1.msra.mxu0 0.0
  %6338 = vmatprep.subr.mxu0 0.0
  %6339 = vmatpush1.msra.mxu0 0.0
  %6340 = vmatprep.subr.mxu0 0.0
  %6341 = vmatpush1.msra.mxu0 0.0
  %6342 = vmatprep.subr.mxu0 0.0
  %6343 = vmatpush1.msra.mxu0 0.0
  %6344 = vmatprep.subr.mxu0 0.0
  %6345 = vmatpush1.msra.mxu0 0.0
  %6346 = vmatprep.subr.mxu0 0.0
  %6347 = vmatpush1.msra.mxu0 0.0
  %6348 = vmatprep.subr.mxu0 0.0
  %6349 = vmatpush1.msra.mxu0 0.0
  %6350 = vmatprep.subr.mxu0 0.0
  %6351 = vmatpush1.msra.mxu0 0.0
  %6352 = vmatprep.subr.mxu0 0.0
  %6353 = vmatpush1.msra.mxu0 0.0
  %6354 = vmatprep.subr.mxu0 0.0
  %6355 = vmatpush1.msra.mxu0 0.0
  %6356 = vmatprep.subr.mxu0 0.0
  %6357 = vmatpush1.msra.mxu0 0.0
  %6358 = vmatprep.mubr.f32.mxu0 0.0
  %6359 = vmatmul.mubr.f32.gmra.mrb[0].mxu0 %v6292
  %v6360 = vpop.f32.mrb[0].mxu0
  %v6361 = vadd.f32 0.0, %v6360
  %v6362 = vpop.f32.mrb[0].mxu0
  %6363 = vdwg.mxu0
  %v6365 = vsel %vm5075, %v5669, 0
  %6367 = vmatprep.subr.mxu0 0.0
  %6368 = vmatpush1.msra.mxu0 %v153
  %6369 = vmatprep.subr.mxu0 0.0
  %6370 = vmatpush1.msra.mxu0 0.0
  %6371 = vmatprep.subr.mxu0 0.0
  %6372 = vmatpush1.msra.mxu0 0.0
  %6373 = vmatprep.subr.mxu0 0.0
  %6374 = vmatpush1.msra.mxu0 0.0
  %6375 = vmatprep.subr.mxu0 0.0
  %6376 = vmatpush1.msra.mxu0 0.0
  %6377 = vmatprep.subr.mxu0 0.0
  %6378 = vmatpush1.msra.mxu0 0.0
  %6379 = vmatprep.subr.mxu0 0.0
  %6380 = vmatpush1.msra.mxu0 0.0
  %6381 = vmatprep.subr.mxu0 0.0
  %6382 = vmatpush1.msra.mxu0 0.0
  %6383 = vmatprep.subr.mxu0 0.0
  %6384 = vmatpush1.msra.mxu0 0.0
  %6385 = vmatprep.subr.mxu0 0.0
  %6386 = vmatpush1.msra.mxu0 0.0
  %6387 = vmatprep.subr.mxu0 0.0
  %6388 = vmatpush1.msra.mxu0 0.0
  %6389 = vmatprep.subr.mxu0 0.0
  %6390 = vmatpush1.msra.mxu0 0.0
  %6391 = vmatprep.subr.mxu0 0.0
  %6392 = vmatpush1.msra.mxu0 0.0
  %6393 = vmatprep.subr.mxu0 0.0
  %6394 = vmatpush1.msra.mxu0 0.0
  %6395 = vmatprep.subr.mxu0 0.0
  %6396 = vmatpush1.msra.mxu0 0.0
  %6397 = vmatprep.subr.mxu0 0.0
  %6398 = vmatpush1.msra.mxu0 0.0
  %6399 = vmatprep.subr.mxu0 0.0
  %6400 = vmatpush1.msra.mxu0 0.0
  %6401 = vmatprep.subr.mxu0 0.0
  %6402 = vmatpush1.msra.mxu0 0.0
  %6403 = vmatprep.subr.mxu0 0.0
  %6404 = vmatpush1.msra.mxu0 0.0
  %6405 = vmatprep.subr.mxu0 0.0
  %6406 = vmatpush1.msra.mxu0 0.0
  %6407 = vmatprep.subr.mxu0 0.0
  %6408 = vmatpush1.msra.mxu0 0.0
  %6409 = vmatprep.subr.mxu0 0.0
  %6410 = vmatpush1.msra.mxu0 0.0
  %6411 = vmatprep.subr.mxu0 0.0
  %6412 = vmatpush1.msra.mxu0 0.0
  %6413 = vmatprep.subr.mxu0 0.0
  %6414 = vmatpush1.msra.mxu0 0.0
  %6415 = vmatprep.subr.mxu0 0.0
  %6416 = vmatpush1.msra.mxu0 0.0
  %6417 = vmatprep.subr.mxu0 0.0
  %6418 = vmatpush1.msra.mxu0 0.0
  %6419 = vmatprep.subr.mxu0 0.0
  %6420 = vmatpush1.msra.mxu0 0.0
  %6421 = vmatprep.subr.mxu0 0.0
  %6422 = vmatpush1.msra.mxu0 0.0
  %6423 = vmatprep.subr.mxu0 0.0
  %6424 = vmatpush1.msra.mxu0 0.0
  %6425 = vmatprep.subr.mxu0 0.0
  %6426 = vmatpush1.msra.mxu0 0.0
  %6427 = vmatprep.subr.mxu0 0.0
  %6428 = vmatpush1.msra.mxu0 0.0
  %6429 = vmatprep.subr.mxu0 0.0
  %6430 = vmatpush1.msra.mxu0 0.0
  %6431 = vmatprep.mubr.f32.mxu0 0.0
  %6432 = vmatmul.mubr.f32.gmra.mrb[0].mxu0 %v6365
  %v6433 = vpop.f32.mrb[0].mxu0
  %v6434 = vadd.f32 0.0, %v6433
  %v6435 = vpop.f32.mrb[0].mxu0
  %6436 = vdwg.mxu0
  %v6438 = vsel %vm5075, %v5671, 0
  %6440 = vmatprep.subr.mxu0 0.0
  %6441 = vmatpush1.msra.mxu0 %v154
  %6442 = vmatprep.subr.mxu0 0.0
  %6443 = vmatpush1.msra.mxu0 0.0
  %6444 = vmatprep.subr.mxu0 0.0
  %6445 = vmatpush1.msra.mxu0 0.0
  %6446 = vmatprep.subr.mxu0 0.0
  %6447 = vmatpush1.msra.mxu0 0.0
  %6448 = vmatprep.subr.mxu0 0.0
  %6449 = vmatpush1.msra.mxu0 0.0
  %6450 = vmatprep.subr.mxu0 0.0
  %6451 = vmatpush1.msra.mxu0 0.0
  %6452 = vmatprep.subr.mxu0 0.0
  %6453 = vmatpush1.msra.mxu0 0.0
  %6454 = vmatprep.subr.mxu0 0.0
  %6455 = vmatpush1.msra.mxu0 0.0
  %6456 = vmatprep.subr.mxu0 0.0
  %6457 = vmatpush1.msra.mxu0 0.0
  %6458 = vmatprep.subr.mxu0 0.0
  %6459 = vmatpush1.msra.mxu0 0.0
  %6460 = vmatprep.subr.mxu0 0.0
  %6461 = vmatpush1.msra.mxu0 0.0
  %6462 = vmatprep.subr.mxu0 0.0
  %6463 = vmatpush1.msra.mxu0 0.0
  %6464 = vmatprep.subr.mxu0 0.0
  %6465 = vmatpush1.msra.mxu0 0.0
  %6466 = vmatprep.subr.mxu0 0.0
  %6467 = vmatpush1.msra.mxu0 0.0
  %6468 = vmatprep.subr.mxu0 0.0
  %6469 = vmatpush1.msra.mxu0 0.0
  %6470 = vmatprep.subr.mxu0 0.0
  %6471 = vmatpush1.msra.mxu0 0.0
  %6472 = vmatprep.subr.mxu0 0.0
  %6473 = vmatpush1.msra.mxu0 0.0
  %6474 = vmatprep.subr.mxu0 0.0
  %6475 = vmatpush1.msra.mxu0 0.0
  %6476 = vmatprep.subr.mxu0 0.0
  %6477 = vmatpush1.msra.mxu0 0.0
  %6478 = vmatprep.subr.mxu0 0.0
  %6479 = vmatpush1.msra.mxu0 0.0
  %6480 = vmatprep.subr.mxu0 0.0
  %6481 = vmatpush1.msra.mxu0 0.0
  %6482 = vmatprep.subr.mxu0 0.0
  %6483 = vmatpush1.msra.mxu0 0.0
  %6484 = vmatprep.subr.mxu0 0.0
  %6485 = vmatpush1.msra.mxu0 0.0
  %6486 = vmatprep.subr.mxu0 0.0
  %6487 = vmatpush1.msra.mxu0 0.0
  %6488 = vmatprep.subr.mxu0 0.0
  %6489 = vmatpush1.msra.mxu0 0.0
  %6490 = vmatprep.subr.mxu0 0.0
  %6491 = vmatpush1.msra.mxu0 0.0
  %6492 = vmatprep.subr.mxu0 0.0
  %6493 = vmatpush1.msra.mxu0 0.0
  %6494 = vmatprep.subr.mxu0 0.0
  %6495 = vmatpush1.msra.mxu0 0.0
  %6496 = vmatprep.subr.mxu0 0.0
  %6497 = vmatpush1.msra.mxu0 0.0
  %6498 = vmatprep.subr.mxu0 0.0
  %6499 = vmatpush1.msra.mxu0 0.0
  %6500 = vmatprep.subr.mxu0 0.0
  %6501 = vmatpush1.msra.mxu0 0.0
  %6502 = vmatprep.subr.mxu0 0.0
  %6503 = vmatpush1.msra.mxu0 0.0
  %6504 = vmatprep.mubr.f32.mxu0 0.0
  %6505 = vmatmul.mubr.f32.gmra.mrb[0].mxu0 %v6438
  %v6506 = vpop.f32.mrb[0].mxu0
  %v6507 = vadd.f32 0.0, %v6506
  %v6508 = vpop.f32.mrb[0].mxu0
  %6509 = vdwg.mxu0
  %v6511 = vsel %vm5075, %v5673, 0
  %6513 = vmatprep.subr.mxu0 0.0
  %6514 = vmatpush1.msra.mxu0 %v155
  %6515 = vmatprep.subr.mxu0 0.0
  %6516 = vmatpush1.msra.mxu0 0.0
  %6517 = vmatprep.subr.mxu0 0.0
  %6518 = vmatpush1.msra.mxu0 0.0
  %6519 = vmatprep.subr.mxu0 0.0
  %6520 = vmatpush1.msra.mxu0 0.0
  %6521 = vmatprep.subr.mxu0 0.0
  %6522 = vmatpush1.msra.mxu0 0.0
  %6523 = vmatprep.subr.mxu0 0.0
  %6524 = vmatpush1.msra.mxu0 0.0
  %6525 = vmatprep.subr.mxu0 0.0
  %6526 = vmatpush1.msra.mxu0 0.0
  %6527 = vmatprep.subr.mxu0 0.0
  %6528 = vmatpush1.msra.mxu0 0.0
  %6529 = vmatprep.subr.mxu0 0.0
  %6530 = vmatpush1.msra.mxu0 0.0
  %6531 = vmatprep.subr.mxu0 0.0
  %6532 = vmatpush1.msra.mxu0 0.0
  %6533 = vmatprep.subr.mxu0 0.0
  %6534 = vmatpush1.msra.mxu0 0.0
  %6535 = vmatprep.subr.mxu0 0.0
  %6536 = vmatpush1.msra.mxu0 0.0
  %6537 = vmatprep.subr.mxu0 0.0
  %6538 = vmatpush1.msra.mxu0 0.0
  %6539 = vmatprep.subr.mxu0 0.0
  %6540 = vmatpush1.msra.mxu0 0.0
  %6541 = vmatprep.subr.mxu0 0.0
  %6542 = vmatpush1.msra.mxu0 0.0
  %6543 = vmatprep.subr.mxu0 0.0
  %6544 = vmatpush1.msra.mxu0 0.0
  %6545 = vmatprep.subr.mxu0 0.0
  %6546 = vmatpush1.msra.mxu0 0.0
  %6547 = vmatprep.subr.mxu0 0.0
  %6548 = vmatpush1.msra.mxu0 0.0
  %6549 = vmatprep.subr.mxu0 0.0
  %6550 = vmatpush1.msra.mxu0 0.0
  %6551 = vmatprep.subr.mxu0 0.0
  %6552 = vmatpush1.msra.mxu0 0.0
  %6553 = vmatprep.subr.mxu0 0.0
  %6554 = vmatpush1.msra.mxu0 0.0
  %6555 = vmatprep.subr.mxu0 0.0
  %6556 = vmatpush1.msra.mxu0 0.0
  %6557 = vmatprep.subr.mxu0 0.0
  %6558 = vmatpush1.msra.mxu0 0.0
  %6559 = vmatprep.subr.mxu0 0.0
  %6560 = vmatpush1.msra.mxu0 0.0
  %6561 = vmatprep.subr.mxu0 0.0
  %6562 = vmatpush1.msra.mxu0 0.0
  %6563 = vmatprep.subr.mxu0 0.0
  %6564 = vmatpush1.msra.mxu0 0.0
  %6565 = vmatprep.subr.mxu0 0.0
  %6566 = vmatpush1.msra.mxu0 0.0
  %6567 = vmatprep.subr.mxu0 0.0
  %6568 = vmatpush1.msra.mxu0 0.0
  %6569 = vmatprep.subr.mxu0 0.0
  %6570 = vmatpush1.msra.mxu0 0.0
  %6571 = vmatprep.subr.mxu0 0.0
  %6572 = vmatpush1.msra.mxu0 0.0
  %6573 = vmatprep.subr.mxu0 0.0
  %6574 = vmatpush1.msra.mxu0 0.0
  %6575 = vmatprep.subr.mxu0 0.0
  %6576 = vmatpush1.msra.mxu0 0.0
  %6577 = vmatprep.mubr.f32.mxu0 0.0
  %6578 = vmatmul.mubr.f32.gmra.mrb[0].mxu0 %v6511
  %v6579 = vpop.f32.mrb[0].mxu0
  %v6580 = vadd.f32 0.0, %v6579
  %v6581 = vpop.f32.mrb[0].mxu0
  %6582 = vdwg.mxu0
  %v6584 = vsel %vm5075, %v5675, 0
  %6586 = vmatprep.subr.mxu0 0.0
  %6587 = vmatpush1.msra.mxu0 %v156
  %6588 = vmatprep.subr.mxu0 0.0
  %6589 = vmatpush1.msra.mxu0 0.0
  %6590 = vmatprep.subr.mxu0 0.0
  %6591 = vmatpush1.msra.mxu0 0.0
  %6592 = vmatprep.subr.mxu0 0.0
  %6593 = vmatpush1.msra.mxu0 0.0
  %6594 = vmatprep.subr.mxu0 0.0
  %6595 = vmatpush1.msra.mxu0 0.0
  %6596 = vmatprep.subr.mxu0 0.0
  %6597 = vmatpush1.msra.mxu0 0.0
  %6598 = vmatprep.subr.mxu0 0.0
  %6599 = vmatpush1.msra.mxu0 0.0
  %6600 = vmatprep.subr.mxu0 0.0
  %6601 = vmatpush1.msra.mxu0 0.0
  %6602 = vmatprep.subr.mxu0 0.0
  %6603 = vmatpush1.msra.mxu0 0.0
  %6604 = vmatprep.subr.mxu0 0.0
  %6605 = vmatpush1.msra.mxu0 0.0
  %6606 = vmatprep.subr.mxu0 0.0
  %6607 = vmatpush1.msra.mxu0 0.0
  %6608 = vmatprep.subr.mxu0 0.0
  %6609 = vmatpush1.msra.mxu0 0.0
  %6610 = vmatprep.subr.mxu0 0.0
  %6611 = vmatpush1.msra.mxu0 0.0
  %6612 = vmatprep.subr.mxu0 0.0
  %6613 = vmatpush1.msra.mxu0 0.0
  %6614 = vmatprep.subr.mxu0 0.0
  %6615 = vmatpush1.msra.mxu0 0.0
  %6616 = vmatprep.subr.mxu0 0.0
  %6617 = vmatpush1.msra.mxu0 0.0
  %6618 = vmatprep.subr.mxu0 0.0
  %6619 = vmatpush1.msra.mxu0 0.0
  %6620 = vmatprep.subr.mxu0 0.0
  %6621 = vmatpush1.msra.mxu0 0.0
  %6622 = vmatprep.subr.mxu0 0.0
  %6623 = vmatpush1.msra.mxu0 0.0
  %6624 = vmatprep.subr.mxu0 0.0
  %6625 = vmatpush1.msra.mxu0 0.0
  %6626 = vmatprep.subr.mxu0 0.0
  %6627 = vmatpush1.msra.mxu0 0.0
  %6628 = vmatprep.subr.mxu0 0.0
  %6629 = vmatpush1.msra.mxu0 0.0
  %6630 = vmatprep.subr.mxu0 0.0
  %6631 = vmatpush1.msra.mxu0 0.0
  %6632 = vmatprep.subr.mxu0 0.0
  %6633 = vmatpush1.msra.mxu0 0.0
  %6634 = vmatprep.subr.mxu0 0.0
  %6635 = vmatpush1.msra.mxu0 0.0
  %6636 = vmatprep.subr.mxu0 0.0
  %6637 = vmatpush1.msra.mxu0 0.0
  %6638 = vmatprep.subr.mxu0 0.0
  %6639 = vmatpush1.msra.mxu0 0.0
  %6640 = vmatprep.subr.mxu0 0.0
  %6641 = vmatpush1.msra.mxu0 0.0
  %6642 = vmatprep.subr.mxu0 0.0
  %6643 = vmatpush1.msra.mxu0 0.0
  %6644 = vmatprep.subr.mxu0 0.0
  %6645 = vmatpush1.msra.mxu0 0.0
  %6646 = vmatprep.subr.mxu0 0.0
  %6647 = vmatpush1.msra.mxu0 0.0
  %6648 = vmatprep.subr.mxu0 0.0
  %6649 = vmatpush1.msra.mxu0 0.0
  %6650 = vmatprep.mubr.f32.mxu0 0.0
  %6651 = vmatmul.mubr.f32.gmra.mrb[0].mxu0 %v6584
  %v6652 = vpop.f32.mrb[0].mxu0
  %v6653 = vadd.f32 0.0, %v6652
  %v6654 = vpop.f32.mrb[0].mxu0
  %6655 = vdwg.mxu0
  %v6657 = vsel %vm5075, %v5677, 0
  %6659 = vmatprep.subr.mxu0 0.0
  %6660 = vmatpush1.msra.mxu0 %v157
  %6661 = vmatprep.subr.mxu0 0.0
  %6662 = vmatpush1.msra.mxu0 0.0
  %6663 = vmatprep.subr.mxu0 0.0
  %6664 = vmatpush1.msra.mxu0 0.0
  %6665 = vmatprep.subr.mxu0 0.0
  %6666 = vmatpush1.msra.mxu0 0.0
  %6667 = vmatprep.subr.mxu0 0.0
  %6668 = vmatpush1.msra.mxu0 0.0
  %6669 = vmatprep.subr.mxu0 0.0
  %6670 = vmatpush1.msra.mxu0 0.0
  %6671 = vmatprep.subr.mxu0 0.0
  %6672 = vmatpush1.msra.mxu0 0.0
  %6673 = vmatprep.subr.mxu0 0.0
  %6674 = vmatpush1.msra.mxu0 0.0
  %6675 = vmatprep.subr.mxu0 0.0
  %6676 = vmatpush1.msra.mxu0 0.0
  %6677 = vmatprep.subr.mxu0 0.0
  %6678 = vmatpush1.msra.mxu0 0.0
  %6679 = vmatprep.subr.mxu0 0.0
  %6680 = vmatpush1.msra.mxu0 0.0
  %6681 = vmatprep.subr.mxu0 0.0
  %6682 = vmatpush1.msra.mxu0 0.0
  %6683 = vmatprep.subr.mxu0 0.0
  %6684 = vmatpush1.msra.mxu0 0.0
  %6685 = vmatprep.subr.mxu0 0.0
  %6686 = vmatpush1.msra.mxu0 0.0
  %6687 = vmatprep.subr.mxu0 0.0
  %6688 = vmatpush1.msra.mxu0 0.0
  %6689 = vmatprep.subr.mxu0 0.0
  %6690 = vmatpush1.msra.mxu0 0.0
  %6691 = vmatprep.subr.mxu0 0.0
  %6692 = vmatpush1.msra.mxu0 0.0
  %6693 = vmatprep.subr.mxu0 0.0
  %6694 = vmatpush1.msra.mxu0 0.0
  %6695 = vmatprep.subr.mxu0 0.0
  %6696 = vmatpush1.msra.mxu0 0.0
  %6697 = vmatprep.subr.mxu0 0.0
  %6698 = vmatpush1.msra.mxu0 0.0
  %6699 = vmatprep.subr.mxu0 0.0
  %6700 = vmatpush1.msra.mxu0 0.0
  %6701 = vmatprep.subr.mxu0 0.0
  %6702 = vmatpush1.msra.mxu0 0.0
  %6703 = vmatprep.subr.mxu0 0.0
  %6704 = vmatpush1.msra.mxu0 0.0
  %6705 = vmatprep.subr.mxu0 0.0
  %6706 = vmatpush1.msra.mxu0 0.0
  %6707 = vmatprep.subr.mxu0 0.0
  %6708 = vmatpush1.msra.mxu0 0.0
  %6709 = vmatprep.subr.mxu0 0.0
  %6710 = vmatpush1.msra.mxu0 0.0
  %6711 = vmatprep.subr.mxu0 0.0
  %6712 = vmatpush1.msra.mxu0 0.0
  %6713 = vmatprep.subr.mxu0 0.0
  %6714 = vmatpush1.msra.mxu0 0.0
  %6715 = vmatprep.subr.mxu0 0.0
  %6716 = vmatpush1.msra.mxu0 0.0
  %6717 = vmatprep.subr.mxu0 0.0
  %6718 = vmatpush1.msra.mxu0 0.0
  %6719 = vmatprep.subr.mxu0 0.0
  %6720 = vmatpush1.msra.mxu0 0.0
  %6721 = vmatprep.subr.mxu0 0.0
  %6722 = vmatpush1.msra.mxu0 0.0
  %6723 = vmatprep.mubr.f32.mxu0 0.0
  %6724 = vmatmul.mubr.f32.gmra.mrb[0].mxu0 %v6657
  %v6725 = vpop.f32.mrb[0].mxu0
  %v6726 = vadd.f32 0.0, %v6725
  %v6727 = vpop.f32.mrb[0].mxu0
  %6728 = vdwg.mxu0
  %v6730 = vsel %vm5075, %v5679, 0
  %6732 = vmatprep.subr.mxu0 0.0
  %6733 = vmatpush1.msra.mxu0 %v158
  %6734 = vmatprep.subr.mxu0 0.0
  %6735 = vmatpush1.msra.mxu0 0.0
  %6736 = vmatprep.subr.mxu0 0.0
  %6737 = vmatpush1.msra.mxu0 0.0
  %6738 = vmatprep.subr.mxu0 0.0
  %6739 = vmatpush1.msra.mxu0 0.0
  %6740 = vmatprep.subr.mxu0 0.0
  %6741 = vmatpush1.msra.mxu0 0.0
  %6742 = vmatprep.subr.mxu0 0.0
  %6743 = vmatpush1.msra.mxu0 0.0
  %6744 = vmatprep.subr.mxu0 0.0
  %6745 = vmatpush1.msra.mxu0 0.0
  %6746 = vmatprep.subr.mxu0 0.0
  %6747 = vmatpush1.msra.mxu0 0.0
  %6748 = vmatprep.subr.mxu0 0.0
  %6749 = vmatpush1.msra.mxu0 0.0
  %6750 = vmatprep.subr.mxu0 0.0
  %6751 = vmatpush1.msra.mxu0 0.0
  %6752 = vmatprep.subr.mxu0 0.0
  %6753 = vmatpush1.msra.mxu0 0.0
  %6754 = vmatprep.subr.mxu0 0.0
  %6755 = vmatpush1.msra.mxu0 0.0
  %6756 = vmatprep.subr.mxu0 0.0
  %6757 = vmatpush1.msra.mxu0 0.0
  %6758 = vmatprep.subr.mxu0 0.0
  %6759 = vmatpush1.msra.mxu0 0.0
  %6760 = vmatprep.subr.mxu0 0.0
  %6761 = vmatpush1.msra.mxu0 0.0
  %6762 = vmatprep.subr.mxu0 0.0
  %6763 = vmatpush1.msra.mxu0 0.0
  %6764 = vmatprep.subr.mxu0 0.0
  %6765 = vmatpush1.msra.mxu0 0.0
  %6766 = vmatprep.subr.mxu0 0.0
  %6767 = vmatpush1.msra.mxu0 0.0
  %6768 = vmatprep.subr.mxu0 0.0
  %6769 = vmatpush1.msra.mxu0 0.0
  %6770 = vmatprep.subr.mxu0 0.0
  %6771 = vmatpush1.msra.mxu0 0.0
  %6772 = vmatprep.subr.mxu0 0.0
  %6773 = vmatpush1.msra.mxu0 0.0
  %6774 = vmatprep.subr.mxu0 0.0
  %6775 = vmatpush1.msra.mxu0 0.0
  %6776 = vmatprep.subr.mxu0 0.0
  %6777 = vmatpush1.msra.mxu0 0.0
  %6778 = vmatprep.subr.mxu0 0.0
  %6779 = vmatpush1.msra.mxu0 0.0
  %6780 = vmatprep.subr.mxu0 0.0
  %6781 = vmatpush1.msra.mxu0 0.0
  %6782 = vmatprep.subr.mxu0 0.0
  %6783 = vmatpush1.msra.mxu0 0.0
  %6784 = vmatprep.subr.mxu0 0.0
  %6785 = vmatpush1.msra.mxu0 0.0
  %6786 = vmatprep.subr.mxu0 0.0
  %6787 = vmatpush1.msra.mxu0 0.0
  %6788 = vmatprep.subr.mxu0 0.0
  %6789 = vmatpush1.msra.mxu0 0.0
  %6790 = vmatprep.subr.mxu0 0.0
  %6791 = vmatpush1.msra.mxu0 0.0
  %6792 = vmatprep.subr.mxu0 0.0
  %6793 = vmatpush1.msra.mxu0 0.0
  %6794 = vmatprep.subr.mxu0 0.0
  %6795 = vmatpush1.msra.mxu0 0.0
  %6796 = vmatprep.mubr.f32.mxu0 0.0
  %6797 = vmatmul.mubr.f32.gmra.mrb[0].mxu0 %v6730
  %v6798 = vpop.f32.mrb[0].mxu0
  %v6799 = vadd.f32 0.0, %v6798
  %v6800 = vpop.f32.mrb[0].mxu0
  %6801 = vdwg.mxu0
  %v6803 = vsel %vm5075, %v5681, 0
  %6805 = vmatprep.subr.mxu0 0.0
  %6806 = vmatpush1.msra.mxu0 %v159
  %6807 = vmatprep.subr.mxu0 0.0
  %6808 = vmatpush1.msra.mxu0 0.0
  %6809 = vmatprep.subr.mxu0 0.0
  %6810 = vmatpush1.msra.mxu0 0.0
  %6811 = vmatprep.subr.mxu0 0.0
  %6812 = vmatpush1.msra.mxu0 0.0
  %6813 = vmatprep.subr.mxu0 0.0
  %6814 = vmatpush1.msra.mxu0 0.0
  %6815 = vmatprep.subr.mxu0 0.0
  %6816 = vmatpush1.msra.mxu0 0.0
  %6817 = vmatprep.subr.mxu0 0.0
  %6818 = vmatpush1.msra.mxu0 0.0
  %6819 = vmatprep.subr.mxu0 0.0
  %6820 = vmatpush1.msra.mxu0 0.0
  %6821 = vmatprep.subr.mxu0 0.0
  %6822 = vmatpush1.msra.mxu0 0.0
  %6823 = vmatprep.subr.mxu0 0.0
  %6824 = vmatpush1.msra.mxu0 0.0
  %6825 = vmatprep.subr.mxu0 0.0
  %6826 = vmatpush1.msra.mxu0 0.0
  %6827 = vmatprep.subr.mxu0 0.0
  %6828 = vmatpush1.msra.mxu0 0.0
  %6829 = vmatprep.subr.mxu0 0.0
  %6830 = vmatpush1.msra.mxu0 0.0
  %6831 = vmatprep.subr.mxu0 0.0
  %6832 = vmatpush1.msra.mxu0 0.0
  %6833 = vmatprep.subr.mxu0 0.0
  %6834 = vmatpush1.msra.mxu0 0.0
  %6835 = vmatprep.subr.mxu0 0.0
  %6836 = vmatpush1.msra.mxu0 0.0
  %6837 = vmatprep.subr.mxu0 0.0
  %6838 = vmatpush1.msra.mxu0 0.0
  %6839 = vmatprep.subr.mxu0 0.0
  %6840 = vmatpush1.msra.mxu0 0.0
  %6841 = vmatprep.subr.mxu0 0.0
  %6842 = vmatpush1.msra.mxu0 0.0
  %6843 = vmatprep.subr.mxu0 0.0
  %6844 = vmatpush1.msra.mxu0 0.0
  %6845 = vmatprep.subr.mxu0 0.0
  %6846 = vmatpush1.msra.mxu0 0.0
  %6847 = vmatprep.subr.mxu0 0.0
  %6848 = vmatpush1.msra.mxu0 0.0
  %6849 = vmatprep.subr.mxu0 0.0
  %6850 = vmatpush1.msra.mxu0 0.0
  %6851 = vmatprep.subr.mxu0 0.0
  %6852 = vmatpush1.msra.mxu0 0.0
  %6853 = vmatprep.subr.mxu0 0.0
  %6854 = vmatpush1.msra.mxu0 0.0
  %6855 = vmatprep.subr.mxu0 0.0
  %6856 = vmatpush1.msra.mxu0 0.0
  %6857 = vmatprep.subr.mxu0 0.0
  %6858 = vmatpush1.msra.mxu0 0.0
  %6859 = vmatprep.subr.mxu0 0.0
  %6860 = vmatpush1.msra.mxu0 0.0
  %6861 = vmatprep.subr.mxu0 0.0
  %6862 = vmatpush1.msra.mxu0 0.0
  %6863 = vmatprep.subr.mxu0 0.0
  %6864 = vmatpush1.msra.mxu0 0.0
  %6865 = vmatprep.subr.mxu0 0.0
  %6866 = vmatpush1.msra.mxu0 0.0
  %6867 = vmatprep.subr.mxu0 0.0
  %6868 = vmatpush1.msra.mxu0 0.0
  %6869 = vmatprep.mubr.f32.mxu0 0.0
  %6870 = vmatmul.mubr.f32.gmra.mrb[0].mxu0 %v6803
  %v6871 = vpop.f32.mrb[0].mxu0
  %v6872 = vadd.f32 0.0, %v6871
  %v6873 = vpop.f32.mrb[0].mxu0
  %6874 = vdwg.mxu0
  %v6876 = vsel %vm5075, %v5683, 0
  %6878 = vmatprep.subr.mxu0 0.0
  %6879 = vmatpush1.msra.mxu0 %v160
  %6880 = vmatprep.subr.mxu0 0.0
  %6881 = vmatpush1.msra.mxu0 0.0
  %6882 = vmatprep.subr.mxu0 0.0
  %6883 = vmatpush1.msra.mxu0 0.0
  %6884 = vmatprep.subr.mxu0 0.0
  %6885 = vmatpush1.msra.mxu0 0.0
  %6886 = vmatprep.subr.mxu0 0.0
  %6887 = vmatpush1.msra.mxu0 0.0
  %6888 = vmatprep.subr.mxu0 0.0
  %6889 = vmatpush1.msra.mxu0 0.0
  %6890 = vmatprep.subr.mxu0 0.0
  %6891 = vmatpush1.msra.mxu0 0.0
  %6892 = vmatprep.subr.mxu0 0.0
  %6893 = vmatpush1.msra.mxu0 0.0
  %6894 = vmatprep.subr.mxu0 0.0
  %6895 = vmatpush1.msra.mxu0 0.0
  %6896 = vmatprep.subr.mxu0 0.0
  %6897 = vmatpush1.msra.mxu0 0.0
  %6898 = vmatprep.subr.mxu0 0.0
  %6899 = vmatpush1.msra.mxu0 0.0
  %6900 = vmatprep.subr.mxu0 0.0
  %6901 = vmatpush1.msra.mxu0 0.0
  %6902 = vmatprep.subr.mxu0 0.0
  %6903 = vmatpush1.msra.mxu0 0.0
  %6904 = vmatprep.subr.mxu0 0.0
  %6905 = vmatpush1.msra.mxu0 0.0
  %6906 = vmatprep.subr.mxu0 0.0
  %6907 = vmatpush1.msra.mxu0 0.0
  %6908 = vmatprep.subr.mxu0 0.0
  %6909 = vmatpush1.msra.mxu0 0.0
  %6910 = vmatprep.subr.mxu0 0.0
  %6911 = vmatpush1.msra.mxu0 0.0
  %6912 = vmatprep.subr.mxu0 0.0
  %6913 = vmatpush1.msra.mxu0 0.0
  %6914 = vmatprep.subr.mxu0 0.0
  %6915 = vmatpush1.msra.mxu0 0.0
  %6916 = vmatprep.subr.mxu0 0.0
  %6917 = vmatpush1.msra.mxu0 0.0
  %6918 = vmatprep.subr.mxu0 0.0
  %6919 = vmatpush1.msra.mxu0 0.0
  %6920 = vmatprep.subr.mxu0 0.0
  %6921 = vmatpush1.msra.mxu0 0.0
  %6922 = vmatprep.subr.mxu0 0.0
  %6923 = vmatpush1.msra.mxu0 0.0
  %6924 = vmatprep.subr.mxu0 0.0
  %6925 = vmatpush1.msra.mxu0 0.0
  %6926 = vmatprep.subr.mxu0 0.0
  %6927 = vmatpush1.msra.mxu0 0.0
  %6928 = vmatprep.subr.mxu0 0.0
  %6929 = vmatpush1.msra.mxu0 0.0
  %6930 = vmatprep.subr.mxu0 0.0
  %6931 = vmatpush1.msra.mxu0 0.0
  %6932 = vmatprep.subr.mxu0 0.0
  %6933 = vmatpush1.msra.mxu0 0.0
  %6934 = vmatprep.subr.mxu0 0.0
  %6935 = vmatpush1.msra.mxu0 0.0
  %6936 = vmatprep.subr.mxu0 0.0
  %6937 = vmatpush1.msra.mxu0 0.0
  %6938 = vmatprep.subr.mxu0 0.0
  %6939 = vmatpush1.msra.mxu0 0.0
  %6940 = vmatprep.subr.mxu0 0.0
  %6941 = vmatpush1.msra.mxu0 0.0
  %6942 = vmatprep.mubr.f32.mxu0 0.0
  %6943 = vmatmul.mubr.f32.gmra.mrb[0].mxu0 %v6876
  %v6944 = vpop.f32.mrb[0].mxu0
  %v6945 = vadd.f32 0.0, %v6944
  %v6946 = vpop.f32.mrb[0].mxu0
  %6947 = vdwg.mxu0
  %v6949 = vsel %vm5075, %v5685, 0
  %6951 = vmatprep.subr.mxu0 0.0
  %6952 = vmatpush1.msra.mxu0 %v161
  %6953 = vmatprep.subr.mxu0 0.0
  %6954 = vmatpush1.msra.mxu0 0.0
  %6955 = vmatprep.subr.mxu0 0.0
  %6956 = vmatpush1.msra.mxu0 0.0
  %6957 = vmatprep.subr.mxu0 0.0
  %6958 = vmatpush1.msra.mxu0 0.0
  %6959 = vmatprep.subr.mxu0 0.0
  %6960 = vmatpush1.msra.mxu0 0.0
  %6961 = vmatprep.subr.mxu0 0.0
  %6962 = vmatpush1.msra.mxu0 0.0
  %6963 = vmatprep.subr.mxu0 0.0
  %6964 = vmatpush1.msra.mxu0 0.0
  %6965 = vmatprep.subr.mxu0 0.0
  %6966 = vmatpush1.msra.mxu0 0.0
  %6967 = vmatprep.subr.mxu0 0.0
  %6968 = vmatpush1.msra.mxu0 0.0
  %6969 = vmatprep.subr.mxu0 0.0
  %6970 = vmatpush1.msra.mxu0 0.0
  %6971 = vmatprep.subr.mxu0 0.0
  %6972 = vmatpush1.msra.mxu0 0.0
  %6973 = vmatprep.subr.mxu0 0.0
  %6974 = vmatpush1.msra.mxu0 0.0
  %6975 = vmatprep.subr.mxu0 0.0
  %6976 = vmatpush1.msra.mxu0 0.0
  %6977 = vmatprep.subr.mxu0 0.0
  %6978 = vmatpush1.msra.mxu0 0.0
  %6979 = vmatprep.subr.mxu0 0.0
  %6980 = vmatpush1.msra.mxu0 0.0
  %6981 = vmatprep.subr.mxu0 0.0
  %6982 = vmatpush1.msra.mxu0 0.0
  %6983 = vmatprep.subr.mxu0 0.0
  %6984 = vmatpush1.msra.mxu0 0.0
  %6985 = vmatprep.subr.mxu0 0.0
  %6986 = vmatpush1.msra.mxu0 0.0
  %6987 = vmatprep.subr.mxu0 0.0
  %6988 = vmatpush1.msra.mxu0 0.0
  %6989 = vmatprep.subr.mxu0 0.0
  %6990 = vmatpush1.msra.mxu0 0.0
  %6991 = vmatprep.subr.mxu0 0.0
  %6992 = vmatpush1.msra.mxu0 0.0
  %6993 = vmatprep.subr.mxu0 0.0
  %6994 = vmatpush1.msra.mxu0 0.0
  %6995 = vmatprep.subr.mxu0 0.0
  %6996 = vmatpush1.msra.mxu0 0.0
  %6997 = vmatprep.subr.mxu0 0.0
  %6998 = vmatpush1.msra.mxu0 0.0
  %6999 = vmatprep.subr.mxu0 0.0
  %7000 = vmatpush1.msra.mxu0 0.0
  %7001 = vmatprep.subr.mxu0 0.0
  %7002 = vmatpush1.msra.mxu0 0.0
  %7003 = vmatprep.subr.mxu0 0.0
  %7004 = vmatpush1.msra.mxu0 0.0
  %7005 = vmatprep.subr.mxu0 0.0
  %7006 = vmatpush1.msra.mxu0 0.0
  %7007 = vmatprep.subr.mxu0 0.0
  %7008 = vmatpush1.msra.mxu0 0.0
  %7009 = vmatprep.subr.mxu0 0.0
  %7010 = vmatpush1.msra.mxu0 0.0
  %7011 = vmatprep.subr.mxu0 0.0
  %7012 = vmatpush1.msra.mxu0 0.0
  %7013 = vmatprep.subr.mxu0 0.0
  %7014 = vmatpush1.msra.mxu0 0.0
  %7015 = vmatprep.mubr.f32.mxu0 0.0
  %7016 = vmatmul.mubr.f32.gmra.mrb[0].mxu0 %v6949
  %v7017 = vpop.f32.mrb[0].mxu0
  %v7018 = vadd.f32 0.0, %v7017
  %v7019 = vpop.f32.mrb[0].mxu0
  %7020 = vdwg.mxu0
  %v7022 = vsel %vm5075, %v5687, 0
  %7024 = vmatprep.subr.mxu0 0.0
  %7025 = vmatpush1.msra.mxu0 %v162
  %7026 = vmatprep.subr.mxu0 0.0
  %7027 = vmatpush1.msra.mxu0 0.0
  %7028 = vmatprep.subr.mxu0 0.0
  %7029 = vmatpush1.msra.mxu0 0.0
  %7030 = vmatprep.subr.mxu0 0.0
  %7031 = vmatpush1.msra.mxu0 0.0
  %7032 = vmatprep.subr.mxu0 0.0
  %7033 = vmatpush1.msra.mxu0 0.0
  %7034 = vmatprep.subr.mxu0 0.0
  %7035 = vmatpush1.msra.mxu0 0.0
  %7036 = vmatprep.subr.mxu0 0.0
  %7037 = vmatpush1.msra.mxu0 0.0
  %7038 = vmatprep.subr.mxu0 0.0
  %7039 = vmatpush1.msra.mxu0 0.0
  %7040 = vmatprep.subr.mxu0 0.0
  %7041 = vmatpush1.msra.mxu0 0.0
  %7042 = vmatprep.subr.mxu0 0.0
  %7043 = vmatpush1.msra.mxu0 0.0
  %7044 = vmatprep.subr.mxu0 0.0
  %7045 = vmatpush1.msra.mxu0 0.0
  %7046 = vmatprep.subr.mxu0 0.0
  %7047 = vmatpush1.msra.mxu0 0.0
  %7048 = vmatprep.subr.mxu0 0.0
  %7049 = vmatpush1.msra.mxu0 0.0
  %7050 = vmatprep.subr.mxu0 0.0
  %7051 = vmatpush1.msra.mxu0 0.0
  %7052 = vmatprep.subr.mxu0 0.0
  %7053 = vmatpush1.msra.mxu0 0.0
  %7054 = vmatprep.subr.mxu0 0.0
  %7055 = vmatpush1.msra.mxu0 0.0
  %7056 = vmatprep.subr.mxu0 0.0
  %7057 = vmatpush1.msra.mxu0 0.0
  %7058 = vmatprep.subr.mxu0 0.0
  %7059 = vmatpush1.msra.mxu0 0.0
  %7060 = vmatprep.subr.mxu0 0.0
  %7061 = vmatpush1.msra.mxu0 0.0
  %7062 = vmatprep.subr.mxu0 0.0
  %7063 = vmatpush1.msra.mxu0 0.0
  %7064 = vmatprep.subr.mxu0 0.0
  %7065 = vmatpush1.msra.mxu0 0.0
  %7066 = vmatprep.subr.mxu0 0.0
  %7067 = vmatpush1.msra.mxu0 0.0
  %7068 = vmatprep.subr.mxu0 0.0
  %7069 = vmatpush1.msra.mxu0 0.0
  %7070 = vmatprep.subr.mxu0 0.0
  %7071 = vmatpush1.msra.mxu0 0.0
  %7072 = vmatprep.subr.mxu0 0.0
  %7073 = vmatpush1.msra.mxu0 0.0
  %7074 = vmatprep.subr.mxu0 0.0
  %7075 = vmatpush1.msra.mxu0 0.0
  %7076 = vmatprep.subr.mxu0 0.0
  %7077 = vmatpush1.msra.mxu0 0.0
  %7078 = vmatprep.subr.mxu0 0.0
  %7079 = vmatpush1.msra.mxu0 0.0
  %7080 = vmatprep.subr.mxu0 0.0
  %7081 = vmatpush1.msra.mxu0 0.0
  %7082 = vmatprep.subr.mxu0 0.0
  %7083 = vmatpush1.msra.mxu0 0.0
  %7084 = vmatprep.subr.mxu0 0.0
  %7085 = vmatpush1.msra.mxu0 0.0
  %7086 = vmatprep.subr.mxu0 0.0
  %7087 = vmatpush1.msra.mxu0 0.0
  %7088 = vmatprep.mubr.f32.mxu0 0.0
  %7089 = vmatmul.mubr.f32.gmra.mrb[0].mxu0 %v7022
  %v7090 = vpop.f32.mrb[0].mxu0
  %v7091 = vadd.f32 0.0, %v7090
  %v7092 = vpop.f32.mrb[0].mxu0
  %7093 = vdwg.mxu0
  %v7095 = vsel %vm5075, %v5689, 0
  %7097 = vmatprep.subr.mxu0 0.0
  %7098 = vmatpush1.msra.mxu0 %v163
  %7099 = vmatprep.subr.mxu0 0.0
  %7100 = vmatpush1.msra.mxu0 0.0
  %7101 = vmatprep.subr.mxu0 0.0
  %7102 = vmatpush1.msra.mxu0 0.0
  %7103 = vmatprep.subr.mxu0 0.0
  %7104 = vmatpush1.msra.mxu0 0.0
  %7105 = vmatprep.subr.mxu0 0.0
  %7106 = vmatpush1.msra.mxu0 0.0
  %7107 = vmatprep.subr.mxu0 0.0
  %7108 = vmatpush1.msra.mxu0 0.0
  %7109 = vmatprep.subr.mxu0 0.0
  %7110 = vmatpush1.msra.mxu0 0.0
  %7111 = vmatprep.subr.mxu0 0.0
  %7112 = vmatpush1.msra.mxu0 0.0
  %7113 = vmatprep.subr.mxu0 0.0
  %7114 = vmatpush1.msra.mxu0 0.0
  %7115 = vmatprep.subr.mxu0 0.0
  %7116 = vmatpush1.msra.mxu0 0.0
  %7117 = vmatprep.subr.mxu0 0.0
  %7118 = vmatpush1.msra.mxu0 0.0
  %7119 = vmatprep.subr.mxu0 0.0
  %7120 = vmatpush1.msra.mxu0 0.0
  %7121 = vmatprep.subr.mxu0 0.0
  %7122 = vmatpush1.msra.mxu0 0.0
  %7123 = vmatprep.subr.mxu0 0.0
  %7124 = vmatpush1.msra.mxu0 0.0
  %7125 = vmatprep.subr.mxu0 0.0
  %7126 = vmatpush1.msra.mxu0 0.0
  %7127 = vmatprep.subr.mxu0 0.0
  %7128 = vmatpush1.msra.mxu0 0.0
  %7129 = vmatprep.subr.mxu0 0.0
  %7130 = vmatpush1.msra.mxu0 0.0
  %7131 = vmatprep.subr.mxu0 0.0
  %7132 = vmatpush1.msra.mxu0 0.0
  %7133 = vmatprep.subr.mxu0 0.0
  %7134 = vmatpush1.msra.mxu0 0.0
  %7135 = vmatprep.subr.mxu0 0.0
  %7136 = vmatpush1.msra.mxu0 0.0
  %7137 = vmatprep.subr.mxu0 0.0
  %7138 = vmatpush1.msra.mxu0 0.0
  %7139 = vmatprep.subr.mxu0 0.0
  %7140 = vmatpush1.msra.mxu0 0.0
  %7141 = vmatprep.subr.mxu0 0.0
  %7142 = vmatpush1.msra.mxu0 0.0
  %7143 = vmatprep.subr.mxu0 0.0
  %7144 = vmatpush1.msra.mxu0 0.0
  %7145 = vmatprep.subr.mxu0 0.0
  %7146 = vmatpush1.msra.mxu0 0.0
  %7147 = vmatprep.subr.mxu0 0.0
  %7148 = vmatpush1.msra.mxu0 0.0
  %7149 = vmatprep.subr.mxu0 0.0
  %7150 = vmatpush1.msra.mxu0 0.0
  %7151 = vmatprep.subr.mxu0 0.0
  %7152 = vmatpush1.msra.mxu0 0.0
  %7153 = vmatprep.subr.mxu0 0.0
  %7154 = vmatpush1.msra.mxu0 0.0
  %7155 = vmatprep.subr.mxu0 0.0
  %7156 = vmatpush1.msra.mxu0 0.0
  %7157 = vmatprep.subr.mxu0 0.0
  %7158 = vmatpush1.msra.mxu0 0.0
  %7159 = vmatprep.subr.mxu0 0.0
  %7160 = vmatpush1.msra.mxu0 0.0
  %7161 = vmatprep.mubr.f32.mxu0 0.0
  %7162 = vmatmul.mubr.f32.gmra.mrb[0].mxu0 %v7095
  %v7163 = vpop.f32.mrb[0].mxu0
  %v7164 = vadd.f32 0.0, %v7163
  %v7165 = vpop.f32.mrb[0].mxu0
  %7166 = vdwg.mxu0
  %v7168 = vsel %vm5075, %v5691, 0
  %7170 = vmatprep.subr.mxu0 0.0
  %7171 = vmatpush1.msra.mxu0 %v164
  %7172 = vmatprep.subr.mxu0 0.0
  %7173 = vmatpush1.msra.mxu0 0.0
  %7174 = vmatprep.subr.mxu0 0.0
  %7175 = vmatpush1.msra.mxu0 0.0
  %7176 = vmatprep.subr.mxu0 0.0
  %7177 = vmatpush1.msra.mxu0 0.0
  %7178 = vmatprep.subr.mxu0 0.0
  %7179 = vmatpush1.msra.mxu0 0.0
  %7180 = vmatprep.subr.mxu0 0.0
  %7181 = vmatpush1.msra.mxu0 0.0
  %7182 = vmatprep.subr.mxu0 0.0
  %7183 = vmatpush1.msra.mxu0 0.0
  %7184 = vmatprep.subr.mxu0 0.0
  %7185 = vmatpush1.msra.mxu0 0.0
  %7186 = vmatprep.subr.mxu0 0.0
  %7187 = vmatpush1.msra.mxu0 0.0
  %7188 = vmatprep.subr.mxu0 0.0
  %7189 = vmatpush1.msra.mxu0 0.0
  %7190 = vmatprep.subr.mxu0 0.0
  %7191 = vmatpush1.msra.mxu0 0.0
  %7192 = vmatprep.subr.mxu0 0.0
  %7193 = vmatpush1.msra.mxu0 0.0
  %7194 = vmatprep.subr.mxu0 0.0
  %7195 = vmatpush1.msra.mxu0 0.0
  %7196 = vmatprep.subr.mxu0 0.0
  %7197 = vmatpush1.msra.mxu0 0.0
  %7198 = vmatprep.subr.mxu0 0.0
  %7199 = vmatpush1.msra.mxu0 0.0
  %7200 = vmatprep.subr.mxu0 0.0
  %7201 = vmatpush1.msra.mxu0 0.0
  %7202 = vmatprep.subr.mxu0 0.0
  %7203 = vmatpush1.msra.mxu0 0.0
  %7204 = vmatprep.subr.mxu0 0.0
  %7205 = vmatpush1.msra.mxu0 0.0
  %7206 = vmatprep.subr.mxu0 0.0
  %7207 = vmatpush1.msra.mxu0 0.0
  %7208 = vmatprep.subr.mxu0 0.0
  %7209 = vmatpush1.msra.mxu0 0.0
  %7210 = vmatprep.subr.mxu0 0.0
  %7211 = vmatpush1.msra.mxu0 0.0
  %7212 = vmatprep.subr.mxu0 0.0
  %7213 = vmatpush1.msra.mxu0 0.0
  %7214 = vmatprep.subr.mxu0 0.0
  %7215 = vmatpush1.msra.mxu0 0.0
  %7216 = vmatprep.subr.mxu0 0.0
  %7217 = vmatpush1.msra.mxu0 0.0
  %7218 = vmatprep.subr.mxu0 0.0
  %7219 = vmatpush1.msra.mxu0 0.0
  %7220 = vmatprep.subr.mxu0 0.0
  %7221 = vmatpush1.msra.mxu0 0.0
  %7222 = vmatprep.subr.mxu0 0.0
  %7223 = vmatpush1.msra.mxu0 0.0
  %7224 = vmatprep.subr.mxu0 0.0
  %7225 = vmatpush1.msra.mxu0 0.0
  %7226 = vmatprep.subr.mxu0 0.0
  %7227 = vmatpush1.msra.mxu0 0.0
  %7228 = vmatprep.subr.mxu0 0.0
  %7229 = vmatpush1.msra.mxu0 0.0
  %7230 = vmatprep.subr.mxu0 0.0
  %7231 = vmatpush1.msra.mxu0 0.0
  %7232 = vmatprep.subr.mxu0 0.0
  %7233 = vmatpush1.msra.mxu0 0.0
  %7234 = vmatprep.mubr.f32.mxu0 0.0
  %7235 = vmatmul.mubr.f32.gmra.mrb[0].mxu0 %v7168
  %v7236 = vpop.f32.mrb[0].mxu0
  %v7237 = vadd.f32 0.0, %v7236
  %v7238 = vpop.f32.mrb[0].mxu0
  %7239 = vdwg.mxu0
  %v7241 = vsel %vm5075, %v5693, 0
  %7243 = vmatprep.subr.mxu0 0.0
  %7244 = vmatpush1.msra.mxu0 %v165
  %7245 = vmatprep.subr.mxu0 0.0
  %7246 = vmatpush1.msra.mxu0 0.0
  %7247 = vmatprep.subr.mxu0 0.0
  %7248 = vmatpush1.msra.mxu0 0.0
  %7249 = vmatprep.subr.mxu0 0.0
  %7250 = vmatpush1.msra.mxu0 0.0
  %7251 = vmatprep.subr.mxu0 0.0
  %7252 = vmatpush1.msra.mxu0 0.0
  %7253 = vmatprep.subr.mxu0 0.0
  %7254 = vmatpush1.msra.mxu0 0.0
  %7255 = vmatprep.subr.mxu0 0.0
  %7256 = vmatpush1.msra.mxu0 0.0
  %7257 = vmatprep.subr.mxu0 0.0
  %7258 = vmatpush1.msra.mxu0 0.0
  %7259 = vmatprep.subr.mxu0 0.0
  %7260 = vmatpush1.msra.mxu0 0.0
  %7261 = vmatprep.subr.mxu0 0.0
  %7262 = vmatpush1.msra.mxu0 0.0
  %7263 = vmatprep.subr.mxu0 0.0
  %7264 = vmatpush1.msra.mxu0 0.0
  %7265 = vmatprep.subr.mxu0 0.0
  %7266 = vmatpush1.msra.mxu0 0.0
  %7267 = vmatprep.subr.mxu0 0.0
  %7268 = vmatpush1.msra.mxu0 0.0
  %7269 = vmatprep.subr.mxu0 0.0
  %7270 = vmatpush1.msra.mxu0 0.0
  %7271 = vmatprep.subr.mxu0 0.0
  %7272 = vmatpush1.msra.mxu0 0.0
  %7273 = vmatprep.subr.mxu0 0.0
  %7274 = vmatpush1.msra.mxu0 0.0
  %7275 = vmatprep.subr.mxu0 0.0
  %7276 = vmatpush1.msra.mxu0 0.0
  %7277 = vmatprep.subr.mxu0 0.0
  %7278 = vmatpush1.msra.mxu0 0.0
  %7279 = vmatprep.subr.mxu0 0.0
  %7280 = vmatpush1.msra.mxu0 0.0
  %7281 = vmatprep.subr.mxu0 0.0
  %7282 = vmatpush1.msra.mxu0 0.0
  %7283 = vmatprep.subr.mxu0 0.0
  %7284 = vmatpush1.msra.mxu0 0.0
  %7285 = vmatprep.subr.mxu0 0.0
  %7286 = vmatpush1.msra.mxu0 0.0
  %7287 = vmatprep.subr.mxu0 0.0
  %7288 = vmatpush1.msra.mxu0 0.0
  %7289 = vmatprep.subr.mxu0 0.0
  %7290 = vmatpush1.msra.mxu0 0.0
  %7291 = vmatprep.subr.mxu0 0.0
  %7292 = vmatpush1.msra.mxu0 0.0
  %7293 = vmatprep.subr.mxu0 0.0
  %7294 = vmatpush1.msra.mxu0 0.0
  %7295 = vmatprep.subr.mxu0 0.0
  %7296 = vmatpush1.msra.mxu0 0.0
  %7297 = vmatprep.subr.mxu0 0.0
  %7298 = vmatpush1.msra.mxu0 0.0
  %7299 = vmatprep.subr.mxu0 0.0
  %7300 = vmatpush1.msra.mxu0 0.0
  %7301 = vmatprep.subr.mxu0 0.0
  %7302 = vmatpush1.msra.mxu0 0.0
  %7303 = vmatprep.subr.mxu0 0.0
  %7304 = vmatpush1.msra.mxu0 0.0
  %7305 = vmatprep.subr.mxu0 0.0
  %7306 = vmatpush1.msra.mxu0 0.0
  %7307 = vmatprep.mubr.f32.mxu0 0.0
  %7308 = vmatmul.mubr.f32.gmra.mrb[0].mxu0 %v7241
  %v7309 = vpop.f32.mrb[0].mxu0
  %v7310 = vadd.f32 0.0, %v7309
  %v7311 = vpop.f32.mrb[0].mxu0
  %7312 = vdwg.mxu0
  %v7314 = vsel %vm5075, %v5695, 0
  %7316 = vmatprep.subr.mxu0 0.0
  %7317 = vmatpush1.msra.mxu0 %v166
  %7318 = vmatprep.subr.mxu0 0.0
  %7319 = vmatpush1.msra.mxu0 0.0
  %7320 = vmatprep.subr.mxu0 0.0
  %7321 = vmatpush1.msra.mxu0 0.0
  %7322 = vmatprep.subr.mxu0 0.0
  %7323 = vmatpush1.msra.mxu0 0.0
  %7324 = vmatprep.subr.mxu0 0.0
  %7325 = vmatpush1.msra.mxu0 0.0
  %7326 = vmatprep.subr.mxu0 0.0
  %7327 = vmatpush1.msra.mxu0 0.0
  %7328 = vmatprep.subr.mxu0 0.0
  %7329 = vmatpush1.msra.mxu0 0.0
  %7330 = vmatprep.subr.mxu0 0.0
  %7331 = vmatpush1.msra.mxu0 0.0
  %7332 = vmatprep.subr.mxu0 0.0
  %7333 = vmatpush1.msra.mxu0 0.0
  %7334 = vmatprep.subr.mxu0 0.0
  %7335 = vmatpush1.msra.mxu0 0.0
  %7336 = vmatprep.subr.mxu0 0.0
  %7337 = vmatpush1.msra.mxu0 0.0
  %7338 = vmatprep.subr.mxu0 0.0
  %7339 = vmatpush1.msra.mxu0 0.0
  %7340 = vmatprep.subr.mxu0 0.0
  %7341 = vmatpush1.msra.mxu0 0.0
  %7342 = vmatprep.subr.mxu0 0.0
  %7343 = vmatpush1.msra.mxu0 0.0
  %7344 = vmatprep.subr.mxu0 0.0
  %7345 = vmatpush1.msra.mxu0 0.0
  %7346 = vmatprep.subr.mxu0 0.0
  %7347 = vmatpush1.msra.mxu0 0.0
  %7348 = vmatprep.subr.mxu0 0.0
  %7349 = vmatpush1.msra.mxu0 0.0
  %7350 = vmatprep.subr.mxu0 0.0
  %7351 = vmatpush1.msra.mxu0 0.0
  %7352 = vmatprep.subr.mxu0 0.0
  %7353 = vmatpush1.msra.mxu0 0.0
  %7354 = vmatprep.subr.mxu0 0.0
  %7355 = vmatpush1.msra.mxu0 0.0
  %7356 = vmatprep.subr.mxu0 0.0
  %7357 = vmatpush1.msra.mxu0 0.0
  %7358 = vmatprep.subr.mxu0 0.0
  %7359 = vmatpush1.msra.mxu0 0.0
  %7360 = vmatprep.subr.mxu0 0.0
  %7361 = vmatpush1.msra.mxu0 0.0
  %7362 = vmatprep.subr.mxu0 0.0
  %7363 = vmatpush1.msra.mxu0 0.0
  %7364 = vmatprep.subr.mxu0 0.0
  %7365 = vmatpush1.msra.mxu0 0.0
  %7366 = vmatprep.subr.mxu0 0.0
  %7367 = vmatpush1.msra.mxu0 0.0
  %7368 = vmatprep.subr.mxu0 0.0
  %7369 = vmatpush1.msra.mxu0 0.0
  %7370 = vmatprep.subr.mxu0 0.0
  %7371 = vmatpush1.msra.mxu0 0.0
  %7372 = vmatprep.subr.mxu0 0.0
  %7373 = vmatpush1.msra.mxu0 0.0
  %7374 = vmatprep.subr.mxu0 0.0
  %7375 = vmatpush1.msra.mxu0 0.0
  %7376 = vmatprep.subr.mxu0 0.0
  %7377 = vmatpush1.msra.mxu0 0.0
  %7378 = vmatprep.subr.mxu0 0.0
  %7379 = vmatpush1.msra.mxu0 0.0
  %7380 = vmatprep.mubr.f32.mxu0 0.0
  %7381 = vmatmul.mubr.f32.gmra.mrb[0].mxu0 %v7314
  %v7382 = vpop.f32.mrb[0].mxu0
  %v7383 = vadd.f32 0.0, %v7382
  %v7384 = vpop.f32.mrb[0].mxu0
  %7385 = vdwg.mxu0
  %v7387 = vsel %vm5075, %v5697, 0
  %7389 = vmatprep.subr.mxu0 0.0
  %7390 = vmatpush1.msra.mxu0 %v167
  %7391 = vmatprep.subr.mxu0 0.0
  %7392 = vmatpush1.msra.mxu0 0.0
  %7393 = vmatprep.subr.mxu0 0.0
  %7394 = vmatpush1.msra.mxu0 0.0
  %7395 = vmatprep.subr.mxu0 0.0
  %7396 = vmatpush1.msra.mxu0 0.0
  %7397 = vmatprep.subr.mxu0 0.0
  %7398 = vmatpush1.msra.mxu0 0.0
  %7399 = vmatprep.subr.mxu0 0.0
  %7400 = vmatpush1.msra.mxu0 0.0
  %7401 = vmatprep.subr.mxu0 0.0
  %7402 = vmatpush1.msra.mxu0 0.0
  %7403 = vmatprep.subr.mxu0 0.0
  %7404 = vmatpush1.msra.mxu0 0.0
  %7405 = vmatprep.subr.mxu0 0.0
  %7406 = vmatpush1.msra.mxu0 0.0
  %7407 = vmatprep.subr.mxu0 0.0
  %7408 = vmatpush1.msra.mxu0 0.0
  %7409 = vmatprep.subr.mxu0 0.0
  %7410 = vmatpush1.msra.mxu0 0.0
  %7411 = vmatprep.subr.mxu0 0.0
  %7412 = vmatpush1.msra.mxu0 0.0
  %7413 = vmatprep.subr.mxu0 0.0
  %7414 = vmatpush1.msra.mxu0 0.0
  %7415 = vmatprep.subr.mxu0 0.0
  %7416 = vmatpush1.msra.mxu0 0.0
  %7417 = vmatprep.subr.mxu0 0.0
  %7418 = vmatpush1.msra.mxu0 0.0
  %7419 = vmatprep.subr.mxu0 0.0
  %7420 = vmatpush1.msra.mxu0 0.0
  %7421 = vmatprep.subr.mxu0 0.0
  %7422 = vmatpush1.msra.mxu0 0.0
  %7423 = vmatprep.subr.mxu0 0.0
  %7424 = vmatpush1.msra.mxu0 0.0
  %7425 = vmatprep.subr.mxu0 0.0
  %7426 = vmatpush1.msra.mxu0 0.0
  %7427 = vmatprep.subr.mxu0 0.0
  %7428 = vmatpush1.msra.mxu0 0.0
  %7429 = vmatprep.subr.mxu0 0.0
  %7430 = vmatpush1.msra.mxu0 0.0
  %7431 = vmatprep.subr.mxu0 0.0
  %7432 = vmatpush1.msra.mxu0 0.0
  %7433 = vmatprep.subr.mxu0 0.0
  %7434 = vmatpush1.msra.mxu0 0.0
  %7435 = vmatprep.subr.mxu0 0.0
  %7436 = vmatpush1.msra.mxu0 0.0
  %7437 = vmatprep.subr.mxu0 0.0
  %7438 = vmatpush1.msra.mxu0 0.0
  %7439 = vmatprep.subr.mxu0 0.0
  %7440 = vmatpush1.msra.mxu0 0.0
  %7441 = vmatprep.subr.mxu0 0.0
  %7442 = vmatpush1.msra.mxu0 0.0
  %7443 = vmatprep.subr.mxu0 0.0
  %7444 = vmatpush1.msra.mxu0 0.0
  %7445 = vmatprep.subr.mxu0 0.0
  %7446 = vmatpush1.msra.mxu0 0.0
  %7447 = vmatprep.subr.mxu0 0.0
  %7448 = vmatpush1.msra.mxu0 0.0
  %7449 = vmatprep.subr.mxu0 0.0
  %7450 = vmatpush1.msra.mxu0 0.0
  %7451 = vmatprep.subr.mxu0 0.0
  %7452 = vmatpush1.msra.mxu0 0.0
  %7453 = vmatprep.mubr.f32.mxu0 0.0
  %7454 = vmatmul.mubr.f32.gmra.mrb[0].mxu0 %v7387
  %v7455 = vpop.f32.mrb[0].mxu0
  %v7456 = vadd.f32 0.0, %v7455
  %v7457 = vpop.f32.mrb[0].mxu0
  %7458 = vdwg.mxu0
  %v7460 = vsel %vm5075, %v5699, 0
  %7462 = vmatprep.subr.mxu0 0.0
  %7463 = vmatpush1.msra.mxu0 %v168
  %7464 = vmatprep.subr.mxu0 0.0
  %7465 = vmatpush1.msra.mxu0 0.0
  %7466 = vmatprep.subr.mxu0 0.0
  %7467 = vmatpush1.msra.mxu0 0.0
  %7468 = vmatprep.subr.mxu0 0.0
  %7469 = vmatpush1.msra.mxu0 0.0
  %7470 = vmatprep.subr.mxu0 0.0
  %7471 = vmatpush1.msra.mxu0 0.0
  %7472 = vmatprep.subr.mxu0 0.0
  %7473 = vmatpush1.msra.mxu0 0.0
  %7474 = vmatprep.subr.mxu0 0.0
  %7475 = vmatpush1.msra.mxu0 0.0
  %7476 = vmatprep.subr.mxu0 0.0
  %7477 = vmatpush1.msra.mxu0 0.0
  %7478 = vmatprep.subr.mxu0 0.0
  %7479 = vmatpush1.msra.mxu0 0.0
  %7480 = vmatprep.subr.mxu0 0.0
  %7481 = vmatpush1.msra.mxu0 0.0
  %7482 = vmatprep.subr.mxu0 0.0
  %7483 = vmatpush1.msra.mxu0 0.0
  %7484 = vmatprep.subr.mxu0 0.0
  %7485 = vmatpush1.msra.mxu0 0.0
  %7486 = vmatprep.subr.mxu0 0.0
  %7487 = vmatpush1.msra.mxu0 0.0
  %7488 = vmatprep.subr.mxu0 0.0
  %7489 = vmatpush1.msra.mxu0 0.0
  %7490 = vmatprep.subr.mxu0 0.0
  %7491 = vmatpush1.msra.mxu0 0.0
  %7492 = vmatprep.subr.mxu0 0.0
  %7493 = vmatpush1.msra.mxu0 0.0
  %7494 = vmatprep.subr.mxu0 0.0
  %7495 = vmatpush1.msra.mxu0 0.0
  %7496 = vmatprep.subr.mxu0 0.0
  %7497 = vmatpush1.msra.mxu0 0.0
  %7498 = vmatprep.subr.mxu0 0.0
  %7499 = vmatpush1.msra.mxu0 0.0
  %7500 = vmatprep.subr.mxu0 0.0
  %7501 = vmatpush1.msra.mxu0 0.0
  %7502 = vmatprep.subr.mxu0 0.0
  %7503 = vmatpush1.msra.mxu0 0.0
  %7504 = vmatprep.subr.mxu0 0.0
  %7505 = vmatpush1.msra.mxu0 0.0
  %7506 = vmatprep.subr.mxu0 0.0
  %7507 = vmatpush1.msra.mxu0 0.0
  %7508 = vmatprep.subr.mxu0 0.0
  %7509 = vmatpush1.msra.mxu0 0.0
  %7510 = vmatprep.subr.mxu0 0.0
  %7511 = vmatpush1.msra.mxu0 0.0
  %7512 = vmatprep.subr.mxu0 0.0
  %7513 = vmatpush1.msra.mxu0 0.0
  %7514 = vmatprep.subr.mxu0 0.0
  %7515 = vmatpush1.msra.mxu0 0.0
  %7516 = vmatprep.subr.mxu0 0.0
  %7517 = vmatpush1.msra.mxu0 0.0
  %7518 = vmatprep.subr.mxu0 0.0
  %7519 = vmatpush1.msra.mxu0 0.0
  %7520 = vmatprep.subr.mxu0 0.0
  %7521 = vmatpush1.msra.mxu0 0.0
  %7522 = vmatprep.subr.mxu0 0.0
  %7523 = vmatpush1.msra.mxu0 0.0
  %7524 = vmatprep.subr.mxu0 0.0
  %7525 = vmatpush1.msra.mxu0 0.0
  %7526 = vmatprep.mubr.f32.mxu0 0.0
  %7527 = vmatmul.mubr.f32.gmra.mrb[0].mxu0 %v7460
  %v7528 = vpop.f32.mrb[0].mxu0
  %v7529 = vadd.f32 0.0, %v7528
  %v7530 = vpop.f32.mrb[0].mxu0
  %7531 = vdwg.mxu0
  %v7533 = vsel %vm5075, %v5701, 0
  %7535 = vmatprep.subr.mxu0 0.0
  %7536 = vmatpush1.msra.mxu0 %v169
  %7537 = vmatprep.subr.mxu0 0.0
  %7538 = vmatpush1.msra.mxu0 0.0
  %7539 = vmatprep.subr.mxu0 0.0
  %7540 = vmatpush1.msra.mxu0 0.0
  %7541 = vmatprep.subr.mxu0 0.0
  %7542 = vmatpush1.msra.mxu0 0.0
  %7543 = vmatprep.subr.mxu0 0.0
  %7544 = vmatpush1.msra.mxu0 0.0
  %7545 = vmatprep.subr.mxu0 0.0
  %7546 = vmatpush1.msra.mxu0 0.0
  %7547 = vmatprep.subr.mxu0 0.0
  %7548 = vmatpush1.msra.mxu0 0.0
  %7549 = vmatprep.subr.mxu0 0.0
  %7550 = vmatpush1.msra.mxu0 0.0
  %7551 = vmatprep.subr.mxu0 0.0
  %7552 = vmatpush1.msra.mxu0 0.0
  %7553 = vmatprep.subr.mxu0 0.0
  %7554 = vmatpush1.msra.mxu0 0.0
  %7555 = vmatprep.subr.mxu0 0.0
  %7556 = vmatpush1.msra.mxu0 0.0
  %7557 = vmatprep.subr.mxu0 0.0
  %7558 = vmatpush1.msra.mxu0 0.0
  %7559 = vmatprep.subr.mxu0 0.0
  %7560 = vmatpush1.msra.mxu0 0.0
  %7561 = vmatprep.subr.mxu0 0.0
  %7562 = vmatpush1.msra.mxu0 0.0
  %7563 = vmatprep.subr.mxu0 0.0
  %7564 = vmatpush1.msra.mxu0 0.0
  %7565 = vmatprep.subr.mxu0 0.0
  %7566 = vmatpush1.msra.mxu0 0.0
  %7567 = vmatprep.subr.mxu0 0.0
  %7568 = vmatpush1.msra.mxu0 0.0
  %7569 = vmatprep.subr.mxu0 0.0
  %7570 = vmatpush1.msra.mxu0 0.0
  %7571 = vmatprep.subr.mxu0 0.0
  %7572 = vmatpush1.msra.mxu0 0.0
  %7573 = vmatprep.subr.mxu0 0.0
  %7574 = vmatpush1.msra.mxu0 0.0
  %7575 = vmatprep.subr.mxu0 0.0
  %7576 = vmatpush1.msra.mxu0 0.0
  %7577 = vmatprep.subr.mxu0 0.0
  %7578 = vmatpush1.msra.mxu0 0.0
  %7579 = vmatprep.subr.mxu0 0.0
  %7580 = vmatpush1.msra.mxu0 0.0
  %7581 = vmatprep.subr.mxu0 0.0
  %7582 = vmatpush1.msra.mxu0 0.0
  %7583 = vmatprep.subr.mxu0 0.0
  %7584 = vmatpush1.msra.mxu0 0.0
  %7585 = vmatprep.subr.mxu0 0.0
  %7586 = vmatpush1.msra.mxu0 0.0
  %7587 = vmatprep.subr.mxu0 0.0
  %7588 = vmatpush1.msra.mxu0 0.0
  %7589 = vmatprep.subr.mxu0 0.0
  %7590 = vmatpush1.msra.mxu0 0.0
  %7591 = vmatprep.subr.mxu0 0.0
  %7592 = vmatpush1.msra.mxu0 0.0
  %7593 = vmatprep.subr.mxu0 0.0
  %7594 = vmatpush1.msra.mxu0 0.0
  %7595 = vmatprep.subr.mxu0 0.0
  %7596 = vmatpush1.msra.mxu0 0.0
  %7597 = vmatprep.subr.mxu0 0.0
  %7598 = vmatpush1.msra.mxu0 0.0
  %7599 = vmatprep.mubr.f32.mxu0 0.0
  %7600 = vmatmul.mubr.f32.gmra.mrb[0].mxu0 %v7533
  %v7601 = vpop.f32.mrb[0].mxu0
  %v7602 = vadd.f32 0.0, %v7601
  %v7603 = vpop.f32.mrb[0].mxu0
  %7604 = vdwg.mxu0
  %v7606 = vsel %vm5075, %v5703, 0
  %7608 = vmatprep.subr.mxu0 0.0
  %7609 = vmatpush1.msra.mxu0 %v170
  %7610 = vmatprep.subr.mxu0 0.0
  %7611 = vmatpush1.msra.mxu0 0.0
  %7612 = vmatprep.subr.mxu0 0.0
  %7613 = vmatpush1.msra.mxu0 0.0
  %7614 = vmatprep.subr.mxu0 0.0
  %7615 = vmatpush1.msra.mxu0 0.0
  %7616 = vmatprep.subr.mxu0 0.0
  %7617 = vmatpush1.msra.mxu0 0.0
  %7618 = vmatprep.subr.mxu0 0.0
  %7619 = vmatpush1.msra.mxu0 0.0
  %7620 = vmatprep.subr.mxu0 0.0
  %7621 = vmatpush1.msra.mxu0 0.0
  %7622 = vmatprep.subr.mxu0 0.0
  %7623 = vmatpush1.msra.mxu0 0.0
  %7624 = vmatprep.subr.mxu0 0.0
  %7625 = vmatpush1.msra.mxu0 0.0
  %7626 = vmatprep.subr.mxu0 0.0
  %7627 = vmatpush1.msra.mxu0 0.0
  %7628 = vmatprep.subr.mxu0 0.0
  %7629 = vmatpush1.msra.mxu0 0.0
  %7630 = vmatprep.subr.mxu0 0.0
  %7631 = vmatpush1.msra.mxu0 0.0
  %7632 = vmatprep.subr.mxu0 0.0
  %7633 = vmatpush1.msra.mxu0 0.0
  %7634 = vmatprep.subr.mxu0 0.0
  %7635 = vmatpush1.msra.mxu0 0.0
  %7636 = vmatprep.subr.mxu0 0.0
  %7637 = vmatpush1.msra.mxu0 0.0
  %7638 = vmatprep.subr.mxu0 0.0
  %7639 = vmatpush1.msra.mxu0 0.0
  %7640 = vmatprep.subr.mxu0 0.0
  %7641 = vmatpush1.msra.mxu0 0.0
  %7642 = vmatprep.subr.mxu0 0.0
  %7643 = vmatpush1.msra.mxu0 0.0
  %7644 = vmatprep.subr.mxu0 0.0
  %7645 = vmatpush1.msra.mxu0 0.0
  %7646 = vmatprep.subr.mxu0 0.0
  %7647 = vmatpush1.msra.mxu0 0.0
  %7648 = vmatprep.subr.mxu0 0.0
  %7649 = vmatpush1.msra.mxu0 0.0
  %7650 = vmatprep.subr.mxu0 0.0
  %7651 = vmatpush1.msra.mxu0 0.0
  %7652 = vmatprep.subr.mxu0 0.0
  %7653 = vmatpush1.msra.mxu0 0.0
  %7654 = vmatprep.subr.mxu0 0.0
  %7655 = vmatpush1.msra.mxu0 0.0
  %7656 = vmatprep.subr.mxu0 0.0
  %7657 = vmatpush1.msra.mxu0 0.0
  %7658 = vmatprep.subr.mxu0 0.0
  %7659 = vmatpush1.msra.mxu0 0.0
  %7660 = vmatprep.subr.mxu0 0.0
  %7661 = vmatpush1.msra.mxu0 0.0
  %7662 = vmatprep.subr.mxu0 0.0
  %7663 = vmatpush1.msra.mxu0 0.0
  %7664 = vmatprep.subr.mxu0 0.0
  %7665 = vmatpush1.msra.mxu0 0.0
  %7666 = vmatprep.subr.mxu0 0.0
  %7667 = vmatpush1.msra.mxu0 0.0
  %7668 = vmatprep.subr.mxu0 0.0
  %7669 = vmatpush1.msra.mxu0 0.0
  %7670 = vmatprep.subr.mxu0 0.0
  %7671 = vmatpush1.msra.mxu0 0.0
  %7672 = vmatprep.mubr.f32.mxu0 0.0
  %7673 = vmatmul.mubr.f32.gmra.mrb[0].mxu0 %v7606
  %v7674 = vpop.f32.mrb[0].mxu0
  %v7675 = vadd.f32 0.0, %v7674
  %v7676 = vpop.f32.mrb[0].mxu0
  %7677 = vdwg.mxu0
  %v7679 = vsel %vm5075, %v5705, 0
  %7681 = vmatprep.subr.mxu0 0.0
  %7682 = vmatpush1.msra.mxu0 %v171
  %7683 = vmatprep.subr.mxu0 0.0
  %7684 = vmatpush1.msra.mxu0 0.0
  %7685 = vmatprep.subr.mxu0 0.0
  %7686 = vmatpush1.msra.mxu0 0.0
  %7687 = vmatprep.subr.mxu0 0.0
  %7688 = vmatpush1.msra.mxu0 0.0
  %7689 = vmatprep.subr.mxu0 0.0
  %7690 = vmatpush1.msra.mxu0 0.0
  %7691 = vmatprep.subr.mxu0 0.0
  %7692 = vmatpush1.msra.mxu0 0.0
  %7693 = vmatprep.subr.mxu0 0.0
  %7694 = vmatpush1.msra.mxu0 0.0
  %7695 = vmatprep.subr.mxu0 0.0
  %7696 = vmatpush1.msra.mxu0 0.0
  %7697 = vmatprep.subr.mxu0 0.0
  %7698 = vmatpush1.msra.mxu0 0.0
  %7699 = vmatprep.subr.mxu0 0.0
  %7700 = vmatpush1.msra.mxu0 0.0
  %7701 = vmatprep.subr.mxu0 0.0
  %7702 = vmatpush1.msra.mxu0 0.0
  %7703 = vmatprep.subr.mxu0 0.0
  %7704 = vmatpush1.msra.mxu0 0.0
  %7705 = vmatprep.subr.mxu0 0.0
  %7706 = vmatpush1.msra.mxu0 0.0
  %7707 = vmatprep.subr.mxu0 0.0
  %7708 = vmatpush1.msra.mxu0 0.0
  %7709 = vmatprep.subr.mxu0 0.0
  %7710 = vmatpush1.msra.mxu0 0.0
  %7711 = vmatprep.subr.mxu0 0.0
  %7712 = vmatpush1.msra.mxu0 0.0
  %7713 = vmatprep.subr.mxu0 0.0
  %7714 = vmatpush1.msra.mxu0 0.0
  %7715 = vmatprep.subr.mxu0 0.0
  %7716 = vmatpush1.msra.mxu0 0.0
  %7717 = vmatprep.subr.mxu0 0.0
  %7718 = vmatpush1.msra.mxu0 0.0
  %7719 = vmatprep.subr.mxu0 0.0
  %7720 = vmatpush1.msra.mxu0 0.0
  %7721 = vmatprep.subr.mxu0 0.0
  %7722 = vmatpush1.msra.mxu0 0.0
  %7723 = vmatprep.subr.mxu0 0.0
  %7724 = vmatpush1.msra.mxu0 0.0
  %7725 = vmatprep.subr.mxu0 0.0
  %7726 = vmatpush1.msra.mxu0 0.0
  %7727 = vmatprep.subr.mxu0 0.0
  %7728 = vmatpush1.msra.mxu0 0.0
  %7729 = vmatprep.subr.mxu0 0.0
  %7730 = vmatpush1.msra.mxu0 0.0
  %7731 = vmatprep.subr.mxu0 0.0
  %7732 = vmatpush1.msra.mxu0 0.0
  %7733 = vmatprep.subr.mxu0 0.0
  %7734 = vmatpush1.msra.mxu0 0.0
  %7735 = vmatprep.subr.mxu0 0.0
  %7736 = vmatpush1.msra.mxu0 0.0
  %7737 = vmatprep.subr.mxu0 0.0
  %7738 = vmatpush1.msra.mxu0 0.0
  %7739 = vmatprep.subr.mxu0 0.0
  %7740 = vmatpush1.msra.mxu0 0.0
  %7741 = vmatprep.subr.mxu0 0.0
  %7742 = vmatpush1.msra.mxu0 0.0
  %7743 = vmatprep.subr.mxu0 0.0
  %7744 = vmatpush1.msra.mxu0 0.0
  %7745 = vmatprep.mubr.f32.mxu0 0.0
  %7746 = vmatmul.mubr.f32.gmra.mrb[0].mxu0 %v7679
  %v7747 = vpop.f32.mrb[0].mxu0
  %v7748 = vadd.f32 0.0, %v7747
  %v7749 = vpop.f32.mrb[0].mxu0
  %7750 = vdwg.mxu0
  %v7752 = vsel %vm5075, %v5707, 0
  %7754 = vmatprep.subr.mxu0 0.0
  %7755 = vmatpush1.msra.mxu0 %v172
  %7756 = vmatprep.subr.mxu0 0.0
  %7757 = vmatpush1.msra.mxu0 0.0
  %7758 = vmatprep.subr.mxu0 0.0
  %7759 = vmatpush1.msra.mxu0 0.0
  %7760 = vmatprep.subr.mxu0 0.0
  %7761 = vmatpush1.msra.mxu0 0.0
  %7762 = vmatprep.subr.mxu0 0.0
  %7763 = vmatpush1.msra.mxu0 0.0
  %7764 = vmatprep.subr.mxu0 0.0
  %7765 = vmatpush1.msra.mxu0 0.0
  %7766 = vmatprep.subr.mxu0 0.0
  %7767 = vmatpush1.msra.mxu0 0.0
  %7768 = vmatprep.subr.mxu0 0.0
  %7769 = vmatpush1.msra.mxu0 0.0
  %7770 = vmatprep.subr.mxu0 0.0
  %7771 = vmatpush1.msra.mxu0 0.0
  %7772 = vmatprep.subr.mxu0 0.0
  %7773 = vmatpush1.msra.mxu0 0.0
  %7774 = vmatprep.subr.mxu0 0.0
  %7775 = vmatpush1.msra.mxu0 0.0
  %7776 = vmatprep.subr.mxu0 0.0
  %7777 = vmatpush1.msra.mxu0 0.0
  %7778 = vmatprep.subr.mxu0 0.0
  %7779 = vmatpush1.msra.mxu0 0.0
  %7780 = vmatprep.subr.mxu0 0.0
  %7781 = vmatpush1.msra.mxu0 0.0
  %7782 = vmatprep.subr.mxu0 0.0
  %7783 = vmatpush1.msra.mxu0 0.0
  %7784 = vmatprep.subr.mxu0 0.0
  %7785 = vmatpush1.msra.mxu0 0.0
  %7786 = vmatprep.subr.mxu0 0.0
  %7787 = vmatpush1.msra.mxu0 0.0
  %7788 = vmatprep.subr.mxu0 0.0
  %7789 = vmatpush1.msra.mxu0 0.0
  %7790 = vmatprep.subr.mxu0 0.0
  %7791 = vmatpush1.msra.mxu0 0.0
  %7792 = vmatprep.subr.mxu0 0.0
  %7793 = vmatpush1.msra.mxu0 0.0
  %7794 = vmatprep.subr.mxu0 0.0
  %7795 = vmatpush1.msra.mxu0 0.0
  %7796 = vmatprep.subr.mxu0 0.0
  %7797 = vmatpush1.msra.mxu0 0.0
  %7798 = vmatprep.subr.mxu0 0.0
  %7799 = vmatpush1.msra.mxu0 0.0
  %7800 = vmatprep.subr.mxu0 0.0
  %7801 = vmatpush1.msra.mxu0 0.0
  %7802 = vmatprep.subr.mxu0 0.0
  %7803 = vmatpush1.msra.mxu0 0.0
  %7804 = vmatprep.subr.mxu0 0.0
  %7805 = vmatpush1.msra.mxu0 0.0
  %7806 = vmatprep.subr.mxu0 0.0
  %7807 = vmatpush1.msra.mxu0 0.0
  %7808 = vmatprep.subr.mxu0 0.0
  %7809 = vmatpush1.msra.mxu0 0.0
  %7810 = vmatprep.subr.mxu0 0.0
  %7811 = vmatpush1.msra.mxu0 0.0
  %7812 = vmatprep.subr.mxu0 0.0
  %7813 = vmatpush1.msra.mxu0 0.0
  %7814 = vmatprep.subr.mxu0 0.0
  %7815 = vmatpush1.msra.mxu0 0.0
  %7816 = vmatprep.subr.mxu0 0.0
  %7817 = vmatpush1.msra.mxu0 0.0
  %7818 = vmatprep.mubr.f32.mxu0 0.0
  %7819 = vmatmul.mubr.f32.gmra.mrb[0].mxu0 %v7752
  %v7820 = vpop.f32.mrb[0].mxu0
  %v7821 = vadd.f32 0.0, %v7820
  %v7822 = vpop.f32.mrb[0].mxu0
  %7823 = vdwg.mxu0
  %v7825 = vsel %vm5075, %v5709, 0
  %7827 = vmatprep.subr.mxu0 0.0
  %7828 = vmatpush1.msra.mxu0 %v173
  %7829 = vmatprep.subr.mxu0 0.0
  %7830 = vmatpush1.msra.mxu0 0.0
  %7831 = vmatprep.subr.mxu0 0.0
  %7832 = vmatpush1.msra.mxu0 0.0
  %7833 = vmatprep.subr.mxu0 0.0
  %7834 = vmatpush1.msra.mxu0 0.0
  %7835 = vmatprep.subr.mxu0 0.0
  %7836 = vmatpush1.msra.mxu0 0.0
  %7837 = vmatprep.subr.mxu0 0.0
  %7838 = vmatpush1.msra.mxu0 0.0
  %7839 = vmatprep.subr.mxu0 0.0
  %7840 = vmatpush1.msra.mxu0 0.0
  %7841 = vmatprep.subr.mxu0 0.0
  %7842 = vmatpush1.msra.mxu0 0.0
  %7843 = vmatprep.subr.mxu0 0.0
  %7844 = vmatpush1.msra.mxu0 0.0
  %7845 = vmatprep.subr.mxu0 0.0
  %7846 = vmatpush1.msra.mxu0 0.0
  %7847 = vmatprep.subr.mxu0 0.0
  %7848 = vmatpush1.msra.mxu0 0.0
  %7849 = vmatprep.subr.mxu0 0.0
  %7850 = vmatpush1.msra.mxu0 0.0
  %7851 = vmatprep.subr.mxu0 0.0
  %7852 = vmatpush1.msra.mxu0 0.0
  %7853 = vmatprep.subr.mxu0 0.0
  %7854 = vmatpush1.msra.mxu0 0.0
  %7855 = vmatprep.subr.mxu0 0.0
  %7856 = vmatpush1.msra.mxu0 0.0
  %7857 = vmatprep.subr.mxu0 0.0
  %7858 = vmatpush1.msra.mxu0 0.0
  %7859 = vmatprep.subr.mxu0 0.0
  %7860 = vmatpush1.msra.mxu0 0.0
  %7861 = vmatprep.subr.mxu0 0.0
  %7862 = vmatpush1.msra.mxu0 0.0
  %7863 = vmatprep.subr.mxu0 0.0
  %7864 = vmatpush1.msra.mxu0 0.0
  %7865 = vmatprep.subr.mxu0 0.0
  %7866 = vmatpush1.msra.mxu0 0.0
  %7867 = vmatprep.subr.mxu0 0.0
  %7868 = vmatpush1.msra.mxu0 0.0
  %7869 = vmatprep.subr.mxu0 0.0
  %7870 = vmatpush1.msra.mxu0 0.0
  %7871 = vmatprep.subr.mxu0 0.0
  %7872 = vmatpush1.msra.mxu0 0.0
  %7873 = vmatprep.subr.mxu0 0.0
  %7874 = vmatpush1.msra.mxu0 0.0
  %7875 = vmatprep.subr.mxu0 0.0
  %7876 = vmatpush1.msra.mxu0 0.0
  %7877 = vmatprep.subr.mxu0 0.0
  %7878 = vmatpush1.msra.mxu0 0.0
  %7879 = vmatprep.subr.mxu0 0.0
  %7880 = vmatpush1.msra.mxu0 0.0
  %7881 = vmatprep.subr.mxu0 0.0
  %7882 = vmatpush1.msra.mxu0 0.0
  %7883 = vmatprep.subr.mxu0 0.0
  %7884 = vmatpush1.msra.mxu0 0.0
  %7885 = vmatprep.subr.mxu0 0.0
  %7886 = vmatpush1.msra.mxu0 0.0
  %7887 = vmatprep.subr.mxu0 0.0
  %7888 = vmatpush1.msra.mxu0 0.0
  %7889 = vmatprep.subr.mxu0 0.0
  %7890 = vmatpush1.msra.mxu0 0.0
  %7891 = vmatprep.mubr.f32.mxu0 0.0
  %7892 = vmatmul.mubr.f32.gmra.mrb[0].mxu0 %v7825
  %v7893 = vpop.f32.mrb[0].mxu0
  %v7894 = vadd.f32 0.0, %v7893
  %v7895 = vpop.f32.mrb[0].mxu0
  %7896 = vdwg.mxu0
  %v7898 = vsel %vm5075, %v5711, 0
  %7900 = vmatprep.subr.mxu0 0.0
  %7901 = vmatpush1.msra.mxu0 %v174
  %7902 = vmatprep.subr.mxu0 0.0
  %7903 = vmatpush1.msra.mxu0 0.0
  %7904 = vmatprep.subr.mxu0 0.0
  %7905 = vmatpush1.msra.mxu0 0.0
  %7906 = vmatprep.subr.mxu0 0.0
  %7907 = vmatpush1.msra.mxu0 0.0
  %7908 = vmatprep.subr.mxu0 0.0
  %7909 = vmatpush1.msra.mxu0 0.0
  %7910 = vmatprep.subr.mxu0 0.0
  %7911 = vmatpush1.msra.mxu0 0.0
  %7912 = vmatprep.subr.mxu0 0.0
  %7913 = vmatpush1.msra.mxu0 0.0
  %7914 = vmatprep.subr.mxu0 0.0
  %7915 = vmatpush1.msra.mxu0 0.0
  %7916 = vmatprep.subr.mxu0 0.0
  %7917 = vmatpush1.msra.mxu0 0.0
  %7918 = vmatprep.subr.mxu0 0.0
  %7919 = vmatpush1.msra.mxu0 0.0
  %7920 = vmatprep.subr.mxu0 0.0
  %7921 = vmatpush1.msra.mxu0 0.0
  %7922 = vmatprep.subr.mxu0 0.0
  %7923 = vmatpush1.msra.mxu0 0.0
  %7924 = vmatprep.subr.mxu0 0.0
  %7925 = vmatpush1.msra.mxu0 0.0
  %7926 = vmatprep.subr.mxu0 0.0
  %7927 = vmatpush1.msra.mxu0 0.0
  %7928 = vmatprep.subr.mxu0 0.0
  %7929 = vmatpush1.msra.mxu0 0.0
  %7930 = vmatprep.subr.mxu0 0.0
  %7931 = vmatpush1.msra.mxu0 0.0
  %7932 = vmatprep.subr.mxu0 0.0
  %7933 = vmatpush1.msra.mxu0 0.0
  %7934 = vmatprep.subr.mxu0 0.0
  %7935 = vmatpush1.msra.mxu0 0.0
  %7936 = vmatprep.subr.mxu0 0.0
  %7937 = vmatpush1.msra.mxu0 0.0
  %7938 = vmatprep.subr.mxu0 0.0
  %7939 = vmatpush1.msra.mxu0 0.0
  %7940 = vmatprep.subr.mxu0 0.0
  %7941 = vmatpush1.msra.mxu0 0.0
  %7942 = vmatprep.subr.mxu0 0.0
  %7943 = vmatpush1.msra.mxu0 0.0
  %7944 = vmatprep.subr.mxu0 0.0
  %7945 = vmatpush1.msra.mxu0 0.0
  %7946 = vmatprep.subr.mxu0 0.0
  %7947 = vmatpush1.msra.mxu0 0.0
  %7948 = vmatprep.subr.mxu0 0.0
  %7949 = vmatpush1.msra.mxu0 0.0
  %7950 = vmatprep.subr.mxu0 0.0
  %7951 = vmatpush1.msra.mxu0 0.0
  %7952 = vmatprep.subr.mxu0 0.0
  %7953 = vmatpush1.msra.mxu0 0.0
  %7954 = vmatprep.subr.mxu0 0.0
  %7955 = vmatpush1.msra.mxu0 0.0
  %7956 = vmatprep.subr.mxu0 0.0
  %7957 = vmatpush1.msra.mxu0 0.0
  %7958 = vmatprep.subr.mxu0 0.0
  %7959 = vmatpush1.msra.mxu0 0.0
  %7960 = vmatprep.subr.mxu0 0.0
  %7961 = vmatpush1.msra.mxu0 0.0
  %7962 = vmatprep.subr.mxu0 0.0
  %7963 = vmatpush1.msra.mxu0 0.0
  %7964 = vmatprep.mubr.f32.mxu0 0.0
  %7965 = vmatmul.mubr.f32.gmra.mrb[0].mxu0 %v7898
  %v7966 = vpop.f32.mrb[0].mxu0
  %v7967 = vadd.f32 0.0, %v7966
  %v7968 = vpop.f32.mrb[0].mxu0
  %7969 = vdwg.mxu0
  %v7971 = vsel %vm5075, %v5713, 0
  %7973 = vmatprep.subr.mxu0 0.0
  %7974 = vmatpush1.msra.mxu0 %v175
  %7975 = vmatprep.subr.mxu0 0.0
  %7976 = vmatpush1.msra.mxu0 0.0
  %7977 = vmatprep.subr.mxu0 0.0
  %7978 = vmatpush1.msra.mxu0 0.0
  %7979 = vmatprep.subr.mxu0 0.0
  %7980 = vmatpush1.msra.mxu0 0.0
  %7981 = vmatprep.subr.mxu0 0.0
  %7982 = vmatpush1.msra.mxu0 0.0
  %7983 = vmatprep.subr.mxu0 0.0
  %7984 = vmatpush1.msra.mxu0 0.0
  %7985 = vmatprep.subr.mxu0 0.0
  %7986 = vmatpush1.msra.mxu0 0.0
  %7987 = vmatprep.subr.mxu0 0.0
  %7988 = vmatpush1.msra.mxu0 0.0
  %7989 = vmatprep.subr.mxu0 0.0
  %7990 = vmatpush1.msra.mxu0 0.0
  %7991 = vmatprep.subr.mxu0 0.0
  %7992 = vmatpush1.msra.mxu0 0.0
  %7993 = vmatprep.subr.mxu0 0.0
  %7994 = vmatpush1.msra.mxu0 0.0
  %7995 = vmatprep.subr.mxu0 0.0
  %7996 = vmatpush1.msra.mxu0 0.0
  %7997 = vmatprep.subr.mxu0 0.0
  %7998 = vmatpush1.msra.mxu0 0.0
  %7999 = vmatprep.subr.mxu0 0.0
  %8000 = vmatpush1.msra.mxu0 0.0
  %8001 = vmatprep.subr.mxu0 0.0
  %8002 = vmatpush1.msra.mxu0 0.0
  %8003 = vmatprep.subr.mxu0 0.0
  %8004 = vmatpush1.msra.mxu0 0.0
  %8005 = vmatprep.subr.mxu0 0.0
  %8006 = vmatpush1.msra.mxu0 0.0
  %8007 = vmatprep.subr.mxu0 0.0
  %8008 = vmatpush1.msra.mxu0 0.0
  %8009 = vmatprep.subr.mxu0 0.0
  %8010 = vmatpush1.msra.mxu0 0.0
  %8011 = vmatprep.subr.mxu0 0.0
  %8012 = vmatpush1.msra.mxu0 0.0
  %8013 = vmatprep.subr.mxu0 0.0
  %8014 = vmatpush1.msra.mxu0 0.0
  %8015 = vmatprep.subr.mxu0 0.0
  %8016 = vmatpush1.msra.mxu0 0.0
  %8017 = vmatprep.subr.mxu0 0.0
  %8018 = vmatpush1.msra.mxu0 0.0
  %8019 = vmatprep.subr.mxu0 0.0
  %8020 = vmatpush1.msra.mxu0 0.0
  %8021 = vmatprep.subr.mxu0 0.0
  %8022 = vmatpush1.msra.mxu0 0.0
  %8023 = vmatprep.subr.mxu0 0.0
  %8024 = vmatpush1.msra.mxu0 0.0
  %8025 = vmatprep.subr.mxu0 0.0
  %8026 = vmatpush1.msra.mxu0 0.0
  %8027 = vmatprep.subr.mxu0 0.0
  %8028 = vmatpush1.msra.mxu0 0.0
  %8029 = vmatprep.subr.mxu0 0.0
  %8030 = vmatpush1.msra.mxu0 0.0
  %8031 = vmatprep.subr.mxu0 0.0
  %8032 = vmatpush1.msra.mxu0 0.0
  %8033 = vmatprep.subr.mxu0 0.0
  %8034 = vmatpush1.msra.mxu0 0.0
  %8035 = vmatprep.subr.mxu0 0.0
  %8036 = vmatpush1.msra.mxu0 0.0
  %8037 = vmatprep.mubr.f32.mxu0 0.0
  %8038 = vmatmul.mubr.f32.gmra.mrb[0].mxu0 %v7971
  %v8039 = vpop.f32.mrb[0].mxu0
  %v8040 = vadd.f32 0.0, %v8039
  %v8041 = vpop.f32.mrb[0].mxu0
  %8042 = vdwg.mxu0
  %v8044 = vsel %vm5075, %v5715, 0
  %8046 = vmatprep.subr.mxu0 0.0
  %8047 = vmatpush1.msra.mxu0 %v176
  %8048 = vmatprep.subr.mxu0 0.0
  %8049 = vmatpush1.msra.mxu0 0.0
  %8050 = vmatprep.subr.mxu0 0.0
  %8051 = vmatpush1.msra.mxu0 0.0
  %8052 = vmatprep.subr.mxu0 0.0
  %8053 = vmatpush1.msra.mxu0 0.0
  %8054 = vmatprep.subr.mxu0 0.0
  %8055 = vmatpush1.msra.mxu0 0.0
  %8056 = vmatprep.subr.mxu0 0.0
  %8057 = vmatpush1.msra.mxu0 0.0
  %8058 = vmatprep.subr.mxu0 0.0
  %8059 = vmatpush1.msra.mxu0 0.0
  %8060 = vmatprep.subr.mxu0 0.0
  %8061 = vmatpush1.msra.mxu0 0.0
  %8062 = vmatprep.subr.mxu0 0.0
  %8063 = vmatpush1.msra.mxu0 0.0
  %8064 = vmatprep.subr.mxu0 0.0
  %8065 = vmatpush1.msra.mxu0 0.0
  %8066 = vmatprep.subr.mxu0 0.0
  %8067 = vmatpush1.msra.mxu0 0.0
  %8068 = vmatprep.subr.mxu0 0.0
  %8069 = vmatpush1.msra.mxu0 0.0
  %8070 = vmatprep.subr.mxu0 0.0
  %8071 = vmatpush1.msra.mxu0 0.0
  %8072 = vmatprep.subr.mxu0 0.0
  %8073 = vmatpush1.msra.mxu0 0.0
  %8074 = vmatprep.subr.mxu0 0.0
  %8075 = vmatpush1.msra.mxu0 0.0
  %8076 = vmatprep.subr.mxu0 0.0
  %8077 = vmatpush1.msra.mxu0 0.0
  %8078 = vmatprep.subr.mxu0 0.0
  %8079 = vmatpush1.msra.mxu0 0.0
  %8080 = vmatprep.subr.mxu0 0.0
  %8081 = vmatpush1.msra.mxu0 0.0
  %8082 = vmatprep.subr.mxu0 0.0
  %8083 = vmatpush1.msra.mxu0 0.0
  %8084 = vmatprep.subr.mxu0 0.0
  %8085 = vmatpush1.msra.mxu0 0.0
  %8086 = vmatprep.subr.mxu0 0.0
  %8087 = vmatpush1.msra.mxu0 0.0
  %8088 = vmatprep.subr.mxu0 0.0
  %8089 = vmatpush1.msra.mxu0 0.0
  %8090 = vmatprep.subr.mxu0 0.0
  %8091 = vmatpush1.msra.mxu0 0.0
  %8092 = vmatprep.subr.mxu0 0.0
  %8093 = vmatpush1.msra.mxu0 0.0
  %8094 = vmatprep.subr.mxu0 0.0
  %8095 = vmatpush1.msra.mxu0 0.0
  %8096 = vmatprep.subr.mxu0 0.0
  %8097 = vmatpush1.msra.mxu0 0.0
  %8098 = vmatprep.subr.mxu0 0.0
  %8099 = vmatpush1.msra.mxu0 0.0
  %8100 = vmatprep.subr.mxu0 0.0
  %8101 = vmatpush1.msra.mxu0 0.0
  %8102 = vmatprep.subr.mxu0 0.0
  %8103 = vmatpush1.msra.mxu0 0.0
  %8104 = vmatprep.subr.mxu0 0.0
  %8105 = vmatpush1.msra.mxu0 0.0
  %8106 = vmatprep.subr.mxu0 0.0
  %8107 = vmatpush1.msra.mxu0 0.0
  %8108 = vmatprep.subr.mxu0 0.0
  %8109 = vmatpush1.msra.mxu0 0.0
  %8110 = vmatprep.mubr.f32.mxu0 0.0
  %8111 = vmatmul.mubr.f32.gmra.mrb[0].mxu0 %v8044
  %v8112 = vpop.f32.mrb[0].mxu0
  %v8113 = vadd.f32 0.0, %v8112
  %v8114 = vpop.f32.mrb[0].mxu0
  %8115 = vdwg.mxu0
  %v8117 = vsel %vm5075, %v5717, 0
  %8119 = vmatprep.subr.mxu0 0.0
  %8120 = vmatpush1.msra.mxu0 %v177
  %8121 = vmatprep.subr.mxu0 0.0
  %8122 = vmatpush1.msra.mxu0 0.0
  %8123 = vmatprep.subr.mxu0 0.0
  %8124 = vmatpush1.msra.mxu0 0.0
  %8125 = vmatprep.subr.mxu0 0.0
  %8126 = vmatpush1.msra.mxu0 0.0
  %8127 = vmatprep.subr.mxu0 0.0
  %8128 = vmatpush1.msra.mxu0 0.0
  %8129 = vmatprep.subr.mxu0 0.0
  %8130 = vmatpush1.msra.mxu0 0.0
  %8131 = vmatprep.subr.mxu0 0.0
  %8132 = vmatpush1.msra.mxu0 0.0
  %8133 = vmatprep.subr.mxu0 0.0
  %8134 = vmatpush1.msra.mxu0 0.0
  %8135 = vmatprep.subr.mxu0 0.0
  %8136 = vmatpush1.msra.mxu0 0.0
  %8137 = vmatprep.subr.mxu0 0.0
  %8138 = vmatpush1.msra.mxu0 0.0
  %8139 = vmatprep.subr.mxu0 0.0
  %8140 = vmatpush1.msra.mxu0 0.0
  %8141 = vmatprep.subr.mxu0 0.0
  %8142 = vmatpush1.msra.mxu0 0.0
  %8143 = vmatprep.subr.mxu0 0.0
  %8144 = vmatpush1.msra.mxu0 0.0
  %8145 = vmatprep.subr.mxu0 0.0
  %8146 = vmatpush1.msra.mxu0 0.0
  %8147 = vmatprep.subr.mxu0 0.0
  %8148 = vmatpush1.msra.mxu0 0.0
  %8149 = vmatprep.subr.mxu0 0.0
  %8150 = vmatpush1.msra.mxu0 0.0
  %8151 = vmatprep.subr.mxu0 0.0
  %8152 = vmatpush1.msra.mxu0 0.0
  %8153 = vmatprep.subr.mxu0 0.0
  %8154 = vmatpush1.msra.mxu0 0.0
  %8155 = vmatprep.subr.mxu0 0.0
  %8156 = vmatpush1.msra.mxu0 0.0
  %8157 = vmatprep.subr.mxu0 0.0
  %8158 = vmatpush1.msra.mxu0 0.0
  %8159 = vmatprep.subr.mxu0 0.0
  %8160 = vmatpush1.msra.mxu0 0.0
  %8161 = vmatprep.subr.mxu0 0.0
  %8162 = vmatpush1.msra.mxu0 0.0
  %8163 = vmatprep.subr.mxu0 0.0
  %8164 = vmatpush1.msra.mxu0 0.0
  %8165 = vmatprep.subr.mxu0 0.0
  %8166 = vmatpush1.msra.mxu0 0.0
  %8167 = vmatprep.subr.mxu0 0.0
  %8168 = vmatpush1.msra.mxu0 0.0
  %8169 = vmatprep.subr.mxu0 0.0
  %8170 = vmatpush1.msra.mxu0 0.0
  %8171 = vmatprep.subr.mxu0 0.0
  %8172 = vmatpush1.msra.mxu0 0.0
  %8173 = vmatprep.subr.mxu0 0.0
  %8174 = vmatpush1.msra.mxu0 0.0
  %8175 = vmatprep.subr.mxu0 0.0
  %8176 = vmatpush1.msra.mxu0 0.0
  %8177 = vmatprep.subr.mxu0 0.0
  %8178 = vmatpush1.msra.mxu0 0.0
  %8179 = vmatprep.subr.mxu0 0.0
  %8180 = vmatpush1.msra.mxu0 0.0
  %8181 = vmatprep.subr.mxu0 0.0
  %8182 = vmatpush1.msra.mxu0 0.0
  %8183 = vmatprep.mubr.f32.mxu0 0.0
  %8184 = vmatmul.mubr.f32.gmra.mrb[0].mxu0 %v8117
  %v8185 = vpop.f32.mrb[0].mxu0
  %v8186 = vadd.f32 0.0, %v8185
  %v8187 = vpop.f32.mrb[0].mxu0
  %8188 = vdwg.mxu0
  %v8190 = vsel %vm5075, %v5719, 0
  %8192 = vmatprep.subr.mxu0 0.0
  %8193 = vmatpush1.msra.mxu0 %v178
  %8194 = vmatprep.subr.mxu0 0.0
  %8195 = vmatpush1.msra.mxu0 0.0
  %8196 = vmatprep.subr.mxu0 0.0
  %8197 = vmatpush1.msra.mxu0 0.0
  %8198 = vmatprep.subr.mxu0 0.0
  %8199 = vmatpush1.msra.mxu0 0.0
  %8200 = vmatprep.subr.mxu0 0.0
  %8201 = vmatpush1.msra.mxu0 0.0
  %8202 = vmatprep.subr.mxu0 0.0
  %8203 = vmatpush1.msra.mxu0 0.0
  %8204 = vmatprep.subr.mxu0 0.0
  %8205 = vmatpush1.msra.mxu0 0.0
  %8206 = vmatprep.subr.mxu0 0.0
  %8207 = vmatpush1.msra.mxu0 0.0
  %8208 = vmatprep.subr.mxu0 0.0
  %8209 = vmatpush1.msra.mxu0 0.0
  %8210 = vmatprep.subr.mxu0 0.0
  %8211 = vmatpush1.msra.mxu0 0.0
  %8212 = vmatprep.subr.mxu0 0.0
  %8213 = vmatpush1.msra.mxu0 0.0
  %8214 = vmatprep.subr.mxu0 0.0
  %8215 = vmatpush1.msra.mxu0 0.0
  %8216 = vmatprep.subr.mxu0 0.0
  %8217 = vmatpush1.msra.mxu0 0.0
  %8218 = vmatprep.subr.mxu0 0.0
  %8219 = vmatpush1.msra.mxu0 0.0
  %8220 = vmatprep.subr.mxu0 0.0
  %8221 = vmatpush1.msra.mxu0 0.0
  %8222 = vmatprep.subr.mxu0 0.0
  %8223 = vmatpush1.msra.mxu0 0.0
  %8224 = vmatprep.subr.mxu0 0.0
  %8225 = vmatpush1.msra.mxu0 0.0
  %8226 = vmatprep.subr.mxu0 0.0
  %8227 = vmatpush1.msra.mxu0 0.0
  %8228 = vmatprep.subr.mxu0 0.0
  %8229 = vmatpush1.msra.mxu0 0.0
  %8230 = vmatprep.subr.mxu0 0.0
  %8231 = vmatpush1.msra.mxu0 0.0
  %8232 = vmatprep.subr.mxu0 0.0
  %8233 = vmatpush1.msra.mxu0 0.0
  %8234 = vmatprep.subr.mxu0 0.0
  %8235 = vmatpush1.msra.mxu0 0.0
  %8236 = vmatprep.subr.mxu0 0.0
  %8237 = vmatpush1.msra.mxu0 0.0
  %8238 = vmatprep.subr.mxu0 0.0
  %8239 = vmatpush1.msra.mxu0 0.0
  %8240 = vmatprep.subr.mxu0 0.0
  %8241 = vmatpush1.msra.mxu0 0.0
  %8242 = vmatprep.subr.mxu0 0.0
  %8243 = vmatpush1.msra.mxu0 0.0
  %8244 = vmatprep.subr.mxu0 0.0
  %8245 = vmatpush1.msra.mxu0 0.0
  %8246 = vmatprep.subr.mxu0 0.0
  %8247 = vmatpush1.msra.mxu0 0.0
  %8248 = vmatprep.subr.mxu0 0.0
  %8249 = vmatpush1.msra.mxu0 0.0
  %8250 = vmatprep.subr.mxu0 0.0
  %8251 = vmatpush1.msra.mxu0 0.0
  %8252 = vmatprep.subr.mxu0 0.0
  %8253 = vmatpush1.msra.mxu0 0.0
  %8254 = vmatprep.subr.mxu0 0.0
  %8255 = vmatpush1.msra.mxu0 0.0
  %8256 = vmatprep.mubr.f32.mxu0 0.0
  %8257 = vmatmul.mubr.f32.gmra.mrb[0].mxu0 %v8190
  %v8258 = vpop.f32.mrb[0].mxu0
  %v8259 = vadd.f32 0.0, %v8258
  %v8260 = vpop.f32.mrb[0].mxu0
  %8261 = vdwg.mxu0
  %v8263 = vsel %vm5075, %v5721, 0
  %8265 = vmatprep.subr.mxu0 0.0
  %8266 = vmatpush1.msra.mxu0 %v179
  %8267 = vmatprep.subr.mxu0 0.0
  %8268 = vmatpush1.msra.mxu0 0.0
  %8269 = vmatprep.subr.mxu0 0.0
  %8270 = vmatpush1.msra.mxu0 0.0
  %8271 = vmatprep.subr.mxu0 0.0
  %8272 = vmatpush1.msra.mxu0 0.0
  %8273 = vmatprep.subr.mxu0 0.0
  %8274 = vmatpush1.msra.mxu0 0.0
  %8275 = vmatprep.subr.mxu0 0.0
  %8276 = vmatpush1.msra.mxu0 0.0
  %8277 = vmatprep.subr.mxu0 0.0
  %8278 = vmatpush1.msra.mxu0 0.0
  %8279 = vmatprep.subr.mxu0 0.0
  %8280 = vmatpush1.msra.mxu0 0.0
  %8281 = vmatprep.subr.mxu0 0.0
  %8282 = vmatpush1.msra.mxu0 0.0
  %8283 = vmatprep.subr.mxu0 0.0
  %8284 = vmatpush1.msra.mxu0 0.0
  %8285 = vmatprep.subr.mxu0 0.0
  %8286 = vmatpush1.msra.mxu0 0.0
  %8287 = vmatprep.subr.mxu0 0.0
  %8288 = vmatpush1.msra.mxu0 0.0
  %8289 = vmatprep.subr.mxu0 0.0
  %8290 = vmatpush1.msra.mxu0 0.0
  %8291 = vmatprep.subr.mxu0 0.0
  %8292 = vmatpush1.msra.mxu0 0.0
  %8293 = vmatprep.subr.mxu0 0.0
  %8294 = vmatpush1.msra.mxu0 0.0
  %8295 = vmatprep.subr.mxu0 0.0
  %8296 = vmatpush1.msra.mxu0 0.0
  %8297 = vmatprep.subr.mxu0 0.0
  %8298 = vmatpush1.msra.mxu0 0.0
  %8299 = vmatprep.subr.mxu0 0.0
  %8300 = vmatpush1.msra.mxu0 0.0
  %8301 = vmatprep.subr.mxu0 0.0
  %8302 = vmatpush1.msra.mxu0 0.0
  %8303 = vmatprep.subr.mxu0 0.0
  %8304 = vmatpush1.msra.mxu0 0.0
  %8305 = vmatprep.subr.mxu0 0.0
  %8306 = vmatpush1.msra.mxu0 0.0
  %8307 = vmatprep.subr.mxu0 0.0
  %8308 = vmatpush1.msra.mxu0 0.0
  %8309 = vmatprep.subr.mxu0 0.0
  %8310 = vmatpush1.msra.mxu0 0.0
  %8311 = vmatprep.subr.mxu0 0.0
  %8312 = vmatpush1.msra.mxu0 0.0
  %8313 = vmatprep.subr.mxu0 0.0
  %8314 = vmatpush1.msra.mxu0 0.0
  %8315 = vmatprep.subr.mxu0 0.0
  %8316 = vmatpush1.msra.mxu0 0.0
  %8317 = vmatprep.subr.mxu0 0.0
  %8318 = vmatpush1.msra.mxu0 0.0
  %8319 = vmatprep.subr.mxu0 0.0
  %8320 = vmatpush1.msra.mxu0 0.0
  %8321 = vmatprep.subr.mxu0 0.0
  %8322 = vmatpush1.msra.mxu0 0.0
  %8323 = vmatprep.subr.mxu0 0.0
  %8324 = vmatpush1.msra.mxu0 0.0
  %8325 = vmatprep.subr.mxu0 0.0
  %8326 = vmatpush1.msra.mxu0 0.0
  %8327 = vmatprep.subr.mxu0 0.0
  %8328 = vmatpush1.msra.mxu0 0.0
  %8329 = vmatprep.mubr.f32.mxu0 0.0
  %8330 = vmatmul.mubr.f32.gmra.mrb[0].mxu0 %v8263
  %v8331 = vpop.f32.mrb[0].mxu0
  %v8332 = vadd.f32 0.0, %v8331
  %v8333 = vpop.f32.mrb[0].mxu0
  %8334 = vdwg.mxu0
  %v8336 = vsel %vm5075, %v5723, 0
  %8338 = vmatprep.subr.mxu0 0.0
  %8339 = vmatpush1.msra.mxu0 %v180
  %8340 = vmatprep.subr.mxu0 0.0
  %8341 = vmatpush1.msra.mxu0 0.0
  %8342 = vmatprep.subr.mxu0 0.0
  %8343 = vmatpush1.msra.mxu0 0.0
  %8344 = vmatprep.subr.mxu0 0.0
  %8345 = vmatpush1.msra.mxu0 0.0
  %8346 = vmatprep.subr.mxu0 0.0
  %8347 = vmatpush1.msra.mxu0 0.0
  %8348 = vmatprep.subr.mxu0 0.0
  %8349 = vmatpush1.msra.mxu0 0.0
  %8350 = vmatprep.subr.mxu0 0.0
  %8351 = vmatpush1.msra.mxu0 0.0
  %8352 = vmatprep.subr.mxu0 0.0
  %8353 = vmatpush1.msra.mxu0 0.0
  %8354 = vmatprep.subr.mxu0 0.0
  %8355 = vmatpush1.msra.mxu0 0.0
  %8356 = vmatprep.subr.mxu0 0.0
  %8357 = vmatpush1.msra.mxu0 0.0
  %8358 = vmatprep.subr.mxu0 0.0
  %8359 = vmatpush1.msra.mxu0 0.0
  %8360 = vmatprep.subr.mxu0 0.0
  %8361 = vmatpush1.msra.mxu0 0.0
  %8362 = vmatprep.subr.mxu0 0.0
  %8363 = vmatpush1.msra.mxu0 0.0
  %8364 = vmatprep.subr.mxu0 0.0
  %8365 = vmatpush1.msra.mxu0 0.0
  %8366 = vmatprep.subr.mxu0 0.0
  %8367 = vmatpush1.msra.mxu0 0.0
  %8368 = vmatprep.subr.mxu0 0.0
  %8369 = vmatpush1.msra.mxu0 0.0
  %8370 = vmatprep.subr.mxu0 0.0
  %8371 = vmatpush1.msra.mxu0 0.0
  %8372 = vmatprep.subr.mxu0 0.0
  %8373 = vmatpush1.msra.mxu0 0.0
  %8374 = vmatprep.subr.mxu0 0.0
  %8375 = vmatpush1.msra.mxu0 0.0
  %8376 = vmatprep.subr.mxu0 0.0
  %8377 = vmatpush1.msra.mxu0 0.0
  %8378 = vmatprep.subr.mxu0 0.0
  %8379 = vmatpush1.msra.mxu0 0.0
  %8380 = vmatprep.subr.mxu0 0.0
  %8381 = vmatpush1.msra.mxu0 0.0
  %8382 = vmatprep.subr.mxu0 0.0
  %8383 = vmatpush1.msra.mxu0 0.0
  %8384 = vmatprep.subr.mxu0 0.0
  %8385 = vmatpush1.msra.mxu0 0.0
  %8386 = vmatprep.subr.mxu0 0.0
  %8387 = vmatpush1.msra.mxu0 0.0
  %8388 = vmatprep.subr.mxu0 0.0
  %8389 = vmatpush1.msra.mxu0 0.0
  %8390 = vmatprep.subr.mxu0 0.0
  %8391 = vmatpush1.msra.mxu0 0.0
  %8392 = vmatprep.subr.mxu0 0.0
  %8393 = vmatpush1.msra.mxu0 0.0
  %8394 = vmatprep.subr.mxu0 0.0
  %8395 = vmatpush1.msra.mxu0 0.0
  %8396 = vmatprep.subr.mxu0 0.0
  %8397 = vmatpush1.msra.mxu0 0.0
  %8398 = vmatprep.subr.mxu0 0.0
  %8399 = vmatpush1.msra.mxu0 0.0
  %8400 = vmatprep.subr.mxu0 0.0
  %8401 = vmatpush1.msra.mxu0 0.0
  %8402 = vmatprep.mubr.f32.mxu0 0.0
  %8403 = vmatmul.mubr.f32.gmra.mrb[0].mxu0 %v8336
  %v8404 = vpop.f32.mrb[0].mxu0
  %v8405 = vadd.f32 0.0, %v8404
  %v8406 = vpop.f32.mrb[0].mxu0
  %8407 = vdwg.mxu0
  %v8409 = vsel %vm5075, %v5725, 0
  %8411 = vmatprep.subr.mxu0 0.0
  %8412 = vmatpush1.msra.mxu0 %v181
  %8413 = vmatprep.subr.mxu0 0.0
  %8414 = vmatpush1.msra.mxu0 0.0
  %8415 = vmatprep.subr.mxu0 0.0
  %8416 = vmatpush1.msra.mxu0 0.0
  %8417 = vmatprep.subr.mxu0 0.0
  %8418 = vmatpush1.msra.mxu0 0.0
  %8419 = vmatprep.subr.mxu0 0.0
  %8420 = vmatpush1.msra.mxu0 0.0
  %8421 = vmatprep.subr.mxu0 0.0
  %8422 = vmatpush1.msra.mxu0 0.0
  %8423 = vmatprep.subr.mxu0 0.0
  %8424 = vmatpush1.msra.mxu0 0.0
  %8425 = vmatprep.subr.mxu0 0.0
  %8426 = vmatpush1.msra.mxu0 0.0
  %8427 = vmatprep.subr.mxu0 0.0
  %8428 = vmatpush1.msra.mxu0 0.0
  %8429 = vmatprep.subr.mxu0 0.0
  %8430 = vmatpush1.msra.mxu0 0.0
  %8431 = vmatprep.subr.mxu0 0.0
  %8432 = vmatpush1.msra.mxu0 0.0
  %8433 = vmatprep.subr.mxu0 0.0
  %8434 = vmatpush1.msra.mxu0 0.0
  %8435 = vmatprep.subr.mxu0 0.0
  %8436 = vmatpush1.msra.mxu0 0.0
  %8437 = vmatprep.subr.mxu0 0.0
  %8438 = vmatpush1.msra.mxu0 0.0
  %8439 = vmatprep.subr.mxu0 0.0
  %8440 = vmatpush1.msra.mxu0 0.0
  %8441 = vmatprep.subr.mxu0 0.0
  %8442 = vmatpush1.msra.mxu0 0.0
  %8443 = vmatprep.subr.mxu0 0.0
  %8444 = vmatpush1.msra.mxu0 0.0
  %8445 = vmatprep.subr.mxu0 0.0
  %8446 = vmatpush1.msra.mxu0 0.0
  %8447 = vmatprep.subr.mxu0 0.0
  %8448 = vmatpush1.msra.mxu0 0.0
  %8449 = vmatprep.subr.mxu0 0.0
  %8450 = vmatpush1.msra.mxu0 0.0
  %8451 = vmatprep.subr.mxu0 0.0
  %8452 = vmatpush1.msra.mxu0 0.0
  %8453 = vmatprep.subr.mxu0 0.0
  %8454 = vmatpush1.msra.mxu0 0.0
  %8455 = vmatprep.subr.mxu0 0.0
  %8456 = vmatpush1.msra.mxu0 0.0
  %8457 = vmatprep.subr.mxu0 0.0
  %8458 = vmatpush1.msra.mxu0 0.0
  %8459 = vmatprep.subr.mxu0 0.0
  %8460 = vmatpush1.msra.mxu0 0.0
  %8461 = vmatprep.subr.mxu0 0.0
  %8462 = vmatpush1.msra.mxu0 0.0
  %8463 = vmatprep.subr.mxu0 0.0
  %8464 = vmatpush1.msra.mxu0 0.0
  %8465 = vmatprep.subr.mxu0 0.0
  %8466 = vmatpush1.msra.mxu0 0.0
  %8467 = vmatprep.subr.mxu0 0.0
  %8468 = vmatpush1.msra.mxu0 0.0
  %8469 = vmatprep.subr.mxu0 0.0
  %8470 = vmatpush1.msra.mxu0 0.0
  %8471 = vmatprep.subr.mxu0 0.0
  %8472 = vmatpush1.msra.mxu0 0.0
  %8473 = vmatprep.subr.mxu0 0.0
  %8474 = vmatpush1.msra.mxu0 0.0
  %8475 = vmatprep.mubr.f32.mxu0 0.0
  %8476 = vmatmul.mubr.f32.gmra.mrb[0].mxu0 %v8409
  %v8477 = vpop.f32.mrb[0].mxu0
  %v8478 = vadd.f32 0.0, %v8477
  %v8479 = vpop.f32.mrb[0].mxu0
  %8480 = vdwg.mxu0
  %v8482 = vsel %vm5075, %v5727, 0
  %8484 = vmatprep.subr.mxu0 0.0
  %8485 = vmatpush1.msra.mxu0 %v182
  %8486 = vmatprep.subr.mxu0 0.0
  %8487 = vmatpush1.msra.mxu0 0.0
  %8488 = vmatprep.subr.mxu0 0.0
  %8489 = vmatpush1.msra.mxu0 0.0
  %8490 = vmatprep.subr.mxu0 0.0
  %8491 = vmatpush1.msra.mxu0 0.0
  %8492 = vmatprep.subr.mxu0 0.0
  %8493 = vmatpush1.msra.mxu0 0.0
  %8494 = vmatprep.subr.mxu0 0.0
  %8495 = vmatpush1.msra.mxu0 0.0
  %8496 = vmatprep.subr.mxu0 0.0
  %8497 = vmatpush1.msra.mxu0 0.0
  %8498 = vmatprep.subr.mxu0 0.0
  %8499 = vmatpush1.msra.mxu0 0.0
  %8500 = vmatprep.subr.mxu0 0.0
  %8501 = vmatpush1.msra.mxu0 0.0
  %8502 = vmatprep.subr.mxu0 0.0
  %8503 = vmatpush1.msra.mxu0 0.0
  %8504 = vmatprep.subr.mxu0 0.0
  %8505 = vmatpush1.msra.mxu0 0.0
  %8506 = vmatprep.subr.mxu0 0.0
  %8507 = vmatpush1.msra.mxu0 0.0
  %8508 = vmatprep.subr.mxu0 0.0
  %8509 = vmatpush1.msra.mxu0 0.0
  %8510 = vmatprep.subr.mxu0 0.0
  %8511 = vmatpush1.msra.mxu0 0.0
  %8512 = vmatprep.subr.mxu0 0.0
  %8513 = vmatpush1.msra.mxu0 0.0
  %8514 = vmatprep.subr.mxu0 0.0
  %8515 = vmatpush1.msra.mxu0 0.0
  %8516 = vmatprep.subr.mxu0 0.0
  %8517 = vmatpush1.msra.mxu0 0.0
  %8518 = vmatprep.subr.mxu0 0.0
  %8519 = vmatpush1.msra.mxu0 0.0
  %8520 = vmatprep.subr.mxu0 0.0
  %8521 = vmatpush1.msra.mxu0 0.0
  %8522 = vmatprep.subr.mxu0 0.0
  %8523 = vmatpush1.msra.mxu0 0.0
  %8524 = vmatprep.subr.mxu0 0.0
  %8525 = vmatpush1.msra.mxu0 0.0
  %8526 = vmatprep.subr.mxu0 0.0
  %8527 = vmatpush1.msra.mxu0 0.0
  %8528 = vmatprep.subr.mxu0 0.0
  %8529 = vmatpush1.msra.mxu0 0.0
  %8530 = vmatprep.subr.mxu0 0.0
  %8531 = vmatpush1.msra.mxu0 0.0
  %8532 = vmatprep.subr.mxu0 0.0
  %8533 = vmatpush1.msra.mxu0 0.0
  %8534 = vmatprep.subr.mxu0 0.0
  %8535 = vmatpush1.msra.mxu0 0.0
  %8536 = vmatprep.subr.mxu0 0.0
  %8537 = vmatpush1.msra.mxu0 0.0
  %8538 = vmatprep.subr.mxu0 0.0
  %8539 = vmatpush1.msra.mxu0 0.0
  %8540 = vmatprep.subr.mxu0 0.0
  %8541 = vmatpush1.msra.mxu0 0.0
  %8542 = vmatprep.subr.mxu0 0.0
  %8543 = vmatpush1.msra.mxu0 0.0
  %8544 = vmatprep.subr.mxu0 0.0
  %8545 = vmatpush1.msra.mxu0 0.0
  %8546 = vmatprep.subr.mxu0 0.0
  %8547 = vmatpush1.msra.mxu0 0.0
  %8548 = vmatprep.mubr.f32.mxu0 0.0
  %8549 = vmatmul.mubr.f32.gmra.mrb[0].mxu0 %v8482
  %v8550 = vpop.f32.mrb[0].mxu0
  %v8551 = vadd.f32 0.0, %v8550
  %v8552 = vpop.f32.mrb[0].mxu0
  %8553 = vdwg.mxu0
  %v8555 = vsel %vm5075, %v5729, 0
  %8557 = vmatprep.subr.mxu0 0.0
  %8558 = vmatpush1.msra.mxu0 %v183
  %8559 = vmatprep.subr.mxu0 0.0
  %8560 = vmatpush1.msra.mxu0 0.0
  %8561 = vmatprep.subr.mxu0 0.0
  %8562 = vmatpush1.msra.mxu0 0.0
  %8563 = vmatprep.subr.mxu0 0.0
  %8564 = vmatpush1.msra.mxu0 0.0
  %8565 = vmatprep.subr.mxu0 0.0
  %8566 = vmatpush1.msra.mxu0 0.0
  %8567 = vmatprep.subr.mxu0 0.0
  %8568 = vmatpush1.msra.mxu0 0.0
  %8569 = vmatprep.subr.mxu0 0.0
  %8570 = vmatpush1.msra.mxu0 0.0
  %8571 = vmatprep.subr.mxu0 0.0
  %8572 = vmatpush1.msra.mxu0 0.0
  %8573 = vmatprep.subr.mxu0 0.0
  %8574 = vmatpush1.msra.mxu0 0.0
  %8575 = vmatprep.subr.mxu0 0.0
  %8576 = vmatpush1.msra.mxu0 0.0
  %8577 = vmatprep.subr.mxu0 0.0
  %8578 = vmatpush1.msra.mxu0 0.0
  %8579 = vmatprep.subr.mxu0 0.0
  %8580 = vmatpush1.msra.mxu0 0.0
  %8581 = vmatprep.subr.mxu0 0.0
  %8582 = vmatpush1.msra.mxu0 0.0
  %8583 = vmatprep.subr.mxu0 0.0
  %8584 = vmatpush1.msra.mxu0 0.0
  %8585 = vmatprep.subr.mxu0 0.0
  %8586 = vmatpush1.msra.mxu0 0.0
  %8587 = vmatprep.subr.mxu0 0.0
  %8588 = vmatpush1.msra.mxu0 0.0
  %8589 = vmatprep.subr.mxu0 0.0
  %8590 = vmatpush1.msra.mxu0 0.0
  %8591 = vmatprep.subr.mxu0 0.0
  %8592 = vmatpush1.msra.mxu0 0.0
  %8593 = vmatprep.subr.mxu0 0.0
  %8594 = vmatpush1.msra.mxu0 0.0
  %8595 = vmatprep.subr.mxu0 0.0
  %8596 = vmatpush1.msra.mxu0 0.0
  %8597 = vmatprep.subr.mxu0 0.0
  %8598 = vmatpush1.msra.mxu0 0.0
  %8599 = vmatprep.subr.mxu0 0.0
  %8600 = vmatpush1.msra.mxu0 0.0
  %8601 = vmatprep.subr.mxu0 0.0
  %8602 = vmatpush1.msra.mxu0 0.0
  %8603 = vmatprep.subr.mxu0 0.0
  %8604 = vmatpush1.msra.mxu0 0.0
  %8605 = vmatprep.subr.mxu0 0.0
  %8606 = vmatpush1.msra.mxu0 0.0
  %8607 = vmatprep.subr.mxu0 0.0
  %8608 = vmatpush1.msra.mxu0 0.0
  %8609 = vmatprep.subr.mxu0 0.0
  %8610 = vmatpush1.msra.mxu0 0.0
  %8611 = vmatprep.subr.mxu0 0.0
  %8612 = vmatpush1.msra.mxu0 0.0
  %8613 = vmatprep.subr.mxu0 0.0
  %8614 = vmatpush1.msra.mxu0 0.0
  %8615 = vmatprep.subr.mxu0 0.0
  %8616 = vmatpush1.msra.mxu0 0.0
  %8617 = vmatprep.subr.mxu0 0.0
  %8618 = vmatpush1.msra.mxu0 0.0
  %8619 = vmatprep.subr.mxu0 0.0
  %8620 = vmatpush1.msra.mxu0 0.0
  %8621 = vmatprep.mubr.f32.mxu0 0.0
  %8622 = vmatmul.mubr.f32.gmra.mrb[0].mxu0 %v8555
  %v8623 = vpop.f32.mrb[0].mxu0
  %v8624 = vadd.f32 0.0, %v8623
  %v8625 = vpop.f32.mrb[0].mxu0
  %8626 = vdwg.mxu0
  %v8628 = vsel %vm5075, %v5731, 0
  %8630 = vmatprep.subr.mxu0 0.0
  %8631 = vmatpush1.msra.mxu0 %v184
  %8632 = vmatprep.subr.mxu0 0.0
  %8633 = vmatpush1.msra.mxu0 0.0
  %8634 = vmatprep.subr.mxu0 0.0
  %8635 = vmatpush1.msra.mxu0 0.0
  %8636 = vmatprep.subr.mxu0 0.0
  %8637 = vmatpush1.msra.mxu0 0.0
  %8638 = vmatprep.subr.mxu0 0.0
  %8639 = vmatpush1.msra.mxu0 0.0
  %8640 = vmatprep.subr.mxu0 0.0
  %8641 = vmatpush1.msra.mxu0 0.0
  %8642 = vmatprep.subr.mxu0 0.0
  %8643 = vmatpush1.msra.mxu0 0.0
  %8644 = vmatprep.subr.mxu0 0.0
  %8645 = vmatpush1.msra.mxu0 0.0
  %8646 = vmatprep.subr.mxu0 0.0
  %8647 = vmatpush1.msra.mxu0 0.0
  %8648 = vmatprep.subr.mxu0 0.0
  %8649 = vmatpush1.msra.mxu0 0.0
  %8650 = vmatprep.subr.mxu0 0.0
  %8651 = vmatpush1.msra.mxu0 0.0
  %8652 = vmatprep.subr.mxu0 0.0
  %8653 = vmatpush1.msra.mxu0 0.0
  %8654 = vmatprep.subr.mxu0 0.0
  %8655 = vmatpush1.msra.mxu0 0.0
  %8656 = vmatprep.subr.mxu0 0.0
  %8657 = vmatpush1.msra.mxu0 0.0
  %8658 = vmatprep.subr.mxu0 0.0
  %8659 = vmatpush1.msra.mxu0 0.0
  %8660 = vmatprep.subr.mxu0 0.0
  %8661 = vmatpush1.msra.mxu0 0.0
  %8662 = vmatprep.subr.mxu0 0.0
  %8663 = vmatpush1.msra.mxu0 0.0
  %8664 = vmatprep.subr.mxu0 0.0
  %8665 = vmatpush1.msra.mxu0 0.0
  %8666 = vmatprep.subr.mxu0 0.0
  %8667 = vmatpush1.msra.mxu0 0.0
  %8668 = vmatprep.subr.mxu0 0.0
  %8669 = vmatpush1.msra.mxu0 0.0
  %8670 = vmatprep.subr.mxu0 0.0
  %8671 = vmatpush1.msra.mxu0 0.0
  %8672 = vmatprep.subr.mxu0 0.0
  %8673 = vmatpush1.msra.mxu0 0.0
  %8674 = vmatprep.subr.mxu0 0.0
  %8675 = vmatpush1.msra.mxu0 0.0
  %8676 = vmatprep.subr.mxu0 0.0
  %8677 = vmatpush1.msra.mxu0 0.0
  %8678 = vmatprep.subr.mxu0 0.0
  %8679 = vmatpush1.msra.mxu0 0.0
  %8680 = vmatprep.subr.mxu0 0.0
  %8681 = vmatpush1.msra.mxu0 0.0
  %8682 = vmatprep.subr.mxu0 0.0
  %8683 = vmatpush1.msra.mxu0 0.0
  %8684 = vmatprep.subr.mxu0 0.0
  %8685 = vmatpush1.msra.mxu0 0.0
  %8686 = vmatprep.subr.mxu0 0.0
  %8687 = vmatpush1.msra.mxu0 0.0
  %8688 = vmatprep.subr.mxu0 0.0
  %8689 = vmatpush1.msra.mxu0 0.0
  %8690 = vmatprep.subr.mxu0 0.0
  %8691 = vmatpush1.msra.mxu0 0.0
  %8692 = vmatprep.subr.mxu0 0.0
  %8693 = vmatpush1.msra.mxu0 0.0
  %8694 = vmatprep.mubr.f32.mxu0 0.0
  %8695 = vmatmul.mubr.f32.gmra.mrb[0].mxu0 %v8628
  %v8696 = vpop.f32.mrb[0].mxu0
  %v8697 = vadd.f32 0.0, %v8696
  %v8698 = vpop.f32.mrb[0].mxu0
  %8699 = vdwg.mxu0
  %v8701 = vsel %vm5075, %v5733, 0
  %8703 = vmatprep.subr.mxu0 0.0
  %8704 = vmatpush1.msra.mxu0 %v185
  %8705 = vmatprep.subr.mxu0 0.0
  %8706 = vmatpush1.msra.mxu0 0.0
  %8707 = vmatprep.subr.mxu0 0.0
  %8708 = vmatpush1.msra.mxu0 0.0
  %8709 = vmatprep.subr.mxu0 0.0
  %8710 = vmatpush1.msra.mxu0 0.0
  %8711 = vmatprep.subr.mxu0 0.0
  %8712 = vmatpush1.msra.mxu0 0.0
  %8713 = vmatprep.subr.mxu0 0.0
  %8714 = vmatpush1.msra.mxu0 0.0
  %8715 = vmatprep.subr.mxu0 0.0
  %8716 = vmatpush1.msra.mxu0 0.0
  %8717 = vmatprep.subr.mxu0 0.0
  %8718 = vmatpush1.msra.mxu0 0.0
  %8719 = vmatprep.subr.mxu0 0.0
  %8720 = vmatpush1.msra.mxu0 0.0
  %8721 = vmatprep.subr.mxu0 0.0
  %8722 = vmatpush1.msra.mxu0 0.0
  %8723 = vmatprep.subr.mxu0 0.0
  %8724 = vmatpush1.msra.mxu0 0.0
  %8725 = vmatprep.subr.mxu0 0.0
  %8726 = vmatpush1.msra.mxu0 0.0
  %8727 = vmatprep.subr.mxu0 0.0
  %8728 = vmatpush1.msra.mxu0 0.0
  %8729 = vmatprep.subr.mxu0 0.0
  %8730 = vmatpush1.msra.mxu0 0.0
  %8731 = vmatprep.subr.mxu0 0.0
  %8732 = vmatpush1.msra.mxu0 0.0
  %8733 = vmatprep.subr.mxu0 0.0
  %8734 = vmatpush1.msra.mxu0 0.0
  %8735 = vmatprep.subr.mxu0 0.0
  %8736 = vmatpush1.msra.mxu0 0.0
  %8737 = vmatprep.subr.mxu0 0.0
  %8738 = vmatpush1.msra.mxu0 0.0
  %8739 = vmatprep.subr.mxu0 0.0
  %8740 = vmatpush1.msra.mxu0 0.0
  %8741 = vmatprep.subr.mxu0 0.0
  %8742 = vmatpush1.msra.mxu0 0.0
  %8743 = vmatprep.subr.mxu0 0.0
  %8744 = vmatpush1.msra.mxu0 0.0
  %8745 = vmatprep.subr.mxu0 0.0
  %8746 = vmatpush1.msra.mxu0 0.0
  %8747 = vmatprep.subr.mxu0 0.0
  %8748 = vmatpush1.msra.mxu0 0.0
  %8749 = vmatprep.subr.mxu0 0.0
  %8750 = vmatpush1.msra.mxu0 0.0
  %8751 = vmatprep.subr.mxu0 0.0
  %8752 = vmatpush1.msra.mxu0 0.0
  %8753 = vmatprep.subr.mxu0 0.0
  %8754 = vmatpush1.msra.mxu0 0.0
  %8755 = vmatprep.subr.mxu0 0.0
  %8756 = vmatpush1.msra.mxu0 0.0
  %8757 = vmatprep.subr.mxu0 0.0
  %8758 = vmatpush1.msra.mxu0 0.0
  %8759 = vmatprep.subr.mxu0 0.0
  %8760 = vmatpush1.msra.mxu0 0.0
  %8761 = vmatprep.subr.mxu0 0.0
  %8762 = vmatpush1.msra.mxu0 0.0
  %8763 = vmatprep.subr.mxu0 0.0
  %8764 = vmatpush1.msra.mxu0 0.0
  %8765 = vmatprep.subr.mxu0 0.0
  %8766 = vmatpush1.msra.mxu0 0.0
  %8767 = vmatprep.mubr.f32.mxu0 0.0
  %8768 = vmatmul.mubr.f32.gmra.mrb[0].mxu0 %v8701
  %v8769 = vpop.f32.mrb[0].mxu0
  %v8770 = vadd.f32 0.0, %v8769
  %v8771 = vpop.f32.mrb[0].mxu0
  %8772 = vdwg.mxu0
  %v8774 = vsel %vm5075, %v5735, 0
  %8776 = vmatprep.subr.mxu0 0.0
  %8777 = vmatpush1.msra.mxu0 %v186
  %8778 = vmatprep.subr.mxu0 0.0
  %8779 = vmatpush1.msra.mxu0 0.0
  %8780 = vmatprep.subr.mxu0 0.0
  %8781 = vmatpush1.msra.mxu0 0.0
  %8782 = vmatprep.subr.mxu0 0.0
  %8783 = vmatpush1.msra.mxu0 0.0
  %8784 = vmatprep.subr.mxu0 0.0
  %8785 = vmatpush1.msra.mxu0 0.0
  %8786 = vmatprep.subr.mxu0 0.0
  %8787 = vmatpush1.msra.mxu0 0.0
  %8788 = vmatprep.subr.mxu0 0.0
  %8789 = vmatpush1.msra.mxu0 0.0
  %8790 = vmatprep.subr.mxu0 0.0
  %8791 = vmatpush1.msra.mxu0 0.0
  %8792 = vmatprep.subr.mxu0 0.0
  %8793 = vmatpush1.msra.mxu0 0.0
  %8794 = vmatprep.subr.mxu0 0.0
  %8795 = vmatpush1.msra.mxu0 0.0
  %8796 = vmatprep.subr.mxu0 0.0
  %8797 = vmatpush1.msra.mxu0 0.0
  %8798 = vmatprep.subr.mxu0 0.0
  %8799 = vmatpush1.msra.mxu0 0.0
  %8800 = vmatprep.subr.mxu0 0.0
  %8801 = vmatpush1.msra.mxu0 0.0
  %8802 = vmatprep.subr.mxu0 0.0
  %8803 = vmatpush1.msra.mxu0 0.0
  %8804 = vmatprep.subr.mxu0 0.0
  %8805 = vmatpush1.msra.mxu0 0.0
  %8806 = vmatprep.subr.mxu0 0.0
  %8807 = vmatpush1.msra.mxu0 0.0
  %8808 = vmatprep.subr.mxu0 0.0
  %8809 = vmatpush1.msra.mxu0 0.0
  %8810 = vmatprep.subr.mxu0 0.0
  %8811 = vmatpush1.msra.mxu0 0.0
  %8812 = vmatprep.subr.mxu0 0.0
  %8813 = vmatpush1.msra.mxu0 0.0
  %8814 = vmatprep.subr.mxu0 0.0
  %8815 = vmatpush1.msra.mxu0 0.0
  %8816 = vmatprep.subr.mxu0 0.0
  %8817 = vmatpush1.msra.mxu0 0.0
  %8818 = vmatprep.subr.mxu0 0.0
  %8819 = vmatpush1.msra.mxu0 0.0
  %8820 = vmatprep.subr.mxu0 0.0
  %8821 = vmatpush1.msra.mxu0 0.0
  %8822 = vmatprep.subr.mxu0 0.0
  %8823 = vmatpush1.msra.mxu0 0.0
  %8824 = vmatprep.subr.mxu0 0.0
  %8825 = vmatpush1.msra.mxu0 0.0
  %8826 = vmatprep.subr.mxu0 0.0
  %8827 = vmatpush1.msra.mxu0 0.0
  %8828 = vmatprep.subr.mxu0 0.0
  %8829 = vmatpush1.msra.mxu0 0.0
  %8830 = vmatprep.subr.mxu0 0.0
  %8831 = vmatpush1.msra.mxu0 0.0
  %8832 = vmatprep.subr.mxu0 0.0
  %8833 = vmatpush1.msra.mxu0 0.0
  %8834 = vmatprep.subr.mxu0 0.0
  %8835 = vmatpush1.msra.mxu0 0.0
  %8836 = vmatprep.subr.mxu0 0.0
  %8837 = vmatpush1.msra.mxu0 0.0
  %8838 = vmatprep.subr.mxu0 0.0
  %8839 = vmatpush1.msra.mxu0 0.0
  %8840 = vmatprep.mubr.f32.mxu0 0.0
  %8841 = vmatmul.mubr.f32.gmra.mrb[0].mxu0 %v8774
  %v8842 = vpop.f32.mrb[0].mxu0
  %v8843 = vadd.f32 0.0, %v8842
  %v8844 = vpop.f32.mrb[0].mxu0
  %8845 = vdwg.mxu0
  %v8847 = vsel %vm5075, %v5737, 0
  %8849 = vmatprep.subr.mxu0 0.0
  %8850 = vmatpush1.msra.mxu0 %v187
  %8851 = vmatprep.subr.mxu0 0.0
  %8852 = vmatpush1.msra.mxu0 0.0
  %8853 = vmatprep.subr.mxu0 0.0
  %8854 = vmatpush1.msra.mxu0 0.0
  %8855 = vmatprep.subr.mxu0 0.0
  %8856 = vmatpush1.msra.mxu0 0.0
  %8857 = vmatprep.subr.mxu0 0.0
  %8858 = vmatpush1.msra.mxu0 0.0
  %8859 = vmatprep.subr.mxu0 0.0
  %8860 = vmatpush1.msra.mxu0 0.0
  %8861 = vmatprep.subr.mxu0 0.0
  %8862 = vmatpush1.msra.mxu0 0.0
  %8863 = vmatprep.subr.mxu0 0.0
  %8864 = vmatpush1.msra.mxu0 0.0
  %8865 = vmatprep.subr.mxu0 0.0
  %8866 = vmatpush1.msra.mxu0 0.0
  %8867 = vmatprep.subr.mxu0 0.0
  %8868 = vmatpush1.msra.mxu0 0.0
  %8869 = vmatprep.subr.mxu0 0.0
  %8870 = vmatpush1.msra.mxu0 0.0
  %8871 = vmatprep.subr.mxu0 0.0
  %8872 = vmatpush1.msra.mxu0 0.0
  %8873 = vmatprep.subr.mxu0 0.0
  %8874 = vmatpush1.msra.mxu0 0.0
  %8875 = vmatprep.subr.mxu0 0.0
  %8876 = vmatpush1.msra.mxu0 0.0
  %8877 = vmatprep.subr.mxu0 0.0
  %8878 = vmatpush1.msra.mxu0 0.0
  %8879 = vmatprep.subr.mxu0 0.0
  %8880 = vmatpush1.msra.mxu0 0.0
  %8881 = vmatprep.subr.mxu0 0.0
  %8882 = vmatpush1.msra.mxu0 0.0
  %8883 = vmatprep.subr.mxu0 0.0
  %8884 = vmatpush1.msra.mxu0 0.0
  %8885 = vmatprep.subr.mxu0 0.0
  %8886 = vmatpush1.msra.mxu0 0.0
  %8887 = vmatprep.subr.mxu0 0.0
  %8888 = vmatpush1.msra.mxu0 0.0
  %8889 = vmatprep.subr.mxu0 0.0
  %8890 = vmatpush1.msra.mxu0 0.0
  %8891 = vmatprep.subr.mxu0 0.0
  %8892 = vmatpush1.msra.mxu0 0.0
  %8893 = vmatprep.subr.mxu0 0.0
  %8894 = vmatpush1.msra.mxu0 0.0
  %8895 = vmatprep.subr.mxu0 0.0
  %8896 = vmatpush1.msra.mxu0 0.0
  %8897 = vmatprep.subr.mxu0 0.0
  %8898 = vmatpush1.msra.mxu0 0.0
  %8899 = vmatprep.subr.mxu0 0.0
  %8900 = vmatpush1.msra.mxu0 0.0
  %8901 = vmatprep.subr.mxu0 0.0
  %8902 = vmatpush1.msra.mxu0 0.0
  %8903 = vmatprep.subr.mxu0 0.0
  %8904 = vmatpush1.msra.mxu0 0.0
  %8905 = vmatprep.subr.mxu0 0.0
  %8906 = vmatpush1.msra.mxu0 0.0
  %8907 = vmatprep.subr.mxu0 0.0
  %8908 = vmatpush1.msra.mxu0 0.0
  %8909 = vmatprep.subr.mxu0 0.0
  %8910 = vmatpush1.msra.mxu0 0.0
  %8911 = vmatprep.subr.mxu0 0.0
  %8912 = vmatpush1.msra.mxu0 0.0
  %8913 = vmatprep.mubr.f32.mxu0 0.0
  %8914 = vmatmul.mubr.f32.gmra.mrb[0].mxu0 %v8847
  %v8915 = vpop.f32.mrb[0].mxu0
  %v8916 = vadd.f32 0.0, %v8915
  %v8917 = vpop.f32.mrb[0].mxu0
  %8918 = vdwg.mxu0
  %v8920 = vsel %vm5075, %v5739, 0
  %8922 = vmatprep.subr.mxu0 0.0
  %8923 = vmatpush1.msra.mxu0 %v188
  %8924 = vmatprep.subr.mxu0 0.0
  %8925 = vmatpush1.msra.mxu0 0.0
  %8926 = vmatprep.subr.mxu0 0.0
  %8927 = vmatpush1.msra.mxu0 0.0
  %8928 = vmatprep.subr.mxu0 0.0
  %8929 = vmatpush1.msra.mxu0 0.0
  %8930 = vmatprep.subr.mxu0 0.0
  %8931 = vmatpush1.msra.mxu0 0.0
  %8932 = vmatprep.subr.mxu0 0.0
  %8933 = vmatpush1.msra.mxu0 0.0
  %8934 = vmatprep.subr.mxu0 0.0
  %8935 = vmatpush1.msra.mxu0 0.0
  %8936 = vmatprep.subr.mxu0 0.0
  %8937 = vmatpush1.msra.mxu0 0.0
  %8938 = vmatprep.subr.mxu0 0.0
  %8939 = vmatpush1.msra.mxu0 0.0
  %8940 = vmatprep.subr.mxu0 0.0
  %8941 = vmatpush1.msra.mxu0 0.0
  %8942 = vmatprep.subr.mxu0 0.0
  %8943 = vmatpush1.msra.mxu0 0.0
  %8944 = vmatprep.subr.mxu0 0.0
  %8945 = vmatpush1.msra.mxu0 0.0
  %8946 = vmatprep.subr.mxu0 0.0
  %8947 = vmatpush1.msra.mxu0 0.0
  %8948 = vmatprep.subr.mxu0 0.0
  %8949 = vmatpush1.msra.mxu0 0.0
  %8950 = vmatprep.subr.mxu0 0.0
  %8951 = vmatpush1.msra.mxu0 0.0
  %8952 = vmatprep.subr.mxu0 0.0
  %8953 = vmatpush1.msra.mxu0 0.0
  %8954 = vmatprep.subr.mxu0 0.0
  %8955 = vmatpush1.msra.mxu0 0.0
  %8956 = vmatprep.subr.mxu0 0.0
  %8957 = vmatpush1.msra.mxu0 0.0
  %8958 = vmatprep.subr.mxu0 0.0
  %8959 = vmatpush1.msra.mxu0 0.0
  %8960 = vmatprep.subr.mxu0 0.0
  %8961 = vmatpush1.msra.mxu0 0.0
  %8962 = vmatprep.subr.mxu0 0.0
  %8963 = vmatpush1.msra.mxu0 0.0
  %8964 = vmatprep.subr.mxu0 0.0
  %8965 = vmatpush1.msra.mxu0 0.0
  %8966 = vmatprep.subr.mxu0 0.0
  %8967 = vmatpush1.msra.mxu0 0.0
  %8968 = vmatprep.subr.mxu0 0.0
  %8969 = vmatpush1.msra.mxu0 0.0
  %8970 = vmatprep.subr.mxu0 0.0
  %8971 = vmatpush1.msra.mxu0 0.0
  %8972 = vmatprep.subr.mxu0 0.0
  %8973 = vmatpush1.msra.mxu0 0.0
  %8974 = vmatprep.subr.mxu0 0.0
  %8975 = vmatpush1.msra.mxu0 0.0
  %8976 = vmatprep.subr.mxu0 0.0
  %8977 = vmatpush1.msra.mxu0 0.0
  %8978 = vmatprep.subr.mxu0 0.0
  %8979 = vmatpush1.msra.mxu0 0.0
  %8980 = vmatprep.subr.mxu0 0.0
  %8981 = vmatpush1.msra.mxu0 0.0
  %8982 = vmatprep.subr.mxu0 0.0
  %8983 = vmatpush1.msra.mxu0 0.0
  %8984 = vmatprep.subr.mxu0 0.0
  %8985 = vmatpush1.msra.mxu0 0.0
  %8986 = vmatprep.mubr.f32.mxu0 0.0
  %8987 = vmatmul.mubr.f32.gmra.mrb[0].mxu0 %v8920
  %v8988 = vpop.f32.mrb[0].mxu0
  %v8989 = vadd.f32 0.0, %v8988
  %v8990 = vpop.f32.mrb[0].mxu0
  %8991 = vdwg.mxu0
  %v8993 = vsel %vm5075, %v5741, 0
  %8995 = vmatprep.subr.mxu0 0.0
  %8996 = vmatpush1.msra.mxu0 %v189
  %8997 = vmatprep.subr.mxu0 0.0
  %8998 = vmatpush1.msra.mxu0 0.0
  %8999 = vmatprep.subr.mxu0 0.0
  %9000 = vmatpush1.msra.mxu0 0.0
  %9001 = vmatprep.subr.mxu0 0.0
  %9002 = vmatpush1.msra.mxu0 0.0
  %9003 = vmatprep.subr.mxu0 0.0
  %9004 = vmatpush1.msra.mxu0 0.0
  %9005 = vmatprep.subr.mxu0 0.0
  %9006 = vmatpush1.msra.mxu0 0.0
  %9007 = vmatprep.subr.mxu0 0.0
  %9008 = vmatpush1.msra.mxu0 0.0
  %9009 = vmatprep.subr.mxu0 0.0
  %9010 = vmatpush1.msra.mxu0 0.0
  %9011 = vmatprep.subr.mxu0 0.0
  %9012 = vmatpush1.msra.mxu0 0.0
  %9013 = vmatprep.subr.mxu0 0.0
  %9014 = vmatpush1.msra.mxu0 0.0
  %9015 = vmatprep.subr.mxu0 0.0
  %9016 = vmatpush1.msra.mxu0 0.0
  %9017 = vmatprep.subr.mxu0 0.0
  %9018 = vmatpush1.msra.mxu0 0.0
  %9019 = vmatprep.subr.mxu0 0.0
  %9020 = vmatpush1.msra.mxu0 0.0
  %9021 = vmatprep.subr.mxu0 0.0
  %9022 = vmatpush1.msra.mxu0 0.0
  %9023 = vmatprep.subr.mxu0 0.0
  %9024 = vmatpush1.msra.mxu0 0.0
  %9025 = vmatprep.subr.mxu0 0.0
  %9026 = vmatpush1.msra.mxu0 0.0
  %9027 = vmatprep.subr.mxu0 0.0
  %9028 = vmatpush1.msra.mxu0 0.0
  %9029 = vmatprep.subr.mxu0 0.0
  %9030 = vmatpush1.msra.mxu0 0.0
  %9031 = vmatprep.subr.mxu0 0.0
  %9032 = vmatpush1.msra.mxu0 0.0
  %9033 = vmatprep.subr.mxu0 0.0
  %9034 = vmatpush1.msra.mxu0 0.0
  %9035 = vmatprep.subr.mxu0 0.0
  %9036 = vmatpush1.msra.mxu0 0.0
  %9037 = vmatprep.subr.mxu0 0.0
  %9038 = vmatpush1.msra.mxu0 0.0
  %9039 = vmatprep.subr.mxu0 0.0
  %9040 = vmatpush1.msra.mxu0 0.0
  %9041 = vmatprep.subr.mxu0 0.0
  %9042 = vmatpush1.msra.mxu0 0.0
  %9043 = vmatprep.subr.mxu0 0.0
  %9044 = vmatpush1.msra.mxu0 0.0
  %9045 = vmatprep.subr.mxu0 0.0
  %9046 = vmatpush1.msra.mxu0 0.0
  %9047 = vmatprep.subr.mxu0 0.0
  %9048 = vmatpush1.msra.mxu0 0.0
  %9049 = vmatprep.subr.mxu0 0.0
  %9050 = vmatpush1.msra.mxu0 0.0
  %9051 = vmatprep.subr.mxu0 0.0
  %9052 = vmatpush1.msra.mxu0 0.0
  %9053 = vmatprep.subr.mxu0 0.0
  %9054 = vmatpush1.msra.mxu0 0.0
  %9055 = vmatprep.subr.mxu0 0.0
  %9056 = vmatpush1.msra.mxu0 0.0
  %9057 = vmatprep.subr.mxu0 0.0
  %9058 = vmatpush1.msra.mxu0 0.0
  %9059 = vmatprep.mubr.f32.mxu0 0.0
  %9060 = vmatmul.mubr.f32.gmra.mrb[0].mxu0 %v8993
  %v9061 = vpop.f32.mrb[0].mxu0
  %v9062 = vadd.f32 0.0, %v9061
  %v9063 = vpop.f32.mrb[0].mxu0
  %9064 = vdwg.mxu0
  %v9066 = vsel %vm5075, %v5743, 0
  %9068 = vmatprep.subr.mxu0 0.0
  %9069 = vmatpush1.msra.mxu0 %v190
  %9070 = vmatprep.subr.mxu0 0.0
  %9071 = vmatpush1.msra.mxu0 0.0
  %9072 = vmatprep.subr.mxu0 0.0
  %9073 = vmatpush1.msra.mxu0 0.0
  %9074 = vmatprep.subr.mxu0 0.0
  %9075 = vmatpush1.msra.mxu0 0.0
  %9076 = vmatprep.subr.mxu0 0.0
  %9077 = vmatpush1.msra.mxu0 0.0
  %9078 = vmatprep.subr.mxu0 0.0
  %9079 = vmatpush1.msra.mxu0 0.0
  %9080 = vmatprep.subr.mxu0 0.0
  %9081 = vmatpush1.msra.mxu0 0.0
  %9082 = vmatprep.subr.mxu0 0.0
  %9083 = vmatpush1.msra.mxu0 0.0
  %9084 = vmatprep.subr.mxu0 0.0
  %9085 = vmatpush1.msra.mxu0 0.0
  %9086 = vmatprep.subr.mxu0 0.0
  %9087 = vmatpush1.msra.mxu0 0.0
  %9088 = vmatprep.subr.mxu0 0.0
  %9089 = vmatpush1.msra.mxu0 0.0
  %9090 = vmatprep.subr.mxu0 0.0
  %9091 = vmatpush1.msra.mxu0 0.0
  %9092 = vmatprep.subr.mxu0 0.0
  %9093 = vmatpush1.msra.mxu0 0.0
  %9094 = vmatprep.subr.mxu0 0.0
  %9095 = vmatpush1.msra.mxu0 0.0
  %9096 = vmatprep.subr.mxu0 0.0
  %9097 = vmatpush1.msra.mxu0 0.0
  %9098 = vmatprep.subr.mxu0 0.0
  %9099 = vmatpush1.msra.mxu0 0.0
  %9100 = vmatprep.subr.mxu0 0.0
  %9101 = vmatpush1.msra.mxu0 0.0
  %9102 = vmatprep.subr.mxu0 0.0
  %9103 = vmatpush1.msra.mxu0 0.0
  %9104 = vmatprep.subr.mxu0 0.0
  %9105 = vmatpush1.msra.mxu0 0.0
  %9106 = vmatprep.subr.mxu0 0.0
  %9107 = vmatpush1.msra.mxu0 0.0
  %9108 = vmatprep.subr.mxu0 0.0
  %9109 = vmatpush1.msra.mxu0 0.0
  %9110 = vmatprep.subr.mxu0 0.0
  %9111 = vmatpush1.msra.mxu0 0.0
  %9112 = vmatprep.subr.mxu0 0.0
  %9113 = vmatpush1.msra.mxu0 0.0
  %9114 = vmatprep.subr.mxu0 0.0
  %9115 = vmatpush1.msra.mxu0 0.0
  %9116 = vmatprep.subr.mxu0 0.0
  %9117 = vmatpush1.msra.mxu0 0.0
  %9118 = vmatprep.subr.mxu0 0.0
  %9119 = vmatpush1.msra.mxu0 0.0
  %9120 = vmatprep.subr.mxu0 0.0
  %9121 = vmatpush1.msra.mxu0 0.0
  %9122 = vmatprep.subr.mxu0 0.0
  %9123 = vmatpush1.msra.mxu0 0.0
  %9124 = vmatprep.subr.mxu0 0.0
  %9125 = vmatpush1.msra.mxu0 0.0
  %9126 = vmatprep.subr.mxu0 0.0
  %9127 = vmatpush1.msra.mxu0 0.0
  %9128 = vmatprep.subr.mxu0 0.0
  %9129 = vmatpush1.msra.mxu0 0.0
  %9130 = vmatprep.subr.mxu0 0.0
  %9131 = vmatpush1.msra.mxu0 0.0
  %9132 = vmatprep.mubr.f32.mxu0 0.0
  %9133 = vmatmul.mubr.f32.gmra.mrb[0].mxu0 %v9066
  %v9134 = vpop.f32.mrb[0].mxu0
  %v9135 = vadd.f32 0.0, %v9134
  %v9136 = vpop.f32.mrb[0].mxu0
  %9137 = vdwg.mxu0
  %v9139 = vsel %vm5075, %v5745, 0
  %9141 = vmatprep.subr.mxu0 0.0
  %9142 = vmatpush1.msra.mxu0 %v191
  %9143 = vmatprep.subr.mxu0 0.0
  %9144 = vmatpush1.msra.mxu0 0.0
  %9145 = vmatprep.subr.mxu0 0.0
  %9146 = vmatpush1.msra.mxu0 0.0
  %9147 = vmatprep.subr.mxu0 0.0
  %9148 = vmatpush1.msra.mxu0 0.0
  %9149 = vmatprep.subr.mxu0 0.0
  %9150 = vmatpush1.msra.mxu0 0.0
  %9151 = vmatprep.subr.mxu0 0.0
  %9152 = vmatpush1.msra.mxu0 0.0
  %9153 = vmatprep.subr.mxu0 0.0
  %9154 = vmatpush1.msra.mxu0 0.0
  %9155 = vmatprep.subr.mxu0 0.0
  %9156 = vmatpush1.msra.mxu0 0.0
  %9157 = vmatprep.subr.mxu0 0.0
  %9158 = vmatpush1.msra.mxu0 0.0
  %9159 = vmatprep.subr.mxu0 0.0
  %9160 = vmatpush1.msra.mxu0 0.0
  %9161 = vmatprep.subr.mxu0 0.0
  %9162 = vmatpush1.msra.mxu0 0.0
  %9163 = vmatprep.subr.mxu0 0.0
  %9164 = vmatpush1.msra.mxu0 0.0
  %9165 = vmatprep.subr.mxu0 0.0
  %9166 = vmatpush1.msra.mxu0 0.0
  %9167 = vmatprep.subr.mxu0 0.0
  %9168 = vmatpush1.msra.mxu0 0.0
  %9169 = vmatprep.subr.mxu0 0.0
  %9170 = vmatpush1.msra.mxu0 0.0
  %9171 = vmatprep.subr.mxu0 0.0
  %9172 = vmatpush1.msra.mxu0 0.0
  %9173 = vmatprep.subr.mxu0 0.0
  %9174 = vmatpush1.msra.mxu0 0.0
  %9175 = vmatprep.subr.mxu0 0.0
  %9176 = vmatpush1.msra.mxu0 0.0
  %9177 = vmatprep.subr.mxu0 0.0
  %9178 = vmatpush1.msra.mxu0 0.0
  %9179 = vmatprep.subr.mxu0 0.0
  %9180 = vmatpush1.msra.mxu0 0.0
  %9181 = vmatprep.subr.mxu0 0.0
  %9182 = vmatpush1.msra.mxu0 0.0
  %9183 = vmatprep.subr.mxu0 0.0
  %9184 = vmatpush1.msra.mxu0 0.0
  %9185 = vmatprep.subr.mxu0 0.0
  %9186 = vmatpush1.msra.mxu0 0.0
  %9187 = vmatprep.subr.mxu0 0.0
  %9188 = vmatpush1.msra.mxu0 0.0
  %9189 = vmatprep.subr.mxu0 0.0
  %9190 = vmatpush1.msra.mxu0 0.0
  %9191 = vmatprep.subr.mxu0 0.0
  %9192 = vmatpush1.msra.mxu0 0.0
  %9193 = vmatprep.subr.mxu0 0.0
  %9194 = vmatpush1.msra.mxu0 0.0
  %9195 = vmatprep.subr.mxu0 0.0
  %9196 = vmatpush1.msra.mxu0 0.0
  %9197 = vmatprep.subr.mxu0 0.0
  %9198 = vmatpush1.msra.mxu0 0.0
  %9199 = vmatprep.subr.mxu0 0.0
  %9200 = vmatpush1.msra.mxu0 0.0
  %9201 = vmatprep.subr.mxu0 0.0
  %9202 = vmatpush1.msra.mxu0 0.0
  %9203 = vmatprep.subr.mxu0 0.0
  %9204 = vmatpush1.msra.mxu0 0.0
  %9205 = vmatprep.mubr.f32.mxu0 0.0
  %9206 = vmatmul.mubr.f32.gmra.mrb[0].mxu0 %v9139
  %v9207 = vpop.f32.mrb[0].mxu0
  %v9208 = vadd.f32 0.0, %v9207
  %v9209 = vpop.f32.mrb[0].mxu0
  %9210 = vdwg.mxu0
  %v9212 = vsel %vm5075, %v5747, 0
  %9214 = vmatprep.subr.mxu0 0.0
  %9215 = vmatpush1.msra.mxu0 %v192
  %9216 = vmatprep.subr.mxu0 0.0
  %9217 = vmatpush1.msra.mxu0 0.0
  %9218 = vmatprep.subr.mxu0 0.0
  %9219 = vmatpush1.msra.mxu0 0.0
  %9220 = vmatprep.subr.mxu0 0.0
  %9221 = vmatpush1.msra.mxu0 0.0
  %9222 = vmatprep.subr.mxu0 0.0
  %9223 = vmatpush1.msra.mxu0 0.0
  %9224 = vmatprep.subr.mxu0 0.0
  %9225 = vmatpush1.msra.mxu0 0.0
  %9226 = vmatprep.subr.mxu0 0.0
  %9227 = vmatpush1.msra.mxu0 0.0
  %9228 = vmatprep.subr.mxu0 0.0
  %9229 = vmatpush1.msra.mxu0 0.0
  %9230 = vmatprep.subr.mxu0 0.0
  %9231 = vmatpush1.msra.mxu0 0.0
  %9232 = vmatprep.subr.mxu0 0.0
  %9233 = vmatpush1.msra.mxu0 0.0
  %9234 = vmatprep.subr.mxu0 0.0
  %9235 = vmatpush1.msra.mxu0 0.0
  %9236 = vmatprep.subr.mxu0 0.0
  %9237 = vmatpush1.msra.mxu0 0.0
  %9238 = vmatprep.subr.mxu0 0.0
  %9239 = vmatpush1.msra.mxu0 0.0
  %9240 = vmatprep.subr.mxu0 0.0
  %9241 = vmatpush1.msra.mxu0 0.0
  %9242 = vmatprep.subr.mxu0 0.0
  %9243 = vmatpush1.msra.mxu0 0.0
  %9244 = vmatprep.subr.mxu0 0.0
  %9245 = vmatpush1.msra.mxu0 0.0
  %9246 = vmatprep.subr.mxu0 0.0
  %9247 = vmatpush1.msra.mxu0 0.0
  %9248 = vmatprep.subr.mxu0 0.0
  %9249 = vmatpush1.msra.mxu0 0.0
  %9250 = vmatprep.subr.mxu0 0.0
  %9251 = vmatpush1.msra.mxu0 0.0
  %9252 = vmatprep.subr.mxu0 0.0
  %9253 = vmatpush1.msra.mxu0 0.0
  %9254 = vmatprep.subr.mxu0 0.0
  %9255 = vmatpush1.msra.mxu0 0.0
  %9256 = vmatprep.subr.mxu0 0.0
  %9257 = vmatpush1.msra.mxu0 0.0
  %9258 = vmatprep.subr.mxu0 0.0
  %9259 = vmatpush1.msra.mxu0 0.0
  %9260 = vmatprep.subr.mxu0 0.0
  %9261 = vmatpush1.msra.mxu0 0.0
  %9262 = vmatprep.subr.mxu0 0.0
  %9263 = vmatpush1.msra.mxu0 0.0
  %9264 = vmatprep.subr.mxu0 0.0
  %9265 = vmatpush1.msra.mxu0 0.0
  %9266 = vmatprep.subr.mxu0 0.0
  %9267 = vmatpush1.msra.mxu0 0.0
  %9268 = vmatprep.subr.mxu0 0.0
  %9269 = vmatpush1.msra.mxu0 0.0
  %9270 = vmatprep.subr.mxu0 0.0
  %9271 = vmatpush1.msra.mxu0 0.0
  %9272 = vmatprep.subr.mxu0 0.0
  %9273 = vmatpush1.msra.mxu0 0.0
  %9274 = vmatprep.subr.mxu0 0.0
  %9275 = vmatpush1.msra.mxu0 0.0
  %9276 = vmatprep.subr.mxu0 0.0
  %9277 = vmatpush1.msra.mxu0 0.0
  %9278 = vmatprep.mubr.f32.mxu0 0.0
  %9279 = vmatmul.mubr.f32.gmra.mrb[0].mxu0 %v9212
  %v9280 = vpop.f32.mrb[0].mxu0
  %v9281 = vadd.f32 0.0, %v9280
  %v9282 = vpop.f32.mrb[0].mxu0
  %9283 = vdwg.mxu0
  %v9285 = vsel %vm5075, %v5749, 0
  %9287 = vmatprep.subr.mxu0 0.0
  %9288 = vmatpush1.msra.mxu0 %v193
  %9289 = vmatprep.subr.mxu0 0.0
  %9290 = vmatpush1.msra.mxu0 0.0
  %9291 = vmatprep.subr.mxu0 0.0
  %9292 = vmatpush1.msra.mxu0 0.0
  %9293 = vmatprep.subr.mxu0 0.0
  %9294 = vmatpush1.msra.mxu0 0.0
  %9295 = vmatprep.subr.mxu0 0.0
  %9296 = vmatpush1.msra.mxu0 0.0
  %9297 = vmatprep.subr.mxu0 0.0
  %9298 = vmatpush1.msra.mxu0 0.0
  %9299 = vmatprep.subr.mxu0 0.0
  %9300 = vmatpush1.msra.mxu0 0.0
  %9301 = vmatprep.subr.mxu0 0.0
  %9302 = vmatpush1.msra.mxu0 0.0
  %9303 = vmatprep.subr.mxu0 0.0
  %9304 = vmatpush1.msra.mxu0 0.0
  %9305 = vmatprep.subr.mxu0 0.0
  %9306 = vmatpush1.msra.mxu0 0.0
  %9307 = vmatprep.subr.mxu0 0.0
  %9308 = vmatpush1.msra.mxu0 0.0
  %9309 = vmatprep.subr.mxu0 0.0
  %9310 = vmatpush1.msra.mxu0 0.0
  %9311 = vmatprep.subr.mxu0 0.0
  %9312 = vmatpush1.msra.mxu0 0.0
  %9313 = vmatprep.subr.mxu0 0.0
  %9314 = vmatpush1.msra.mxu0 0.0
  %9315 = vmatprep.subr.mxu0 0.0
  %9316 = vmatpush1.msra.mxu0 0.0
  %9317 = vmatprep.subr.mxu0 0.0
  %9318 = vmatpush1.msra.mxu0 0.0
  %9319 = vmatprep.subr.mxu0 0.0
  %9320 = vmatpush1.msra.mxu0 0.0
  %9321 = vmatprep.subr.mxu0 0.0
  %9322 = vmatpush1.msra.mxu0 0.0
  %9323 = vmatprep.subr.mxu0 0.0
  %9324 = vmatpush1.msra.mxu0 0.0
  %9325 = vmatprep.subr.mxu0 0.0
  %9326 = vmatpush1.msra.mxu0 0.0
  %9327 = vmatprep.subr.mxu0 0.0
  %9328 = vmatpush1.msra.mxu0 0.0
  %9329 = vmatprep.subr.mxu0 0.0
  %9330 = vmatpush1.msra.mxu0 0.0
  %9331 = vmatprep.subr.mxu0 0.0
  %9332 = vmatpush1.msra.mxu0 0.0
  %9333 = vmatprep.subr.mxu0 0.0
  %9334 = vmatpush1.msra.mxu0 0.0
  %9335 = vmatprep.subr.mxu0 0.0
  %9336 = vmatpush1.msra.mxu0 0.0
  %9337 = vmatprep.subr.mxu0 0.0
  %9338 = vmatpush1.msra.mxu0 0.0
  %9339 = vmatprep.subr.mxu0 0.0
  %9340 = vmatpush1.msra.mxu0 0.0
  %9341 = vmatprep.subr.mxu0 0.0
  %9342 = vmatpush1.msra.mxu0 0.0
  %9343 = vmatprep.subr.mxu0 0.0
  %9344 = vmatpush1.msra.mxu0 0.0
  %9345 = vmatprep.subr.mxu0 0.0
  %9346 = vmatpush1.msra.mxu0 0.0
  %9347 = vmatprep.subr.mxu0 0.0
  %9348 = vmatpush1.msra.mxu0 0.0
  %9349 = vmatprep.subr.mxu0 0.0
  %9350 = vmatpush1.msra.mxu0 0.0
  %9351 = vmatprep.mubr.f32.mxu0 0.0
  %9352 = vmatmul.mubr.f32.gmra.mrb[0].mxu0 %v9285
  %v9353 = vpop.f32.mrb[0].mxu0
  %v9354 = vadd.f32 0.0, %v9353
  %v9355 = vpop.f32.mrb[0].mxu0
  %9356 = vdwg.mxu0
  %v9358 = vsel %vm5075, %v5751, 0
  %9360 = vmatprep.subr.mxu0 0.0
  %9361 = vmatpush1.msra.mxu0 %v194
  %9362 = vmatprep.subr.mxu0 0.0
  %9363 = vmatpush1.msra.mxu0 0.0
  %9364 = vmatprep.subr.mxu0 0.0
  %9365 = vmatpush1.msra.mxu0 0.0
  %9366 = vmatprep.subr.mxu0 0.0
  %9367 = vmatpush1.msra.mxu0 0.0
  %9368 = vmatprep.subr.mxu0 0.0
  %9369 = vmatpush1.msra.mxu0 0.0
  %9370 = vmatprep.subr.mxu0 0.0
  %9371 = vmatpush1.msra.mxu0 0.0
  %9372 = vmatprep.subr.mxu0 0.0
  %9373 = vmatpush1.msra.mxu0 0.0
  %9374 = vmatprep.subr.mxu0 0.0
  %9375 = vmatpush1.msra.mxu0 0.0
  %9376 = vmatprep.subr.mxu0 0.0
  %9377 = vmatpush1.msra.mxu0 0.0
  %9378 = vmatprep.subr.mxu0 0.0
  %9379 = vmatpush1.msra.mxu0 0.0
  %9380 = vmatprep.subr.mxu0 0.0
  %9381 = vmatpush1.msra.mxu0 0.0
  %9382 = vmatprep.subr.mxu0 0.0
  %9383 = vmatpush1.msra.mxu0 0.0
  %9384 = vmatprep.subr.mxu0 0.0
  %9385 = vmatpush1.msra.mxu0 0.0
  %9386 = vmatprep.subr.mxu0 0.0
  %9387 = vmatpush1.msra.mxu0 0.0
  %9388 = vmatprep.subr.mxu0 0.0
  %9389 = vmatpush1.msra.mxu0 0.0
  %9390 = vmatprep.subr.mxu0 0.0
  %9391 = vmatpush1.msra.mxu0 0.0
  %9392 = vmatprep.subr.mxu0 0.0
  %9393 = vmatpush1.msra.mxu0 0.0
  %9394 = vmatprep.subr.mxu0 0.0
  %9395 = vmatpush1.msra.mxu0 0.0
  %9396 = vmatprep.subr.mxu0 0.0
  %9397 = vmatpush1.msra.mxu0 0.0
  %9398 = vmatprep.subr.mxu0 0.0
  %9399 = vmatpush1.msra.mxu0 0.0
  %9400 = vmatprep.subr.mxu0 0.0
  %9401 = vmatpush1.msra.mxu0 0.0
  %9402 = vmatprep.subr.mxu0 0.0
  %9403 = vmatpush1.msra.mxu0 0.0
  %9404 = vmatprep.subr.mxu0 0.0
  %9405 = vmatpush1.msra.mxu0 0.0
  %9406 = vmatprep.subr.mxu0 0.0
  %9407 = vmatpush1.msra.mxu0 0.0
  %9408 = vmatprep.subr.mxu0 0.0
  %9409 = vmatpush1.msra.mxu0 0.0
  %9410 = vmatprep.subr.mxu0 0.0
  %9411 = vmatpush1.msra.mxu0 0.0
  %9412 = vmatprep.subr.mxu0 0.0
  %9413 = vmatpush1.msra.mxu0 0.0
  %9414 = vmatprep.subr.mxu0 0.0
  %9415 = vmatpush1.msra.mxu0 0.0
  %9416 = vmatprep.subr.mxu0 0.0
  %9417 = vmatpush1.msra.mxu0 0.0
  %9418 = vmatprep.subr.mxu0 0.0
  %9419 = vmatpush1.msra.mxu0 0.0
  %9420 = vmatprep.subr.mxu0 0.0
  %9421 = vmatpush1.msra.mxu0 0.0
  %9422 = vmatprep.subr.mxu0 0.0
  %9423 = vmatpush1.msra.mxu0 0.0
  %9424 = vmatprep.mubr.f32.mxu0 0.0
  %9425 = vmatmul.mubr.f32.gmra.mrb[0].mxu0 %v9358
  %v9426 = vpop.f32.mrb[0].mxu0
  %v9427 = vadd.f32 0.0, %v9426
  %v9428 = vpop.f32.mrb[0].mxu0
  %9429 = vdwg.mxu0
  %v9431 = vsel %vm5075, %v5753, 0
  %9433 = vmatprep.subr.mxu0 0.0
  %9434 = vmatpush1.msra.mxu0 %v195
  %9435 = vmatprep.subr.mxu0 0.0
  %9436 = vmatpush1.msra.mxu0 0.0
  %9437 = vmatprep.subr.mxu0 0.0
  %9438 = vmatpush1.msra.mxu0 0.0
  %9439 = vmatprep.subr.mxu0 0.0
  %9440 = vmatpush1.msra.mxu0 0.0
  %9441 = vmatprep.subr.mxu0 0.0
  %9442 = vmatpush1.msra.mxu0 0.0
  %9443 = vmatprep.subr.mxu0 0.0
  %9444 = vmatpush1.msra.mxu0 0.0
  %9445 = vmatprep.subr.mxu0 0.0
  %9446 = vmatpush1.msra.mxu0 0.0
  %9447 = vmatprep.subr.mxu0 0.0
  %9448 = vmatpush1.msra.mxu0 0.0
  %9449 = vmatprep.subr.mxu0 0.0
  %9450 = vmatpush1.msra.mxu0 0.0
  %9451 = vmatprep.subr.mxu0 0.0
  %9452 = vmatpush1.msra.mxu0 0.0
  %9453 = vmatprep.subr.mxu0 0.0
  %9454 = vmatpush1.msra.mxu0 0.0
  %9455 = vmatprep.subr.mxu0 0.0
  %9456 = vmatpush1.msra.mxu0 0.0
  %9457 = vmatprep.subr.mxu0 0.0
  %9458 = vmatpush1.msra.mxu0 0.0
  %9459 = vmatprep.subr.mxu0 0.0
  %9460 = vmatpush1.msra.mxu0 0.0
  %9461 = vmatprep.subr.mxu0 0.0
  %9462 = vmatpush1.msra.mxu0 0.0
  %9463 = vmatprep.subr.mxu0 0.0
  %9464 = vmatpush1.msra.mxu0 0.0
  %9465 = vmatprep.subr.mxu0 0.0
  %9466 = vmatpush1.msra.mxu0 0.0
  %9467 = vmatprep.subr.mxu0 0.0
  %9468 = vmatpush1.msra.mxu0 0.0
  %9469 = vmatprep.subr.mxu0 0.0
  %9470 = vmatpush1.msra.mxu0 0.0
  %9471 = vmatprep.subr.mxu0 0.0
  %9472 = vmatpush1.msra.mxu0 0.0
  %9473 = vmatprep.subr.mxu0 0.0
  %9474 = vmatpush1.msra.mxu0 0.0
  %9475 = vmatprep.subr.mxu0 0.0
  %9476 = vmatpush1.msra.mxu0 0.0
  %9477 = vmatprep.subr.mxu0 0.0
  %9478 = vmatpush1.msra.mxu0 0.0
  %9479 = vmatprep.subr.mxu0 0.0
  %9480 = vmatpush1.msra.mxu0 0.0
  %9481 = vmatprep.subr.mxu0 0.0
  %9482 = vmatpush1.msra.mxu0 0.0
  %9483 = vmatprep.subr.mxu0 0.0
  %9484 = vmatpush1.msra.mxu0 0.0
  %9485 = vmatprep.subr.mxu0 0.0
  %9486 = vmatpush1.msra.mxu0 0.0
  %9487 = vmatprep.subr.mxu0 0.0
  %9488 = vmatpush1.msra.mxu0 0.0
  %9489 = vmatprep.subr.mxu0 0.0
  %9490 = vmatpush1.msra.mxu0 0.0
  %9491 = vmatprep.subr.mxu0 0.0
  %9492 = vmatpush1.msra.mxu0 0.0
  %9493 = vmatprep.subr.mxu0 0.0
  %9494 = vmatpush1.msra.mxu0 0.0
  %9495 = vmatprep.subr.mxu0 0.0
  %9496 = vmatpush1.msra.mxu0 0.0
  %9497 = vmatprep.mubr.f32.mxu0 0.0
  %9498 = vmatmul.mubr.f32.gmra.mrb[0].mxu0 %v9431
  %v9499 = vpop.f32.mrb[0].mxu0
  %v9500 = vadd.f32 0.0, %v9499
  %v9501 = vpop.f32.mrb[0].mxu0
  %9502 = vdwg.mxu0
  %v9504 = vsel %vm5075, %v5755, 0
  %9506 = vmatprep.subr.mxu0 0.0
  %9507 = vmatpush1.msra.mxu0 %v196
  %9508 = vmatprep.subr.mxu0 0.0
  %9509 = vmatpush1.msra.mxu0 0.0
  %9510 = vmatprep.subr.mxu0 0.0
  %9511 = vmatpush1.msra.mxu0 0.0
  %9512 = vmatprep.subr.mxu0 0.0
  %9513 = vmatpush1.msra.mxu0 0.0
  %9514 = vmatprep.subr.mxu0 0.0
  %9515 = vmatpush1.msra.mxu0 0.0
  %9516 = vmatprep.subr.mxu0 0.0
  %9517 = vmatpush1.msra.mxu0 0.0
  %9518 = vmatprep.subr.mxu0 0.0
  %9519 = vmatpush1.msra.mxu0 0.0
  %9520 = vmatprep.subr.mxu0 0.0
  %9521 = vmatpush1.msra.mxu0 0.0
  %9522 = vmatprep.subr.mxu0 0.0
  %9523 = vmatpush1.msra.mxu0 0.0
  %9524 = vmatprep.subr.mxu0 0.0
  %9525 = vmatpush1.msra.mxu0 0.0
  %9526 = vmatprep.subr.mxu0 0.0
  %9527 = vmatpush1.msra.mxu0 0.0
  %9528 = vmatprep.subr.mxu0 0.0
  %9529 = vmatpush1.msra.mxu0 0.0
  %9530 = vmatprep.subr.mxu0 0.0
  %9531 = vmatpush1.msra.mxu0 0.0
  %9532 = vmatprep.subr.mxu0 0.0
  %9533 = vmatpush1.msra.mxu0 0.0
  %9534 = vmatprep.subr.mxu0 0.0
  %9535 = vmatpush1.msra.mxu0 0.0
  %9536 = vmatprep.subr.mxu0 0.0
  %9537 = vmatpush1.msra.mxu0 0.0
  %9538 = vmatprep.subr.mxu0 0.0
  %9539 = vmatpush1.msra.mxu0 0.0
  %9540 = vmatprep.subr.mxu0 0.0
  %9541 = vmatpush1.msra.mxu0 0.0
  %9542 = vmatprep.subr.mxu0 0.0
  %9543 = vmatpush1.msra.mxu0 0.0
  %9544 = vmatprep.subr.mxu0 0.0
  %9545 = vmatpush1.msra.mxu0 0.0
  %9546 = vmatprep.subr.mxu0 0.0
  %9547 = vmatpush1.msra.mxu0 0.0
  %9548 = vmatprep.subr.mxu0 0.0
  %9549 = vmatpush1.msra.mxu0 0.0
  %9550 = vmatprep.subr.mxu0 0.0
  %9551 = vmatpush1.msra.mxu0 0.0
  %9552 = vmatprep.subr.mxu0 0.0
  %9553 = vmatpush1.msra.mxu0 0.0
  %9554 = vmatprep.subr.mxu0 0.0
  %9555 = vmatpush1.msra.mxu0 0.0
  %9556 = vmatprep.subr.mxu0 0.0
  %9557 = vmatpush1.msra.mxu0 0.0
  %9558 = vmatprep.subr.mxu0 0.0
  %9559 = vmatpush1.msra.mxu0 0.0
  %9560 = vmatprep.subr.mxu0 0.0
  %9561 = vmatpush1.msra.mxu0 0.0
  %9562 = vmatprep.subr.mxu0 0.0
  %9563 = vmatpush1.msra.mxu0 0.0
  %9564 = vmatprep.subr.mxu0 0.0
  %9565 = vmatpush1.msra.mxu0 0.0
  %9566 = vmatprep.subr.mxu0 0.0
  %9567 = vmatpush1.msra.mxu0 0.0
  %9568 = vmatprep.subr.mxu0 0.0
  %9569 = vmatpush1.msra.mxu0 0.0
  %9570 = vmatprep.mubr.f32.mxu0 0.0
  %9571 = vmatmul.mubr.f32.gmra.mrb[0].mxu0 %v9504
  %v9572 = vpop.f32.mrb[0].mxu0
  %v9573 = vadd.f32 0.0, %v9572
  %v9574 = vpop.f32.mrb[0].mxu0
  %9575 = vdwg.mxu0
  %v9577 = vsel %vm5075, %v5757, 0
  %9579 = vmatprep.subr.mxu0 0.0
  %9580 = vmatpush1.msra.mxu0 %v197
  %9581 = vmatprep.subr.mxu0 0.0
  %9582 = vmatpush1.msra.mxu0 0.0
  %9583 = vmatprep.subr.mxu0 0.0
  %9584 = vmatpush1.msra.mxu0 0.0
  %9585 = vmatprep.subr.mxu0 0.0
  %9586 = vmatpush1.msra.mxu0 0.0
  %9587 = vmatprep.subr.mxu0 0.0
  %9588 = vmatpush1.msra.mxu0 0.0
  %9589 = vmatprep.subr.mxu0 0.0
  %9590 = vmatpush1.msra.mxu0 0.0
  %9591 = vmatprep.subr.mxu0 0.0
  %9592 = vmatpush1.msra.mxu0 0.0
  %9593 = vmatprep.subr.mxu0 0.0
  %9594 = vmatpush1.msra.mxu0 0.0
  %9595 = vmatprep.subr.mxu0 0.0
  %9596 = vmatpush1.msra.mxu0 0.0
  %9597 = vmatprep.subr.mxu0 0.0
  %9598 = vmatpush1.msra.mxu0 0.0
  %9599 = vmatprep.subr.mxu0 0.0
  %9600 = vmatpush1.msra.mxu0 0.0
  %9601 = vmatprep.subr.mxu0 0.0
  %9602 = vmatpush1.msra.mxu0 0.0
  %9603 = vmatprep.subr.mxu0 0.0
  %9604 = vmatpush1.msra.mxu0 0.0
  %9605 = vmatprep.subr.mxu0 0.0
  %9606 = vmatpush1.msra.mxu0 0.0
  %9607 = vmatprep.subr.mxu0 0.0
  %9608 = vmatpush1.msra.mxu0 0.0
  %9609 = vmatprep.subr.mxu0 0.0
  %9610 = vmatpush1.msra.mxu0 0.0
  %9611 = vmatprep.subr.mxu0 0.0
  %9612 = vmatpush1.msra.mxu0 0.0
  %9613 = vmatprep.subr.mxu0 0.0
  %9614 = vmatpush1.msra.mxu0 0.0
  %9615 = vmatprep.subr.mxu0 0.0
  %9616 = vmatpush1.msra.mxu0 0.0
  %9617 = vmatprep.subr.mxu0 0.0
  %9618 = vmatpush1.msra.mxu0 0.0
  %9619 = vmatprep.subr.mxu0 0.0
  %9620 = vmatpush1.msra.mxu0 0.0
  %9621 = vmatprep.subr.mxu0 0.0
  %9622 = vmatpush1.msra.mxu0 0.0
  %9623 = vmatprep.subr.mxu0 0.0
  %9624 = vmatpush1.msra.mxu0 0.0
  %9625 = vmatprep.subr.mxu0 0.0
  %9626 = vmatpush1.msra.mxu0 0.0
  %9627 = vmatprep.subr.mxu0 0.0
  %9628 = vmatpush1.msra.mxu0 0.0
  %9629 = vmatprep.subr.mxu0 0.0
  %9630 = vmatpush1.msra.mxu0 0.0
  %9631 = vmatprep.subr.mxu0 0.0
  %9632 = vmatpush1.msra.mxu0 0.0
  %9633 = vmatprep.subr.mxu0 0.0
  %9634 = vmatpush1.msra.mxu0 0.0
  %9635 = vmatprep.subr.mxu0 0.0
  %9636 = vmatpush1.msra.mxu0 0.0
  %9637 = vmatprep.subr.mxu0 0.0
  %9638 = vmatpush1.msra.mxu0 0.0
  %9639 = vmatprep.subr.mxu0 0.0
  %9640 = vmatpush1.msra.mxu0 0.0
  %9641 = vmatprep.subr.mxu0 0.0
  %9642 = vmatpush1.msra.mxu0 0.0
  %9643 = vmatprep.mubr.f32.mxu0 0.0
  %9644 = vmatmul.mubr.f32.gmra.mrb[0].mxu0 %v9577
  %v9645 = vpop.f32.mrb[0].mxu0
  %v9646 = vadd.f32 0.0, %v9645
  %v9647 = vpop.f32.mrb[0].mxu0
  %9648 = vdwg.mxu0
  %v9650 = vsel %vm5075, %v5759, 0
  %9652 = vmatprep.subr.mxu0 0.0
  %9653 = vmatpush1.msra.mxu0 %v198
  %9654 = vmatprep.subr.mxu0 0.0
  %9655 = vmatpush1.msra.mxu0 0.0
  %9656 = vmatprep.subr.mxu0 0.0
  %9657 = vmatpush1.msra.mxu0 0.0
  %9658 = vmatprep.subr.mxu0 0.0
  %9659 = vmatpush1.msra.mxu0 0.0
  %9660 = vmatprep.subr.mxu0 0.0
  %9661 = vmatpush1.msra.mxu0 0.0
  %9662 = vmatprep.subr.mxu0 0.0
  %9663 = vmatpush1.msra.mxu0 0.0
  %9664 = vmatprep.subr.mxu0 0.0
  %9665 = vmatpush1.msra.mxu0 0.0
  %9666 = vmatprep.subr.mxu0 0.0
  %9667 = vmatpush1.msra.mxu0 0.0
  %9668 = vmatprep.subr.mxu0 0.0
  %9669 = vmatpush1.msra.mxu0 0.0
  %9670 = vmatprep.subr.mxu0 0.0
  %9671 = vmatpush1.msra.mxu0 0.0
  %9672 = vmatprep.subr.mxu0 0.0
  %9673 = vmatpush1.msra.mxu0 0.0
  %9674 = vmatprep.subr.mxu0 0.0
  %9675 = vmatpush1.msra.mxu0 0.0
  %9676 = vmatprep.subr.mxu0 0.0
  %9677 = vmatpush1.msra.mxu0 0.0
  %9678 = vmatprep.subr.mxu0 0.0
  %9679 = vmatpush1.msra.mxu0 0.0
  %9680 = vmatprep.subr.mxu0 0.0
  %9681 = vmatpush1.msra.mxu0 0.0
  %9682 = vmatprep.subr.mxu0 0.0
  %9683 = vmatpush1.msra.mxu0 0.0
  %9684 = vmatprep.subr.mxu0 0.0
  %9685 = vmatpush1.msra.mxu0 0.0
  %9686 = vmatprep.subr.mxu0 0.0
  %9687 = vmatpush1.msra.mxu0 0.0
  %9688 = vmatprep.subr.mxu0 0.0
  %9689 = vmatpush1.msra.mxu0 0.0
  %9690 = vmatprep.subr.mxu0 0.0
  %9691 = vmatpush1.msra.mxu0 0.0
  %9692 = vmatprep.subr.mxu0 0.0
  %9693 = vmatpush1.msra.mxu0 0.0
  %9694 = vmatprep.subr.mxu0 0.0
  %9695 = vmatpush1.msra.mxu0 0.0
  %9696 = vmatprep.subr.mxu0 0.0
  %9697 = vmatpush1.msra.mxu0 0.0
  %9698 = vmatprep.subr.mxu0 0.0
  %9699 = vmatpush1.msra.mxu0 0.0
  %9700 = vmatprep.subr.mxu0 0.0
  %9701 = vmatpush1.msra.mxu0 0.0
  %9702 = vmatprep.subr.mxu0 0.0
  %9703 = vmatpush1.msra.mxu0 0.0
  %9704 = vmatprep.subr.mxu0 0.0
  %9705 = vmatpush1.msra.mxu0 0.0
  %9706 = vmatprep.subr.mxu0 0.0
  %9707 = vmatpush1.msra.mxu0 0.0
  %9708 = vmatprep.subr.mxu0 0.0
  %9709 = vmatpush1.msra.mxu0 0.0
  %9710 = vmatprep.subr.mxu0 0.0
  %9711 = vmatpush1.msra.mxu0 0.0
  %9712 = vmatprep.subr.mxu0 0.0
  %9713 = vmatpush1.msra.mxu0 0.0
  %9714 = vmatprep.subr.mxu0 0.0
  %9715 = vmatpush1.msra.mxu0 0.0
  %9716 = vmatprep.mubr.f32.mxu0 0.0
  %9717 = vmatmul.mubr.f32.gmra.mrb[0].mxu0 %v9650
  %v9718 = vpop.f32.mrb[0].mxu0
  %v9719 = vadd.f32 0.0, %v9718
  %v9720 = vpop.f32.mrb[0].mxu0
  %9721 = vdwg.mxu0
  %v9723 = vsel %vm5075, %v5761, 0
  %9725 = vmatprep.subr.mxu0 0.0
  %9726 = vmatpush1.msra.mxu0 %v199
  %9727 = vmatprep.subr.mxu0 0.0
  %9728 = vmatpush1.msra.mxu0 0.0
  %9729 = vmatprep.subr.mxu0 0.0
  %9730 = vmatpush1.msra.mxu0 0.0
  %9731 = vmatprep.subr.mxu0 0.0
  %9732 = vmatpush1.msra.mxu0 0.0
  %9733 = vmatprep.subr.mxu0 0.0
  %9734 = vmatpush1.msra.mxu0 0.0
  %9735 = vmatprep.subr.mxu0 0.0
  %9736 = vmatpush1.msra.mxu0 0.0
  %9737 = vmatprep.subr.mxu0 0.0
  %9738 = vmatpush1.msra.mxu0 0.0
  %9739 = vmatprep.subr.mxu0 0.0
  %9740 = vmatpush1.msra.mxu0 0.0
  %9741 = vmatprep.subr.mxu0 0.0
  %9742 = vmatpush1.msra.mxu0 0.0
  %9743 = vmatprep.subr.mxu0 0.0
  %9744 = vmatpush1.msra.mxu0 0.0
  %9745 = vmatprep.subr.mxu0 0.0
  %9746 = vmatpush1.msra.mxu0 0.0
  %9747 = vmatprep.subr.mxu0 0.0
  %9748 = vmatpush1.msra.mxu0 0.0
  %9749 = vmatprep.subr.mxu0 0.0
  %9750 = vmatpush1.msra.mxu0 0.0
  %9751 = vmatprep.subr.mxu0 0.0
  %9752 = vmatpush1.msra.mxu0 0.0
  %9753 = vmatprep.subr.mxu0 0.0
  %9754 = vmatpush1.msra.mxu0 0.0
  %9755 = vmatprep.subr.mxu0 0.0
  %9756 = vmatpush1.msra.mxu0 0.0
  %9757 = vmatprep.subr.mxu0 0.0
  %9758 = vmatpush1.msra.mxu0 0.0
  %9759 = vmatprep.subr.mxu0 0.0
  %9760 = vmatpush1.msra.mxu0 0.0
  %9761 = vmatprep.subr.mxu0 0.0
  %9762 = vmatpush1.msra.mxu0 0.0
  %9763 = vmatprep.subr.mxu0 0.0
  %9764 = vmatpush1.msra.mxu0 0.0
  %9765 = vmatprep.subr.mxu0 0.0
  %9766 = vmatpush1.msra.mxu0 0.0
  %9767 = vmatprep.subr.mxu0 0.0
  %9768 = vmatpush1.msra.mxu0 0.0
  %9769 = vmatprep.subr.mxu0 0.0
  %9770 = vmatpush1.msra.mxu0 0.0
  %9771 = vmatprep.subr.mxu0 0.0
  %9772 = vmatpush1.msra.mxu0 0.0
  %9773 = vmatprep.subr.mxu0 0.0
  %9774 = vmatpush1.msra.mxu0 0.0
  %9775 = vmatprep.subr.mxu0 0.0
  %9776 = vmatpush1.msra.mxu0 0.0
  %9777 = vmatprep.subr.mxu0 0.0
  %9778 = vmatpush1.msra.mxu0 0.0
  %9779 = vmatprep.subr.mxu0 0.0
  %9780 = vmatpush1.msra.mxu0 0.0
  %9781 = vmatprep.subr.mxu0 0.0
  %9782 = vmatpush1.msra.mxu0 0.0
  %9783 = vmatprep.subr.mxu0 0.0
  %9784 = vmatpush1.msra.mxu0 0.0
  %9785 = vmatprep.subr.mxu0 0.0
  %9786 = vmatpush1.msra.mxu0 0.0
  %9787 = vmatprep.subr.mxu0 0.0
  %9788 = vmatpush1.msra.mxu0 0.0
  %9789 = vmatprep.mubr.f32.mxu0 0.0
  %9790 = vmatmul.mubr.f32.gmra.mrb[0].mxu0 %v9723
  %v9791 = vpop.f32.mrb[0].mxu0
  %v9792 = vadd.f32 0.0, %v9791
  %v9793 = vpop.f32.mrb[0].mxu0
  %9794 = vdwg.mxu0
  %v9796 = vsel %vm5075, %v5763, 0
  %9798 = vmatprep.subr.mxu0 0.0
  %9799 = vmatpush1.msra.mxu0 %v200
  %9800 = vmatprep.subr.mxu0 0.0
  %9801 = vmatpush1.msra.mxu0 0.0
  %9802 = vmatprep.subr.mxu0 0.0
  %9803 = vmatpush1.msra.mxu0 0.0
  %9804 = vmatprep.subr.mxu0 0.0
  %9805 = vmatpush1.msra.mxu0 0.0
  %9806 = vmatprep.subr.mxu0 0.0
  %9807 = vmatpush1.msra.mxu0 0.0
  %9808 = vmatprep.subr.mxu0 0.0
  %9809 = vmatpush1.msra.mxu0 0.0
  %9810 = vmatprep.subr.mxu0 0.0
  %9811 = vmatpush1.msra.mxu0 0.0
  %9812 = vmatprep.subr.mxu0 0.0
  %9813 = vmatpush1.msra.mxu0 0.0
  %9814 = vmatprep.subr.mxu0 0.0
  %9815 = vmatpush1.msra.mxu0 0.0
  %9816 = vmatprep.subr.mxu0 0.0
  %9817 = vmatpush1.msra.mxu0 0.0
  %9818 = vmatprep.subr.mxu0 0.0
  %9819 = vmatpush1.msra.mxu0 0.0
  %9820 = vmatprep.subr.mxu0 0.0
  %9821 = vmatpush1.msra.mxu0 0.0
  %9822 = vmatprep.subr.mxu0 0.0
  %9823 = vmatpush1.msra.mxu0 0.0
  %9824 = vmatprep.subr.mxu0 0.0
  %9825 = vmatpush1.msra.mxu0 0.0
  %9826 = vmatprep.subr.mxu0 0.0
  %9827 = vmatpush1.msra.mxu0 0.0
  %9828 = vmatprep.subr.mxu0 0.0
  %9829 = vmatpush1.msra.mxu0 0.0
  %9830 = vmatprep.subr.mxu0 0.0
  %9831 = vmatpush1.msra.mxu0 0.0
  %9832 = vmatprep.subr.mxu0 0.0
  %9833 = vmatpush1.msra.mxu0 0.0
  %9834 = vmatprep.subr.mxu0 0.0
  %9835 = vmatpush1.msra.mxu0 0.0
  %9836 = vmatprep.subr.mxu0 0.0
  %9837 = vmatpush1.msra.mxu0 0.0
  %9838 = vmatprep.subr.mxu0 0.0
  %9839 = vmatpush1.msra.mxu0 0.0
  %9840 = vmatprep.subr.mxu0 0.0
  %9841 = vmatpush1.msra.mxu0 0.0
  %9842 = vmatprep.subr.mxu0 0.0
  %9843 = vmatpush1.msra.mxu0 0.0
  %9844 = vmatprep.subr.mxu0 0.0
  %9845 = vmatpush1.msra.mxu0 0.0
  %9846 = vmatprep.subr.mxu0 0.0
  %9847 = vmatpush1.msra.mxu0 0.0
  %9848 = vmatprep.subr.mxu0 0.0
  %9849 = vmatpush1.msra.mxu0 0.0
  %9850 = vmatprep.subr.mxu0 0.0
  %9851 = vmatpush1.msra.mxu0 0.0
  %9852 = vmatprep.subr.mxu0 0.0
  %9853 = vmatpush1.msra.mxu0 0.0
  %9854 = vmatprep.subr.mxu0 0.0
  %9855 = vmatpush1.msra.mxu0 0.0
  %9856 = vmatprep.subr.mxu0 0.0
  %9857 = vmatpush1.msra.mxu0 0.0
  %9858 = vmatprep.subr.mxu0 0.0
  %9859 = vmatpush1.msra.mxu0 0.0
  %9860 = vmatprep.subr.mxu0 0.0
  %9861 = vmatpush1.msra.mxu0 0.0
  %9862 = vmatprep.mubr.f32.mxu0 0.0
  %9863 = vmatmul.mubr.f32.gmra.mrb[0].mxu0 %v9796
  %v9864 = vpop.f32.mrb[0].mxu0
  %v9865 = vadd.f32 0.0, %v9864
  %v9866 = vpop.f32.mrb[0].mxu0
  %9867 = vdwg.mxu0
  %v9869 = vsel %vm5075, %v5765, 0
  %9871 = vmatprep.subr.mxu0 0.0
  %9872 = vmatpush1.msra.mxu0 %v201
  %9873 = vmatprep.subr.mxu0 0.0
  %9874 = vmatpush1.msra.mxu0 0.0
  %9875 = vmatprep.subr.mxu0 0.0
  %9876 = vmatpush1.msra.mxu0 0.0
  %9877 = vmatprep.subr.mxu0 0.0
  %9878 = vmatpush1.msra.mxu0 0.0
  %9879 = vmatprep.subr.mxu0 0.0
  %9880 = vmatpush1.msra.mxu0 0.0
  %9881 = vmatprep.subr.mxu0 0.0
  %9882 = vmatpush1.msra.mxu0 0.0
  %9883 = vmatprep.subr.mxu0 0.0
  %9884 = vmatpush1.msra.mxu0 0.0
  %9885 = vmatprep.subr.mxu0 0.0
  %9886 = vmatpush1.msra.mxu0 0.0
  %9887 = vmatprep.subr.mxu0 0.0
  %9888 = vmatpush1.msra.mxu0 0.0
  %9889 = vmatprep.subr.mxu0 0.0
  %9890 = vmatpush1.msra.mxu0 0.0
  %9891 = vmatprep.subr.mxu0 0.0
  %9892 = vmatpush1.msra.mxu0 0.0
  %9893 = vmatprep.subr.mxu0 0.0
  %9894 = vmatpush1.msra.mxu0 0.0
  %9895 = vmatprep.subr.mxu0 0.0
  %9896 = vmatpush1.msra.mxu0 0.0
  %9897 = vmatprep.subr.mxu0 0.0
  %9898 = vmatpush1.msra.mxu0 0.0
  %9899 = vmatprep.subr.mxu0 0.0
  %9900 = vmatpush1.msra.mxu0 0.0
  %9901 = vmatprep.subr.mxu0 0.0
  %9902 = vmatpush1.msra.mxu0 0.0
  %9903 = vmatprep.subr.mxu0 0.0
  %9904 = vmatpush1.msra.mxu0 0.0
  %9905 = vmatprep.subr.mxu0 0.0
  %9906 = vmatpush1.msra.mxu0 0.0
  %9907 = vmatprep.subr.mxu0 0.0
  %9908 = vmatpush1.msra.mxu0 0.0
  %9909 = vmatprep.subr.mxu0 0.0
  %9910 = vmatpush1.msra.mxu0 0.0
  %9911 = vmatprep.subr.mxu0 0.0
  %9912 = vmatpush1.msra.mxu0 0.0
  %9913 = vmatprep.subr.mxu0 0.0
  %9914 = vmatpush1.msra.mxu0 0.0
  %9915 = vmatprep.subr.mxu0 0.0
  %9916 = vmatpush1.msra.mxu0 0.0
  %9917 = vmatprep.subr.mxu0 0.0
  %9918 = vmatpush1.msra.mxu0 0.0
  %9919 = vmatprep.subr.mxu0 0.0
  %9920 = vmatpush1.msra.mxu0 0.0
  %9921 = vmatprep.subr.mxu0 0.0
  %9922 = vmatpush1.msra.mxu0 0.0
  %9923 = vmatprep.subr.mxu0 0.0
  %9924 = vmatpush1.msra.mxu0 0.0
  %9925 = vmatprep.subr.mxu0 0.0
  %9926 = vmatpush1.msra.mxu0 0.0
  %9927 = vmatprep.subr.mxu0 0.0
  %9928 = vmatpush1.msra.mxu0 0.0
  %9929 = vmatprep.subr.mxu0 0.0
  %9930 = vmatpush1.msra.mxu0 0.0
  %9931 = vmatprep.subr.mxu0 0.0
  %9932 = vmatpush1.msra.mxu0 0.0
  %9933 = vmatprep.subr.mxu0 0.0
  %9934 = vmatpush1.msra.mxu0 0.0
  %9935 = vmatprep.mubr.f32.mxu0 0.0
  %9936 = vmatmul.mubr.f32.gmra.mrb[0].mxu0 %v9869
  %v9937 = vpop.f32.mrb[0].mxu0
  %v9938 = vadd.f32 0.0, %v9937
  %v9939 = vpop.f32.mrb[0].mxu0
  %9940 = vdwg.mxu0
  %v9942 = vsel %vm5075, %v5767, 0
  %9944 = vmatprep.subr.mxu0 0.0
  %9945 = vmatpush1.msra.mxu0 %v202
  %9946 = vmatprep.subr.mxu0 0.0
  %9947 = vmatpush1.msra.mxu0 0.0
  %9948 = vmatprep.subr.mxu0 0.0
  %9949 = vmatpush1.msra.mxu0 0.0
  %9950 = vmatprep.subr.mxu0 0.0
  %9951 = vmatpush1.msra.mxu0 0.0
  %9952 = vmatprep.subr.mxu0 0.0
  %9953 = vmatpush1.msra.mxu0 0.0
  %9954 = vmatprep.subr.mxu0 0.0
  %9955 = vmatpush1.msra.mxu0 0.0
  %9956 = vmatprep.subr.mxu0 0.0
  %9957 = vmatpush1.msra.mxu0 0.0
  %9958 = vmatprep.subr.mxu0 0.0
  %9959 = vmatpush1.msra.mxu0 0.0
  %9960 = vmatprep.subr.mxu0 0.0
  %9961 = vmatpush1.msra.mxu0 0.0
  %9962 = vmatprep.subr.mxu0 0.0
  %9963 = vmatpush1.msra.mxu0 0.0
  %9964 = vmatprep.subr.mxu0 0.0
  %9965 = vmatpush1.msra.mxu0 0.0
  %9966 = vmatprep.subr.mxu0 0.0
  %9967 = vmatpush1.msra.mxu0 0.0
  %9968 = vmatprep.subr.mxu0 0.0
  %9969 = vmatpush1.msra.mxu0 0.0
  %9970 = vmatprep.subr.mxu0 0.0
  %9971 = vmatpush1.msra.mxu0 0.0
  %9972 = vmatprep.subr.mxu0 0.0
  %9973 = vmatpush1.msra.mxu0 0.0
  %9974 = vmatprep.subr.mxu0 0.0
  %9975 = vmatpush1.msra.mxu0 0.0
  %9976 = vmatprep.subr.mxu0 0.0
  %9977 = vmatpush1.msra.mxu0 0.0
  %9978 = vmatprep.subr.mxu0 0.0
  %9979 = vmatpush1.msra.mxu0 0.0
  %9980 = vmatprep.subr.mxu0 0.0
  %9981 = vmatpush1.msra.mxu0 0.0
  %9982 = vmatprep.subr.mxu0 0.0
  %9983 = vmatpush1.msra.mxu0 0.0
  %9984 = vmatprep.subr.mxu0 0.0
  %9985 = vmatpush1.msra.mxu0 0.0
  %9986 = vmatprep.subr.mxu0 0.0
  %9987 = vmatpush1.msra.mxu0 0.0
  %9988 = vmatprep.subr.mxu0 0.0
  %9989 = vmatpush1.msra.mxu0 0.0
  %9990 = vmatprep.subr.mxu0 0.0
  %9991 = vmatpush1.msra.mxu0 0.0
  %9992 = vmatprep.subr.mxu0 0.0
  %9993 = vmatpush1.msra.mxu0 0.0
  %9994 = vmatprep.subr.mxu0 0.0
  %9995 = vmatpush1.msra.mxu0 0.0
  %9996 = vmatprep.subr.mxu0 0.0
  %9997 = vmatpush1.msra.mxu0 0.0
  %9998 = vmatprep.subr.mxu0 0.0
  %9999 = vmatpush1.msra.mxu0 0.0
  %10000 = vmatprep.subr.mxu0 0.0
  %10001 = vmatpush1.msra.mxu0 0.0
  %10002 = vmatprep.subr.mxu0 0.0
  %10003 = vmatpush1.msra.mxu0 0.0
  %10004 = vmatprep.subr.mxu0 0.0
  %10005 = vmatpush1.msra.mxu0 0.0
  %10006 = vmatprep.subr.mxu0 0.0
  %10007 = vmatpush1.msra.mxu0 0.0
  %10008 = vmatprep.mubr.f32.mxu0 0.0
  %10009 = vmatmul.mubr.f32.gmra.mrb[0].mxu0 %v9942
  %v10010 = vpop.f32.mrb[0].mxu0
  %v10011 = vadd.f32 0.0, %v10010
  %v10012 = vpop.f32.mrb[0].mxu0
  %10013 = vdwg.mxu0
  %v10015 = vsel %vm5075, %v5769, 0
  %10017 = vmatprep.subr.mxu0 0.0
  %10018 = vmatpush1.msra.mxu0 %v203
  %10019 = vmatprep.subr.mxu0 0.0
  %10020 = vmatpush1.msra.mxu0 0.0
  %10021 = vmatprep.subr.mxu0 0.0
  %10022 = vmatpush1.msra.mxu0 0.0
  %10023 = vmatprep.subr.mxu0 0.0
  %10024 = vmatpush1.msra.mxu0 0.0
  %10025 = vmatprep.subr.mxu0 0.0
  %10026 = vmatpush1.msra.mxu0 0.0
  %10027 = vmatprep.subr.mxu0 0.0
  %10028 = vmatpush1.msra.mxu0 0.0
  %10029 = vmatprep.subr.mxu0 0.0
  %10030 = vmatpush1.msra.mxu0 0.0
  %10031 = vmatprep.subr.mxu0 0.0
  %10032 = vmatpush1.msra.mxu0 0.0
  %10033 = vmatprep.subr.mxu0 0.0
  %10034 = vmatpush1.msra.mxu0 0.0
  %10035 = vmatprep.subr.mxu0 0.0
  %10036 = vmatpush1.msra.mxu0 0.0
  %10037 = vmatprep.subr.mxu0 0.0
  %10038 = vmatpush1.msra.mxu0 0.0
  %10039 = vmatprep.subr.mxu0 0.0
  %10040 = vmatpush1.msra.mxu0 0.0
  %10041 = vmatprep.subr.mxu0 0.0
  %10042 = vmatpush1.msra.mxu0 0.0
  %10043 = vmatprep.subr.mxu0 0.0
  %10044 = vmatpush1.msra.mxu0 0.0
  %10045 = vmatprep.subr.mxu0 0.0
  %10046 = vmatpush1.msra.mxu0 0.0
  %10047 = vmatprep.subr.mxu0 0.0
  %10048 = vmatpush1.msra.mxu0 0.0
  %10049 = vmatprep.subr.mxu0 0.0
  %10050 = vmatpush1.msra.mxu0 0.0
  %10051 = vmatprep.subr.mxu0 0.0
  %10052 = vmatpush1.msra.mxu0 0.0
  %10053 = vmatprep.subr.mxu0 0.0
  %10054 = vmatpush1.msra.mxu0 0.0
  %10055 = vmatprep.subr.mxu0 0.0
  %10056 = vmatpush1.msra.mxu0 0.0
  %10057 = vmatprep.subr.mxu0 0.0
  %10058 = vmatpush1.msra.mxu0 0.0
  %10059 = vmatprep.subr.mxu0 0.0
  %10060 = vmatpush1.msra.mxu0 0.0
  %10061 = vmatprep.subr.mxu0 0.0
  %10062 = vmatpush1.msra.mxu0 0.0
  %10063 = vmatprep.subr.mxu0 0.0
  %10064 = vmatpush1.msra.mxu0 0.0
  %10065 = vmatprep.subr.mxu0 0.0
  %10066 = vmatpush1.msra.mxu0 0.0
  %10067 = vmatprep.subr.mxu0 0.0
  %10068 = vmatpush1.msra.mxu0 0.0
  %10069 = vmatprep.subr.mxu0 0.0
  %10070 = vmatpush1.msra.mxu0 0.0
  %10071 = vmatprep.subr.mxu0 0.0
  %10072 = vmatpush1.msra.mxu0 0.0
  %10073 = vmatprep.subr.mxu0 0.0
  %10074 = vmatpush1.msra.mxu0 0.0
  %10075 = vmatprep.subr.mxu0 0.0
  %10076 = vmatpush1.msra.mxu0 0.0
  %10077 = vmatprep.subr.mxu0 0.0
  %10078 = vmatpush1.msra.mxu0 0.0
  %10079 = vmatprep.subr.mxu0 0.0
  %10080 = vmatpush1.msra.mxu0 0.0
  %10081 = vmatprep.mubr.f32.mxu0 0.0
  %10082 = vmatmul.mubr.f32.gmra.mrb[0].mxu0 %v10015
  %v10083 = vpop.f32.mrb[0].mxu0
  %v10084 = vadd.f32 0.0, %v10083
  %v10085 = vpop.f32.mrb[0].mxu0
  %10086 = vdwg.mxu0
  %v10088 = vsel %vm5075, %v5771, 0
  %10090 = vmatprep.subr.mxu0 0.0
  %10091 = vmatpush1.msra.mxu0 %v204
  %10092 = vmatprep.subr.mxu0 0.0
  %10093 = vmatpush1.msra.mxu0 0.0
  %10094 = vmatprep.subr.mxu0 0.0
  %10095 = vmatpush1.msra.mxu0 0.0
  %10096 = vmatprep.subr.mxu0 0.0
  %10097 = vmatpush1.msra.mxu0 0.0
  %10098 = vmatprep.subr.mxu0 0.0
  %10099 = vmatpush1.msra.mxu0 0.0
  %10100 = vmatprep.subr.mxu0 0.0
  %10101 = vmatpush1.msra.mxu0 0.0
  %10102 = vmatprep.subr.mxu0 0.0
  %10103 = vmatpush1.msra.mxu0 0.0
  %10104 = vmatprep.subr.mxu0 0.0
  %10105 = vmatpush1.msra.mxu0 0.0
  %10106 = vmatprep.subr.mxu0 0.0
  %10107 = vmatpush1.msra.mxu0 0.0
  %10108 = vmatprep.subr.mxu0 0.0
  %10109 = vmatpush1.msra.mxu0 0.0
  %10110 = vmatprep.subr.mxu0 0.0
  %10111 = vmatpush1.msra.mxu0 0.0
  %10112 = vmatprep.subr.mxu0 0.0
  %10113 = vmatpush1.msra.mxu0 0.0
  %10114 = vmatprep.subr.mxu0 0.0
  %10115 = vmatpush1.msra.mxu0 0.0
  %10116 = vmatprep.subr.mxu0 0.0
  %10117 = vmatpush1.msra.mxu0 0.0
  %10118 = vmatprep.subr.mxu0 0.0
  %10119 = vmatpush1.msra.mxu0 0.0
  %10120 = vmatprep.subr.mxu0 0.0
  %10121 = vmatpush1.msra.mxu0 0.0
  %10122 = vmatprep.subr.mxu0 0.0
  %10123 = vmatpush1.msra.mxu0 0.0
  %10124 = vmatprep.subr.mxu0 0.0
  %10125 = vmatpush1.msra.mxu0 0.0
  %10126 = vmatprep.subr.mxu0 0.0
  %10127 = vmatpush1.msra.mxu0 0.0
  %10128 = vmatprep.subr.mxu0 0.0
  %10129 = vmatpush1.msra.mxu0 0.0
  %10130 = vmatprep.subr.mxu0 0.0
  %10131 = vmatpush1.msra.mxu0 0.0
  %10132 = vmatprep.subr.mxu0 0.0
  %10133 = vmatpush1.msra.mxu0 0.0
  %10134 = vmatprep.subr.mxu0 0.0
  %10135 = vmatpush1.msra.mxu0 0.0
  %10136 = vmatprep.subr.mxu0 0.0
  %10137 = vmatpush1.msra.mxu0 0.0
  %10138 = vmatprep.subr.mxu0 0.0
  %10139 = vmatpush1.msra.mxu0 0.0
  %10140 = vmatprep.subr.mxu0 0.0
  %10141 = vmatpush1.msra.mxu0 0.0
  %10142 = vmatprep.subr.mxu0 0.0
  %10143 = vmatpush1.msra.mxu0 0.0
  %10144 = vmatprep.subr.mxu0 0.0
  %10145 = vmatpush1.msra.mxu0 0.0
  %10146 = vmatprep.subr.mxu0 0.0
  %10147 = vmatpush1.msra.mxu0 0.0
  %10148 = vmatprep.subr.mxu0 0.0
  %10149 = vmatpush1.msra.mxu0 0.0
  %10150 = vmatprep.subr.mxu0 0.0
  %10151 = vmatpush1.msra.mxu0 0.0
  %10152 = vmatprep.subr.mxu0 0.0
  %10153 = vmatpush1.msra.mxu0 0.0
  %10154 = vmatprep.mubr.f32.mxu0 0.0
  %10155 = vmatmul.mubr.f32.gmra.mrb[0].mxu0 %v10088
  %v10156 = vpop.f32.mrb[0].mxu0
  %v10157 = vadd.f32 0.0, %v10156
  %v10158 = vpop.f32.mrb[0].mxu0
  %10159 = vdwg.mxu0
  %v10161 = vsel %vm5075, %v5773, 0
  %10163 = vmatprep.subr.mxu0 0.0
  %10164 = vmatpush1.msra.mxu0 %v205
  %10165 = vmatprep.subr.mxu0 0.0
  %10166 = vmatpush1.msra.mxu0 0.0
  %10167 = vmatprep.subr.mxu0 0.0
  %10168 = vmatpush1.msra.mxu0 0.0
  %10169 = vmatprep.subr.mxu0 0.0
  %10170 = vmatpush1.msra.mxu0 0.0
  %10171 = vmatprep.subr.mxu0 0.0
  %10172 = vmatpush1.msra.mxu0 0.0
  %10173 = vmatprep.subr.mxu0 0.0
  %10174 = vmatpush1.msra.mxu0 0.0
  %10175 = vmatprep.subr.mxu0 0.0
  %10176 = vmatpush1.msra.mxu0 0.0
  %10177 = vmatprep.subr.mxu0 0.0
  %10178 = vmatpush1.msra.mxu0 0.0
  %10179 = vmatprep.subr.mxu0 0.0
  %10180 = vmatpush1.msra.mxu0 0.0
  %10181 = vmatprep.subr.mxu0 0.0
  %10182 = vmatpush1.msra.mxu0 0.0
  %10183 = vmatprep.subr.mxu0 0.0
  %10184 = vmatpush1.msra.mxu0 0.0
  %10185 = vmatprep.subr.mxu0 0.0
  %10186 = vmatpush1.msra.mxu0 0.0
  %10187 = vmatprep.subr.mxu0 0.0
  %10188 = vmatpush1.msra.mxu0 0.0
  %10189 = vmatprep.subr.mxu0 0.0
  %10190 = vmatpush1.msra.mxu0 0.0
  %10191 = vmatprep.subr.mxu0 0.0
  %10192 = vmatpush1.msra.mxu0 0.0
  %10193 = vmatprep.subr.mxu0 0.0
  %10194 = vmatpush1.msra.mxu0 0.0
  %10195 = vmatprep.subr.mxu0 0.0
  %10196 = vmatpush1.msra.mxu0 0.0
  %10197 = vmatprep.subr.mxu0 0.0
  %10198 = vmatpush1.msra.mxu0 0.0
  %10199 = vmatprep.subr.mxu0 0.0
  %10200 = vmatpush1.msra.mxu0 0.0
  %10201 = vmatprep.subr.mxu0 0.0
  %10202 = vmatpush1.msra.mxu0 0.0
  %10203 = vmatprep.subr.mxu0 0.0
  %10204 = vmatpush1.msra.mxu0 0.0
  %10205 = vmatprep.subr.mxu0 0.0
  %10206 = vmatpush1.msra.mxu0 0.0
  %10207 = vmatprep.subr.mxu0 0.0
  %10208 = vmatpush1.msra.mxu0 0.0
  %10209 = vmatprep.subr.mxu0 0.0
  %10210 = vmatpush1.msra.mxu0 0.0
  %10211 = vmatprep.subr.mxu0 0.0
  %10212 = vmatpush1.msra.mxu0 0.0
  %10213 = vmatprep.subr.mxu0 0.0
  %10214 = vmatpush1.msra.mxu0 0.0
  %10215 = vmatprep.subr.mxu0 0.0
  %10216 = vmatpush1.msra.mxu0 0.0
  %10217 = vmatprep.subr.mxu0 0.0
  %10218 = vmatpush1.msra.mxu0 0.0
  %10219 = vmatprep.subr.mxu0 0.0
  %10220 = vmatpush1.msra.mxu0 0.0
  %10221 = vmatprep.subr.mxu0 0.0
  %10222 = vmatpush1.msra.mxu0 0.0
  %10223 = vmatprep.subr.mxu0 0.0
  %10224 = vmatpush1.msra.mxu0 0.0
  %10225 = vmatprep.subr.mxu0 0.0
  %10226 = vmatpush1.msra.mxu0 0.0
  %10227 = vmatprep.mubr.f32.mxu0 0.0
  %10228 = vmatmul.mubr.f32.gmra.mrb[0].mxu0 %v10161
  %v10229 = vpop.f32.mrb[0].mxu0
  %v10230 = vadd.f32 0.0, %v10229
  %v10231 = vpop.f32.mrb[0].mxu0
  %10232 = vdwg.mxu0
  %v10234 = vsel %vm5075, %v5775, 0
  %10236 = vmatprep.subr.mxu0 0.0
  %10237 = vmatpush1.msra.mxu0 %v206
  %10238 = vmatprep.subr.mxu0 0.0
  %10239 = vmatpush1.msra.mxu0 0.0
  %10240 = vmatprep.subr.mxu0 0.0
  %10241 = vmatpush1.msra.mxu0 0.0
  %10242 = vmatprep.subr.mxu0 0.0
  %10243 = vmatpush1.msra.mxu0 0.0
  %10244 = vmatprep.subr.mxu0 0.0
  %10245 = vmatpush1.msra.mxu0 0.0
  %10246 = vmatprep.subr.mxu0 0.0
  %10247 = vmatpush1.msra.mxu0 0.0
  %10248 = vmatprep.subr.mxu0 0.0
  %10249 = vmatpush1.msra.mxu0 0.0
  %10250 = vmatprep.subr.mxu0 0.0
  %10251 = vmatpush1.msra.mxu0 0.0
  %10252 = vmatprep.subr.mxu0 0.0
  %10253 = vmatpush1.msra.mxu0 0.0
  %10254 = vmatprep.subr.mxu0 0.0
  %10255 = vmatpush1.msra.mxu0 0.0
  %10256 = vmatprep.subr.mxu0 0.0
  %10257 = vmatpush1.msra.mxu0 0.0
  %10258 = vmatprep.subr.mxu0 0.0
  %10259 = vmatpush1.msra.mxu0 0.0
  %10260 = vmatprep.subr.mxu0 0.0
  %10261 = vmatpush1.msra.mxu0 0.0
  %10262 = vmatprep.subr.mxu0 0.0
  %10263 = vmatpush1.msra.mxu0 0.0
  %10264 = vmatprep.subr.mxu0 0.0
  %10265 = vmatpush1.msra.mxu0 0.0
  %10266 = vmatprep.subr.mxu0 0.0
  %10267 = vmatpush1.msra.mxu0 0.0
  %10268 = vmatprep.subr.mxu0 0.0
  %10269 = vmatpush1.msra.mxu0 0.0
  %10270 = vmatprep.subr.mxu0 0.0
  %10271 = vmatpush1.msra.mxu0 0.0
  %10272 = vmatprep.subr.mxu0 0.0
  %10273 = vmatpush1.msra.mxu0 0.0
  %10274 = vmatprep.subr.mxu0 0.0
  %10275 = vmatpush1.msra.mxu0 0.0
  %10276 = vmatprep.subr.mxu0 0.0
  %10277 = vmatpush1.msra.mxu0 0.0
  %10278 = vmatprep.subr.mxu0 0.0
  %10279 = vmatpush1.msra.mxu0 0.0
  %10280 = vmatprep.subr.mxu0 0.0
  %10281 = vmatpush1.msra.mxu0 0.0
  %10282 = vmatprep.subr.mxu0 0.0
  %10283 = vmatpush1.msra.mxu0 0.0
  %10284 = vmatprep.subr.mxu0 0.0
  %10285 = vmatpush1.msra.mxu0 0.0
  %10286 = vmatprep.subr.mxu0 0.0
  %10287 = vmatpush1.msra.mxu0 0.0
  %10288 = vmatprep.subr.mxu0 0.0
  %10289 = vmatpush1.msra.mxu0 0.0
  %10290 = vmatprep.subr.mxu0 0.0
  %10291 = vmatpush1.msra.mxu0 0.0
  %10292 = vmatprep.subr.mxu0 0.0
  %10293 = vmatpush1.msra.mxu0 0.0
  %10294 = vmatprep.subr.mxu0 0.0
  %10295 = vmatpush1.msra.mxu0 0.0
  %10296 = vmatprep.subr.mxu0 0.0
  %10297 = vmatpush1.msra.mxu0 0.0
  %10298 = vmatprep.subr.mxu0 0.0
  %10299 = vmatpush1.msra.mxu0 0.0
  %10300 = vmatprep.mubr.f32.mxu0 0.0
  %10301 = vmatmul.mubr.f32.gmra.mrb[0].mxu0 %v10234
  %v10302 = vpop.f32.mrb[0].mxu0
  %v10303 = vadd.f32 0.0, %v10302
  %v10304 = vpop.f32.mrb[0].mxu0
  %10305 = vdwg.mxu0
  %v10307 = vsel %vm5075, %v5777, 0
  %10309 = vmatprep.subr.mxu0 0.0
  %10310 = vmatpush1.msra.mxu0 %v207
  %10311 = vmatprep.subr.mxu0 0.0
  %10312 = vmatpush1.msra.mxu0 0.0
  %10313 = vmatprep.subr.mxu0 0.0
  %10314 = vmatpush1.msra.mxu0 0.0
  %10315 = vmatprep.subr.mxu0 0.0
  %10316 = vmatpush1.msra.mxu0 0.0
  %10317 = vmatprep.subr.mxu0 0.0
  %10318 = vmatpush1.msra.mxu0 0.0
  %10319 = vmatprep.subr.mxu0 0.0
  %10320 = vmatpush1.msra.mxu0 0.0
  %10321 = vmatprep.subr.mxu0 0.0
  %10322 = vmatpush1.msra.mxu0 0.0
  %10323 = vmatprep.subr.mxu0 0.0
  %10324 = vmatpush1.msra.mxu0 0.0
  %10325 = vmatprep.subr.mxu0 0.0
  %10326 = vmatpush1.msra.mxu0 0.0
  %10327 = vmatprep.subr.mxu0 0.0
  %10328 = vmatpush1.msra.mxu0 0.0
  %10329 = vmatprep.subr.mxu0 0.0
  %10330 = vmatpush1.msra.mxu0 0.0
  %10331 = vmatprep.subr.mxu0 0.0
  %10332 = vmatpush1.msra.mxu0 0.0
  %10333 = vmatprep.subr.mxu0 0.0
  %10334 = vmatpush1.msra.mxu0 0.0
  %10335 = vmatprep.subr.mxu0 0.0
  %10336 = vmatpush1.msra.mxu0 0.0
  %10337 = vmatprep.subr.mxu0 0.0
  %10338 = vmatpush1.msra.mxu0 0.0
  %10339 = vmatprep.subr.mxu0 0.0
  %10340 = vmatpush1.msra.mxu0 0.0
  %10341 = vmatprep.subr.mxu0 0.0
  %10342 = vmatpush1.msra.mxu0 0.0
  %10343 = vmatprep.subr.mxu0 0.0
  %10344 = vmatpush1.msra.mxu0 0.0
  %10345 = vmatprep.subr.mxu0 0.0
  %10346 = vmatpush1.msra.mxu0 0.0
  %10347 = vmatprep.subr.mxu0 0.0
  %10348 = vmatpush1.msra.mxu0 0.0
  %10349 = vmatprep.subr.mxu0 0.0
  %10350 = vmatpush1.msra.mxu0 0.0
  %10351 = vmatprep.subr.mxu0 0.0
  %10352 = vmatpush1.msra.mxu0 0.0
  %10353 = vmatprep.subr.mxu0 0.0
  %10354 = vmatpush1.msra.mxu0 0.0
  %10355 = vmatprep.subr.mxu0 0.0
  %10356 = vmatpush1.msra.mxu0 0.0
  %10357 = vmatprep.subr.mxu0 0.0
  %10358 = vmatpush1.msra.mxu0 0.0
  %10359 = vmatprep.subr.mxu0 0.0
  %10360 = vmatpush1.msra.mxu0 0.0
  %10361 = vmatprep.subr.mxu0 0.0
  %10362 = vmatpush1.msra.mxu0 0.0
  %10363 = vmatprep.subr.mxu0 0.0
  %10364 = vmatpush1.msra.mxu0 0.0
  %10365 = vmatprep.subr.mxu0 0.0
  %10366 = vmatpush1.msra.mxu0 0.0
  %10367 = vmatprep.subr.mxu0 0.0
  %10368 = vmatpush1.msra.mxu0 0.0
  %10369 = vmatprep.subr.mxu0 0.0
  %10370 = vmatpush1.msra.mxu0 0.0
  %10371 = vmatprep.subr.mxu0 0.0
  %10372 = vmatpush1.msra.mxu0 0.0
  %10373 = vmatprep.mubr.f32.mxu0 0.0
  %10374 = vmatmul.mubr.f32.gmra.mrb[0].mxu0 %v10307
  %v10375 = vpop.f32.mrb[0].mxu0
  %v10376 = vadd.f32 0.0, %v10375
  %v10377 = vpop.f32.mrb[0].mxu0
  %10378 = vdwg.mxu0
  %v10380 = vsel %vm5075, %v5779, 0
  %10382 = vmatprep.subr.mxu0 0.0
  %10383 = vmatpush1.msra.mxu0 %v208
  %10384 = vmatprep.subr.mxu0 0.0
  %10385 = vmatpush1.msra.mxu0 0.0
  %10386 = vmatprep.subr.mxu0 0.0
  %10387 = vmatpush1.msra.mxu0 0.0
  %10388 = vmatprep.subr.mxu0 0.0
  %10389 = vmatpush1.msra.mxu0 0.0
  %10390 = vmatprep.subr.mxu0 0.0
  %10391 = vmatpush1.msra.mxu0 0.0
  %10392 = vmatprep.subr.mxu0 0.0
  %10393 = vmatpush1.msra.mxu0 0.0
  %10394 = vmatprep.subr.mxu0 0.0
  %10395 = vmatpush1.msra.mxu0 0.0
  %10396 = vmatprep.subr.mxu0 0.0
  %10397 = vmatpush1.msra.mxu0 0.0
  %10398 = vmatprep.subr.mxu0 0.0
  %10399 = vmatpush1.msra.mxu0 0.0
  %10400 = vmatprep.subr.mxu0 0.0
  %10401 = vmatpush1.msra.mxu0 0.0
  %10402 = vmatprep.subr.mxu0 0.0
  %10403 = vmatpush1.msra.mxu0 0.0
  %10404 = vmatprep.subr.mxu0 0.0
  %10405 = vmatpush1.msra.mxu0 0.0
  %10406 = vmatprep.subr.mxu0 0.0
  %10407 = vmatpush1.msra.mxu0 0.0
  %10408 = vmatprep.subr.mxu0 0.0
  %10409 = vmatpush1.msra.mxu0 0.0
  %10410 = vmatprep.subr.mxu0 0.0
  %10411 = vmatpush1.msra.mxu0 0.0
  %10412 = vmatprep.subr.mxu0 0.0
  %10413 = vmatpush1.msra.mxu0 0.0
  %10414 = vmatprep.subr.mxu0 0.0
  %10415 = vmatpush1.msra.mxu0 0.0
  %10416 = vmatprep.subr.mxu0 0.0
  %10417 = vmatpush1.msra.mxu0 0.0
  %10418 = vmatprep.subr.mxu0 0.0
  %10419 = vmatpush1.msra.mxu0 0.0
  %10420 = vmatprep.subr.mxu0 0.0
  %10421 = vmatpush1.msra.mxu0 0.0
  %10422 = vmatprep.subr.mxu0 0.0
  %10423 = vmatpush1.msra.mxu0 0.0
  %10424 = vmatprep.subr.mxu0 0.0
  %10425 = vmatpush1.msra.mxu0 0.0
  %10426 = vmatprep.subr.mxu0 0.0
  %10427 = vmatpush1.msra.mxu0 0.0
  %10428 = vmatprep.subr.mxu0 0.0
  %10429 = vmatpush1.msra.mxu0 0.0
  %10430 = vmatprep.subr.mxu0 0.0
  %10431 = vmatpush1.msra.mxu0 0.0
  %10432 = vmatprep.subr.mxu0 0.0
  %10433 = vmatpush1.msra.mxu0 0.0
  %10434 = vmatprep.subr.mxu0 0.0
  %10435 = vmatpush1.msra.mxu0 0.0
  %10436 = vmatprep.subr.mxu0 0.0
  %10437 = vmatpush1.msra.mxu0 0.0
  %10438 = vmatprep.subr.mxu0 0.0
  %10439 = vmatpush1.msra.mxu0 0.0
  %10440 = vmatprep.subr.mxu0 0.0
  %10441 = vmatpush1.msra.mxu0 0.0
  %10442 = vmatprep.subr.mxu0 0.0
  %10443 = vmatpush1.msra.mxu0 0.0
  %10444 = vmatprep.subr.mxu0 0.0
  %10445 = vmatpush1.msra.mxu0 0.0
  %10446 = vmatprep.mubr.f32.mxu0 0.0
  %10447 = vmatmul.mubr.f32.gmra.mrb[0].mxu0 %v10380
  %v10448 = vpop.f32.mrb[0].mxu0
  %v10449 = vadd.f32 0.0, %v10448
  %v10450 = vpop.f32.mrb[0].mxu0
  %10451 = vdwg.mxu0
  %10452 = vst.msk [vmem:[%s4] sm:$0xff] %vm210, %v5850
  %10453 = vst.msk [vmem:[%s4 + $0x8] sm:$0xff] %vm210, %v5923
  %10454 = vst.msk [vmem:[%s4 + $0x10] sm:$0xff] %vm210, %v5996
  %10455 = vst.msk [vmem:[%s4 + $0x18] sm:$0xff] %vm210, %v6069
  %10456 = vst.msk [vmem:[%s4 + $0x20] sm:$0xff] %vm210, %v6142
  %10457 = vst.msk [vmem:[%s4 + $0x28] sm:$0xff] %vm210, %v6215
  %10458 = vst.msk [vmem:[%s4 + $0x30] sm:$0xff] %vm210, %v6288
  %10459 = vst.msk [vmem:[%s4 + $0x38] sm:$0xff] %vm210, %v6361
  %10460 = vst.msk [vmem:[%s4 + $0x40] sm:$0xff] %vm210, %v6434
  %10461 = vst.msk [vmem:[%s4 + $0x48] sm:$0xff] %vm210, %v6507
  %10462 = vst.msk [vmem:[%s4 + $0x50] sm:$0xff] %vm210, %v6580
  %10463 = vst.msk [vmem:[%s4 + $0x58] sm:$0xff] %vm210, %v6653
  %10464 = vst.msk [vmem:[%s4 + $0x60] sm:$0xff] %vm210, %v6726
  %10465 = vst.msk [vmem:[%s4 + $0x68] sm:$0xff] %vm210, %v6799
  %10466 = vst.msk [vmem:[%s4 + $0x70] sm:$0xff] %vm210, %v6872
  %10467 = vst.msk [vmem:[%s4 + $0x78] sm:$0xff] %vm210, %v6945
  %10468 = vst.msk [vmem:[%s4 + $0x80] sm:$0xff] %vm210, %v7018
  %10469 = vst.msk [vmem:[%s4 + $0x88] sm:$0xff] %vm210, %v7091
  %10470 = vst.msk [vmem:[%s4 + $0x90] sm:$0xff] %vm210, %v7164
  %10471 = vst.msk [vmem:[%s4 + $0x98] sm:$0xff] %vm210, %v7237
  %10472 = vst.msk [vmem:[%s4 + $0xa0] sm:$0xff] %vm210, %v7310
  %10473 = vst.msk [vmem:[%s4 + $0xa8] sm:$0xff] %vm210, %v7383
  %10474 = vst.msk [vmem:[%s4 + $0xb0] sm:$0xff] %vm210, %v7456
  %10475 = vst.msk [vmem:[%s4 + $0xb8] sm:$0xff] %vm210, %v7529
  %10476 = vst.msk [vmem:[%s4 + $0xc0] sm:$0xff] %vm210, %v7602
  %10477 = vst.msk [vmem:[%s4 + $0xc8] sm:$0xff] %vm210, %v7675
  %10478 = vst.msk [vmem:[%s4 + $0xd0] sm:$0xff] %vm210, %v7748
  %10479 = vst.msk [vmem:[%s4 + $0xd8] sm:$0xff] %vm210, %v7821
  %10480 = vst.msk [vmem:[%s4 + $0xe0] sm:$0xff] %vm210, %v7894
  %10481 = vst.msk [vmem:[%s4 + $0xe8] sm:$0xff] %vm210, %v7967
  %10482 = vst.msk [vmem:[%s4 + $0xf0] sm:$0xff] %vm210, %v8040
  %10483 = vst.msk [vmem:[%s4 + $0xf8] sm:$0xff] %vm210, %v8113
  %10484 = vst.msk [vmem:[%s4 + $0x100] sm:$0xff] %vm210, %v8186
  %10485 = vst.msk [vmem:[%s4 + $0x108] sm:$0xff] %vm210, %v8259
  %10486 = vst.msk [vmem:[%s4 + $0x110] sm:$0xff] %vm210, %v8332
  %10487 = vst.msk [vmem:[%s4 + $0x118] sm:$0xff] %vm210, %v8405
  %10488 = vst.msk [vmem:[%s4 + $0x120] sm:$0xff] %vm210, %v8478
  %10489 = vst.msk [vmem:[%s4 + $0x128] sm:$0xff] %vm210, %v8551
  %10490 = vst.msk [vmem:[%s4 + $0x130] sm:$0xff] %vm210, %v8624
  %10491 = vst.msk [vmem:[%s4 + $0x138] sm:$0xff] %vm210, %v8697
  %10492 = vst.msk [vmem:[%s4 + $0x140] sm:$0xff] %vm210, %v8770
  %10493 = vst.msk [vmem:[%s4 + $0x148] sm:$0xff] %vm210, %v8843
  %10494 = vst.msk [vmem:[%s4 + $0x150] sm:$0xff] %vm210, %v8916
  %10495 = vst.msk [vmem:[%s4 + $0x158] sm:$0xff] %vm210, %v8989
  %10496 = vst.msk [vmem:[%s4 + $0x160] sm:$0xff] %vm210, %v9062
  %10497 = vst.msk [vmem:[%s4 + $0x168] sm:$0xff] %vm210, %v9135
  %10498 = vst.msk [vmem:[%s4 + $0x170] sm:$0xff] %vm210, %v9208
  %10499 = vst.msk [vmem:[%s4 + $0x178] sm:$0xff] %vm210, %v9281
  %10500 = vst.msk [vmem:[%s4 + $0x180] sm:$0xff] %vm210, %v9354
  %10501 = vst.msk [vmem:[%s4 + $0x188] sm:$0xff] %vm210, %v9427
  %10502 = vst.msk [vmem:[%s4 + $0x190] sm:$0xff] %vm210, %v9500
  %10503 = vst.msk [vmem:[%s4 + $0x198] sm:$0xff] %vm210, %v9573
  %10504 = vst.msk [vmem:[%s4 + $0x1a0] sm:$0xff] %vm210, %v9646
  %10505 = vst.msk [vmem:[%s4 + $0x1a8] sm:$0xff] %vm210, %v9719
  %10506 = vst.msk [vmem:[%s4 + $0x1b0] sm:$0xff] %vm210, %v9792
  %10507 = vst.msk [vmem:[%s4 + $0x1b8] sm:$0xff] %vm210, %v9865
  %10508 = vst.msk [vmem:[%s4 + $0x1c0] sm:$0xff] %vm210, %v9938
  %10509 = vst.msk [vmem:[%s4 + $0x1c8] sm:$0xff] %vm210, %v10011
  %10510 = vst.msk [vmem:[%s4 + $0x1d0] sm:$0xff] %vm210, %v10084
  %10511 = vst.msk [vmem:[%s4 + $0x1d8] sm:$0xff] %vm210, %v10157
  %10512 = vst.msk [vmem:[%s4 + $0x1e0] sm:$0xff] %vm210, %v10230
  %10513 = vst.msk [vmem:[%s4 + $0x1e8] sm:$0xff] %vm210, %v10303
  %10514 = vst.msk [vmem:[%s4 + $0x1f0] sm:$0xff] %vm210, %v10376
  %10515 = vst.msk [vmem:[%s4 + $0x1f8] sm:$0xff] %vm210, %v10449
  // Predicated region
  $region18: #{_lambda_.20} parent=0 // pred_check
    _
  $region19: #{_lambda_.20} parent=0 // pred_check_branch
    %10517 = sbr.rel (0) target = $region21
  $region20: #{_lambda_.20} parent=0 // pred_region
    _
  $region21: #{_lambda_.20} parent=0 // pred_fallthru
    _
  // Predicated region
  $region22: #{_lambda_.20} parent=0 // pred_check
    _
  $region23: #{_lambda_.20} parent=0 // pred_check_branch
    %10519 = sbr.rel (0) target = $region25
  $region24: #{_lambda_.20} parent=0 // pred_region
    _
  $region25: #{_lambda_.20} parent=0 // pred_fallthru
    _

</llo_original>
